<compile_context>
chip_gen: v6e
topology: v6e:2x2x1
jax: 0.10.0
libtpu: 0.0.40
codegen_flags: <defaults>
</compile_context>

<pallas_src>
import functools

import jax
import jax.numpy as jnp
from jax import lax
from jax.experimental import pallas as pl
from jax.experimental.pallas import tpu as pltpu

EPS = 1e-5                       # PyTorch BatchNorm default eps
VMEM_LIMIT = 48 * 1024 * 1024    # headroom below v7x's 64 MiB physical VMEM


# --------------------------------------------------------------------------
# Fused kernel: projector (both views) -> BN(affine=False) -> cross-corr -> loss
# Single invocation: every operand lives in VMEM exactly once.
# --------------------------------------------------------------------------
def fused_forward_kernel(*refs, n_linear, batch_size, lambd, scale_loss):
    f1_ref, f2_ref = refs[0], refs[1]
    loss_ref = refs[-1]
    wgb = refs[2:-1]  # (w, g, b) per hidden layer, then the final w

    def hidden_layer(x_bf16, w_ref, g_ref, b_ref):
        B = x_bf16.shape[0]
        # bf16 x bf16 MXU matmul, f32 accumulation.
        h = jnp.dot(x_bf16, w_ref[...], preferred_element_type=jnp.float32)
        # Single-pass batch statistics folded into a per-channel scale/shift.
        s = jnp.sum(h, axis=0, keepdims=True)
        ss = jnp.sum(h * h, axis=0, keepdims=True)
        mean = s * (1.0 / B)
        var = jnp.maximum(ss * (1.0 / B) - mean * mean, 0.0)   # clamp cancellation
        scale = g_ref[...] * lax.rsqrt(var + EPS)
        shift = b_ref[...] - mean * scale
        # Hidden activations stay bf16 (next layer's MXU operand).
        return jnp.maximum(h * scale + shift, 0.0).astype(jnp.bfloat16)

    def projector(x_bf16):
        idx = 0
        for _ in range(n_linear - 1):
            x_bf16 = hidden_layer(x_bf16, wgb[idx], wgb[idx + 1], wgb[idx + 2])
            idx += 3
        # Final Linear (no bias / BN / ReLU); keep f32 for the loss epilogue.
        return jnp.dot(x_bf16, wgb[idx][...], preferred_element_type=jnp.float32)

    z1 = projector(f1_ref[...])
    z2 = projector(f2_ref[...])

    def bn_no_affine(z):
        B = z.shape[0]
        s = jnp.sum(z, axis=0, keepdims=True)
        ss = jnp.sum(z * z, axis=0, keepdims=True)
        mean = s * (1.0 / B)
        var = jnp.maximum(ss * (1.0 / B) - mean * mean, 0.0)
        return (z - mean) * lax.rsqrt(var + EPS)

    z1n = bn_no_affine(z1)
    z2n = bn_no_affine(z2)

    # c = z1n.T @ z2n / batch_size  (contract over the batch axis; small f32 matmul).
    c = lax.dot_general(
        z1n, z2n, (((0,), (0,)), ((), ())), preferred_element_type=jnp.float32
    ) * (1.0 / batch_size)

    D = c.shape[0]
    rows = lax.broadcasted_iota(jnp.int32, (D, D), 0)
    cols = lax.broadcasted_iota(jnp.int32, (D, D), 1)
    # Single masked select:  diag -> (c - 1),  off-diag -> sqrt(lambd) * c.
    d = jnp.where(rows == cols, c - 1.0, (lambd ** 0.5) * c)
    sq = d * d
    partial = jnp.sum(sq, axis=1, keepdims=True)                 # (D, 1)
    loss_ref[...] = scale_loss * jnp.sum(partial, axis=0, keepdims=True)  # (1, 1)


@functools.partial(jax.jit, static_argnames=("batch_size", "lambd", "scale_loss"))
def barlow_twins_forward(f1, f2, params, *, batch_size, lambd, scale_loss):
    # TODO(synk): resnet50 backbone not implemented; f1/f2 are its pooled features.
    n_linear = sum(1 for k in params if k.startswith("w"))
    B, D0 = f1.shape
    D_out = params[f"w{n_linear}"].shape[1]

    inputs = [f1.astype(jnp.bfloat16), f2.astype(jnp.bfloat16)]
    for i in range(1, n_linear):
        inputs += [params[f"w{i}"], params[f"g{i}"], params[f"b{i}"]]
    inputs.append(params[f"w{n_linear}"])

    # Cost / bytes accounting (bf16 operands, two views share each weight).
    flops = 0
    bytes_accessed = 2 * (2 * B * D0)           # both views, bf16
    trans = 0
    din = D0
    for i in range(1, n_linear + 1):
        dout = params[f"w{i}"].shape[1]
        flops += 2 * (2 * B) * din * dout       # both views
        bytes_accessed += 2 * din * dout        # bf16 weight
        if i < n_linear:
            bytes_accessed += 2 * 4 * dout      # gamma / beta (f32)
            trans += 2 * dout                   # rsqrt per view
        din = dout
    flops += 2 * B * D_out * D_out              # cross-correlation
    trans += 2 * D_out                          # final-BN rsqrt per view
    bytes_accessed += 4                         # scalar loss
    cost = pl.CostEstimate(flops=flops, transcendentals=trans,
                           bytes_accessed=bytes_accessed)

    kernel = functools.partial(
        fused_forward_kernel,
        n_linear=n_linear,
        batch_size=batch_size,
        lambd=lambd,
        scale_loss=scale_loss,
    )
    vmem = pl.BlockSpec(memory_space=pltpu.MemorySpace.VMEM)
    loss = pl.pallas_call(
        kernel,
        out_shape=jax.ShapeDtypeStruct((1, 1), jnp.float32),
        in_specs=[vmem] * len(inputs),
        out_specs=vmem,
        compiler_params=pltpu.CompilerParams(vmem_limit_bytes=VMEM_LIMIT),
        cost_estimate=cost,
    )(*inputs)
    return loss[0, 0]


# --------------------------------------------------------------------------
# Parameters / pure-JAX reference
# --------------------------------------------------------------------------
def init_params(key, sizes):
    n_layers = len(sizes) - 1
    ks = jax.random.split(key, 3 * n_layers)
    params = {}
    for i in range(n_layers):
        fan_in = sizes[i]
        w_scale = 1.0 / jnp.sqrt(jnp.float32(fan_in))
        w = w_scale * jax.random.normal(ks[3 * i], (sizes[i], sizes[i + 1]), jnp.float32)
        params[f"w{i+1}"] = w.astype(jnp.bfloat16)      # weights stored in bf16
        if i < n_layers - 1:  # hidden layers carry BN affine params (f32)
            params[f"g{i+1}"] = 1.0 + 0.1 * jax.random.normal(
                ks[3 * i + 1], (1, sizes[i + 1]), jnp.float32
            )
            params[f"b{i+1}"] = 0.1 * jax.random.normal(
                ks[3 * i + 2], (1, sizes[i + 1]), jnp.float32
            )
    return params


def reference_forward(f1, f2, params, batch_size, lambd, scale_loss):
    """Pure-JAX f32 reference matching PyTorch training-mode semantics."""
    n_layers = sum(1 for k in params if k.startswith("w"))

    def w(i):
        return params[f"w{i}"].astype(jnp.float32)

    def bn(h, g, b):
        m = jnp.mean(h, axis=0, keepdims=True)
        v = jnp.mean((h - m) ** 2, axis=0, keepdims=True)
        return (h - m) * lax.rsqrt(v + EPS) * g + b

    def proj(x):
        for i in range(1, n_layers):
            x = jax.nn.relu(bn(x @ w(i), params[f"g{i}"], params[f"b{i}"]))
        return x @ w(n_layers)

    def bn_na(z):
        m = jnp.mean(z, axis=0, keepdims=True)
        v = jnp.mean((z - m) ** 2, axis=0, keepdims=True)
        return (z - m) * lax.rsqrt(v + EPS)

    z1, z2 = proj(f1), proj(f2)
    c = bn_na(z1).T @ bn_na(z2) / batch_size
    D = c.shape[0]
    on = jnp.sum((jnp.diagonal(c) - 1.0) ** 2) * scale_loss
    off = jnp.sum((c * (1.0 - jnp.eye(D, dtype=c.dtype))) ** 2) * scale_loss
    return on + lambd * off


if __name__ == "__main__":
    key = jax.random.PRNGKey(0)
    k_f1, k_f2, k_p = jax.random.split(key, 3)

    # Scaled-down BarlowTwins: backbone feature dim 256, projector "512-512-256",
    # batch 128 (lane-dense: all feature dims multiples of 128, batch multiple of 8).
    batch_size = 128
    sizes = [256, 512, 512, 256]
    lambd = 0.0051
    scale_loss = 1.0 / 32.0

    params = init_params(k_p, sizes)
    f1 = jax.random.normal(k_f1, (batch_size, sizes[0]), jnp.float32)
    f2 = jax.random.normal(k_f2, (batch_size, sizes[0]), jnp.float32)

    loss = barlow_twins_forward(
        f1, f2, params, batch_size=batch_size, lambd=lambd, scale_loss=scale_loss
    )
    loss = jax.block_until_ready(loss)

    # Reference consumes the same bf16-rounded inputs (bf16 storage is by design);
    # remaining difference isolates the bf16-MXU vs f32 compute error.
    f1_r = f1.astype(jnp.bfloat16).astype(jnp.float32)
    f2_r = f2.astype(jnp.bfloat16).astype(jnp.float32)
    ref = jax.block_until_ready(
        reference_forward(f1_r, f2_r, params, batch_size, lambd, scale_loss)
    )

    assert jnp.isfinite(loss), float(loss)
    rel_err = abs(float(loss) - float(ref)) / max(1e-6, abs(float(ref)))
    assert rel_err < 5e-2, (float(loss), float(ref), rel_err)  # bf16 MXU operands

    print("KERNEL_OK")
</pallas_src>

<mosaic_0001>
module attributes {stable_mosaic.version = 11 : i64} {
  func.func @fused_forward_kernel(%arg0: memref<128x256xbf16, #tpu.memory_space<vmem>>, %arg1: memref<128x256xbf16, #tpu.memory_space<vmem>>, %arg2: memref<256x512xbf16, #tpu.memory_space<vmem>>, %arg3: memref<1x512xf32, #tpu.memory_space<vmem>>, %arg4: memref<1x512xf32, #tpu.memory_space<vmem>>, %arg5: memref<512x512xbf16, #tpu.memory_space<vmem>>, %arg6: memref<1x512xf32, #tpu.memory_space<vmem>>, %arg7: memref<1x512xf32, #tpu.memory_space<vmem>>, %arg8: memref<512x256xbf16, #tpu.memory_space<vmem>>, %arg9: memref<1x1xf32, #tpu.memory_space<vmem>>) attributes {dimension_semantics = [], scalar_prefetch = 0 : i64, scratch_operands = 0 : i64, tpu.core_type = #tpu.core_type<tc>} {
    %c0 = arith.constant 0 : index
    %c0_0 = arith.constant 0 : index
    %0 = vector.load %arg0[%c0, %c0_0] : memref<128x256xbf16, #tpu.memory_space<vmem>>, vector<128x256xbf16>
    %c0_1 = arith.constant 0 : index
    %c0_2 = arith.constant 0 : index
    %1 = vector.load %arg2[%c0_1, %c0_2] : memref<256x512xbf16, #tpu.memory_space<vmem>>, vector<256x512xbf16>
    %cst = arith.constant dense<0.000000e+00> : vector<128x512xf32>
    %2 = tpu.matmul %0, %1, %cst {dimension_numbers = #tpu.dot_dimension_numbers<[1], [0], [0], [1], [0, 0, 1, 1], [], []>} : vector<128x256xbf16>, vector<256x512xbf16>, vector<128x512xf32> -> vector<128x512xf32>
    %cst_3 = arith.constant dense<0.000000e+00> : vector<512xf32>
    %3 = vector.multi_reduction <add>, %2, %cst_3 [0] : vector<128x512xf32> to vector<512xf32>
    %4 = vector.shape_cast %3 : vector<512xf32> to vector<1x512xf32>
    %5 = arith.mulf %2, %2 : vector<128x512xf32>
    %cst_4 = arith.constant dense<0.000000e+00> : vector<512xf32>
    %6 = vector.multi_reduction <add>, %5, %cst_4 [0] : vector<128x512xf32> to vector<512xf32>
    %7 = vector.shape_cast %6 : vector<512xf32> to vector<1x512xf32>
    %cst_5 = arith.constant 7.812500e-03 : f32
    %8 = vector.broadcast %cst_5 : f32 to vector<1x512xf32>
    %9 = arith.mulf %4, %8 : vector<1x512xf32>
    %cst_6 = arith.constant 7.812500e-03 : f32
    %10 = vector.broadcast %cst_6 : f32 to vector<1x512xf32>
    %11 = arith.mulf %7, %10 : vector<1x512xf32>
    %12 = arith.mulf %9, %9 : vector<1x512xf32>
    %13 = arith.subf %11, %12 : vector<1x512xf32>
    %cst_7 = arith.constant 0.000000e+00 : f32
    %14 = vector.broadcast %cst_7 : f32 to vector<1x512xf32>
    %15 = arith.maximumf %13, %14 : vector<1x512xf32>
    %c0_8 = arith.constant 0 : index
    %c0_9 = arith.constant 0 : index
    %16 = vector.load %arg3[%c0_8, %c0_9] : memref<1x512xf32, #tpu.memory_space<vmem>>, vector<1x512xf32>
    %cst_10 = arith.constant 9.99999974E-6 : f32
    %17 = vector.broadcast %cst_10 : f32 to vector<1x512xf32>
    %18 = arith.addf %15, %17 : vector<1x512xf32>
    %19 = math.rsqrt %18 : vector<1x512xf32>
    %20 = arith.mulf %16, %19 : vector<1x512xf32>
    %c0_11 = arith.constant 0 : index
    %c0_12 = arith.constant 0 : index
    %21 = vector.load %arg4[%c0_11, %c0_12] : memref<1x512xf32, #tpu.memory_space<vmem>>, vector<1x512xf32>
    %22 = arith.mulf %9, %20 : vector<1x512xf32>
    %23 = arith.subf %21, %22 : vector<1x512xf32>
    %24 = vector.broadcast %20 : vector<1x512xf32> to vector<128x512xf32>
    %25 = arith.mulf %2, %24 : vector<128x512xf32>
    %26 = vector.broadcast %23 : vector<1x512xf32> to vector<128x512xf32>
    %27 = arith.addf %25, %26 : vector<128x512xf32>
    %cst_13 = arith.constant 0.000000e+00 : f32
    %28 = vector.broadcast %cst_13 : f32 to vector<128x512xf32>
    %29 = arith.maximumf %27, %28 : vector<128x512xf32>
    %30 = arith.truncf %29 : vector<128x512xf32> to vector<128x512xbf16>
    %c0_14 = arith.constant 0 : index
    %c0_15 = arith.constant 0 : index
    %31 = vector.load %arg5[%c0_14, %c0_15] : memref<512x512xbf16, #tpu.memory_space<vmem>>, vector<512x512xbf16>
    %cst_16 = arith.constant dense<0.000000e+00> : vector<128x512xf32>
    %32 = tpu.matmul %30, %31, %cst_16 {dimension_numbers = #tpu.dot_dimension_numbers<[1], [0], [0], [1], [0, 0, 1, 1], [], []>} : vector<128x512xbf16>, vector<512x512xbf16>, vector<128x512xf32> -> vector<128x512xf32>
    %cst_17 = arith.constant dense<0.000000e+00> : vector<512xf32>
    %33 = vector.multi_reduction <add>, %32, %cst_17 [0] : vector<128x512xf32> to vector<512xf32>
    %34 = vector.shape_cast %33 : vector<512xf32> to vector<1x512xf32>
    %35 = arith.mulf %32, %32 : vector<128x512xf32>
    %cst_18 = arith.constant dense<0.000000e+00> : vector<512xf32>
    %36 = vector.multi_reduction <add>, %35, %cst_18 [0] : vector<128x512xf32> to vector<512xf32>
    %37 = vector.shape_cast %36 : vector<512xf32> to vector<1x512xf32>
    %cst_19 = arith.constant 7.812500e-03 : f32
    %38 = vector.broadcast %cst_19 : f32 to vector<1x512xf32>
    %39 = arith.mulf %34, %38 : vector<1x512xf32>
    %cst_20 = arith.constant 7.812500e-03 : f32
    %40 = vector.broadcast %cst_20 : f32 to vector<1x512xf32>
    %41 = arith.mulf %37, %40 : vector<1x512xf32>
    %42 = arith.mulf %39, %39 : vector<1x512xf32>
    %43 = arith.subf %41, %42 : vector<1x512xf32>
    %cst_21 = arith.constant 0.000000e+00 : f32
    %44 = vector.broadcast %cst_21 : f32 to vector<1x512xf32>
    %45 = arith.maximumf %43, %44 : vector<1x512xf32>
    %c0_22 = arith.constant 0 : index
    %c0_23 = arith.constant 0 : index
    %46 = vector.load %arg6[%c0_22, %c0_23] : memref<1x512xf32, #tpu.memory_space<vmem>>, vector<1x512xf32>
    %cst_24 = arith.constant 9.99999974E-6 : f32
    %47 = vector.broadcast %cst_24 : f32 to vector<1x512xf32>
    %48 = arith.addf %45, %47 : vector<1x512xf32>
    %49 = math.rsqrt %48 : vector<1x512xf32>
    %50 = arith.mulf %46, %49 : vector<1x512xf32>
    %c0_25 = arith.constant 0 : index
    %c0_26 = arith.constant 0 : index
    %51 = vector.load %arg7[%c0_25, %c0_26] : memref<1x512xf32, #tpu.memory_space<vmem>>, vector<1x512xf32>
    %52 = arith.mulf %39, %50 : vector<1x512xf32>
    %53 = arith.subf %51, %52 : vector<1x512xf32>
    %54 = vector.broadcast %50 : vector<1x512xf32> to vector<128x512xf32>
    %55 = arith.mulf %32, %54 : vector<128x512xf32>
    %56 = vector.broadcast %53 : vector<1x512xf32> to vector<128x512xf32>
    %57 = arith.addf %55, %56 : vector<128x512xf32>
    %cst_27 = arith.constant 0.000000e+00 : f32
    %58 = vector.broadcast %cst_27 : f32 to vector<128x512xf32>
    %59 = arith.maximumf %57, %58 : vector<128x512xf32>
    %60 = arith.truncf %59 : vector<128x512xf32> to vector<128x512xbf16>
    %c0_28 = arith.constant 0 : index
    %c0_29 = arith.constant 0 : index
    %61 = vector.load %arg8[%c0_28, %c0_29] : memref<512x256xbf16, #tpu.memory_space<vmem>>, vector<512x256xbf16>
    %cst_30 = arith.constant dense<0.000000e+00> : vector<128x256xf32>
    %62 = tpu.matmul %60, %61, %cst_30 {dimension_numbers = #tpu.dot_dimension_numbers<[1], [0], [0], [1], [0, 0, 1, 1], [], []>} : vector<128x512xbf16>, vector<512x256xbf16>, vector<128x256xf32> -> vector<128x256xf32>
    %c0_31 = arith.constant 0 : index
    %c0_32 = arith.constant 0 : index
    %63 = vector.load %arg1[%c0_31, %c0_32] : memref<128x256xbf16, #tpu.memory_space<vmem>>, vector<128x256xbf16>
    %c0_33 = arith.constant 0 : index
    %c0_34 = arith.constant 0 : index
    %64 = vector.load %arg2[%c0_33, %c0_34] : memref<256x512xbf16, #tpu.memory_space<vmem>>, vector<256x512xbf16>
    %cst_35 = arith.constant dense<0.000000e+00> : vector<128x512xf32>
    %65 = tpu.matmul %63, %64, %cst_35 {dimension_numbers = #tpu.dot_dimension_numbers<[1], [0], [0], [1], [0, 0, 1, 1], [], []>} : vector<128x256xbf16>, vector<256x512xbf16>, vector<128x512xf32> -> vector<128x512xf32>
    %cst_36 = arith.constant dense<0.000000e+00> : vector<512xf32>
    %66 = vector.multi_reduction <add>, %65, %cst_36 [0] : vector<128x512xf32> to vector<512xf32>
    %67 = vector.shape_cast %66 : vector<512xf32> to vector<1x512xf32>
    %68 = arith.mulf %65, %65 : vector<128x512xf32>
    %cst_37 = arith.constant dense<0.000000e+00> : vector<512xf32>
    %69 = vector.multi_reduction <add>, %68, %cst_37 [0] : vector<128x512xf32> to vector<512xf32>
    %70 = vector.shape_cast %69 : vector<512xf32> to vector<1x512xf32>
    %cst_38 = arith.constant 7.812500e-03 : f32
    %71 = vector.broadcast %cst_38 : f32 to vector<1x512xf32>
    %72 = arith.mulf %67, %71 : vector<1x512xf32>
    %cst_39 = arith.constant 7.812500e-03 : f32
    %73 = vector.broadcast %cst_39 : f32 to vector<1x512xf32>
    %74 = arith.mulf %70, %73 : vector<1x512xf32>
    %75 = arith.mulf %72, %72 : vector<1x512xf32>
    %76 = arith.subf %74, %75 : vector<1x512xf32>
    %cst_40 = arith.constant 0.000000e+00 : f32
    %77 = vector.broadcast %cst_40 : f32 to vector<1x512xf32>
    %78 = arith.maximumf %76, %77 : vector<1x512xf32>
    %c0_41 = arith.constant 0 : index
    %c0_42 = arith.constant 0 : index
    %79 = vector.load %arg3[%c0_41, %c0_42] : memref<1x512xf32, #tpu.memory_space<vmem>>, vector<1x512xf32>
    %cst_43 = arith.constant 9.99999974E-6 : f32
    %80 = vector.broadcast %cst_43 : f32 to vector<1x512xf32>
    %81 = arith.addf %78, %80 : vector<1x512xf32>
    %82 = math.rsqrt %81 : vector<1x512xf32>
    %83 = arith.mulf %79, %82 : vector<1x512xf32>
    %c0_44 = arith.constant 0 : index
    %c0_45 = arith.constant 0 : index
    %84 = vector.load %arg4[%c0_44, %c0_45] : memref<1x512xf32, #tpu.memory_space<vmem>>, vector<1x512xf32>
    %85 = arith.mulf %72, %83 : vector<1x512xf32>
    %86 = arith.subf %84, %85 : vector<1x512xf32>
    %87 = vector.broadcast %83 : vector<1x512xf32> to vector<128x512xf32>
    %88 = arith.mulf %65, %87 : vector<128x512xf32>
    %89 = vector.broadcast %86 : vector<1x512xf32> to vector<128x512xf32>
    %90 = arith.addf %88, %89 : vector<128x512xf32>
    %cst_46 = arith.constant 0.000000e+00 : f32
    %91 = vector.broadcast %cst_46 : f32 to vector<128x512xf32>
    %92 = arith.maximumf %90, %91 : vector<128x512xf32>
    %93 = arith.truncf %92 : vector<128x512xf32> to vector<128x512xbf16>
    %c0_47 = arith.constant 0 : index
    %c0_48 = arith.constant 0 : index
    %94 = vector.load %arg5[%c0_47, %c0_48] : memref<512x512xbf16, #tpu.memory_space<vmem>>, vector<512x512xbf16>
    %cst_49 = arith.constant dense<0.000000e+00> : vector<128x512xf32>
    %95 = tpu.matmul %93, %94, %cst_49 {dimension_numbers = #tpu.dot_dimension_numbers<[1], [0], [0], [1], [0, 0, 1, 1], [], []>} : vector<128x512xbf16>, vector<512x512xbf16>, vector<128x512xf32> -> vector<128x512xf32>
    %cst_50 = arith.constant dense<0.000000e+00> : vector<512xf32>
    %96 = vector.multi_reduction <add>, %95, %cst_50 [0] : vector<128x512xf32> to vector<512xf32>
    %97 = vector.shape_cast %96 : vector<512xf32> to vector<1x512xf32>
    %98 = arith.mulf %95, %95 : vector<128x512xf32>
    %cst_51 = arith.constant dense<0.000000e+00> : vector<512xf32>
    %99 = vector.multi_reduction <add>, %98, %cst_51 [0] : vector<128x512xf32> to vector<512xf32>
    %100 = vector.shape_cast %99 : vector<512xf32> to vector<1x512xf32>
    %cst_52 = arith.constant 7.812500e-03 : f32
    %101 = vector.broadcast %cst_52 : f32 to vector<1x512xf32>
    %102 = arith.mulf %97, %101 : vector<1x512xf32>
    %cst_53 = arith.constant 7.812500e-03 : f32
    %103 = vector.broadcast %cst_53 : f32 to vector<1x512xf32>
    %104 = arith.mulf %100, %103 : vector<1x512xf32>
    %105 = arith.mulf %102, %102 : vector<1x512xf32>
    %106 = arith.subf %104, %105 : vector<1x512xf32>
    %cst_54 = arith.constant 0.000000e+00 : f32
    %107 = vector.broadcast %cst_54 : f32 to vector<1x512xf32>
    %108 = arith.maximumf %106, %107 : vector<1x512xf32>
    %c0_55 = arith.constant 0 : index
    %c0_56 = arith.constant 0 : index
    %109 = vector.load %arg6[%c0_55, %c0_56] : memref<1x512xf32, #tpu.memory_space<vmem>>, vector<1x512xf32>
    %cst_57 = arith.constant 9.99999974E-6 : f32
    %110 = vector.broadcast %cst_57 : f32 to vector<1x512xf32>
    %111 = arith.addf %108, %110 : vector<1x512xf32>
    %112 = math.rsqrt %111 : vector<1x512xf32>
    %113 = arith.mulf %109, %112 : vector<1x512xf32>
    %c0_58 = arith.constant 0 : index
    %c0_59 = arith.constant 0 : index
    %114 = vector.load %arg7[%c0_58, %c0_59] : memref<1x512xf32, #tpu.memory_space<vmem>>, vector<1x512xf32>
    %115 = arith.mulf %102, %113 : vector<1x512xf32>
    %116 = arith.subf %114, %115 : vector<1x512xf32>
    %117 = vector.broadcast %113 : vector<1x512xf32> to vector<128x512xf32>
    %118 = arith.mulf %95, %117 : vector<128x512xf32>
    %119 = vector.broadcast %116 : vector<1x512xf32> to vector<128x512xf32>
    %120 = arith.addf %118, %119 : vector<128x512xf32>
    %cst_60 = arith.constant 0.000000e+00 : f32
    %121 = vector.broadcast %cst_60 : f32 to vector<128x512xf32>
    %122 = arith.maximumf %120, %121 : vector<128x512xf32>
    %123 = arith.truncf %122 : vector<128x512xf32> to vector<128x512xbf16>
    %c0_61 = arith.constant 0 : index
    %c0_62 = arith.constant 0 : index
    %124 = vector.load %arg8[%c0_61, %c0_62] : memref<512x256xbf16, #tpu.memory_space<vmem>>, vector<512x256xbf16>
    %cst_63 = arith.constant dense<0.000000e+00> : vector<128x256xf32>
    %125 = tpu.matmul %123, %124, %cst_63 {dimension_numbers = #tpu.dot_dimension_numbers<[1], [0], [0], [1], [0, 0, 1, 1], [], []>} : vector<128x512xbf16>, vector<512x256xbf16>, vector<128x256xf32> -> vector<128x256xf32>
    %cst_64 = arith.constant dense<0.000000e+00> : vector<256xf32>
    %126 = vector.multi_reduction <add>, %62, %cst_64 [0] : vector<128x256xf32> to vector<256xf32>
    %127 = vector.shape_cast %126 : vector<256xf32> to vector<1x256xf32>
    %128 = arith.mulf %62, %62 : vector<128x256xf32>
    %cst_65 = arith.constant dense<0.000000e+00> : vector<256xf32>
    %129 = vector.multi_reduction <add>, %128, %cst_65 [0] : vector<128x256xf32> to vector<256xf32>
    %130 = vector.shape_cast %129 : vector<256xf32> to vector<1x256xf32>
    %cst_66 = arith.constant 7.812500e-03 : f32
    %131 = vector.broadcast %cst_66 : f32 to vector<1x256xf32>
    %132 = arith.mulf %127, %131 : vector<1x256xf32>
    %cst_67 = arith.constant 7.812500e-03 : f32
    %133 = vector.broadcast %cst_67 : f32 to vector<1x256xf32>
    %134 = arith.mulf %130, %133 : vector<1x256xf32>
    %135 = arith.mulf %132, %132 : vector<1x256xf32>
    %136 = arith.subf %134, %135 : vector<1x256xf32>
    %cst_68 = arith.constant 0.000000e+00 : f32
    %137 = vector.broadcast %cst_68 : f32 to vector<1x256xf32>
    %138 = arith.maximumf %136, %137 : vector<1x256xf32>
    %139 = vector.broadcast %132 : vector<1x256xf32> to vector<128x256xf32>
    %140 = arith.subf %62, %139 : vector<128x256xf32>
    %cst_69 = arith.constant 9.99999974E-6 : f32
    %141 = vector.broadcast %cst_69 : f32 to vector<1x256xf32>
    %142 = arith.addf %138, %141 : vector<1x256xf32>
    %143 = math.rsqrt %142 : vector<1x256xf32>
    %144 = vector.broadcast %143 : vector<1x256xf32> to vector<128x256xf32>
    %145 = arith.mulf %140, %144 : vector<128x256xf32>
    %cst_70 = arith.constant dense<0.000000e+00> : vector<256xf32>
    %146 = vector.multi_reduction <add>, %125, %cst_70 [0] : vector<128x256xf32> to vector<256xf32>
    %147 = vector.shape_cast %146 : vector<256xf32> to vector<1x256xf32>
    %148 = arith.mulf %125, %125 : vector<128x256xf32>
    %cst_71 = arith.constant dense<0.000000e+00> : vector<256xf32>
    %149 = vector.multi_reduction <add>, %148, %cst_71 [0] : vector<128x256xf32> to vector<256xf32>
    %150 = vector.shape_cast %149 : vector<256xf32> to vector<1x256xf32>
    %cst_72 = arith.constant 7.812500e-03 : f32
    %151 = vector.broadcast %cst_72 : f32 to vector<1x256xf32>
    %152 = arith.mulf %147, %151 : vector<1x256xf32>
    %cst_73 = arith.constant 7.812500e-03 : f32
    %153 = vector.broadcast %cst_73 : f32 to vector<1x256xf32>
    %154 = arith.mulf %150, %153 : vector<1x256xf32>
    %155 = arith.mulf %152, %152 : vector<1x256xf32>
    %156 = arith.subf %154, %155 : vector<1x256xf32>
    %cst_74 = arith.constant 0.000000e+00 : f32
    %157 = vector.broadcast %cst_74 : f32 to vector<1x256xf32>
    %158 = arith.maximumf %156, %157 : vector<1x256xf32>
    %159 = vector.broadcast %152 : vector<1x256xf32> to vector<128x256xf32>
    %160 = arith.subf %125, %159 : vector<128x256xf32>
    %cst_75 = arith.constant 9.99999974E-6 : f32
    %161 = vector.broadcast %cst_75 : f32 to vector<1x256xf32>
    %162 = arith.addf %158, %161 : vector<1x256xf32>
    %163 = math.rsqrt %162 : vector<1x256xf32>
    %164 = vector.broadcast %163 : vector<1x256xf32> to vector<128x256xf32>
    %165 = arith.mulf %160, %164 : vector<128x256xf32>
    %cst_76 = arith.constant dense<0.000000e+00> : vector<256x256xf32>
    %166 = tpu.matmul %145, %165, %cst_76 {dimension_numbers = #tpu.dot_dimension_numbers<[0], [0], [1], [1], [0, 1, 1, 1], [], []>} : vector<128x256xf32>, vector<128x256xf32>, vector<256x256xf32> -> vector<256x256xf32>
    %cst_77 = arith.constant 7.812500e-03 : f32
    %167 = vector.broadcast %cst_77 : f32 to vector<256x256xf32>
    %168 = arith.mulf %166, %167 : vector<256x256xf32>
    %169 = tpu.iota {dimensions = array<i32: 0>} : vector<256x256xi32>
    %170 = tpu.iota {dimensions = array<i32: 1>} : vector<256x256xi32>
    %171 = arith.cmpi eq, %169, %170 : vector<256x256xi32>
    %cst_78 = arith.constant 1.000000e+00 : f32
    %172 = vector.broadcast %cst_78 : f32 to vector<256x256xf32>
    %173 = arith.subf %168, %172 : vector<256x256xf32>
    %cst_79 = arith.constant 0.0714142844 : f32
    %174 = vector.broadcast %cst_79 : f32 to vector<256x256xf32>
    %175 = arith.mulf %174, %168 : vector<256x256xf32>
    %176 = arith.select %171, %173, %175 : vector<256x256xi1>, vector<256x256xf32>
    %177 = arith.mulf %176, %176 : vector<256x256xf32>
    %cst_80 = arith.constant dense<0.000000e+00> : vector<256xf32>
    %178 = vector.multi_reduction <add>, %177, %cst_80 [1] : vector<256x256xf32> to vector<256xf32>
    %179 = vector.shape_cast %178 : vector<256xf32> to vector<256x1xf32>
    %cst_81 = arith.constant dense<0.000000e+00> : vector<1xf32>
    %180 = vector.multi_reduction <add>, %179, %cst_81 [0] : vector<256x1xf32> to vector<1xf32>
    %181 = vector.shape_cast %180 : vector<1xf32> to vector<1x1xf32>
    %cst_82 = arith.constant 3.125000e-02 : f32
    %182 = vector.broadcast %cst_82 : f32 to vector<1x1xf32>
    %183 = arith.mulf %182, %181 : vector<1x1xf32>
    %c0_83 = arith.constant 0 : index
    %c0_84 = arith.constant 0 : index
    %184 = vector.load %arg9[%c0_83, %c0_84] : memref<1x1xf32, #tpu.memory_space<vmem>>, vector<1x1xf32>
    tpu.vector_store %arg9[%c0_83, %c0_84], %183 {strides = array<i32>} : memref<1x1xf32, #tpu.memory_space<vmem>>, vector<1x1xf32>,
    return
  }
}

</mosaic_0001>

<llo_original>
// kernel: barlow_twins_forward.1
$region0: #{barlow_twins_forward.1}
  #allocation0 [shape = 'u32[]', space=smem, size = 0x4, offset = 0x4, fixed_abs, tag = 'smem constant byte address 0x4 - core index']
  #allocation1 [shape = 'u32[144,128]{1,0:T(1,128)}', space=vmem, size = 0x12000, scoped, tag = 'internal scratch']
  %s0 = inlined_call_operand.vmem [shape: bf16[128,256], index: 0, kind: input, shape index: {}]
  %s1 = inlined_call_operand.vmem [shape: bf16[128,256], index: 1, kind: input, shape index: {}]
  %s2 = inlined_call_operand.vmem [shape: bf16[256,512], index: 2, kind: input, shape index: {}]
  %s3 = inlined_call_operand.vmem [shape: f32[1,512], index: 3, kind: input, shape index: {}]
  %s4 = inlined_call_operand.vmem [shape: f32[1,512], index: 4, kind: input, shape index: {}]
  %s5 = inlined_call_operand.hbm [shape: bf16[512,512], index: 5, kind: input, shape index: {}]
  %s6 = inlined_call_operand.vmem [shape: f32[1,512], index: 6, kind: input, shape index: {}]
  %s7 = inlined_call_operand.vmem [shape: f32[1,512], index: 7, kind: input, shape index: {}]
  %s8 = inlined_call_operand.hbm [shape: bf16[512,256], index: 8, kind: input, shape index: {}]
  %s9 = inlined_call_operand.hbm [shape: f32[1,1], index: 9, kind: output, shape index: {}]
  %s10 = sld [smem:[#allocation0]]
  $region54: #{barlow_twins_forward.1} parent=0
    _
  %s12 = ssub.s32 1, %s10
  %s13 = scalar_select 0, %s12, %s10
  $region1: #{barlow_twins_forward.1} parent=0
    #allocation2 [shape = 'u8[524288]{0}', space=vmem, size = 0x80000, scoped, tag = 'input window, operand 5, single buffered']
    #allocation3 [shape = 's32[1]{0}', space=sflag, size = 0x4, scoped, tag = 'scoped memory for barlow_twins_forward.1']
    #allocation4 [shape = 's32[1]{0}', space=sflag, size = 0x4, scoped, tag = 'scoped memory for barlow_twins_forward.1']
    #allocation5 [shape = 'u8[262144]{0}', space=vmem, size = 0x40000, scoped, tag = 'input window, operand 8, single buffered']
    #allocation6 [shape = 's32[1]{0}', space=sflag, size = 0x4, scoped, tag = 'scoped memory for barlow_twins_forward.1']
    #allocation7 [shape = 'u8[512]{0}', space=vmem, size = 0x400, scoped, tag = 'output window, operand 0, single buffered']
    %14 = vsyncpa [#allocation3], 0
    %15 = vsyncpa [#allocation6], 0
    %16 = vsyncpa [#allocation4], 0
    // Predicated region
    $region2: #{barlow_twins_forward.1} parent=1 // pred_check
      _
    $region3: #{barlow_twins_forward.1} parent=1 // pred_check_branch
      %18 = sbr.rel (0) target = $region5
    $region4: #{barlow_twins_forward.1} parent=1 // pred_region
      _
    $region5: #{barlow_twins_forward.1} parent=1 // pred_fallthru
      _
    // Predicated region
    $region6: #{barlow_twins_forward.1} parent=1 // pred_check
      _
    $region7: #{barlow_twins_forward.1} parent=1 // pred_check_branch
      %20 = sbr.rel (0) target = $region9
    $region8: #{barlow_twins_forward.1} parent=1 // pred_region
      _
    $region9: #{barlow_twins_forward.1} parent=1 // pred_fallthru
      _
    // Predicated region
    $region10: #{barlow_twins_forward.1} parent=1 // pred_check
      _
    $region11: #{barlow_twins_forward.1} parent=1 // pred_check_branch
      %22 = sbr.rel (0) target = $region13
    $region12: #{barlow_twins_forward.1} parent=1 // pred_region
      _
    $region13: #{barlow_twins_forward.1} parent=1 // pred_fallthru
      _
    // Predicated region
    $region14: #{barlow_twins_forward.1} parent=1 // pred_check
      _
    $region15: #{barlow_twins_forward.1} parent=1 // pred_check_branch
      %24 = sbr.rel (0) target = $region17
    $region16: #{barlow_twins_forward.1} parent=1 // pred_region
      _
    $region17: #{barlow_twins_forward.1} parent=1 // pred_fallthru
      _
    // Predicated region
    $region18: #{barlow_twins_forward.1} parent=1 // pred_check
      _
    $region19: #{barlow_twins_forward.1} parent=1 // pred_check_branch
      %26 = sbr.rel (0) target = $region21
    $region20: #{barlow_twins_forward.1} parent=1 // pred_region
      _
    $region21: #{barlow_twins_forward.1} parent=1 // pred_fallthru
      _
    // Predicated region
    $region22: #{barlow_twins_forward.1} parent=1 // pred_check
      _
    $region23: #{barlow_twins_forward.1} parent=1 // pred_check_branch
      %28 = sbr.rel (0) target = $region25
    $region24: #{barlow_twins_forward.1} parent=1 // pred_region
      %s30 = ssub.s32 16384, 16384
      %31 = vsyncadd [#allocation3], %s30
      %s32 = sshll.u32 [#allocation2], 4
      %s33 = int_to_ptr.vmem [resolvable:$true] %s32
      %38 = dma.hbm_to_vmem [thread:$0]  %s5, 16384, %s33, [#allocation3], 256, 256, 16
    $region25: #{barlow_twins_forward.1} parent=1 // pred_fallthru
      _
    // Predicated region
    $region26: #{barlow_twins_forward.1} parent=1 // pred_check
      _
    $region27: #{barlow_twins_forward.1} parent=1 // pred_check_branch
      %40 = sbr.rel (0) target = $region29
    $region28: #{barlow_twins_forward.1} parent=1 // pred_region
      _
    $region29: #{barlow_twins_forward.1} parent=1 // pred_fallthru
      _
    // Predicated region
    $region30: #{barlow_twins_forward.1} parent=1 // pred_check
      _
    $region31: #{barlow_twins_forward.1} parent=1 // pred_check_branch
      %42 = sbr.rel (0) target = $region33
    $region32: #{barlow_twins_forward.1} parent=1 // pred_region
      _
    $region33: #{barlow_twins_forward.1} parent=1 // pred_fallthru
      _
    // Predicated region
    $region34: #{barlow_twins_forward.1} parent=1 // pred_check
      _
    $region35: #{barlow_twins_forward.1} parent=1 // pred_check_branch
      %44 = sbr.rel (0) target = $region37
    $region36: #{barlow_twins_forward.1} parent=1 // pred_region
      %s46 = ssub.s32 8192, 8192
      %47 = vsyncadd [#allocation6], %s46
      %s48 = sshll.u32 [#allocation5], 4
      %s49 = int_to_ptr.vmem [resolvable:$true] %s48
      %54 = dma.hbm_to_vmem [thread:$0]  %s8, 8192, %s49, [#allocation6], 128, 128, 8
    $region37: #{barlow_twins_forward.1} parent=1 // pred_fallthru
      _
    // Predicated region
    $region38: #{barlow_twins_forward.1} parent=1 // pred_check
      _
    $region39: #{barlow_twins_forward.1} parent=1 // pred_check_branch
      %56 = sbr.rel (0) target = $region41
    $region40: #{barlow_twins_forward.1} parent=1 // pred_region
      %57 = dma.done [#allocation3], 16384
    $region41: #{barlow_twins_forward.1} parent=1 // pred_fallthru
      _
    // Predicated region
    $region42: #{barlow_twins_forward.1} parent=1 // pred_check
      _
    $region43: #{barlow_twins_forward.1} parent=1 // pred_check_branch
      %59 = sbr.rel (0) target = $region45
    $region44: #{barlow_twins_forward.1} parent=1 // pred_region
      %60 = dma.done [#allocation6], 8192
    $region45: #{barlow_twins_forward.1} parent=1 // pred_fallthru
      _
    %v61 = vld [vmem:[%s0] sm:$0xff]
    %v62 = vld [vmem:[%s0 + $0x8] sm:$0xff]
    %v63 = vld [vmem:[%s0 + $0x10] sm:$0xff]
    %v64 = vld [vmem:[%s0 + $0x18] sm:$0xff]
    %v65 = vld [vmem:[%s0 + $0x20] sm:$0xff]
    %v66 = vld [vmem:[%s0 + $0x28] sm:$0xff]
    %v67 = vld [vmem:[%s0 + $0x30] sm:$0xff]
    %v68 = vld [vmem:[%s0 + $0x38] sm:$0xff]
    %v69 = vld [vmem:[%s0 + $0x40] sm:$0xff]
    %v70 = vld [vmem:[%s0 + $0x48] sm:$0xff]
    %v71 = vld [vmem:[%s0 + $0x50] sm:$0xff]
    %v72 = vld [vmem:[%s0 + $0x58] sm:$0xff]
    %v73 = vld [vmem:[%s0 + $0x60] sm:$0xff]
    %v74 = vld [vmem:[%s0 + $0x68] sm:$0xff]
    %v75 = vld [vmem:[%s0 + $0x70] sm:$0xff]
    %v76 = vld [vmem:[%s0 + $0x78] sm:$0xff]
    %v77 = vld [vmem:[%s2] sm:$0xff]
    %v78 = vld [vmem:[%s2 + $0x8] sm:$0xff]
    %v79 = vld [vmem:[%s2 + $0x10] sm:$0xff]
    %v80 = vld [vmem:[%s2 + $0x18] sm:$0xff]
    %v81 = vld [vmem:[%s2 + $0x20] sm:$0xff]
    %v82 = vld [vmem:[%s2 + $0x28] sm:$0xff]
    %v83 = vld [vmem:[%s2 + $0x30] sm:$0xff]
    %v84 = vld [vmem:[%s2 + $0x38] sm:$0xff]
    %v85 = vld [vmem:[%s2 + $0x40] sm:$0xff]
    %v86 = vld [vmem:[%s2 + $0x48] sm:$0xff]
    %v87 = vld [vmem:[%s2 + $0x50] sm:$0xff]
    %v88 = vld [vmem:[%s2 + $0x58] sm:$0xff]
    %v89 = vld [vmem:[%s2 + $0x60] sm:$0xff]
    %v90 = vld [vmem:[%s2 + $0x68] sm:$0xff]
    %v91 = vld [vmem:[%s2 + $0x70] sm:$0xff]
    %v92 = vld [vmem:[%s2 + $0x78] sm:$0xff]
    %v93 = vld [vmem:[%s2 + $0x80] sm:$0xff]
    %v94 = vld [vmem:[%s2 + $0x88] sm:$0xff]
    %v95 = vld [vmem:[%s2 + $0x90] sm:$0xff]
    %v96 = vld [vmem:[%s2 + $0x98] sm:$0xff]
    %v97 = vld [vmem:[%s2 + $0xa0] sm:$0xff]
    %v98 = vld [vmem:[%s2 + $0xa8] sm:$0xff]
    %v99 = vld [vmem:[%s2 + $0xb0] sm:$0xff]
    %v100 = vld [vmem:[%s2 + $0xb8] sm:$0xff]
    %v101 = vld [vmem:[%s2 + $0xc0] sm:$0xff]
    %v102 = vld [vmem:[%s2 + $0xc8] sm:$0xff]
    %v103 = vld [vmem:[%s2 + $0xd0] sm:$0xff]
    %v104 = vld [vmem:[%s2 + $0xd8] sm:$0xff]
    %v105 = vld [vmem:[%s2 + $0xe0] sm:$0xff]
    %v106 = vld [vmem:[%s2 + $0xe8] sm:$0xff]
    %v107 = vld [vmem:[%s2 + $0xf0] sm:$0xff]
    %v108 = vld [vmem:[%s2 + $0xf8] sm:$0xff]
    %v109 = vld [vmem:[%s2 + $0x100] sm:$0xff]
    %v110 = vld [vmem:[%s2 + $0x108] sm:$0xff]
    %v111 = vld [vmem:[%s2 + $0x110] sm:$0xff]
    %v112 = vld [vmem:[%s2 + $0x118] sm:$0xff]
    %v113 = vld [vmem:[%s2 + $0x120] sm:$0xff]
    %v114 = vld [vmem:[%s2 + $0x128] sm:$0xff]
    %v115 = vld [vmem:[%s2 + $0x130] sm:$0xff]
    %v116 = vld [vmem:[%s2 + $0x138] sm:$0xff]
    %v117 = vld [vmem:[%s2 + $0x140] sm:$0xff]
    %v118 = vld [vmem:[%s2 + $0x148] sm:$0xff]
    %v119 = vld [vmem:[%s2 + $0x150] sm:$0xff]
    %v120 = vld [vmem:[%s2 + $0x158] sm:$0xff]
    %v121 = vld [vmem:[%s2 + $0x160] sm:$0xff]
    %v122 = vld [vmem:[%s2 + $0x168] sm:$0xff]
    %v123 = vld [vmem:[%s2 + $0x170] sm:$0xff]
    %v124 = vld [vmem:[%s2 + $0x178] sm:$0xff]
    %v125 = vld [vmem:[%s2 + $0x180] sm:$0xff]
    %v126 = vld [vmem:[%s2 + $0x188] sm:$0xff]
    %v127 = vld [vmem:[%s2 + $0x190] sm:$0xff]
    %v128 = vld [vmem:[%s2 + $0x198] sm:$0xff]
    %v129 = vld [vmem:[%s2 + $0x1a0] sm:$0xff]
    %v130 = vld [vmem:[%s2 + $0x1a8] sm:$0xff]
    %v131 = vld [vmem:[%s2 + $0x1b0] sm:$0xff]
    %v132 = vld [vmem:[%s2 + $0x1b8] sm:$0xff]
    %v133 = vld [vmem:[%s2 + $0x1c0] sm:$0xff]
    %v134 = vld [vmem:[%s2 + $0x1c8] sm:$0xff]
    %v135 = vld [vmem:[%s2 + $0x1d0] sm:$0xff]
    %v136 = vld [vmem:[%s2 + $0x1d8] sm:$0xff]
    %v137 = vld [vmem:[%s2 + $0x1e0] sm:$0xff]
    %v138 = vld [vmem:[%s2 + $0x1e8] sm:$0xff]
    %v139 = vld [vmem:[%s2 + $0x1f0] sm:$0xff]
    %v140 = vld [vmem:[%s2 + $0x1f8] sm:$0xff]
    %v157 = vunpack.c.l.b16 %v61
    %v158 = vunpack.c.h.b16 %v61
    %v159 = vunpack.c.l.b16 %v62
    %v160 = vunpack.c.h.b16 %v62
    %v161 = vunpack.c.l.b16 %v63
    %v162 = vunpack.c.h.b16 %v63
    %v163 = vunpack.c.l.b16 %v64
    %v164 = vunpack.c.h.b16 %v64
    %v165 = vunpack.c.l.b16 %v65
    %v166 = vunpack.c.h.b16 %v65
    %v167 = vunpack.c.l.b16 %v66
    %v168 = vunpack.c.h.b16 %v66
    %v169 = vunpack.c.l.b16 %v67
    %v170 = vunpack.c.h.b16 %v67
    %v171 = vunpack.c.l.b16 %v68
    %v172 = vunpack.c.h.b16 %v68
    %v173 = vunpack.c.l.b16 %v69
    %v174 = vunpack.c.h.b16 %v69
    %v175 = vunpack.c.l.b16 %v70
    %v176 = vunpack.c.h.b16 %v70
    %v177 = vunpack.c.l.b16 %v71
    %v178 = vunpack.c.h.b16 %v71
    %v179 = vunpack.c.l.b16 %v72
    %v180 = vunpack.c.h.b16 %v72
    %v181 = vunpack.c.l.b16 %v73
    %v182 = vunpack.c.h.b16 %v73
    %v183 = vunpack.c.l.b16 %v74
    %v184 = vunpack.c.h.b16 %v74
    %v185 = vunpack.c.l.b16 %v75
    %v186 = vunpack.c.h.b16 %v75
    %v187 = vunpack.c.l.b16 %v76
    %v188 = vunpack.c.h.b16 %v76
    %v189 = vpack.c.b16 %v159, %v157
    %v190 = vpack.c.b16 %v160, %v158
    %v191 = vpack.c.b16 %v163, %v161
    %v192 = vpack.c.b16 %v164, %v162
    %v193 = vpack.c.b16 %v167, %v165
    %v194 = vpack.c.b16 %v168, %v166
    %v195 = vpack.c.b16 %v171, %v169
    %v196 = vpack.c.b16 %v172, %v170
    %v197 = vpack.c.b16 %v175, %v173
    %v198 = vpack.c.b16 %v176, %v174
    %v199 = vpack.c.b16 %v179, %v177
    %v200 = vpack.c.b16 %v180, %v178
    %v201 = vpack.c.b16 %v183, %v181
    %v202 = vpack.c.b16 %v184, %v182
    %v203 = vpack.c.b16 %v187, %v185
    %v204 = vpack.c.b16 %v188, %v186
    %v285 = vunpack.c.l.b16 %v77
    %v286 = vunpack.c.h.b16 %v77
    %v287 = vunpack.c.l.b16 %v78
    %v288 = vunpack.c.h.b16 %v78
    %v289 = vunpack.c.l.b16 %v79
    %v290 = vunpack.c.h.b16 %v79
    %v291 = vunpack.c.l.b16 %v80
    %v292 = vunpack.c.h.b16 %v80
    %v293 = vunpack.c.l.b16 %v81
    %v294 = vunpack.c.h.b16 %v81
    %v295 = vunpack.c.l.b16 %v82
    %v296 = vunpack.c.h.b16 %v82
    %v297 = vunpack.c.l.b16 %v83
    %v298 = vunpack.c.h.b16 %v83
    %v299 = vunpack.c.l.b16 %v84
    %v300 = vunpack.c.h.b16 %v84
    %v301 = vunpack.c.l.b16 %v85
    %v302 = vunpack.c.h.b16 %v85
    %v303 = vunpack.c.l.b16 %v86
    %v304 = vunpack.c.h.b16 %v86
    %v305 = vunpack.c.l.b16 %v87
    %v306 = vunpack.c.h.b16 %v87
    %v307 = vunpack.c.l.b16 %v88
    %v308 = vunpack.c.h.b16 %v88
    %v309 = vunpack.c.l.b16 %v89
    %v310 = vunpack.c.h.b16 %v89
    %v311 = vunpack.c.l.b16 %v90
    %v312 = vunpack.c.h.b16 %v90
    %v313 = vunpack.c.l.b16 %v91
    %v314 = vunpack.c.h.b16 %v91
    %v315 = vunpack.c.l.b16 %v92
    %v316 = vunpack.c.h.b16 %v92
    %v317 = vunpack.c.l.b16 %v93
    %v318 = vunpack.c.h.b16 %v93
    %v319 = vunpack.c.l.b16 %v94
    %v320 = vunpack.c.h.b16 %v94
    %v321 = vunpack.c.l.b16 %v95
    %v322 = vunpack.c.h.b16 %v95
    %v323 = vunpack.c.l.b16 %v96
    %v324 = vunpack.c.h.b16 %v96
    %v325 = vunpack.c.l.b16 %v97
    %v326 = vunpack.c.h.b16 %v97
    %v327 = vunpack.c.l.b16 %v98
    %v328 = vunpack.c.h.b16 %v98
    %v329 = vunpack.c.l.b16 %v99
    %v330 = vunpack.c.h.b16 %v99
    %v331 = vunpack.c.l.b16 %v100
    %v332 = vunpack.c.h.b16 %v100
    %v333 = vunpack.c.l.b16 %v101
    %v334 = vunpack.c.h.b16 %v101
    %v335 = vunpack.c.l.b16 %v102
    %v336 = vunpack.c.h.b16 %v102
    %v337 = vunpack.c.l.b16 %v103
    %v338 = vunpack.c.h.b16 %v103
    %v339 = vunpack.c.l.b16 %v104
    %v340 = vunpack.c.h.b16 %v104
    %v341 = vunpack.c.l.b16 %v105
    %v342 = vunpack.c.h.b16 %v105
    %v343 = vunpack.c.l.b16 %v106
    %v344 = vunpack.c.h.b16 %v106
    %v345 = vunpack.c.l.b16 %v107
    %v346 = vunpack.c.h.b16 %v107
    %v347 = vunpack.c.l.b16 %v108
    %v348 = vunpack.c.h.b16 %v108
    %v349 = vunpack.c.l.b16 %v109
    %v350 = vunpack.c.h.b16 %v109
    %v351 = vunpack.c.l.b16 %v110
    %v352 = vunpack.c.h.b16 %v110
    %v353 = vunpack.c.l.b16 %v111
    %v354 = vunpack.c.h.b16 %v111
    %v355 = vunpack.c.l.b16 %v112
    %v356 = vunpack.c.h.b16 %v112
    %v357 = vunpack.c.l.b16 %v113
    %v358 = vunpack.c.h.b16 %v113
    %v359 = vunpack.c.l.b16 %v114
    %v360 = vunpack.c.h.b16 %v114
    %v361 = vunpack.c.l.b16 %v115
    %v362 = vunpack.c.h.b16 %v115
    %v363 = vunpack.c.l.b16 %v116
    %v364 = vunpack.c.h.b16 %v116
    %v365 = vunpack.c.l.b16 %v117
    %v366 = vunpack.c.h.b16 %v117
    %v367 = vunpack.c.l.b16 %v118
    %v368 = vunpack.c.h.b16 %v118
    %v369 = vunpack.c.l.b16 %v119
    %v370 = vunpack.c.h.b16 %v119
    %v371 = vunpack.c.l.b16 %v120
    %v372 = vunpack.c.h.b16 %v120
    %v373 = vunpack.c.l.b16 %v121
    %v374 = vunpack.c.h.b16 %v121
    %v375 = vunpack.c.l.b16 %v122
    %v376 = vunpack.c.h.b16 %v122
    %v377 = vunpack.c.l.b16 %v123
    %v378 = vunpack.c.h.b16 %v123
    %v379 = vunpack.c.l.b16 %v124
    %v380 = vunpack.c.h.b16 %v124
    %v381 = vunpack.c.l.b16 %v125
    %v382 = vunpack.c.h.b16 %v125
    %v383 = vunpack.c.l.b16 %v126
    %v384 = vunpack.c.h.b16 %v126
    %v385 = vunpack.c.l.b16 %v127
    %v386 = vunpack.c.h.b16 %v127
    %v387 = vunpack.c.l.b16 %v128
    %v388 = vunpack.c.h.b16 %v128
    %v389 = vunpack.c.l.b16 %v129
    %v390 = vunpack.c.h.b16 %v129
    %v391 = vunpack.c.l.b16 %v130
    %v392 = vunpack.c.h.b16 %v130
    %v393 = vunpack.c.l.b16 %v131
    %v394 = vunpack.c.h.b16 %v131
    %v395 = vunpack.c.l.b16 %v132
    %v396 = vunpack.c.h.b16 %v132
    %v397 = vunpack.c.l.b16 %v133
    %v398 = vunpack.c.h.b16 %v133
    %v399 = vunpack.c.l.b16 %v134
    %v400 = vunpack.c.h.b16 %v134
    %v401 = vunpack.c.l.b16 %v135
    %v402 = vunpack.c.h.b16 %v135
    %v403 = vunpack.c.l.b16 %v136
    %v404 = vunpack.c.h.b16 %v136
    %v405 = vunpack.c.l.b16 %v137
    %v406 = vunpack.c.h.b16 %v137
    %v407 = vunpack.c.l.b16 %v138
    %v408 = vunpack.c.h.b16 %v138
    %v409 = vunpack.c.l.b16 %v139
    %v410 = vunpack.c.h.b16 %v139
    %v411 = vunpack.c.l.b16 %v140
    %v412 = vunpack.c.h.b16 %v140
    %v413 = vpack.c.b16 %v289, %v285
    %v414 = vpack.c.b16 %v290, %v286
    %v415 = vpack.c.b16 %v291, %v287
    %v416 = vpack.c.b16 %v292, %v288
    %v417 = vpack.c.b16 %v297, %v293
    %v418 = vpack.c.b16 %v298, %v294
    %v419 = vpack.c.b16 %v299, %v295
    %v420 = vpack.c.b16 %v300, %v296
    %v421 = vpack.c.b16 %v305, %v301
    %v422 = vpack.c.b16 %v306, %v302
    %v423 = vpack.c.b16 %v307, %v303
    %v424 = vpack.c.b16 %v308, %v304
    %v425 = vpack.c.b16 %v313, %v309
    %v426 = vpack.c.b16 %v314, %v310
    %v427 = vpack.c.b16 %v315, %v311
    %v428 = vpack.c.b16 %v316, %v312
    %v429 = vpack.c.b16 %v321, %v317
    %v430 = vpack.c.b16 %v322, %v318
    %v431 = vpack.c.b16 %v323, %v319
    %v432 = vpack.c.b16 %v324, %v320
    %v433 = vpack.c.b16 %v329, %v325
    %v434 = vpack.c.b16 %v330, %v326
    %v435 = vpack.c.b16 %v331, %v327
    %v436 = vpack.c.b16 %v332, %v328
    %v437 = vpack.c.b16 %v337, %v333
    %v438 = vpack.c.b16 %v338, %v334
    %v439 = vpack.c.b16 %v339, %v335
    %v440 = vpack.c.b16 %v340, %v336
    %v441 = vpack.c.b16 %v345, %v341
    %v442 = vpack.c.b16 %v346, %v342
    %v443 = vpack.c.b16 %v347, %v343
    %v444 = vpack.c.b16 %v348, %v344
    %v445 = vpack.c.b16 %v353, %v349
    %v446 = vpack.c.b16 %v354, %v350
    %v447 = vpack.c.b16 %v355, %v351
    %v448 = vpack.c.b16 %v356, %v352
    %v449 = vpack.c.b16 %v361, %v357
    %v450 = vpack.c.b16 %v362, %v358
    %v451 = vpack.c.b16 %v363, %v359
    %v452 = vpack.c.b16 %v364, %v360
    %v453 = vpack.c.b16 %v369, %v365
    %v454 = vpack.c.b16 %v370, %v366
    %v455 = vpack.c.b16 %v371, %v367
    %v456 = vpack.c.b16 %v372, %v368
    %v457 = vpack.c.b16 %v377, %v373
    %v458 = vpack.c.b16 %v378, %v374
    %v459 = vpack.c.b16 %v379, %v375
    %v460 = vpack.c.b16 %v380, %v376
    %v461 = vpack.c.b16 %v385, %v381
    %v462 = vpack.c.b16 %v386, %v382
    %v463 = vpack.c.b16 %v387, %v383
    %v464 = vpack.c.b16 %v388, %v384
    %v465 = vpack.c.b16 %v393, %v389
    %v466 = vpack.c.b16 %v394, %v390
    %v467 = vpack.c.b16 %v395, %v391
    %v468 = vpack.c.b16 %v396, %v392
    %v469 = vpack.c.b16 %v401, %v397
    %v470 = vpack.c.b16 %v402, %v398
    %v471 = vpack.c.b16 %v403, %v399
    %v472 = vpack.c.b16 %v404, %v400
    %v473 = vpack.c.b16 %v409, %v405
    %v474 = vpack.c.b16 %v410, %v406
    %v475 = vpack.c.b16 %v411, %v407
    %v476 = vpack.c.b16 %v412, %v408
    %541 = vmatprep.subr.bf16.mxu0 %v442
    %542 = vmatpush1.bf16.msra.mxu0 %v441
    %543 = vmatprep.subr.bf16.mxu0 %v438
    %544 = vmatpush1.bf16.msra.mxu0 %v437
    %545 = vmatprep.subr.bf16.mxu0 %v434
    %546 = vmatpush1.bf16.msra.mxu0 %v433
    %547 = vmatprep.subr.bf16.mxu0 %v430
    %548 = vmatpush1.bf16.msra.mxu0 %v429
    %549 = vmatprep.subr.bf16.mxu0 %v426
    %550 = vmatpush1.bf16.msra.mxu0 %v425
    %551 = vmatprep.subr.bf16.mxu0 %v422
    %552 = vmatpush1.bf16.msra.mxu0 %v421
    %553 = vmatprep.subr.bf16.mxu0 %v418
    %554 = vmatpush1.bf16.msra.mxu0 %v417
    %555 = vmatprep.subr.bf16.mxu0 %v414
    %556 = vmatpush1.bf16.msra.mxu0 %v413
    %557 = vmatprep.subr.bf16.mxu0 %v474
    %558 = vmatpush2.bf16.msra.mxu0 %v473
    %559 = vmatprep.subr.bf16.mxu0 %v470
    %560 = vmatpush2.bf16.msra.mxu0 %v469
    %561 = vmatprep.subr.bf16.mxu0 %v466
    %562 = vmatpush2.bf16.msra.mxu0 %v465
    %563 = vmatprep.subr.bf16.mxu0 %v462
    %564 = vmatpush2.bf16.msra.mxu0 %v461
    %565 = vmatprep.subr.bf16.mxu0 %v458
    %566 = vmatpush2.bf16.msra.mxu0 %v457
    %567 = vmatprep.subr.bf16.mxu0 %v454
    %568 = vmatpush2.bf16.msra.mxu0 %v453
    %569 = vmatprep.subr.bf16.mxu0 %v450
    %570 = vmatpush2.bf16.msra.mxu0 %v449
    %571 = vmatprep.subr.bf16.mxu0 %v446
    %572 = vmatpush2.bf16.msra.mxu0 %v445
    %573 = vmatprep.mubr.bf16.mxu0 %v190
    %574 = vmatmul.mubr.bf16.gmra.mxu0 %v189
    %v575 = vpop.f32.mrf.mxu0
    %v576 = vadd.f32 0.0, %v575
    %v577 = vpop.f32.mrf.mxu0
    %v578 = vadd.f32 0.0, %v577
    %v579 = vpop.f32.mrf.mxu0
    %v580 = vadd.f32 0.0, %v579
    %v581 = vpop.f32.mrf.mxu0
    %v582 = vadd.f32 0.0, %v581
    %583 = vmatprep.mubr.bf16.mxu0 %v192
    %584 = vmatmul.mubr.bf16.gmra.mxu0 %v191
    %v585 = vpop.f32.mrf.mxu0
    %v586 = vadd.f32 0.0, %v585
    %v587 = vpop.f32.mrf.mxu0
    %v588 = vadd.f32 0.0, %v587
    %v589 = vpop.f32.mrf.mxu0
    %v590 = vadd.f32 0.0, %v589
    %v591 = vpop.f32.mrf.mxu0
    %v592 = vadd.f32 0.0, %v591
    %593 = vmatprep.mubr.bf16.mxu0 %v194
    %594 = vmatmul.mubr.bf16.gmra.mxu0 %v193
    %v595 = vpop.f32.mrf.mxu0
    %v596 = vadd.f32 0.0, %v595
    %v597 = vpop.f32.mrf.mxu0
    %v598 = vadd.f32 0.0, %v597
    %v599 = vpop.f32.mrf.mxu0
    %v600 = vadd.f32 0.0, %v599
    %v601 = vpop.f32.mrf.mxu0
    %v602 = vadd.f32 0.0, %v601
    %603 = vmatprep.mubr.bf16.mxu0 %v196
    %604 = vmatmul.mubr.bf16.gmra.mxu0 %v195
    %v605 = vpop.f32.mrf.mxu0
    %v606 = vadd.f32 0.0, %v605
    %v607 = vpop.f32.mrf.mxu0
    %v608 = vadd.f32 0.0, %v607
    %v609 = vpop.f32.mrf.mxu0
    %v610 = vadd.f32 0.0, %v609
    %v611 = vpop.f32.mrf.mxu0
    %v612 = vadd.f32 0.0, %v611
    %613 = vmatprep.mubr.bf16.mxu0 %v198
    %614 = vmatmul.mubr.bf16.gmra.mxu0 %v197
    %v615 = vpop.f32.mrf.mxu0
    %v616 = vadd.f32 0.0, %v615
    %v617 = vpop.f32.mrf.mxu0
    %v618 = vadd.f32 0.0, %v617
    %v619 = vpop.f32.mrf.mxu0
    %v620 = vadd.f32 0.0, %v619
    %v621 = vpop.f32.mrf.mxu0
    %v622 = vadd.f32 0.0, %v621
    %623 = vmatprep.mubr.bf16.mxu0 %v200
    %624 = vmatmul.mubr.bf16.gmra.mxu0 %v199
    %v625 = vpop.f32.mrf.mxu0
    %v626 = vadd.f32 0.0, %v625
    %v627 = vpop.f32.mrf.mxu0
    %v628 = vadd.f32 0.0, %v627
    %v629 = vpop.f32.mrf.mxu0
    %v630 = vadd.f32 0.0, %v629
    %v631 = vpop.f32.mrf.mxu0
    %v632 = vadd.f32 0.0, %v631
    %633 = vmatprep.mubr.bf16.mxu0 %v202
    %634 = vmatmul.mubr.bf16.gmra.mxu0 %v201
    %v635 = vpop.f32.mrf.mxu0
    %v636 = vadd.f32 0.0, %v635
    %v637 = vpop.f32.mrf.mxu0
    %v638 = vadd.f32 0.0, %v637
    %v639 = vpop.f32.mrf.mxu0
    %v640 = vadd.f32 0.0, %v639
    %v641 = vpop.f32.mrf.mxu0
    %v642 = vadd.f32 0.0, %v641
    %643 = vmatprep.mubr.bf16.mxu0 %v204
    %644 = vmatmul.mubr.bf16.gmra.mxu0 %v203
    %v645 = vpop.f32.mrf.mxu0
    %v646 = vadd.f32 0.0, %v645
    %v647 = vpop.f32.mrf.mxu0
    %v648 = vadd.f32 0.0, %v647
    %v649 = vpop.f32.mrf.mxu0
    %v650 = vadd.f32 0.0, %v649
    %v651 = vpop.f32.mrf.mxu0
    %v652 = vadd.f32 0.0, %v651
    %653 = vdwg.mxu0
    %654 = vmatprep.subr.bf16.mxu0 %v444
    %655 = vmatpush1.bf16.msra.mxu0 %v443
    %656 = vmatprep.subr.bf16.mxu0 %v440
    %657 = vmatpush1.bf16.msra.mxu0 %v439
    %658 = vmatprep.subr.bf16.mxu0 %v436
    %659 = vmatpush1.bf16.msra.mxu0 %v435
    %660 = vmatprep.subr.bf16.mxu0 %v432
    %661 = vmatpush1.bf16.msra.mxu0 %v431
    %662 = vmatprep.subr.bf16.mxu0 %v428
    %663 = vmatpush1.bf16.msra.mxu0 %v427
    %664 = vmatprep.subr.bf16.mxu0 %v424
    %665 = vmatpush1.bf16.msra.mxu0 %v423
    %666 = vmatprep.subr.bf16.mxu0 %v420
    %667 = vmatpush1.bf16.msra.mxu0 %v419
    %668 = vmatprep.subr.bf16.mxu0 %v416
    %669 = vmatpush1.bf16.msra.mxu0 %v415
    %670 = vmatprep.subr.bf16.mxu0 %v476
    %671 = vmatpush2.bf16.msra.mxu0 %v475
    %672 = vmatprep.subr.bf16.mxu0 %v472
    %673 = vmatpush2.bf16.msra.mxu0 %v471
    %674 = vmatprep.subr.bf16.mxu0 %v468
    %675 = vmatpush2.bf16.msra.mxu0 %v467
    %676 = vmatprep.subr.bf16.mxu0 %v464
    %677 = vmatpush2.bf16.msra.mxu0 %v463
    %678 = vmatprep.subr.bf16.mxu0 %v460
    %679 = vmatpush2.bf16.msra.mxu0 %v459
    %680 = vmatprep.subr.bf16.mxu0 %v456
    %681 = vmatpush2.bf16.msra.mxu0 %v455
    %682 = vmatprep.subr.bf16.mxu0 %v452
    %683 = vmatpush2.bf16.msra.mxu0 %v451
    %684 = vmatprep.subr.bf16.mxu0 %v448
    %685 = vmatpush2.bf16.msra.mxu0 %v447
    %686 = vmatprep.mubr.bf16.mxu0 %v190
    %687 = vmatmul.mubr.bf16.gmra.mxu0 %v189
    %v688 = vpop.f32.mrf.mxu0
    %v689 = vadd.f32 0.0, %v688
    %v690 = vpop.f32.mrf.mxu0
    %v691 = vadd.f32 0.0, %v690
    %v692 = vpop.f32.mrf.mxu0
    %v693 = vadd.f32 0.0, %v692
    %v694 = vpop.f32.mrf.mxu0
    %v695 = vadd.f32 0.0, %v694
    %696 = vmatprep.mubr.bf16.mxu0 %v192
    %697 = vmatmul.mubr.bf16.gmra.mxu0 %v191
    %v698 = vpop.f32.mrf.mxu0
    %v699 = vadd.f32 0.0, %v698
    %v700 = vpop.f32.mrf.mxu0
    %v701 = vadd.f32 0.0, %v700
    %v702 = vpop.f32.mrf.mxu0
    %v703 = vadd.f32 0.0, %v702
    %v704 = vpop.f32.mrf.mxu0
    %v705 = vadd.f32 0.0, %v704
    %706 = vmatprep.mubr.bf16.mxu0 %v194
    %707 = vmatmul.mubr.bf16.gmra.mxu0 %v193
    %v708 = vpop.f32.mrf.mxu0
    %v709 = vadd.f32 0.0, %v708
    %v710 = vpop.f32.mrf.mxu0
    %v711 = vadd.f32 0.0, %v710
    %v712 = vpop.f32.mrf.mxu0
    %v713 = vadd.f32 0.0, %v712
    %v714 = vpop.f32.mrf.mxu0
    %v715 = vadd.f32 0.0, %v714
    %716 = vmatprep.mubr.bf16.mxu0 %v196
    %717 = vmatmul.mubr.bf16.gmra.mxu0 %v195
    %v718 = vpop.f32.mrf.mxu0
    %v719 = vadd.f32 0.0, %v718
    %v720 = vpop.f32.mrf.mxu0
    %v721 = vadd.f32 0.0, %v720
    %v722 = vpop.f32.mrf.mxu0
    %v723 = vadd.f32 0.0, %v722
    %v724 = vpop.f32.mrf.mxu0
    %v725 = vadd.f32 0.0, %v724
    %726 = vmatprep.mubr.bf16.mxu0 %v198
    %727 = vmatmul.mubr.bf16.gmra.mxu0 %v197
    %v728 = vpop.f32.mrf.mxu0
    %v729 = vadd.f32 0.0, %v728
    %v730 = vpop.f32.mrf.mxu0
    %v731 = vadd.f32 0.0, %v730
    %v732 = vpop.f32.mrf.mxu0
    %v733 = vadd.f32 0.0, %v732
    %v734 = vpop.f32.mrf.mxu0
    %v735 = vadd.f32 0.0, %v734
    %736 = vmatprep.mubr.bf16.mxu0 %v200
    %737 = vmatmul.mubr.bf16.gmra.mxu0 %v199
    %v738 = vpop.f32.mrf.mxu0
    %v739 = vadd.f32 0.0, %v738
    %v740 = vpop.f32.mrf.mxu0
    %v741 = vadd.f32 0.0, %v740
    %v742 = vpop.f32.mrf.mxu0
    %v743 = vadd.f32 0.0, %v742
    %v744 = vpop.f32.mrf.mxu0
    %v745 = vadd.f32 0.0, %v744
    %746 = vmatprep.mubr.bf16.mxu0 %v202
    %747 = vmatmul.mubr.bf16.gmra.mxu0 %v201
    %v748 = vpop.f32.mrf.mxu0
    %v749 = vadd.f32 0.0, %v748
    %v750 = vpop.f32.mrf.mxu0
    %v751 = vadd.f32 0.0, %v750
    %v752 = vpop.f32.mrf.mxu0
    %v753 = vadd.f32 0.0, %v752
    %v754 = vpop.f32.mrf.mxu0
    %v755 = vadd.f32 0.0, %v754
    %756 = vmatprep.mubr.bf16.mxu0 %v204
    %757 = vmatmul.mubr.bf16.gmra.mxu0 %v203
    %v758 = vpop.f32.mrf.mxu0
    %v759 = vadd.f32 0.0, %v758
    %v760 = vpop.f32.mrf.mxu0
    %v761 = vadd.f32 0.0, %v760
    %v762 = vpop.f32.mrf.mxu0
    %v763 = vadd.f32 0.0, %v762
    %v764 = vpop.f32.mrf.mxu0
    %v765 = vadd.f32 0.0, %v764
    %766 = vdwg.mxu0
    %v767 = vadd.f32 %v576, %v580
    %v768 = vadd.f32 %v767, %v586
    %v769 = vadd.f32 %v768, %v590
    %v770 = vadd.f32 %v769, %v596
    %v771 = vadd.f32 %v770, %v600
    %v772 = vadd.f32 %v771, %v606
    %v773 = vadd.f32 %v772, %v610
    %v774 = vadd.f32 %v773, %v616
    %v775 = vadd.f32 %v774, %v620
    %v776 = vadd.f32 %v775, %v626
    %v777 = vadd.f32 %v776, %v630
    %v778 = vadd.f32 %v777, %v636
    %v779 = vadd.f32 %v778, %v640
    %v780 = vadd.f32 %v779, %v646
    %v781 = vadd.f32 %v780, %v650
    %v782 = vrot.slane %v781, 4
    %v783 = vadd.f32 %v781, %v782
    %v784 = vrot.slane %v783, 2
    %v785 = vadd.f32 %v783, %v784
    %v786 = vrot.slane %v785, 1
    %v787 = vadd.f32 %v785, %v786
    %v788 = vadd.f32 %v578, %v582
    %v789 = vadd.f32 %v788, %v588
    %v790 = vadd.f32 %v789, %v592
    %v791 = vadd.f32 %v790, %v598
    %v792 = vadd.f32 %v791, %v602
    %v793 = vadd.f32 %v792, %v608
    %v794 = vadd.f32 %v793, %v612
    %v795 = vadd.f32 %v794, %v618
    %v796 = vadd.f32 %v795, %v622
    %v797 = vadd.f32 %v796, %v628
    %v798 = vadd.f32 %v797, %v632
    %v799 = vadd.f32 %v798, %v638
    %v800 = vadd.f32 %v799, %v642
    %v801 = vadd.f32 %v800, %v648
    %v802 = vadd.f32 %v801, %v652
    %v803 = vrot.slane %v802, 4
    %v804 = vadd.f32 %v802, %v803
    %v805 = vrot.slane %v804, 2
    %v806 = vadd.f32 %v804, %v805
    %v807 = vrot.slane %v806, 1
    %v808 = vadd.f32 %v806, %v807
    %v809 = vadd.f32 %v689, %v693
    %v810 = vadd.f32 %v809, %v699
    %v811 = vadd.f32 %v810, %v703
    %v812 = vadd.f32 %v811, %v709
    %v813 = vadd.f32 %v812, %v713
    %v814 = vadd.f32 %v813, %v719
    %v815 = vadd.f32 %v814, %v723
    %v816 = vadd.f32 %v815, %v729
    %v817 = vadd.f32 %v816, %v733
    %v818 = vadd.f32 %v817, %v739
    %v819 = vadd.f32 %v818, %v743
    %v820 = vadd.f32 %v819, %v749
    %v821 = vadd.f32 %v820, %v753
    %v822 = vadd.f32 %v821, %v759
    %v823 = vadd.f32 %v822, %v763
    %v824 = vrot.slane %v823, 4
    %v825 = vadd.f32 %v823, %v824
    %v826 = vrot.slane %v825, 2
    %v827 = vadd.f32 %v825, %v826
    %v828 = vrot.slane %v827, 1
    %v829 = vadd.f32 %v827, %v828
    %v830 = vadd.f32 %v691, %v695
    %v831 = vadd.f32 %v830, %v701
    %v832 = vadd.f32 %v831, %v705
    %v833 = vadd.f32 %v832, %v711
    %v834 = vadd.f32 %v833, %v715
    %v835 = vadd.f32 %v834, %v721
    %v836 = vadd.f32 %v835, %v725
    %v837 = vadd.f32 %v836, %v731
    %v838 = vadd.f32 %v837, %v735
    %v839 = vadd.f32 %v838, %v741
    %v840 = vadd.f32 %v839, %v745
    %v841 = vadd.f32 %v840, %v751
    %v842 = vadd.f32 %v841, %v755
    %v843 = vadd.f32 %v842, %v761
    %v844 = vadd.f32 %v843, %v765
    %v845 = vrot.slane %v844, 4
    %v846 = vadd.f32 %v844, %v845
    %v847 = vrot.slane %v846, 2
    %v848 = vadd.f32 %v846, %v847
    %v849 = vrot.slane %v848, 1
    %v850 = vadd.f32 %v848, %v849
    %v851 = vmul.f32 %v576, %v576
    %v852 = vmul.f32 %v578, %v578
    %v853 = vmul.f32 %v689, %v689
    %v854 = vmul.f32 %v691, %v691
    %v855 = vmul.f32 %v580, %v580
    %v856 = vmul.f32 %v582, %v582
    %v857 = vmul.f32 %v693, %v693
    %v858 = vmul.f32 %v695, %v695
    %v859 = vmul.f32 %v586, %v586
    %v860 = vmul.f32 %v588, %v588
    %v861 = vmul.f32 %v699, %v699
    %v862 = vmul.f32 %v701, %v701
    %v863 = vmul.f32 %v590, %v590
    %v864 = vmul.f32 %v592, %v592
    %v865 = vmul.f32 %v703, %v703
    %v866 = vmul.f32 %v705, %v705
    %v867 = vmul.f32 %v596, %v596
    %v868 = vmul.f32 %v598, %v598
    %v869 = vmul.f32 %v709, %v709
    %v870 = vmul.f32 %v711, %v711
    %v871 = vmul.f32 %v600, %v600
    %v872 = vmul.f32 %v602, %v602
    %v873 = vmul.f32 %v713, %v713
    %v874 = vmul.f32 %v715, %v715
    %v875 = vmul.f32 %v606, %v606
    %v876 = vmul.f32 %v608, %v608
    %v877 = vmul.f32 %v719, %v719
    %v878 = vmul.f32 %v721, %v721
    %v879 = vmul.f32 %v610, %v610
    %v880 = vmul.f32 %v612, %v612
    %v881 = vmul.f32 %v723, %v723
    %v882 = vmul.f32 %v725, %v725
    %v883 = vmul.f32 %v616, %v616
    %v884 = vmul.f32 %v618, %v618
    %v885 = vmul.f32 %v729, %v729
    %v886 = vmul.f32 %v731, %v731
    %v887 = vmul.f32 %v620, %v620
    %v888 = vmul.f32 %v622, %v622
    %v889 = vmul.f32 %v733, %v733
    %v890 = vmul.f32 %v735, %v735
    %v891 = vmul.f32 %v626, %v626
    %v892 = vmul.f32 %v628, %v628
    %v893 = vmul.f32 %v739, %v739
    %v894 = vmul.f32 %v741, %v741
    %v895 = vmul.f32 %v630, %v630
    %v896 = vmul.f32 %v632, %v632
    %v897 = vmul.f32 %v743, %v743
    %v898 = vmul.f32 %v745, %v745
    %v899 = vmul.f32 %v636, %v636
    %v900 = vmul.f32 %v638, %v638
    %v901 = vmul.f32 %v749, %v749
    %v902 = vmul.f32 %v751, %v751
    %v903 = vmul.f32 %v640, %v640
    %v904 = vmul.f32 %v642, %v642
    %v905 = vmul.f32 %v753, %v753
    %v906 = vmul.f32 %v755, %v755
    %v907 = vmul.f32 %v646, %v646
    %v908 = vmul.f32 %v648, %v648
    %v909 = vmul.f32 %v759, %v759
    %v910 = vmul.f32 %v761, %v761
    %v911 = vmul.f32 %v650, %v650
    %v912 = vmul.f32 %v652, %v652
    %v913 = vmul.f32 %v763, %v763
    %v914 = vmul.f32 %v765, %v765
    %v915 = vadd.f32 %v851, %v855
    %v916 = vadd.f32 %v915, %v859
    %v917 = vadd.f32 %v916, %v863
    %v918 = vadd.f32 %v917, %v867
    %v919 = vadd.f32 %v918, %v871
    %v920 = vadd.f32 %v919, %v875
    %v921 = vadd.f32 %v920, %v879
    %v922 = vadd.f32 %v921, %v883
    %v923 = vadd.f32 %v922, %v887
    %v924 = vadd.f32 %v923, %v891
    %v925 = vadd.f32 %v924, %v895
    %v926 = vadd.f32 %v925, %v899
    %v927 = vadd.f32 %v926, %v903
    %v928 = vadd.f32 %v927, %v907
    %v929 = vadd.f32 %v928, %v911
    %v930 = vrot.slane %v929, 4
    %v931 = vadd.f32 %v929, %v930
    %v932 = vrot.slane %v931, 2
    %v933 = vadd.f32 %v931, %v932
    %v934 = vrot.slane %v933, 1
    %v935 = vadd.f32 %v933, %v934
    %v936 = vadd.f32 %v852, %v856
    %v937 = vadd.f32 %v936, %v860
    %v938 = vadd.f32 %v937, %v864
    %v939 = vadd.f32 %v938, %v868
    %v940 = vadd.f32 %v939, %v872
    %v941 = vadd.f32 %v940, %v876
    %v942 = vadd.f32 %v941, %v880
    %v943 = vadd.f32 %v942, %v884
    %v944 = vadd.f32 %v943, %v888
    %v945 = vadd.f32 %v944, %v892
    %v946 = vadd.f32 %v945, %v896
    %v947 = vadd.f32 %v946, %v900
    %v948 = vadd.f32 %v947, %v904
    %v949 = vadd.f32 %v948, %v908
    %v950 = vadd.f32 %v949, %v912
    %v951 = vrot.slane %v950, 4
    %v952 = vadd.f32 %v950, %v951
    %v953 = vrot.slane %v952, 2
    %v954 = vadd.f32 %v952, %v953
    %v955 = vrot.slane %v954, 1
    %v956 = vadd.f32 %v954, %v955
    %v957 = vadd.f32 %v853, %v857
    %v958 = vadd.f32 %v957, %v861
    %v959 = vadd.f32 %v958, %v865
    %v960 = vadd.f32 %v959, %v869
    %v961 = vadd.f32 %v960, %v873
    %v962 = vadd.f32 %v961, %v877
    %v963 = vadd.f32 %v962, %v881
    %v964 = vadd.f32 %v963, %v885
    %v965 = vadd.f32 %v964, %v889
    %v966 = vadd.f32 %v965, %v893
    %v967 = vadd.f32 %v966, %v897
    %v968 = vadd.f32 %v967, %v901
    %v969 = vadd.f32 %v968, %v905
    %v970 = vadd.f32 %v969, %v909
    %v971 = vadd.f32 %v970, %v913
    %v972 = vrot.slane %v971, 4
    %v973 = vadd.f32 %v971, %v972
    %v974 = vrot.slane %v973, 2
    %v975 = vadd.f32 %v973, %v974
    %v976 = vrot.slane %v975, 1
    %v977 = vadd.f32 %v975, %v976
    %v978 = vadd.f32 %v854, %v858
    %v979 = vadd.f32 %v978, %v862
    %v980 = vadd.f32 %v979, %v866
    %v981 = vadd.f32 %v980, %v870
    %v982 = vadd.f32 %v981, %v874
    %v983 = vadd.f32 %v982, %v878
    %v984 = vadd.f32 %v983, %v882
    %v985 = vadd.f32 %v984, %v886
    %v986 = vadd.f32 %v985, %v890
    %v987 = vadd.f32 %v986, %v894
    %v988 = vadd.f32 %v987, %v898
    %v989 = vadd.f32 %v988, %v902
    %v990 = vadd.f32 %v989, %v906
    %v991 = vadd.f32 %v990, %v910
    %v992 = vadd.f32 %v991, %v914
    %v993 = vrot.slane %v992, 4
    %v994 = vadd.f32 %v992, %v993
    %v995 = vrot.slane %v994, 2
    %v996 = vadd.f32 %v994, %v995
    %v997 = vrot.slane %v996, 1
    %v998 = vadd.f32 %v996, %v997
    %v999 = vmul.f32 %v787, 0.0078125
    %v1000 = vmul.f32 %v808, 0.0078125
    %v1001 = vmul.f32 %v829, 0.0078125
    %v1002 = vmul.f32 %v850, 0.0078125
    %v1003 = vmul.f32 %v935, 0.0078125
    %v1004 = vmul.f32 %v956, 0.0078125
    %v1005 = vmul.f32 %v977, 0.0078125
    %v1006 = vmul.f32 %v998, 0.0078125
    %v1007 = vmul.f32 %v999, %v999
    %v1008 = vmul.f32 %v1000, %v1000
    %v1009 = vmul.f32 %v1001, %v1001
    %v1010 = vmul.f32 %v1002, %v1002
    %v1011 = vsub.f32 %v1003, %v1007
    %v1012 = vsub.f32 %v1004, %v1008
    %v1013 = vsub.f32 %v1005, %v1009
    %v1014 = vsub.f32 %v1006, %v1010
    %v1015 = vmax.f32 %v1011, 0.0
    %v1016 = vmax.f32 %v1012, 0.0
    %v1017 = vmax.f32 %v1013, 0.0
    %v1018 = vmax.f32 %v1014, 0.0
    %v1019 = vld [vmem:[%s3] sm:$0xf]
    %v1020 = vadd.f32 %v1015, 1e-05
    %v1021 = vadd.f32 %v1016, 1e-05
    %v1022 = vadd.f32 %v1017, 1e-05
    %v1023 = vadd.f32 %v1018, 1e-05
    %v1024 = vrsqrt.pop %v1020
    %v1025 = vrsqrt.pop %v1021
    %v1026 = vrsqrt.pop %v1022
    %v1027 = vrsqrt.pop %v1023
    %v1032 = vcombine.low %v1024, %v1025
    %v1033 = vcombine.low %v1026, %v1027
    %v1035 = vunpack.c.l.s4 1966171168
    %v1036 = vunpack.c.0.s8 %v1035
    %v1037 = vlaneseq
    %v1038 = vshrl.u32 %v1037, 7
    %v1039 = vsub.s32 %v1036, %v1038
    %v1040 = vrot.slane %v1032, %v1039
    %v1042 = vunpack.c.l.s4 1966171168
    %v1043 = vunpack.c.0.s8 %v1042
    %v1044 = vlaneseq
    %v1045 = vshrl.u32 %v1044, 7
    %v1046 = vsub.s32 %v1043, %v1045
    %v1047 = vrot.slane %v1033, %v1046
    %v1048 = vcombine.low %v1040, %v1047
    %v1050 = vunpack.c.l.s4 1966171168
    %v1051 = vunpack.c.0.s8 %v1050
    %v1052 = vlaneseq
    %v1053 = vshrl.u32 %v1052, 7
    %v1054 = vsub.s32 %v1051, %v1053
    %v1055 = vrot.slane %v1048, %v1054
    %v1057 = vmul.f32 %v1019, %v1055
    %v1058 = vld [vmem:[%s4] sm:$0xf]
    %v1060 = vlaneseq
    %v1061 = vshrl.u32 %v1060, 7
    %v1062 = vsub.s32 0, %v1061
    %v1063 = vrot.slane %v1057, %v1062
    %v1064 = vlaneseq
    %v1065 = vshrl.u32 %v1064, 7
    %v1066 = vsub.s32 1, %v1065
    %v1067 = vrot.slane %v1057, %v1066
    %v1068 = vlaneseq
    %v1069 = vshrl.u32 %v1068, 7
    %v1070 = vsub.s32 2, %v1069
    %v1071 = vrot.slane %v1057, %v1070
    %v1072 = vlaneseq
    %v1073 = vshrl.u32 %v1072, 7
    %v1074 = vsub.s32 3, %v1073
    %v1075 = vrot.slane %v1057, %v1074
    %v1080 = vmul.f32 %v999, %v1063
    %v1081 = vmul.f32 %v1000, %v1067
    %v1082 = vmul.f32 %v1001, %v1071
    %v1083 = vmul.f32 %v1002, %v1075
    %v1088 = vcombine.low %v1080, %v1081
    %v1089 = vcombine.low %v1082, %v1083
    %v1091 = vunpack.c.l.s4 1966171168
    %v1092 = vunpack.c.0.s8 %v1091
    %v1093 = vlaneseq
    %v1094 = vshrl.u32 %v1093, 7
    %v1095 = vsub.s32 %v1092, %v1094
    %v1096 = vrot.slane %v1088, %v1095
    %v1098 = vunpack.c.l.s4 1966171168
    %v1099 = vunpack.c.0.s8 %v1098
    %v1100 = vlaneseq
    %v1101 = vshrl.u32 %v1100, 7
    %v1102 = vsub.s32 %v1099, %v1101
    %v1103 = vrot.slane %v1089, %v1102
    %v1104 = vcombine.low %v1096, %v1103
    %v1106 = vunpack.c.l.s4 1966171168
    %v1107 = vunpack.c.0.s8 %v1106
    %v1108 = vlaneseq
    %v1109 = vshrl.u32 %v1108, 7
    %v1110 = vsub.s32 %v1107, %v1109
    %v1111 = vrot.slane %v1104, %v1110
    %v1113 = vsub.f32 %v1058, %v1111
    %v1114 = vmul.f32 %v576, %v1063
    %v1115 = vmul.f32 %v578, %v1067
    %v1116 = vmul.f32 %v689, %v1071
    %v1117 = vmul.f32 %v691, %v1075
    %v1118 = vmul.f32 %v580, %v1063
    %v1119 = vmul.f32 %v582, %v1067
    %v1120 = vmul.f32 %v693, %v1071
    %v1121 = vmul.f32 %v695, %v1075
    %v1122 = vmul.f32 %v586, %v1063
    %v1123 = vmul.f32 %v588, %v1067
    %v1124 = vmul.f32 %v699, %v1071
    %v1125 = vmul.f32 %v701, %v1075
    %v1126 = vmul.f32 %v590, %v1063
    %v1127 = vmul.f32 %v592, %v1067
    %v1128 = vmul.f32 %v703, %v1071
    %v1129 = vmul.f32 %v705, %v1075
    %v1130 = vmul.f32 %v596, %v1063
    %v1131 = vmul.f32 %v598, %v1067
    %v1132 = vmul.f32 %v709, %v1071
    %v1133 = vmul.f32 %v711, %v1075
    %v1134 = vmul.f32 %v600, %v1063
    %v1135 = vmul.f32 %v602, %v1067
    %v1136 = vmul.f32 %v713, %v1071
    %v1137 = vmul.f32 %v715, %v1075
    %v1138 = vmul.f32 %v606, %v1063
    %v1139 = vmul.f32 %v608, %v1067
    %v1140 = vmul.f32 %v719, %v1071
    %v1141 = vmul.f32 %v721, %v1075
    %v1142 = vmul.f32 %v610, %v1063
    %v1143 = vmul.f32 %v612, %v1067
    %v1144 = vmul.f32 %v723, %v1071
    %v1145 = vmul.f32 %v725, %v1075
    %v1146 = vmul.f32 %v616, %v1063
    %v1147 = vmul.f32 %v618, %v1067
    %v1148 = vmul.f32 %v729, %v1071
    %v1149 = vmul.f32 %v731, %v1075
    %v1150 = vmul.f32 %v620, %v1063
    %v1151 = vmul.f32 %v622, %v1067
    %v1152 = vmul.f32 %v733, %v1071
    %v1153 = vmul.f32 %v735, %v1075
    %v1154 = vmul.f32 %v626, %v1063
    %v1155 = vmul.f32 %v628, %v1067
    %v1156 = vmul.f32 %v739, %v1071
    %v1157 = vmul.f32 %v741, %v1075
    %v1158 = vmul.f32 %v630, %v1063
    %v1159 = vmul.f32 %v632, %v1067
    %v1160 = vmul.f32 %v743, %v1071
    %v1161 = vmul.f32 %v745, %v1075
    %v1162 = vmul.f32 %v636, %v1063
    %v1163 = vmul.f32 %v638, %v1067
    %v1164 = vmul.f32 %v749, %v1071
    %v1165 = vmul.f32 %v751, %v1075
    %v1166 = vmul.f32 %v640, %v1063
    %v1167 = vmul.f32 %v642, %v1067
    %v1168 = vmul.f32 %v753, %v1071
    %v1169 = vmul.f32 %v755, %v1075
    %v1170 = vmul.f32 %v646, %v1063
    %v1171 = vmul.f32 %v648, %v1067
    %v1172 = vmul.f32 %v759, %v1071
    %v1173 = vmul.f32 %v761, %v1075
    %v1174 = vmul.f32 %v650, %v1063
    %v1175 = vmul.f32 %v652, %v1067
    %v1176 = vmul.f32 %v763, %v1071
    %v1177 = vmul.f32 %v765, %v1075
    %v1179 = vlaneseq
    %v1180 = vshrl.u32 %v1179, 7
    %v1181 = vsub.s32 0, %v1180
    %v1182 = vrot.slane %v1113, %v1181
    %v1183 = vlaneseq
    %v1184 = vshrl.u32 %v1183, 7
    %v1185 = vsub.s32 1, %v1184
    %v1186 = vrot.slane %v1113, %v1185
    %v1187 = vlaneseq
    %v1188 = vshrl.u32 %v1187, 7
    %v1189 = vsub.s32 2, %v1188
    %v1190 = vrot.slane %v1113, %v1189
    %v1191 = vlaneseq
    %v1192 = vshrl.u32 %v1191, 7
    %v1193 = vsub.s32 3, %v1192
    %v1194 = vrot.slane %v1113, %v1193
    %v1199 = vadd.f32 %v1114, %v1182
    %v1200 = vadd.f32 %v1115, %v1186
    %v1201 = vadd.f32 %v1116, %v1190
    %v1202 = vadd.f32 %v1117, %v1194
    %v1203 = vadd.f32 %v1118, %v1182
    %v1204 = vadd.f32 %v1119, %v1186
    %v1205 = vadd.f32 %v1120, %v1190
    %v1206 = vadd.f32 %v1121, %v1194
    %v1207 = vadd.f32 %v1122, %v1182
    %v1208 = vadd.f32 %v1123, %v1186
    %v1209 = vadd.f32 %v1124, %v1190
    %v1210 = vadd.f32 %v1125, %v1194
    %v1211 = vadd.f32 %v1126, %v1182
    %v1212 = vadd.f32 %v1127, %v1186
    %v1213 = vadd.f32 %v1128, %v1190
    %v1214 = vadd.f32 %v1129, %v1194
    %v1215 = vadd.f32 %v1130, %v1182
    %v1216 = vadd.f32 %v1131, %v1186
    %v1217 = vadd.f32 %v1132, %v1190
    %v1218 = vadd.f32 %v1133, %v1194
    %v1219 = vadd.f32 %v1134, %v1182
    %v1220 = vadd.f32 %v1135, %v1186
    %v1221 = vadd.f32 %v1136, %v1190
    %v1222 = vadd.f32 %v1137, %v1194
    %v1223 = vadd.f32 %v1138, %v1182
    %v1224 = vadd.f32 %v1139, %v1186
    %v1225 = vadd.f32 %v1140, %v1190
    %v1226 = vadd.f32 %v1141, %v1194
    %v1227 = vadd.f32 %v1142, %v1182
    %v1228 = vadd.f32 %v1143, %v1186
    %v1229 = vadd.f32 %v1144, %v1190
    %v1230 = vadd.f32 %v1145, %v1194
    %v1231 = vadd.f32 %v1146, %v1182
    %v1232 = vadd.f32 %v1147, %v1186
    %v1233 = vadd.f32 %v1148, %v1190
    %v1234 = vadd.f32 %v1149, %v1194
    %v1235 = vadd.f32 %v1150, %v1182
    %v1236 = vadd.f32 %v1151, %v1186
    %v1237 = vadd.f32 %v1152, %v1190
    %v1238 = vadd.f32 %v1153, %v1194
    %v1239 = vadd.f32 %v1154, %v1182
    %v1240 = vadd.f32 %v1155, %v1186
    %v1241 = vadd.f32 %v1156, %v1190
    %v1242 = vadd.f32 %v1157, %v1194
    %v1243 = vadd.f32 %v1158, %v1182
    %v1244 = vadd.f32 %v1159, %v1186
    %v1245 = vadd.f32 %v1160, %v1190
    %v1246 = vadd.f32 %v1161, %v1194
    %v1247 = vadd.f32 %v1162, %v1182
    %v1248 = vadd.f32 %v1163, %v1186
    %v1249 = vadd.f32 %v1164, %v1190
    %v1250 = vadd.f32 %v1165, %v1194
    %v1251 = vadd.f32 %v1166, %v1182
    %v1252 = vadd.f32 %v1167, %v1186
    %v1253 = vadd.f32 %v1168, %v1190
    %v1254 = vadd.f32 %v1169, %v1194
    %v1255 = vadd.f32 %v1170, %v1182
    %v1256 = vadd.f32 %v1171, %v1186
    %v1257 = vadd.f32 %v1172, %v1190
    %v1258 = vadd.f32 %v1173, %v1194
    %v1259 = vadd.f32 %v1174, %v1182
    %v1260 = vadd.f32 %v1175, %v1186
    %v1261 = vadd.f32 %v1176, %v1190
    %v1262 = vadd.f32 %v1177, %v1194
    %v1263 = vmax.f32 %v1199, 0.0
    %v1264 = vmax.f32 %v1200, 0.0
    %v1265 = vmax.f32 %v1201, 0.0
    %v1266 = vmax.f32 %v1202, 0.0
    %v1267 = vmax.f32 %v1203, 0.0
    %v1268 = vmax.f32 %v1204, 0.0
    %v1269 = vmax.f32 %v1205, 0.0
    %v1270 = vmax.f32 %v1206, 0.0
    %v1271 = vmax.f32 %v1207, 0.0
    %v1272 = vmax.f32 %v1208, 0.0
    %v1273 = vmax.f32 %v1209, 0.0
    %v1274 = vmax.f32 %v1210, 0.0
    %v1275 = vmax.f32 %v1211, 0.0
    %v1276 = vmax.f32 %v1212, 0.0
    %v1277 = vmax.f32 %v1213, 0.0
    %v1278 = vmax.f32 %v1214, 0.0
    %v1279 = vmax.f32 %v1215, 0.0
    %v1280 = vmax.f32 %v1216, 0.0
    %v1281 = vmax.f32 %v1217, 0.0
    %v1282 = vmax.f32 %v1218, 0.0
    %v1283 = vmax.f32 %v1219, 0.0
    %v1284 = vmax.f32 %v1220, 0.0
    %v1285 = vmax.f32 %v1221, 0.0
    %v1286 = vmax.f32 %v1222, 0.0
    %v1287 = vmax.f32 %v1223, 0.0
    %v1288 = vmax.f32 %v1224, 0.0
    %v1289 = vmax.f32 %v1225, 0.0
    %v1290 = vmax.f32 %v1226, 0.0
    %v1291 = vmax.f32 %v1227, 0.0
    %v1292 = vmax.f32 %v1228, 0.0
    %v1293 = vmax.f32 %v1229, 0.0
    %v1294 = vmax.f32 %v1230, 0.0
    %v1295 = vmax.f32 %v1231, 0.0
    %v1296 = vmax.f32 %v1232, 0.0
    %v1297 = vmax.f32 %v1233, 0.0
    %v1298 = vmax.f32 %v1234, 0.0
    %v1299 = vmax.f32 %v1235, 0.0
    %v1300 = vmax.f32 %v1236, 0.0
    %v1301 = vmax.f32 %v1237, 0.0
    %v1302 = vmax.f32 %v1238, 0.0
    %v1303 = vmax.f32 %v1239, 0.0
    %v1304 = vmax.f32 %v1240, 0.0
    %v1305 = vmax.f32 %v1241, 0.0
    %v1306 = vmax.f32 %v1242, 0.0
    %v1307 = vmax.f32 %v1243, 0.0
    %v1308 = vmax.f32 %v1244, 0.0
    %v1309 = vmax.f32 %v1245, 0.0
    %v1310 = vmax.f32 %v1246, 0.0
    %v1311 = vmax.f32 %v1247, 0.0
    %v1312 = vmax.f32 %v1248, 0.0
    %v1313 = vmax.f32 %v1249, 0.0
    %v1314 = vmax.f32 %v1250, 0.0
    %v1315 = vmax.f32 %v1251, 0.0
    %v1316 = vmax.f32 %v1252, 0.0
    %v1317 = vmax.f32 %v1253, 0.0
    %v1318 = vmax.f32 %v1254, 0.0
    %v1319 = vmax.f32 %v1255, 0.0
    %v1320 = vmax.f32 %v1256, 0.0
    %v1321 = vmax.f32 %v1257, 0.0
    %v1322 = vmax.f32 %v1258, 0.0
    %v1323 = vmax.f32 %v1259, 0.0
    %v1324 = vmax.f32 %v1260, 0.0
    %v1325 = vmax.f32 %v1261, 0.0
    %v1326 = vmax.f32 %v1262, 0.0
    %v1327 = vpack.c.bf16 %v1267, %v1263
    %v1328 = vpack.c.bf16 %v1268, %v1264
    %v1329 = vpack.c.bf16 %v1269, %v1265
    %v1330 = vpack.c.bf16 %v1270, %v1266
    %v1331 = vpack.c.bf16 %v1275, %v1271
    %v1332 = vpack.c.bf16 %v1276, %v1272
    %v1333 = vpack.c.bf16 %v1277, %v1273
    %v1334 = vpack.c.bf16 %v1278, %v1274
    %v1335 = vpack.c.bf16 %v1283, %v1279
    %v1336 = vpack.c.bf16 %v1284, %v1280
    %v1337 = vpack.c.bf16 %v1285, %v1281
    %v1338 = vpack.c.bf16 %v1286, %v1282
    %v1339 = vpack.c.bf16 %v1291, %v1287
    %v1340 = vpack.c.bf16 %v1292, %v1288
    %v1341 = vpack.c.bf16 %v1293, %v1289
    %v1342 = vpack.c.bf16 %v1294, %v1290
    %v1343 = vpack.c.bf16 %v1299, %v1295
    %v1344 = vpack.c.bf16 %v1300, %v1296
    %v1345 = vpack.c.bf16 %v1301, %v1297
    %v1346 = vpack.c.bf16 %v1302, %v1298
    %v1347 = vpack.c.bf16 %v1307, %v1303
    %v1348 = vpack.c.bf16 %v1308, %v1304
    %v1349 = vpack.c.bf16 %v1309, %v1305
    %v1350 = vpack.c.bf16 %v1310, %v1306
    %v1351 = vpack.c.bf16 %v1315, %v1311
    %v1352 = vpack.c.bf16 %v1316, %v1312
    %v1353 = vpack.c.bf16 %v1317, %v1313
    %v1354 = vpack.c.bf16 %v1318, %v1314
    %v1355 = vpack.c.bf16 %v1323, %v1319
    %v1356 = vpack.c.bf16 %v1324, %v1320
    %v1357 = vpack.c.bf16 %v1325, %v1321
    %v1358 = vpack.c.bf16 %v1326, %v1322
    %v1359 = vld [vmem:[#allocation2] sm:$0xff]
    %v1360 = vld [vmem:[#allocation2 + $0x8] sm:$0xff]
    %v1361 = vld [vmem:[#allocation2 + $0x10] sm:$0xff]
    %v1362 = vld [vmem:[#allocation2 + $0x18] sm:$0xff]
    %v1363 = vld [vmem:[#allocation2 + $0x20] sm:$0xff]
    %v1364 = vld [vmem:[#allocation2 + $0x28] sm:$0xff]
    %v1365 = vld [vmem:[#allocation2 + $0x30] sm:$0xff]
    %v1366 = vld [vmem:[#allocation2 + $0x38] sm:$0xff]
    %v1367 = vld [vmem:[#allocation2 + $0x40] sm:$0xff]
    %v1368 = vld [vmem:[#allocation2 + $0x48] sm:$0xff]
    %v1369 = vld [vmem:[#allocation2 + $0x50] sm:$0xff]
    %v1370 = vld [vmem:[#allocation2 + $0x58] sm:$0xff]
    %v1371 = vld [vmem:[#allocation2 + $0x60] sm:$0xff]
    %v1372 = vld [vmem:[#allocation2 + $0x68] sm:$0xff]
    %v1373 = vld [vmem:[#allocation2 + $0x70] sm:$0xff]
    %v1374 = vld [vmem:[#allocation2 + $0x78] sm:$0xff]
    %v1375 = vld [vmem:[#allocation2 + $0x80] sm:$0xff]
    %v1376 = vld [vmem:[#allocation2 + $0x88] sm:$0xff]
    %v1377 = vld [vmem:[#allocation2 + $0x90] sm:$0xff]
    %v1378 = vld [vmem:[#allocation2 + $0x98] sm:$0xff]
    %v1379 = vld [vmem:[#allocation2 + $0xa0] sm:$0xff]
    %v1380 = vld [vmem:[#allocation2 + $0xa8] sm:$0xff]
    %v1381 = vld [vmem:[#allocation2 + $0xb0] sm:$0xff]
    %v1382 = vld [vmem:[#allocation2 + $0xb8] sm:$0xff]
    %v1383 = vld [vmem:[#allocation2 + $0xc0] sm:$0xff]
    %v1384 = vld [vmem:[#allocation2 + $0xc8] sm:$0xff]
    %v1385 = vld [vmem:[#allocation2 + $0xd0] sm:$0xff]
    %v1386 = vld [vmem:[#allocation2 + $0xd8] sm:$0xff]
    %v1387 = vld [vmem:[#allocation2 + $0xe0] sm:$0xff]
    %v1388 = vld [vmem:[#allocation2 + $0xe8] sm:$0xff]
    %v1389 = vld [vmem:[#allocation2 + $0xf0] sm:$0xff]
    %v1390 = vld [vmem:[#allocation2 + $0xf8] sm:$0xff]
    %v1391 = vld [vmem:[#allocation2 + $0x100] sm:$0xff]
    %v1392 = vld [vmem:[#allocation2 + $0x108] sm:$0xff]
    %v1393 = vld [vmem:[#allocation2 + $0x110] sm:$0xff]
    %v1394 = vld [vmem:[#allocation2 + $0x118] sm:$0xff]
    %v1395 = vld [vmem:[#allocation2 + $0x120] sm:$0xff]
    %v1396 = vld [vmem:[#allocation2 + $0x128] sm:$0xff]
    %v1397 = vld [vmem:[#allocation2 + $0x130] sm:$0xff]
    %v1398 = vld [vmem:[#allocation2 + $0x138] sm:$0xff]
    %v1399 = vld [vmem:[#allocation2 + $0x140] sm:$0xff]
    %v1400 = vld [vmem:[#allocation2 + $0x148] sm:$0xff]
    %v1401 = vld [vmem:[#allocation2 + $0x150] sm:$0xff]
    %v1402 = vld [vmem:[#allocation2 + $0x158] sm:$0xff]
    %v1403 = vld [vmem:[#allocation2 + $0x160] sm:$0xff]
    %v1404 = vld [vmem:[#allocation2 + $0x168] sm:$0xff]
    %v1405 = vld [vmem:[#allocation2 + $0x170] sm:$0xff]
    %v1406 = vld [vmem:[#allocation2 + $0x178] sm:$0xff]
    %v1407 = vld [vmem:[#allocation2 + $0x180] sm:$0xff]
    %v1408 = vld [vmem:[#allocation2 + $0x188] sm:$0xff]
    %v1409 = vld [vmem:[#allocation2 + $0x190] sm:$0xff]
    %v1410 = vld [vmem:[#allocation2 + $0x198] sm:$0xff]
    %v1411 = vld [vmem:[#allocation2 + $0x1a0] sm:$0xff]
    %v1412 = vld [vmem:[#allocation2 + $0x1a8] sm:$0xff]
    %v1413 = vld [vmem:[#allocation2 + $0x1b0] sm:$0xff]
    %v1414 = vld [vmem:[#allocation2 + $0x1b8] sm:$0xff]
    %v1415 = vld [vmem:[#allocation2 + $0x1c0] sm:$0xff]
    %v1416 = vld [vmem:[#allocation2 + $0x1c8] sm:$0xff]
    %v1417 = vld [vmem:[#allocation2 + $0x1d0] sm:$0xff]
    %v1418 = vld [vmem:[#allocation2 + $0x1d8] sm:$0xff]
    %v1419 = vld [vmem:[#allocation2 + $0x1e0] sm:$0xff]
    %v1420 = vld [vmem:[#allocation2 + $0x1e8] sm:$0xff]
    %v1421 = vld [vmem:[#allocation2 + $0x1f0] sm:$0xff]
    %v1422 = vld [vmem:[#allocation2 + $0x1f8] sm:$0xff]
    %v1423 = vld [vmem:[#allocation2 + $0x200] sm:$0xff]
    %v1424 = vld [vmem:[#allocation2 + $0x208] sm:$0xff]
    %v1425 = vld [vmem:[#allocation2 + $0x210] sm:$0xff]
    %v1426 = vld [vmem:[#allocation2 + $0x218] sm:$0xff]
    %v1427 = vld [vmem:[#allocation2 + $0x220] sm:$0xff]
    %v1428 = vld [vmem:[#allocation2 + $0x228] sm:$0xff]
    %v1429 = vld [vmem:[#allocation2 + $0x230] sm:$0xff]
    %v1430 = vld [vmem:[#allocation2 + $0x238] sm:$0xff]
    %v1431 = vld [vmem:[#allocation2 + $0x240] sm:$0xff]
    %v1432 = vld [vmem:[#allocation2 + $0x248] sm:$0xff]
    %v1433 = vld [vmem:[#allocation2 + $0x250] sm:$0xff]
    %v1434 = vld [vmem:[#allocation2 + $0x258] sm:$0xff]
    %v1435 = vld [vmem:[#allocation2 + $0x260] sm:$0xff]
    %v1436 = vld [vmem:[#allocation2 + $0x268] sm:$0xff]
    %v1437 = vld [vmem:[#allocation2 + $0x270] sm:$0xff]
    %v1438 = vld [vmem:[#allocation2 + $0x278] sm:$0xff]
    %v1439 = vld [vmem:[#allocation2 + $0x280] sm:$0xff]
    %v1440 = vld [vmem:[#allocation2 + $0x288] sm:$0xff]
    %v1441 = vld [vmem:[#allocation2 + $0x290] sm:$0xff]
    %v1442 = vld [vmem:[#allocation2 + $0x298] sm:$0xff]
    %v1443 = vld [vmem:[#allocation2 + $0x2a0] sm:$0xff]
    %v1444 = vld [vmem:[#allocation2 + $0x2a8] sm:$0xff]
    %v1445 = vld [vmem:[#allocation2 + $0x2b0] sm:$0xff]
    %v1446 = vld [vmem:[#allocation2 + $0x2b8] sm:$0xff]
    %v1447 = vld [vmem:[#allocation2 + $0x2c0] sm:$0xff]
    %v1448 = vld [vmem:[#allocation2 + $0x2c8] sm:$0xff]
    %v1449 = vld [vmem:[#allocation2 + $0x2d0] sm:$0xff]
    %v1450 = vld [vmem:[#allocation2 + $0x2d8] sm:$0xff]
    %v1451 = vld [vmem:[#allocation2 + $0x2e0] sm:$0xff]
    %v1452 = vld [vmem:[#allocation2 + $0x2e8] sm:$0xff]
    %v1453 = vld [vmem:[#allocation2 + $0x2f0] sm:$0xff]
    %v1454 = vld [vmem:[#allocation2 + $0x2f8] sm:$0xff]
    %v1455 = vld [vmem:[#allocation2 + $0x300] sm:$0xff]
    %v1456 = vld [vmem:[#allocation2 + $0x308] sm:$0xff]
    %v1457 = vld [vmem:[#allocation2 + $0x310] sm:$0xff]
    %v1458 = vld [vmem:[#allocation2 + $0x318] sm:$0xff]
    %v1459 = vld [vmem:[#allocation2 + $0x320] sm:$0xff]
    %v1460 = vld [vmem:[#allocation2 + $0x328] sm:$0xff]
    %v1461 = vld [vmem:[#allocation2 + $0x330] sm:$0xff]
    %v1462 = vld [vmem:[#allocation2 + $0x338] sm:$0xff]
    %v1463 = vld [vmem:[#allocation2 + $0x340] sm:$0xff]
    %v1464 = vld [vmem:[#allocation2 + $0x348] sm:$0xff]
    %v1465 = vld [vmem:[#allocation2 + $0x350] sm:$0xff]
    %v1466 = vld [vmem:[#allocation2 + $0x358] sm:$0xff]
    %v1467 = vld [vmem:[#allocation2 + $0x360] sm:$0xff]
    %v1468 = vld [vmem:[#allocation2 + $0x368] sm:$0xff]
    %v1469 = vld [vmem:[#allocation2 + $0x370] sm:$0xff]
    %v1470 = vld [vmem:[#allocation2 + $0x378] sm:$0xff]
    %v1471 = vld [vmem:[#allocation2 + $0x380] sm:$0xff]
    %v1472 = vld [vmem:[#allocation2 + $0x388] sm:$0xff]
    %v1473 = vld [vmem:[#allocation2 + $0x390] sm:$0xff]
    %v1474 = vld [vmem:[#allocation2 + $0x398] sm:$0xff]
    %v1475 = vld [vmem:[#allocation2 + $0x3a0] sm:$0xff]
    %v1476 = vld [vmem:[#allocation2 + $0x3a8] sm:$0xff]
    %v1477 = vld [vmem:[#allocation2 + $0x3b0] sm:$0xff]
    %v1478 = vld [vmem:[#allocation2 + $0x3b8] sm:$0xff]
    %v1479 = vld [vmem:[#allocation2 + $0x3c0] sm:$0xff]
    %v1480 = vld [vmem:[#allocation2 + $0x3c8] sm:$0xff]
    %v1481 = vld [vmem:[#allocation2 + $0x3d0] sm:$0xff]
    %v1482 = vld [vmem:[#allocation2 + $0x3d8] sm:$0xff]
    %v1483 = vld [vmem:[#allocation2 + $0x3e0] sm:$0xff]
    %v1484 = vld [vmem:[#allocation2 + $0x3e8] sm:$0xff]
    %v1485 = vld [vmem:[#allocation2 + $0x3f0] sm:$0xff]
    %v1486 = vld [vmem:[#allocation2 + $0x3f8] sm:$0xff]
    %v1615 = vunpack.c.l.b16 %v1359
    %v1616 = vunpack.c.h.b16 %v1359
    %v1617 = vunpack.c.l.b16 %v1360
    %v1618 = vunpack.c.h.b16 %v1360
    %v1619 = vunpack.c.l.b16 %v1361
    %v1620 = vunpack.c.h.b16 %v1361
    %v1621 = vunpack.c.l.b16 %v1362
    %v1622 = vunpack.c.h.b16 %v1362
    %v1623 = vunpack.c.l.b16 %v1363
    %v1624 = vunpack.c.h.b16 %v1363
    %v1625 = vunpack.c.l.b16 %v1364
    %v1626 = vunpack.c.h.b16 %v1364
    %v1627 = vunpack.c.l.b16 %v1365
    %v1628 = vunpack.c.h.b16 %v1365
    %v1629 = vunpack.c.l.b16 %v1366
    %v1630 = vunpack.c.h.b16 %v1366
    %v1631 = vunpack.c.l.b16 %v1367
    %v1632 = vunpack.c.h.b16 %v1367
    %v1633 = vunpack.c.l.b16 %v1368
    %v1634 = vunpack.c.h.b16 %v1368
    %v1635 = vunpack.c.l.b16 %v1369
    %v1636 = vunpack.c.h.b16 %v1369
    %v1637 = vunpack.c.l.b16 %v1370
    %v1638 = vunpack.c.h.b16 %v1370
    %v1639 = vunpack.c.l.b16 %v1371
    %v1640 = vunpack.c.h.b16 %v1371
    %v1641 = vunpack.c.l.b16 %v1372
    %v1642 = vunpack.c.h.b16 %v1372
    %v1643 = vunpack.c.l.b16 %v1373
    %v1644 = vunpack.c.h.b16 %v1373
    %v1645 = vunpack.c.l.b16 %v1374
    %v1646 = vunpack.c.h.b16 %v1374
    %v1647 = vunpack.c.l.b16 %v1375
    %v1648 = vunpack.c.h.b16 %v1375
    %v1649 = vunpack.c.l.b16 %v1376
    %v1650 = vunpack.c.h.b16 %v1376
    %v1651 = vunpack.c.l.b16 %v1377
    %v1652 = vunpack.c.h.b16 %v1377
    %v1653 = vunpack.c.l.b16 %v1378
    %v1654 = vunpack.c.h.b16 %v1378
    %v1655 = vunpack.c.l.b16 %v1379
    %v1656 = vunpack.c.h.b16 %v1379
    %v1657 = vunpack.c.l.b16 %v1380
    %v1658 = vunpack.c.h.b16 %v1380
    %v1659 = vunpack.c.l.b16 %v1381
    %v1660 = vunpack.c.h.b16 %v1381
    %v1661 = vunpack.c.l.b16 %v1382
    %v1662 = vunpack.c.h.b16 %v1382
    %v1663 = vunpack.c.l.b16 %v1383
    %v1664 = vunpack.c.h.b16 %v1383
    %v1665 = vunpack.c.l.b16 %v1384
    %v1666 = vunpack.c.h.b16 %v1384
    %v1667 = vunpack.c.l.b16 %v1385
    %v1668 = vunpack.c.h.b16 %v1385
    %v1669 = vunpack.c.l.b16 %v1386
    %v1670 = vunpack.c.h.b16 %v1386
    %v1671 = vunpack.c.l.b16 %v1387
    %v1672 = vunpack.c.h.b16 %v1387
    %v1673 = vunpack.c.l.b16 %v1388
    %v1674 = vunpack.c.h.b16 %v1388
    %v1675 = vunpack.c.l.b16 %v1389
    %v1676 = vunpack.c.h.b16 %v1389
    %v1677 = vunpack.c.l.b16 %v1390
    %v1678 = vunpack.c.h.b16 %v1390
    %v1679 = vunpack.c.l.b16 %v1391
    %v1680 = vunpack.c.h.b16 %v1391
    %v1681 = vunpack.c.l.b16 %v1392
    %v1682 = vunpack.c.h.b16 %v1392
    %v1683 = vunpack.c.l.b16 %v1393
    %v1684 = vunpack.c.h.b16 %v1393
    %v1685 = vunpack.c.l.b16 %v1394
    %v1686 = vunpack.c.h.b16 %v1394
    %v1687 = vunpack.c.l.b16 %v1395
    %v1688 = vunpack.c.h.b16 %v1395
    %v1689 = vunpack.c.l.b16 %v1396
    %v1690 = vunpack.c.h.b16 %v1396
    %v1691 = vunpack.c.l.b16 %v1397
    %v1692 = vunpack.c.h.b16 %v1397
    %v1693 = vunpack.c.l.b16 %v1398
    %v1694 = vunpack.c.h.b16 %v1398
    %v1695 = vunpack.c.l.b16 %v1399
    %v1696 = vunpack.c.h.b16 %v1399
    %v1697 = vunpack.c.l.b16 %v1400
    %v1698 = vunpack.c.h.b16 %v1400
    %v1699 = vunpack.c.l.b16 %v1401
    %v1700 = vunpack.c.h.b16 %v1401
    %v1701 = vunpack.c.l.b16 %v1402
    %v1702 = vunpack.c.h.b16 %v1402
    %v1703 = vunpack.c.l.b16 %v1403
    %v1704 = vunpack.c.h.b16 %v1403
    %v1705 = vunpack.c.l.b16 %v1404
    %v1706 = vunpack.c.h.b16 %v1404
    %v1707 = vunpack.c.l.b16 %v1405
    %v1708 = vunpack.c.h.b16 %v1405
    %v1709 = vunpack.c.l.b16 %v1406
    %v1710 = vunpack.c.h.b16 %v1406
    %v1711 = vunpack.c.l.b16 %v1407
    %v1712 = vunpack.c.h.b16 %v1407
    %v1713 = vunpack.c.l.b16 %v1408
    %v1714 = vunpack.c.h.b16 %v1408
    %v1715 = vunpack.c.l.b16 %v1409
    %v1716 = vunpack.c.h.b16 %v1409
    %v1717 = vunpack.c.l.b16 %v1410
    %v1718 = vunpack.c.h.b16 %v1410
    %v1719 = vunpack.c.l.b16 %v1411
    %v1720 = vunpack.c.h.b16 %v1411
    %v1721 = vunpack.c.l.b16 %v1412
    %v1722 = vunpack.c.h.b16 %v1412
    %v1723 = vunpack.c.l.b16 %v1413
    %v1724 = vunpack.c.h.b16 %v1413
    %v1725 = vunpack.c.l.b16 %v1414
    %v1726 = vunpack.c.h.b16 %v1414
    %v1727 = vunpack.c.l.b16 %v1415
    %v1728 = vunpack.c.h.b16 %v1415
    %v1729 = vunpack.c.l.b16 %v1416
    %v1730 = vunpack.c.h.b16 %v1416
    %v1731 = vunpack.c.l.b16 %v1417
    %v1732 = vunpack.c.h.b16 %v1417
    %v1733 = vunpack.c.l.b16 %v1418
    %v1734 = vunpack.c.h.b16 %v1418
    %v1735 = vunpack.c.l.b16 %v1419
    %v1736 = vunpack.c.h.b16 %v1419
    %v1737 = vunpack.c.l.b16 %v1420
    %v1738 = vunpack.c.h.b16 %v1420
    %v1739 = vunpack.c.l.b16 %v1421
    %v1740 = vunpack.c.h.b16 %v1421
    %v1741 = vunpack.c.l.b16 %v1422
    %v1742 = vunpack.c.h.b16 %v1422
    %v1743 = vunpack.c.l.b16 %v1423
    %v1744 = vunpack.c.h.b16 %v1423
    %v1745 = vunpack.c.l.b16 %v1424
    %v1746 = vunpack.c.h.b16 %v1424
    %v1747 = vunpack.c.l.b16 %v1425
    %v1748 = vunpack.c.h.b16 %v1425
    %v1749 = vunpack.c.l.b16 %v1426
    %v1750 = vunpack.c.h.b16 %v1426
    %v1751 = vunpack.c.l.b16 %v1427
    %v1752 = vunpack.c.h.b16 %v1427
    %v1753 = vunpack.c.l.b16 %v1428
    %v1754 = vunpack.c.h.b16 %v1428
    %v1755 = vunpack.c.l.b16 %v1429
    %v1756 = vunpack.c.h.b16 %v1429
    %v1757 = vunpack.c.l.b16 %v1430
    %v1758 = vunpack.c.h.b16 %v1430
    %v1759 = vunpack.c.l.b16 %v1431
    %v1760 = vunpack.c.h.b16 %v1431
    %v1761 = vunpack.c.l.b16 %v1432
    %v1762 = vunpack.c.h.b16 %v1432
    %v1763 = vunpack.c.l.b16 %v1433
    %v1764 = vunpack.c.h.b16 %v1433
    %v1765 = vunpack.c.l.b16 %v1434
    %v1766 = vunpack.c.h.b16 %v1434
    %v1767 = vunpack.c.l.b16 %v1435
    %v1768 = vunpack.c.h.b16 %v1435
    %v1769 = vunpack.c.l.b16 %v1436
    %v1770 = vunpack.c.h.b16 %v1436
    %v1771 = vunpack.c.l.b16 %v1437
    %v1772 = vunpack.c.h.b16 %v1437
    %v1773 = vunpack.c.l.b16 %v1438
    %v1774 = vunpack.c.h.b16 %v1438
    %v1775 = vunpack.c.l.b16 %v1439
    %v1776 = vunpack.c.h.b16 %v1439
    %v1777 = vunpack.c.l.b16 %v1440
    %v1778 = vunpack.c.h.b16 %v1440
    %v1779 = vunpack.c.l.b16 %v1441
    %v1780 = vunpack.c.h.b16 %v1441
    %v1781 = vunpack.c.l.b16 %v1442
    %v1782 = vunpack.c.h.b16 %v1442
    %v1783 = vunpack.c.l.b16 %v1443
    %v1784 = vunpack.c.h.b16 %v1443
    %v1785 = vunpack.c.l.b16 %v1444
    %v1786 = vunpack.c.h.b16 %v1444
    %v1787 = vunpack.c.l.b16 %v1445
    %v1788 = vunpack.c.h.b16 %v1445
    %v1789 = vunpack.c.l.b16 %v1446
    %v1790 = vunpack.c.h.b16 %v1446
    %v1791 = vunpack.c.l.b16 %v1447
    %v1792 = vunpack.c.h.b16 %v1447
    %v1793 = vunpack.c.l.b16 %v1448
    %v1794 = vunpack.c.h.b16 %v1448
    %v1795 = vunpack.c.l.b16 %v1449
    %v1796 = vunpack.c.h.b16 %v1449
    %v1797 = vunpack.c.l.b16 %v1450
    %v1798 = vunpack.c.h.b16 %v1450
    %v1799 = vunpack.c.l.b16 %v1451
    %v1800 = vunpack.c.h.b16 %v1451
    %v1801 = vunpack.c.l.b16 %v1452
    %v1802 = vunpack.c.h.b16 %v1452
    %v1803 = vunpack.c.l.b16 %v1453
    %v1804 = vunpack.c.h.b16 %v1453
    %v1805 = vunpack.c.l.b16 %v1454
    %v1806 = vunpack.c.h.b16 %v1454
    %v1807 = vunpack.c.l.b16 %v1455
    %v1808 = vunpack.c.h.b16 %v1455
    %v1809 = vunpack.c.l.b16 %v1456
    %v1810 = vunpack.c.h.b16 %v1456
    %v1811 = vunpack.c.l.b16 %v1457
    %v1812 = vunpack.c.h.b16 %v1457
    %v1813 = vunpack.c.l.b16 %v1458
    %v1814 = vunpack.c.h.b16 %v1458
    %v1815 = vunpack.c.l.b16 %v1459
    %v1816 = vunpack.c.h.b16 %v1459
    %v1817 = vunpack.c.l.b16 %v1460
    %v1818 = vunpack.c.h.b16 %v1460
    %v1819 = vunpack.c.l.b16 %v1461
    %v1820 = vunpack.c.h.b16 %v1461
    %v1821 = vunpack.c.l.b16 %v1462
    %v1822 = vunpack.c.h.b16 %v1462
    %v1823 = vunpack.c.l.b16 %v1463
    %v1824 = vunpack.c.h.b16 %v1463
    %v1825 = vunpack.c.l.b16 %v1464
    %v1826 = vunpack.c.h.b16 %v1464
    %v1827 = vunpack.c.l.b16 %v1465
    %v1828 = vunpack.c.h.b16 %v1465
    %v1829 = vunpack.c.l.b16 %v1466
    %v1830 = vunpack.c.h.b16 %v1466
    %v1831 = vunpack.c.l.b16 %v1467
    %v1832 = vunpack.c.h.b16 %v1467
    %v1833 = vunpack.c.l.b16 %v1468
    %v1834 = vunpack.c.h.b16 %v1468
    %v1835 = vunpack.c.l.b16 %v1469
    %v1836 = vunpack.c.h.b16 %v1469
    %v1837 = vunpack.c.l.b16 %v1470
    %v1838 = vunpack.c.h.b16 %v1470
    %v1839 = vunpack.c.l.b16 %v1471
    %v1840 = vunpack.c.h.b16 %v1471
    %v1841 = vunpack.c.l.b16 %v1472
    %v1842 = vunpack.c.h.b16 %v1472
    %v1843 = vunpack.c.l.b16 %v1473
    %v1844 = vunpack.c.h.b16 %v1473
    %v1845 = vunpack.c.l.b16 %v1474
    %v1846 = vunpack.c.h.b16 %v1474
    %v1847 = vunpack.c.l.b16 %v1475
    %v1848 = vunpack.c.h.b16 %v1475
    %v1849 = vunpack.c.l.b16 %v1476
    %v1850 = vunpack.c.h.b16 %v1476
    %v1851 = vunpack.c.l.b16 %v1477
    %v1852 = vunpack.c.h.b16 %v1477
    %v1853 = vunpack.c.l.b16 %v1478
    %v1854 = vunpack.c.h.b16 %v1478
    %v1855 = vunpack.c.l.b16 %v1479
    %v1856 = vunpack.c.h.b16 %v1479
    %v1857 = vunpack.c.l.b16 %v1480
    %v1858 = vunpack.c.h.b16 %v1480
    %v1859 = vunpack.c.l.b16 %v1481
    %v1860 = vunpack.c.h.b16 %v1481
    %v1861 = vunpack.c.l.b16 %v1482
    %v1862 = vunpack.c.h.b16 %v1482
    %v1863 = vunpack.c.l.b16 %v1483
    %v1864 = vunpack.c.h.b16 %v1483
    %v1865 = vunpack.c.l.b16 %v1484
    %v1866 = vunpack.c.h.b16 %v1484
    %v1867 = vunpack.c.l.b16 %v1485
    %v1868 = vunpack.c.h.b16 %v1485
    %v1869 = vunpack.c.l.b16 %v1486
    %v1870 = vunpack.c.h.b16 %v1486
    %v1871 = vpack.c.b16 %v1619, %v1615
    %v1872 = vpack.c.b16 %v1620, %v1616
    %v1873 = vpack.c.b16 %v1621, %v1617
    %v1874 = vpack.c.b16 %v1622, %v1618
    %v1875 = vpack.c.b16 %v1627, %v1623
    %v1876 = vpack.c.b16 %v1628, %v1624
    %v1877 = vpack.c.b16 %v1629, %v1625
    %v1878 = vpack.c.b16 %v1630, %v1626
    %v1879 = vpack.c.b16 %v1635, %v1631
    %v1880 = vpack.c.b16 %v1636, %v1632
    %v1881 = vpack.c.b16 %v1637, %v1633
    %v1882 = vpack.c.b16 %v1638, %v1634
    %v1883 = vpack.c.b16 %v1643, %v1639
    %v1884 = vpack.c.b16 %v1644, %v1640
    %v1885 = vpack.c.b16 %v1645, %v1641
    %v1886 = vpack.c.b16 %v1646, %v1642
    %v1887 = vpack.c.b16 %v1651, %v1647
    %v1888 = vpack.c.b16 %v1652, %v1648
    %v1889 = vpack.c.b16 %v1653, %v1649
    %v1890 = vpack.c.b16 %v1654, %v1650
    %v1891 = vpack.c.b16 %v1659, %v1655
    %v1892 = vpack.c.b16 %v1660, %v1656
    %v1893 = vpack.c.b16 %v1661, %v1657
    %v1894 = vpack.c.b16 %v1662, %v1658
    %v1895 = vpack.c.b16 %v1667, %v1663
    %v1896 = vpack.c.b16 %v1668, %v1664
    %v1897 = vpack.c.b16 %v1669, %v1665
    %v1898 = vpack.c.b16 %v1670, %v1666
    %v1899 = vpack.c.b16 %v1675, %v1671
    %v1900 = vpack.c.b16 %v1676, %v1672
    %v1901 = vpack.c.b16 %v1677, %v1673
    %v1902 = vpack.c.b16 %v1678, %v1674
    %v1903 = vpack.c.b16 %v1683, %v1679
    %v1904 = vpack.c.b16 %v1684, %v1680
    %v1905 = vpack.c.b16 %v1685, %v1681
    %v1906 = vpack.c.b16 %v1686, %v1682
    %v1907 = vpack.c.b16 %v1691, %v1687
    %v1908 = vpack.c.b16 %v1692, %v1688
    %v1909 = vpack.c.b16 %v1693, %v1689
    %v1910 = vpack.c.b16 %v1694, %v1690
    %v1911 = vpack.c.b16 %v1699, %v1695
    %v1912 = vpack.c.b16 %v1700, %v1696
    %v1913 = vpack.c.b16 %v1701, %v1697
    %v1914 = vpack.c.b16 %v1702, %v1698
    %v1915 = vpack.c.b16 %v1707, %v1703
    %v1916 = vpack.c.b16 %v1708, %v1704
    %v1917 = vpack.c.b16 %v1709, %v1705
    %v1918 = vpack.c.b16 %v1710, %v1706
    %v1919 = vpack.c.b16 %v1715, %v1711
    %v1920 = vpack.c.b16 %v1716, %v1712
    %v1921 = vpack.c.b16 %v1717, %v1713
    %v1922 = vpack.c.b16 %v1718, %v1714
    %v1923 = vpack.c.b16 %v1723, %v1719
    %v1924 = vpack.c.b16 %v1724, %v1720
    %v1925 = vpack.c.b16 %v1725, %v1721
    %v1926 = vpack.c.b16 %v1726, %v1722
    %v1927 = vpack.c.b16 %v1731, %v1727
    %v1928 = vpack.c.b16 %v1732, %v1728
    %v1929 = vpack.c.b16 %v1733, %v1729
    %v1930 = vpack.c.b16 %v1734, %v1730
    %v1931 = vpack.c.b16 %v1739, %v1735
    %v1932 = vpack.c.b16 %v1740, %v1736
    %v1933 = vpack.c.b16 %v1741, %v1737
    %v1934 = vpack.c.b16 %v1742, %v1738
    %v1935 = vpack.c.b16 %v1747, %v1743
    %v1936 = vpack.c.b16 %v1748, %v1744
    %v1937 = vpack.c.b16 %v1749, %v1745
    %v1938 = vpack.c.b16 %v1750, %v1746
    %v1939 = vpack.c.b16 %v1755, %v1751
    %v1940 = vpack.c.b16 %v1756, %v1752
    %v1941 = vpack.c.b16 %v1757, %v1753
    %v1942 = vpack.c.b16 %v1758, %v1754
    %v1943 = vpack.c.b16 %v1763, %v1759
    %v1944 = vpack.c.b16 %v1764, %v1760
    %v1945 = vpack.c.b16 %v1765, %v1761
    %v1946 = vpack.c.b16 %v1766, %v1762
    %v1947 = vpack.c.b16 %v1771, %v1767
    %v1948 = vpack.c.b16 %v1772, %v1768
    %v1949 = vpack.c.b16 %v1773, %v1769
    %v1950 = vpack.c.b16 %v1774, %v1770
    %v1951 = vpack.c.b16 %v1779, %v1775
    %v1952 = vpack.c.b16 %v1780, %v1776
    %v1953 = vpack.c.b16 %v1781, %v1777
    %v1954 = vpack.c.b16 %v1782, %v1778
    %v1955 = vpack.c.b16 %v1787, %v1783
    %v1956 = vpack.c.b16 %v1788, %v1784
    %v1957 = vpack.c.b16 %v1789, %v1785
    %v1958 = vpack.c.b16 %v1790, %v1786
    %v1959 = vpack.c.b16 %v1795, %v1791
    %v1960 = vpack.c.b16 %v1796, %v1792
    %v1961 = vpack.c.b16 %v1797, %v1793
    %v1962 = vpack.c.b16 %v1798, %v1794
    %v1963 = vpack.c.b16 %v1803, %v1799
    %v1964 = vpack.c.b16 %v1804, %v1800
    %v1965 = vpack.c.b16 %v1805, %v1801
    %v1966 = vpack.c.b16 %v1806, %v1802
    %v1967 = vpack.c.b16 %v1811, %v1807
    %v1968 = vpack.c.b16 %v1812, %v1808
    %v1969 = vpack.c.b16 %v1813, %v1809
    %v1970 = vpack.c.b16 %v1814, %v1810
    %v1971 = vpack.c.b16 %v1819, %v1815
    %v1972 = vpack.c.b16 %v1820, %v1816
    %v1973 = vpack.c.b16 %v1821, %v1817
    %v1974 = vpack.c.b16 %v1822, %v1818
    %v1975 = vpack.c.b16 %v1827, %v1823
    %v1976 = vpack.c.b16 %v1828, %v1824
    %v1977 = vpack.c.b16 %v1829, %v1825
    %v1978 = vpack.c.b16 %v1830, %v1826
    %v1979 = vpack.c.b16 %v1835, %v1831
    %v1980 = vpack.c.b16 %v1836, %v1832
    %v1981 = vpack.c.b16 %v1837, %v1833
    %v1982 = vpack.c.b16 %v1838, %v1834
    %v1983 = vpack.c.b16 %v1843, %v1839
    %v1984 = vpack.c.b16 %v1844, %v1840
    %v1985 = vpack.c.b16 %v1845, %v1841
    %v1986 = vpack.c.b16 %v1846, %v1842
    %v1987 = vpack.c.b16 %v1851, %v1847
    %v1988 = vpack.c.b16 %v1852, %v1848
    %v1989 = vpack.c.b16 %v1853, %v1849
    %v1990 = vpack.c.b16 %v1854, %v1850
    %v1991 = vpack.c.b16 %v1859, %v1855
    %v1992 = vpack.c.b16 %v1860, %v1856
    %v1993 = vpack.c.b16 %v1861, %v1857
    %v1994 = vpack.c.b16 %v1862, %v1858
    %v1995 = vpack.c.b16 %v1867, %v1863
    %v1996 = vpack.c.b16 %v1868, %v1864
    %v1997 = vpack.c.b16 %v1869, %v1865
    %v1998 = vpack.c.b16 %v1870, %v1866
    %2127 = vmatprep.subr.bf16.mxu0 %v1900
    %2128 = vmatpush1.bf16.msra.mxu0 %v1899
    %2129 = vmatprep.subr.bf16.mxu0 %v1896
    %2130 = vmatpush1.bf16.msra.mxu0 %v1895
    %2131 = vmatprep.subr.bf16.mxu0 %v1892
    %2132 = vmatpush1.bf16.msra.mxu0 %v1891
    %2133 = vmatprep.subr.bf16.mxu0 %v1888
    %2134 = vmatpush1.bf16.msra.mxu0 %v1887
    %2135 = vmatprep.subr.bf16.mxu0 %v1884
    %2136 = vmatpush1.bf16.msra.mxu0 %v1883
    %2137 = vmatprep.subr.bf16.mxu0 %v1880
    %2138 = vmatpush1.bf16.msra.mxu0 %v1879
    %2139 = vmatprep.subr.bf16.mxu0 %v1876
    %2140 = vmatpush1.bf16.msra.mxu0 %v1875
    %2141 = vmatprep.subr.bf16.mxu0 %v1872
    %2142 = vmatpush1.bf16.msra.mxu0 %v1871
    %2143 = vmatprep.subr.bf16.mxu0 %v1932
    %2144 = vmatpush2.bf16.msra.mxu0 %v1931
    %2145 = vmatprep.subr.bf16.mxu0 %v1928
    %2146 = vmatpush2.bf16.msra.mxu0 %v1927
    %2147 = vmatprep.subr.bf16.mxu0 %v1924
    %2148 = vmatpush2.bf16.msra.mxu0 %v1923
    %2149 = vmatprep.subr.bf16.mxu0 %v1920
    %2150 = vmatpush2.bf16.msra.mxu0 %v1919
    %2151 = vmatprep.subr.bf16.mxu0 %v1916
    %2152 = vmatpush2.bf16.msra.mxu0 %v1915
    %2153 = vmatprep.subr.bf16.mxu0 %v1912
    %2154 = vmatpush2.bf16.msra.mxu0 %v1911
    %2155 = vmatprep.subr.bf16.mxu0 %v1908
    %2156 = vmatpush2.bf16.msra.mxu0 %v1907
    %2157 = vmatprep.subr.bf16.mxu0 %v1904
    %2158 = vmatpush2.bf16.msra.mxu0 %v1903
    %2159 = vmatprep.mubr.bf16.mxu0 %v1328
    %2160 = vmatmul.mubr.bf16.gmra.mxu0 %v1327
    %v2161 = vpop.f32.mrf.mxu0
    %v2162 = vadd.f32 0.0, %v2161
    %v2163 = vpop.f32.mrf.mxu0
    %v2164 = vadd.f32 0.0, %v2163
    %v2165 = vpop.f32.mrf.mxu0
    %v2166 = vadd.f32 0.0, %v2165
    %v2167 = vpop.f32.mrf.mxu0
    %v2168 = vadd.f32 0.0, %v2167
    %2169 = vmatprep.mubr.bf16.mxu0 %v1332
    %2170 = vmatmul.mubr.bf16.gmra.mxu0 %v1331
    %v2171 = vpop.f32.mrf.mxu0
    %v2172 = vadd.f32 0.0, %v2171
    %v2173 = vpop.f32.mrf.mxu0
    %v2174 = vadd.f32 0.0, %v2173
    %v2175 = vpop.f32.mrf.mxu0
    %v2176 = vadd.f32 0.0, %v2175
    %v2177 = vpop.f32.mrf.mxu0
    %v2178 = vadd.f32 0.0, %v2177
    %2179 = vmatprep.mubr.bf16.mxu0 %v1336
    %2180 = vmatmul.mubr.bf16.gmra.mxu0 %v1335
    %v2181 = vpop.f32.mrf.mxu0
    %v2182 = vadd.f32 0.0, %v2181
    %v2183 = vpop.f32.mrf.mxu0
    %v2184 = vadd.f32 0.0, %v2183
    %v2185 = vpop.f32.mrf.mxu0
    %v2186 = vadd.f32 0.0, %v2185
    %v2187 = vpop.f32.mrf.mxu0
    %v2188 = vadd.f32 0.0, %v2187
    %2189 = vmatprep.mubr.bf16.mxu0 %v1340
    %2190 = vmatmul.mubr.bf16.gmra.mxu0 %v1339
    %v2191 = vpop.f32.mrf.mxu0
    %v2192 = vadd.f32 0.0, %v2191
    %v2193 = vpop.f32.mrf.mxu0
    %v2194 = vadd.f32 0.0, %v2193
    %v2195 = vpop.f32.mrf.mxu0
    %v2196 = vadd.f32 0.0, %v2195
    %v2197 = vpop.f32.mrf.mxu0
    %v2198 = vadd.f32 0.0, %v2197
    %2199 = vmatprep.mubr.bf16.mxu0 %v1344
    %2200 = vmatmul.mubr.bf16.gmra.mxu0 %v1343
    %v2201 = vpop.f32.mrf.mxu0
    %v2202 = vadd.f32 0.0, %v2201
    %v2203 = vpop.f32.mrf.mxu0
    %v2204 = vadd.f32 0.0, %v2203
    %v2205 = vpop.f32.mrf.mxu0
    %v2206 = vadd.f32 0.0, %v2205
    %v2207 = vpop.f32.mrf.mxu0
    %v2208 = vadd.f32 0.0, %v2207
    %2209 = vmatprep.mubr.bf16.mxu0 %v1348
    %2210 = vmatmul.mubr.bf16.gmra.mxu0 %v1347
    %v2211 = vpop.f32.mrf.mxu0
    %v2212 = vadd.f32 0.0, %v2211
    %v2213 = vpop.f32.mrf.mxu0
    %v2214 = vadd.f32 0.0, %v2213
    %v2215 = vpop.f32.mrf.mxu0
    %v2216 = vadd.f32 0.0, %v2215
    %v2217 = vpop.f32.mrf.mxu0
    %v2218 = vadd.f32 0.0, %v2217
    %2219 = vmatprep.mubr.bf16.mxu0 %v1352
    %2220 = vmatmul.mubr.bf16.gmra.mxu0 %v1351
    %v2221 = vpop.f32.mrf.mxu0
    %v2222 = vadd.f32 0.0, %v2221
    %v2223 = vpop.f32.mrf.mxu0
    %v2224 = vadd.f32 0.0, %v2223
    %v2225 = vpop.f32.mrf.mxu0
    %v2226 = vadd.f32 0.0, %v2225
    %v2227 = vpop.f32.mrf.mxu0
    %v2228 = vadd.f32 0.0, %v2227
    %2229 = vmatprep.mubr.bf16.mxu0 %v1356
    %2230 = vmatmul.mubr.bf16.gmra.mxu0 %v1355
    %v2231 = vpop.f32.mrf.mxu0
    %v2232 = vadd.f32 0.0, %v2231
    %v2233 = vpop.f32.mrf.mxu0
    %v2234 = vadd.f32 0.0, %v2233
    %v2235 = vpop.f32.mrf.mxu0
    %v2236 = vadd.f32 0.0, %v2235
    %v2237 = vpop.f32.mrf.mxu0
    %v2238 = vadd.f32 0.0, %v2237
    %2239 = vdwg.mxu0
    %2240 = vmatprep.subr.bf16.mxu0 %v1964
    %2241 = vmatpush1.bf16.msra.mxu0 %v1963
    %2242 = vmatprep.subr.bf16.mxu0 %v1960
    %2243 = vmatpush1.bf16.msra.mxu0 %v1959
    %2244 = vmatprep.subr.bf16.mxu0 %v1956
    %2245 = vmatpush1.bf16.msra.mxu0 %v1955
    %2246 = vmatprep.subr.bf16.mxu0 %v1952
    %2247 = vmatpush1.bf16.msra.mxu0 %v1951
    %2248 = vmatprep.subr.bf16.mxu0 %v1948
    %2249 = vmatpush1.bf16.msra.mxu0 %v1947
    %2250 = vmatprep.subr.bf16.mxu0 %v1944
    %2251 = vmatpush1.bf16.msra.mxu0 %v1943
    %2252 = vmatprep.subr.bf16.mxu0 %v1940
    %2253 = vmatpush1.bf16.msra.mxu0 %v1939
    %2254 = vmatprep.subr.bf16.mxu0 %v1936
    %2255 = vmatpush1.bf16.msra.mxu0 %v1935
    %2256 = vmatprep.subr.bf16.mxu0 %v1996
    %2257 = vmatpush2.bf16.msra.mxu0 %v1995
    %2258 = vmatprep.subr.bf16.mxu0 %v1992
    %2259 = vmatpush2.bf16.msra.mxu0 %v1991
    %2260 = vmatprep.subr.bf16.mxu0 %v1988
    %2261 = vmatpush2.bf16.msra.mxu0 %v1987
    %2262 = vmatprep.subr.bf16.mxu0 %v1984
    %2263 = vmatpush2.bf16.msra.mxu0 %v1983
    %2264 = vmatprep.subr.bf16.mxu0 %v1980
    %2265 = vmatpush2.bf16.msra.mxu0 %v1979
    %2266 = vmatprep.subr.bf16.mxu0 %v1976
    %2267 = vmatpush2.bf16.msra.mxu0 %v1975
    %2268 = vmatprep.subr.bf16.mxu0 %v1972
    %2269 = vmatpush2.bf16.msra.mxu0 %v1971
    %2270 = vmatprep.subr.bf16.mxu0 %v1968
    %2271 = vmatpush2.bf16.msra.mxu0 %v1967
    %2272 = vmatprep.mubr.bf16.mxu0 %v1330
    %2273 = vmatmul.mubr.bf16.gmra.mxu0 %v1329
    %v2274 = vpop.f32.mrf.mxu0
    %v2275 = vadd.f32 %v2162, %v2274
    %v2276 = vpop.f32.mrf.mxu0
    %v2277 = vadd.f32 %v2164, %v2276
    %v2278 = vpop.f32.mrf.mxu0
    %v2279 = vadd.f32 %v2166, %v2278
    %v2280 = vpop.f32.mrf.mxu0
    %v2281 = vadd.f32 %v2168, %v2280
    %2282 = vmatprep.mubr.bf16.mxu0 %v1334
    %2283 = vmatmul.mubr.bf16.gmra.mxu0 %v1333
    %v2284 = vpop.f32.mrf.mxu0
    %v2285 = vadd.f32 %v2172, %v2284
    %v2286 = vpop.f32.mrf.mxu0
    %v2287 = vadd.f32 %v2174, %v2286
    %v2288 = vpop.f32.mrf.mxu0
    %v2289 = vadd.f32 %v2176, %v2288
    %v2290 = vpop.f32.mrf.mxu0
    %v2291 = vadd.f32 %v2178, %v2290
    %2292 = vmatprep.mubr.bf16.mxu0 %v1338
    %2293 = vmatmul.mubr.bf16.gmra.mxu0 %v1337
    %v2294 = vpop.f32.mrf.mxu0
    %v2295 = vadd.f32 %v2182, %v2294
    %v2296 = vpop.f32.mrf.mxu0
    %v2297 = vadd.f32 %v2184, %v2296
    %v2298 = vpop.f32.mrf.mxu0
    %v2299 = vadd.f32 %v2186, %v2298
    %v2300 = vpop.f32.mrf.mxu0
    %v2301 = vadd.f32 %v2188, %v2300
    %2302 = vmatprep.mubr.bf16.mxu0 %v1342
    %2303 = vmatmul.mubr.bf16.gmra.mxu0 %v1341
    %v2304 = vpop.f32.mrf.mxu0
    %v2305 = vadd.f32 %v2192, %v2304
    %v2306 = vpop.f32.mrf.mxu0
    %v2307 = vadd.f32 %v2194, %v2306
    %v2308 = vpop.f32.mrf.mxu0
    %v2309 = vadd.f32 %v2196, %v2308
    %v2310 = vpop.f32.mrf.mxu0
    %v2311 = vadd.f32 %v2198, %v2310
    %2312 = vmatprep.mubr.bf16.mxu0 %v1346
    %2313 = vmatmul.mubr.bf16.gmra.mxu0 %v1345
    %v2314 = vpop.f32.mrf.mxu0
    %v2315 = vadd.f32 %v2202, %v2314
    %v2316 = vpop.f32.mrf.mxu0
    %v2317 = vadd.f32 %v2204, %v2316
    %v2318 = vpop.f32.mrf.mxu0
    %v2319 = vadd.f32 %v2206, %v2318
    %v2320 = vpop.f32.mrf.mxu0
    %v2321 = vadd.f32 %v2208, %v2320
    %2322 = vmatprep.mubr.bf16.mxu0 %v1350
    %2323 = vmatmul.mubr.bf16.gmra.mxu0 %v1349
    %v2324 = vpop.f32.mrf.mxu0
    %v2325 = vadd.f32 %v2212, %v2324
    %v2326 = vpop.f32.mrf.mxu0
    %v2327 = vadd.f32 %v2214, %v2326
    %v2328 = vpop.f32.mrf.mxu0
    %v2329 = vadd.f32 %v2216, %v2328
    %v2330 = vpop.f32.mrf.mxu0
    %v2331 = vadd.f32 %v2218, %v2330
    %2332 = vmatprep.mubr.bf16.mxu0 %v1354
    %2333 = vmatmul.mubr.bf16.gmra.mxu0 %v1353
    %v2334 = vpop.f32.mrf.mxu0
    %v2335 = vadd.f32 %v2222, %v2334
    %v2336 = vpop.f32.mrf.mxu0
    %v2337 = vadd.f32 %v2224, %v2336
    %v2338 = vpop.f32.mrf.mxu0
    %v2339 = vadd.f32 %v2226, %v2338
    %v2340 = vpop.f32.mrf.mxu0
    %v2341 = vadd.f32 %v2228, %v2340
    %2342 = vmatprep.mubr.bf16.mxu0 %v1358
    %2343 = vmatmul.mubr.bf16.gmra.mxu0 %v1357
    %v2344 = vpop.f32.mrf.mxu0
    %v2345 = vadd.f32 %v2232, %v2344
    %v2346 = vpop.f32.mrf.mxu0
    %v2347 = vadd.f32 %v2234, %v2346
    %v2348 = vpop.f32.mrf.mxu0
    %v2349 = vadd.f32 %v2236, %v2348
    %v2350 = vpop.f32.mrf.mxu0
    %v2351 = vadd.f32 %v2238, %v2350
    %2352 = vdwg.mxu0
    %2353 = vmatprep.subr.bf16.mxu0 %v1902
    %2354 = vmatpush1.bf16.msra.mxu0 %v1901
    %2355 = vmatprep.subr.bf16.mxu0 %v1898
    %2356 = vmatpush1.bf16.msra.mxu0 %v1897
    %2357 = vmatprep.subr.bf16.mxu0 %v1894
    %2358 = vmatpush1.bf16.msra.mxu0 %v1893
    %2359 = vmatprep.subr.bf16.mxu0 %v1890
    %2360 = vmatpush1.bf16.msra.mxu0 %v1889
    %2361 = vmatprep.subr.bf16.mxu0 %v1886
    %2362 = vmatpush1.bf16.msra.mxu0 %v1885
    %2363 = vmatprep.subr.bf16.mxu0 %v1882
    %2364 = vmatpush1.bf16.msra.mxu0 %v1881
    %2365 = vmatprep.subr.bf16.mxu0 %v1878
    %2366 = vmatpush1.bf16.msra.mxu0 %v1877
    %2367 = vmatprep.subr.bf16.mxu0 %v1874
    %2368 = vmatpush1.bf16.msra.mxu0 %v1873
    %2369 = vmatprep.subr.bf16.mxu0 %v1934
    %2370 = vmatpush2.bf16.msra.mxu0 %v1933
    %2371 = vmatprep.subr.bf16.mxu0 %v1930
    %2372 = vmatpush2.bf16.msra.mxu0 %v1929
    %2373 = vmatprep.subr.bf16.mxu0 %v1926
    %2374 = vmatpush2.bf16.msra.mxu0 %v1925
    %2375 = vmatprep.subr.bf16.mxu0 %v1922
    %2376 = vmatpush2.bf16.msra.mxu0 %v1921
    %2377 = vmatprep.subr.bf16.mxu0 %v1918
    %2378 = vmatpush2.bf16.msra.mxu0 %v1917
    %2379 = vmatprep.subr.bf16.mxu0 %v1914
    %2380 = vmatpush2.bf16.msra.mxu0 %v1913
    %2381 = vmatprep.subr.bf16.mxu0 %v1910
    %2382 = vmatpush2.bf16.msra.mxu0 %v1909
    %2383 = vmatprep.subr.bf16.mxu0 %v1906
    %2384 = vmatpush2.bf16.msra.mxu0 %v1905
    %2385 = vmatprep.mubr.bf16.mxu0 %v1328
    %2386 = vmatmul.mubr.bf16.gmra.mxu0 %v1327
    %v2387 = vpop.f32.mrf.mxu0
    %v2388 = vadd.f32 0.0, %v2387
    %v2389 = vpop.f32.mrf.mxu0
    %v2390 = vadd.f32 0.0, %v2389
    %v2391 = vpop.f32.mrf.mxu0
    %v2392 = vadd.f32 0.0, %v2391
    %v2393 = vpop.f32.mrf.mxu0
    %v2394 = vadd.f32 0.0, %v2393
    %2395 = vmatprep.mubr.bf16.mxu0 %v1332
    %2396 = vmatmul.mubr.bf16.gmra.mxu0 %v1331
    %v2397 = vpop.f32.mrf.mxu0
    %v2398 = vadd.f32 0.0, %v2397
    %v2399 = vpop.f32.mrf.mxu0
    %v2400 = vadd.f32 0.0, %v2399
    %v2401 = vpop.f32.mrf.mxu0
    %v2402 = vadd.f32 0.0, %v2401
    %v2403 = vpop.f32.mrf.mxu0
    %v2404 = vadd.f32 0.0, %v2403
    %2405 = vmatprep.mubr.bf16.mxu0 %v1336
    %2406 = vmatmul.mubr.bf16.gmra.mxu0 %v1335
    %v2407 = vpop.f32.mrf.mxu0
    %v2408 = vadd.f32 0.0, %v2407
    %v2409 = vpop.f32.mrf.mxu0
    %v2410 = vadd.f32 0.0, %v2409
    %v2411 = vpop.f32.mrf.mxu0
    %v2412 = vadd.f32 0.0, %v2411
    %v2413 = vpop.f32.mrf.mxu0
    %v2414 = vadd.f32 0.0, %v2413
    %2415 = vmatprep.mubr.bf16.mxu0 %v1340
    %2416 = vmatmul.mubr.bf16.gmra.mxu0 %v1339
    %v2417 = vpop.f32.mrf.mxu0
    %v2418 = vadd.f32 0.0, %v2417
    %v2419 = vpop.f32.mrf.mxu0
    %v2420 = vadd.f32 0.0, %v2419
    %v2421 = vpop.f32.mrf.mxu0
    %v2422 = vadd.f32 0.0, %v2421
    %v2423 = vpop.f32.mrf.mxu0
    %v2424 = vadd.f32 0.0, %v2423
    %2425 = vmatprep.mubr.bf16.mxu0 %v1344
    %2426 = vmatmul.mubr.bf16.gmra.mxu0 %v1343
    %v2427 = vpop.f32.mrf.mxu0
    %v2428 = vadd.f32 0.0, %v2427
    %v2429 = vpop.f32.mrf.mxu0
    %v2430 = vadd.f32 0.0, %v2429
    %v2431 = vpop.f32.mrf.mxu0
    %v2432 = vadd.f32 0.0, %v2431
    %v2433 = vpop.f32.mrf.mxu0
    %v2434 = vadd.f32 0.0, %v2433
    %2435 = vmatprep.mubr.bf16.mxu0 %v1348
    %2436 = vmatmul.mubr.bf16.gmra.mxu0 %v1347
    %v2437 = vpop.f32.mrf.mxu0
    %v2438 = vadd.f32 0.0, %v2437
    %v2439 = vpop.f32.mrf.mxu0
    %v2440 = vadd.f32 0.0, %v2439
    %v2441 = vpop.f32.mrf.mxu0
    %v2442 = vadd.f32 0.0, %v2441
    %v2443 = vpop.f32.mrf.mxu0
    %v2444 = vadd.f32 0.0, %v2443
    %2445 = vmatprep.mubr.bf16.mxu0 %v1352
    %2446 = vmatmul.mubr.bf16.gmra.mxu0 %v1351
    %v2447 = vpop.f32.mrf.mxu0
    %v2448 = vadd.f32 0.0, %v2447
    %v2449 = vpop.f32.mrf.mxu0
    %v2450 = vadd.f32 0.0, %v2449
    %v2451 = vpop.f32.mrf.mxu0
    %v2452 = vadd.f32 0.0, %v2451
    %v2453 = vpop.f32.mrf.mxu0
    %v2454 = vadd.f32 0.0, %v2453
    %2455 = vmatprep.mubr.bf16.mxu0 %v1356
    %2456 = vmatmul.mubr.bf16.gmra.mxu0 %v1355
    %v2457 = vpop.f32.mrf.mxu0
    %v2458 = vadd.f32 0.0, %v2457
    %v2459 = vpop.f32.mrf.mxu0
    %v2460 = vadd.f32 0.0, %v2459
    %v2461 = vpop.f32.mrf.mxu0
    %v2462 = vadd.f32 0.0, %v2461
    %v2463 = vpop.f32.mrf.mxu0
    %v2464 = vadd.f32 0.0, %v2463
    %2465 = vdwg.mxu0
    %2466 = vmatprep.subr.bf16.mxu0 %v1966
    %2467 = vmatpush1.bf16.msra.mxu0 %v1965
    %2468 = vmatprep.subr.bf16.mxu0 %v1962
    %2469 = vmatpush1.bf16.msra.mxu0 %v1961
    %2470 = vmatprep.subr.bf16.mxu0 %v1958
    %2471 = vmatpush1.bf16.msra.mxu0 %v1957
    %2472 = vmatprep.subr.bf16.mxu0 %v1954
    %2473 = vmatpush1.bf16.msra.mxu0 %v1953
    %2474 = vmatprep.subr.bf16.mxu0 %v1950
    %2475 = vmatpush1.bf16.msra.mxu0 %v1949
    %2476 = vmatprep.subr.bf16.mxu0 %v1946
    %2477 = vmatpush1.bf16.msra.mxu0 %v1945
    %2478 = vmatprep.subr.bf16.mxu0 %v1942
    %2479 = vmatpush1.bf16.msra.mxu0 %v1941
    %2480 = vmatprep.subr.bf16.mxu0 %v1938
    %2481 = vmatpush1.bf16.msra.mxu0 %v1937
    %2482 = vmatprep.subr.bf16.mxu0 %v1998
    %2483 = vmatpush2.bf16.msra.mxu0 %v1997
    %2484 = vmatprep.subr.bf16.mxu0 %v1994
    %2485 = vmatpush2.bf16.msra.mxu0 %v1993
    %2486 = vmatprep.subr.bf16.mxu0 %v1990
    %2487 = vmatpush2.bf16.msra.mxu0 %v1989
    %2488 = vmatprep.subr.bf16.mxu0 %v1986
    %2489 = vmatpush2.bf16.msra.mxu0 %v1985
    %2490 = vmatprep.subr.bf16.mxu0 %v1982
    %2491 = vmatpush2.bf16.msra.mxu0 %v1981
    %2492 = vmatprep.subr.bf16.mxu0 %v1978
    %2493 = vmatpush2.bf16.msra.mxu0 %v1977
    %2494 = vmatprep.subr.bf16.mxu0 %v1974
    %2495 = vmatpush2.bf16.msra.mxu0 %v1973
    %2496 = vmatprep.subr.bf16.mxu0 %v1970
    %2497 = vmatpush2.bf16.msra.mxu0 %v1969
    %2498 = vmatprep.mubr.bf16.mxu0 %v1330
    %2499 = vmatmul.mubr.bf16.gmra.mxu0 %v1329
    %v2500 = vpop.f32.mrf.mxu0
    %v2501 = vadd.f32 %v2388, %v2500
    %v2502 = vpop.f32.mrf.mxu0
    %v2503 = vadd.f32 %v2390, %v2502
    %v2504 = vpop.f32.mrf.mxu0
    %v2505 = vadd.f32 %v2392, %v2504
    %v2506 = vpop.f32.mrf.mxu0
    %v2507 = vadd.f32 %v2394, %v2506
    %2508 = vmatprep.mubr.bf16.mxu0 %v1334
    %2509 = vmatmul.mubr.bf16.gmra.mxu0 %v1333
    %v2510 = vpop.f32.mrf.mxu0
    %v2511 = vadd.f32 %v2398, %v2510
    %v2512 = vpop.f32.mrf.mxu0
    %v2513 = vadd.f32 %v2400, %v2512
    %v2514 = vpop.f32.mrf.mxu0
    %v2515 = vadd.f32 %v2402, %v2514
    %v2516 = vpop.f32.mrf.mxu0
    %v2517 = vadd.f32 %v2404, %v2516
    %2518 = vmatprep.mubr.bf16.mxu0 %v1338
    %2519 = vmatmul.mubr.bf16.gmra.mxu0 %v1337
    %v2520 = vpop.f32.mrf.mxu0
    %v2521 = vadd.f32 %v2408, %v2520
    %v2522 = vpop.f32.mrf.mxu0
    %v2523 = vadd.f32 %v2410, %v2522
    %v2524 = vpop.f32.mrf.mxu0
    %v2525 = vadd.f32 %v2412, %v2524
    %v2526 = vpop.f32.mrf.mxu0
    %v2527 = vadd.f32 %v2414, %v2526
    %2528 = vmatprep.mubr.bf16.mxu0 %v1342
    %2529 = vmatmul.mubr.bf16.gmra.mxu0 %v1341
    %v2530 = vpop.f32.mrf.mxu0
    %v2531 = vadd.f32 %v2418, %v2530
    %v2532 = vpop.f32.mrf.mxu0
    %v2533 = vadd.f32 %v2420, %v2532
    %v2534 = vpop.f32.mrf.mxu0
    %v2535 = vadd.f32 %v2422, %v2534
    %v2536 = vpop.f32.mrf.mxu0
    %v2537 = vadd.f32 %v2424, %v2536
    %2538 = vmatprep.mubr.bf16.mxu0 %v1346
    %2539 = vmatmul.mubr.bf16.gmra.mxu0 %v1345
    %v2540 = vpop.f32.mrf.mxu0
    %v2541 = vadd.f32 %v2428, %v2540
    %v2542 = vpop.f32.mrf.mxu0
    %v2543 = vadd.f32 %v2430, %v2542
    %v2544 = vpop.f32.mrf.mxu0
    %v2545 = vadd.f32 %v2432, %v2544
    %v2546 = vpop.f32.mrf.mxu0
    %v2547 = vadd.f32 %v2434, %v2546
    %2548 = vmatprep.mubr.bf16.mxu0 %v1350
    %2549 = vmatmul.mubr.bf16.gmra.mxu0 %v1349
    %v2550 = vpop.f32.mrf.mxu0
    %v2551 = vadd.f32 %v2438, %v2550
    %v2552 = vpop.f32.mrf.mxu0
    %v2553 = vadd.f32 %v2440, %v2552
    %v2554 = vpop.f32.mrf.mxu0
    %v2555 = vadd.f32 %v2442, %v2554
    %v2556 = vpop.f32.mrf.mxu0
    %v2557 = vadd.f32 %v2444, %v2556
    %2558 = vmatprep.mubr.bf16.mxu0 %v1354
    %2559 = vmatmul.mubr.bf16.gmra.mxu0 %v1353
    %v2560 = vpop.f32.mrf.mxu0
    %v2561 = vadd.f32 %v2448, %v2560
    %v2562 = vpop.f32.mrf.mxu0
    %v2563 = vadd.f32 %v2450, %v2562
    %v2564 = vpop.f32.mrf.mxu0
    %v2565 = vadd.f32 %v2452, %v2564
    %v2566 = vpop.f32.mrf.mxu0
    %v2567 = vadd.f32 %v2454, %v2566
    %2568 = vmatprep.mubr.bf16.mxu0 %v1358
    %2569 = vmatmul.mubr.bf16.gmra.mxu0 %v1357
    %v2570 = vpop.f32.mrf.mxu0
    %v2571 = vadd.f32 %v2458, %v2570
    %v2572 = vpop.f32.mrf.mxu0
    %v2573 = vadd.f32 %v2460, %v2572
    %v2574 = vpop.f32.mrf.mxu0
    %v2575 = vadd.f32 %v2462, %v2574
    %v2576 = vpop.f32.mrf.mxu0
    %v2577 = vadd.f32 %v2464, %v2576
    %2578 = vdwg.mxu0
    %v2579 = vadd.f32 %v2275, %v2279
    %v2580 = vadd.f32 %v2579, %v2285
    %v2581 = vadd.f32 %v2580, %v2289
    %v2582 = vadd.f32 %v2581, %v2295
    %v2583 = vadd.f32 %v2582, %v2299
    %v2584 = vadd.f32 %v2583, %v2305
    %v2585 = vadd.f32 %v2584, %v2309
    %v2586 = vadd.f32 %v2585, %v2315
    %v2587 = vadd.f32 %v2586, %v2319
    %v2588 = vadd.f32 %v2587, %v2325
    %v2589 = vadd.f32 %v2588, %v2329
    %v2590 = vadd.f32 %v2589, %v2335
    %v2591 = vadd.f32 %v2590, %v2339
    %v2592 = vadd.f32 %v2591, %v2345
    %v2593 = vadd.f32 %v2592, %v2349
    %v2594 = vrot.slane %v2593, 4
    %v2595 = vadd.f32 %v2593, %v2594
    %v2596 = vrot.slane %v2595, 2
    %v2597 = vadd.f32 %v2595, %v2596
    %v2598 = vrot.slane %v2597, 1
    %v2599 = vadd.f32 %v2597, %v2598
    %v2600 = vadd.f32 %v2277, %v2281
    %v2601 = vadd.f32 %v2600, %v2287
    %v2602 = vadd.f32 %v2601, %v2291
    %v2603 = vadd.f32 %v2602, %v2297
    %v2604 = vadd.f32 %v2603, %v2301
    %v2605 = vadd.f32 %v2604, %v2307
    %v2606 = vadd.f32 %v2605, %v2311
    %v2607 = vadd.f32 %v2606, %v2317
    %v2608 = vadd.f32 %v2607, %v2321
    %v2609 = vadd.f32 %v2608, %v2327
    %v2610 = vadd.f32 %v2609, %v2331
    %v2611 = vadd.f32 %v2610, %v2337
    %v2612 = vadd.f32 %v2611, %v2341
    %v2613 = vadd.f32 %v2612, %v2347
    %v2614 = vadd.f32 %v2613, %v2351
    %v2615 = vrot.slane %v2614, 4
    %v2616 = vadd.f32 %v2614, %v2615
    %v2617 = vrot.slane %v2616, 2
    %v2618 = vadd.f32 %v2616, %v2617
    %v2619 = vrot.slane %v2618, 1
    %v2620 = vadd.f32 %v2618, %v2619
    %v2621 = vadd.f32 %v2501, %v2505
    %v2622 = vadd.f32 %v2621, %v2511
    %v2623 = vadd.f32 %v2622, %v2515
    %v2624 = vadd.f32 %v2623, %v2521
    %v2625 = vadd.f32 %v2624, %v2525
    %v2626 = vadd.f32 %v2625, %v2531
    %v2627 = vadd.f32 %v2626, %v2535
    %v2628 = vadd.f32 %v2627, %v2541
    %v2629 = vadd.f32 %v2628, %v2545
    %v2630 = vadd.f32 %v2629, %v2551
    %v2631 = vadd.f32 %v2630, %v2555
    %v2632 = vadd.f32 %v2631, %v2561
    %v2633 = vadd.f32 %v2632, %v2565
    %v2634 = vadd.f32 %v2633, %v2571
    %v2635 = vadd.f32 %v2634, %v2575
    %v2636 = vrot.slane %v2635, 4
    %v2637 = vadd.f32 %v2635, %v2636
    %v2638 = vrot.slane %v2637, 2
    %v2639 = vadd.f32 %v2637, %v2638
    %v2640 = vrot.slane %v2639, 1
    %v2641 = vadd.f32 %v2639, %v2640
    %v2642 = vadd.f32 %v2503, %v2507
    %v2643 = vadd.f32 %v2642, %v2513
    %v2644 = vadd.f32 %v2643, %v2517
    %v2645 = vadd.f32 %v2644, %v2523
    %v2646 = vadd.f32 %v2645, %v2527
    %v2647 = vadd.f32 %v2646, %v2533
    %v2648 = vadd.f32 %v2647, %v2537
    %v2649 = vadd.f32 %v2648, %v2543
    %v2650 = vadd.f32 %v2649, %v2547
    %v2651 = vadd.f32 %v2650, %v2553
    %v2652 = vadd.f32 %v2651, %v2557
    %v2653 = vadd.f32 %v2652, %v2563
    %v2654 = vadd.f32 %v2653, %v2567
    %v2655 = vadd.f32 %v2654, %v2573
    %v2656 = vadd.f32 %v2655, %v2577
    %v2657 = vrot.slane %v2656, 4
    %v2658 = vadd.f32 %v2656, %v2657
    %v2659 = vrot.slane %v2658, 2
    %v2660 = vadd.f32 %v2658, %v2659
    %v2661 = vrot.slane %v2660, 1
    %v2662 = vadd.f32 %v2660, %v2661
    %v2663 = vmul.f32 %v2275, %v2275
    %v2664 = vmul.f32 %v2277, %v2277
    %v2665 = vmul.f32 %v2501, %v2501
    %v2666 = vmul.f32 %v2503, %v2503
    %v2667 = vmul.f32 %v2279, %v2279
    %v2668 = vmul.f32 %v2281, %v2281
    %v2669 = vmul.f32 %v2505, %v2505
    %v2670 = vmul.f32 %v2507, %v2507
    %v2671 = vmul.f32 %v2285, %v2285
    %v2672 = vmul.f32 %v2287, %v2287
    %v2673 = vmul.f32 %v2511, %v2511
    %v2674 = vmul.f32 %v2513, %v2513
    %v2675 = vmul.f32 %v2289, %v2289
    %v2676 = vmul.f32 %v2291, %v2291
    %v2677 = vmul.f32 %v2515, %v2515
    %v2678 = vmul.f32 %v2517, %v2517
    %v2679 = vmul.f32 %v2295, %v2295
    %v2680 = vmul.f32 %v2297, %v2297
    %v2681 = vmul.f32 %v2521, %v2521
    %v2682 = vmul.f32 %v2523, %v2523
    %v2683 = vmul.f32 %v2299, %v2299
    %v2684 = vmul.f32 %v2301, %v2301
    %v2685 = vmul.f32 %v2525, %v2525
    %v2686 = vmul.f32 %v2527, %v2527
    %v2687 = vmul.f32 %v2305, %v2305
    %v2688 = vmul.f32 %v2307, %v2307
    %v2689 = vmul.f32 %v2531, %v2531
    %v2690 = vmul.f32 %v2533, %v2533
    %v2691 = vmul.f32 %v2309, %v2309
    %v2692 = vmul.f32 %v2311, %v2311
    %v2693 = vmul.f32 %v2535, %v2535
    %v2694 = vmul.f32 %v2537, %v2537
    %v2695 = vmul.f32 %v2315, %v2315
    %v2696 = vmul.f32 %v2317, %v2317
    %v2697 = vmul.f32 %v2541, %v2541
    %v2698 = vmul.f32 %v2543, %v2543
    %v2699 = vmul.f32 %v2319, %v2319
    %v2700 = vmul.f32 %v2321, %v2321
    %v2701 = vmul.f32 %v2545, %v2545
    %v2702 = vmul.f32 %v2547, %v2547
    %v2703 = vmul.f32 %v2325, %v2325
    %v2704 = vmul.f32 %v2327, %v2327
    %v2705 = vmul.f32 %v2551, %v2551
    %v2706 = vmul.f32 %v2553, %v2553
    %v2707 = vmul.f32 %v2329, %v2329
    %v2708 = vmul.f32 %v2331, %v2331
    %v2709 = vmul.f32 %v2555, %v2555
    %v2710 = vmul.f32 %v2557, %v2557
    %v2711 = vmul.f32 %v2335, %v2335
    %v2712 = vmul.f32 %v2337, %v2337
    %v2713 = vmul.f32 %v2561, %v2561
    %v2714 = vmul.f32 %v2563, %v2563
    %v2715 = vmul.f32 %v2339, %v2339
    %v2716 = vmul.f32 %v2341, %v2341
    %v2717 = vmul.f32 %v2565, %v2565
    %v2718 = vmul.f32 %v2567, %v2567
    %v2719 = vmul.f32 %v2345, %v2345
    %v2720 = vmul.f32 %v2347, %v2347
    %v2721 = vmul.f32 %v2571, %v2571
    %v2722 = vmul.f32 %v2573, %v2573
    %v2723 = vmul.f32 %v2349, %v2349
    %v2724 = vmul.f32 %v2351, %v2351
    %v2725 = vmul.f32 %v2575, %v2575
    %v2726 = vmul.f32 %v2577, %v2577
    %v2727 = vadd.f32 %v2663, %v2667
    %v2728 = vadd.f32 %v2727, %v2671
    %v2729 = vadd.f32 %v2728, %v2675
    %v2730 = vadd.f32 %v2729, %v2679
    %v2731 = vadd.f32 %v2730, %v2683
    %v2732 = vadd.f32 %v2731, %v2687
    %v2733 = vadd.f32 %v2732, %v2691
    %v2734 = vadd.f32 %v2733, %v2695
    %v2735 = vadd.f32 %v2734, %v2699
    %v2736 = vadd.f32 %v2735, %v2703
    %v2737 = vadd.f32 %v2736, %v2707
    %v2738 = vadd.f32 %v2737, %v2711
    %v2739 = vadd.f32 %v2738, %v2715
    %v2740 = vadd.f32 %v2739, %v2719
    %v2741 = vadd.f32 %v2740, %v2723
    %v2742 = vrot.slane %v2741, 4
    %v2743 = vadd.f32 %v2741, %v2742
    %v2744 = vrot.slane %v2743, 2
    %v2745 = vadd.f32 %v2743, %v2744
    %v2746 = vrot.slane %v2745, 1
    %v2747 = vadd.f32 %v2745, %v2746
    %v2748 = vadd.f32 %v2664, %v2668
    %v2749 = vadd.f32 %v2748, %v2672
    %v2750 = vadd.f32 %v2749, %v2676
    %v2751 = vadd.f32 %v2750, %v2680
    %v2752 = vadd.f32 %v2751, %v2684
    %v2753 = vadd.f32 %v2752, %v2688
    %v2754 = vadd.f32 %v2753, %v2692
    %v2755 = vadd.f32 %v2754, %v2696
    %v2756 = vadd.f32 %v2755, %v2700
    %v2757 = vadd.f32 %v2756, %v2704
    %v2758 = vadd.f32 %v2757, %v2708
    %v2759 = vadd.f32 %v2758, %v2712
    %v2760 = vadd.f32 %v2759, %v2716
    %v2761 = vadd.f32 %v2760, %v2720
    %v2762 = vadd.f32 %v2761, %v2724
    %v2763 = vrot.slane %v2762, 4
    %v2764 = vadd.f32 %v2762, %v2763
    %v2765 = vrot.slane %v2764, 2
    %v2766 = vadd.f32 %v2764, %v2765
    %v2767 = vrot.slane %v2766, 1
    %v2768 = vadd.f32 %v2766, %v2767
    %v2769 = vadd.f32 %v2665, %v2669
    %v2770 = vadd.f32 %v2769, %v2673
    %v2771 = vadd.f32 %v2770, %v2677
    %v2772 = vadd.f32 %v2771, %v2681
    %v2773 = vadd.f32 %v2772, %v2685
    %v2774 = vadd.f32 %v2773, %v2689
    %v2775 = vadd.f32 %v2774, %v2693
    %v2776 = vadd.f32 %v2775, %v2697
    %v2777 = vadd.f32 %v2776, %v2701
    %v2778 = vadd.f32 %v2777, %v2705
    %v2779 = vadd.f32 %v2778, %v2709
    %v2780 = vadd.f32 %v2779, %v2713
    %v2781 = vadd.f32 %v2780, %v2717
    %v2782 = vadd.f32 %v2781, %v2721
    %v2783 = vadd.f32 %v2782, %v2725
    %v2784 = vrot.slane %v2783, 4
    %v2785 = vadd.f32 %v2783, %v2784
    %v2786 = vrot.slane %v2785, 2
    %v2787 = vadd.f32 %v2785, %v2786
    %v2788 = vrot.slane %v2787, 1
    %v2789 = vadd.f32 %v2787, %v2788
    %v2790 = vadd.f32 %v2666, %v2670
    %v2791 = vadd.f32 %v2790, %v2674
    %v2792 = vadd.f32 %v2791, %v2678
    %v2793 = vadd.f32 %v2792, %v2682
    %v2794 = vadd.f32 %v2793, %v2686
    %v2795 = vadd.f32 %v2794, %v2690
    %v2796 = vadd.f32 %v2795, %v2694
    %v2797 = vadd.f32 %v2796, %v2698
    %v2798 = vadd.f32 %v2797, %v2702
    %v2799 = vadd.f32 %v2798, %v2706
    %v2800 = vadd.f32 %v2799, %v2710
    %v2801 = vadd.f32 %v2800, %v2714
    %v2802 = vadd.f32 %v2801, %v2718
    %v2803 = vadd.f32 %v2802, %v2722
    %v2804 = vadd.f32 %v2803, %v2726
    %v2805 = vrot.slane %v2804, 4
    %v2806 = vadd.f32 %v2804, %v2805
    %v2807 = vrot.slane %v2806, 2
    %v2808 = vadd.f32 %v2806, %v2807
    %v2809 = vrot.slane %v2808, 1
    %v2810 = vadd.f32 %v2808, %v2809
    %v2811 = vmul.f32 %v2599, 0.0078125
    %v2812 = vmul.f32 %v2620, 0.0078125
    %v2813 = vmul.f32 %v2641, 0.0078125
    %v2814 = vmul.f32 %v2662, 0.0078125
    %v2815 = vmul.f32 %v2747, 0.0078125
    %v2816 = vmul.f32 %v2768, 0.0078125
    %v2817 = vmul.f32 %v2789, 0.0078125
    %v2818 = vmul.f32 %v2810, 0.0078125
    %v2819 = vmul.f32 %v2811, %v2811
    %v2820 = vmul.f32 %v2812, %v2812
    %v2821 = vmul.f32 %v2813, %v2813
    %v2822 = vmul.f32 %v2814, %v2814
    %v2823 = vsub.f32 %v2815, %v2819
    %v2824 = vsub.f32 %v2816, %v2820
    %v2825 = vsub.f32 %v2817, %v2821
    %v2826 = vsub.f32 %v2818, %v2822
    %v2827 = vmax.f32 %v2823, 0.0
    %v2828 = vmax.f32 %v2824, 0.0
    %v2829 = vmax.f32 %v2825, 0.0
    %v2830 = vmax.f32 %v2826, 0.0
    %v2831 = vld [vmem:[%s6] sm:$0xf]
    %v2832 = vadd.f32 %v2827, 1e-05
    %v2833 = vadd.f32 %v2828, 1e-05
    %v2834 = vadd.f32 %v2829, 1e-05
    %v2835 = vadd.f32 %v2830, 1e-05
    %v2836 = vrsqrt.pop %v2832
    %v2837 = vrsqrt.pop %v2833
    %v2838 = vrsqrt.pop %v2834
    %v2839 = vrsqrt.pop %v2835
    %v2844 = vcombine.low %v2836, %v2837
    %v2845 = vcombine.low %v2838, %v2839
    %v2847 = vunpack.c.l.s4 1966171168
    %v2848 = vunpack.c.0.s8 %v2847
    %v2849 = vlaneseq
    %v2850 = vshrl.u32 %v2849, 7
    %v2851 = vsub.s32 %v2848, %v2850
    %v2852 = vrot.slane %v2844, %v2851
    %v2854 = vunpack.c.l.s4 1966171168
    %v2855 = vunpack.c.0.s8 %v2854
    %v2856 = vlaneseq
    %v2857 = vshrl.u32 %v2856, 7
    %v2858 = vsub.s32 %v2855, %v2857
    %v2859 = vrot.slane %v2845, %v2858
    %v2860 = vcombine.low %v2852, %v2859
    %v2862 = vunpack.c.l.s4 1966171168
    %v2863 = vunpack.c.0.s8 %v2862
    %v2864 = vlaneseq
    %v2865 = vshrl.u32 %v2864, 7
    %v2866 = vsub.s32 %v2863, %v2865
    %v2867 = vrot.slane %v2860, %v2866
    %v2869 = vmul.f32 %v2831, %v2867
    %v2870 = vld [vmem:[%s7] sm:$0xf]
    %v2872 = vlaneseq
    %v2873 = vshrl.u32 %v2872, 7
    %v2874 = vsub.s32 0, %v2873
    %v2875 = vrot.slane %v2869, %v2874
    %v2876 = vlaneseq
    %v2877 = vshrl.u32 %v2876, 7
    %v2878 = vsub.s32 1, %v2877
    %v2879 = vrot.slane %v2869, %v2878
    %v2880 = vlaneseq
    %v2881 = vshrl.u32 %v2880, 7
    %v2882 = vsub.s32 2, %v2881
    %v2883 = vrot.slane %v2869, %v2882
    %v2884 = vlaneseq
    %v2885 = vshrl.u32 %v2884, 7
    %v2886 = vsub.s32 3, %v2885
    %v2887 = vrot.slane %v2869, %v2886
    %v2892 = vmul.f32 %v2811, %v2875
    %v2893 = vmul.f32 %v2812, %v2879
    %v2894 = vmul.f32 %v2813, %v2883
    %v2895 = vmul.f32 %v2814, %v2887
    %v2900 = vcombine.low %v2892, %v2893
    %v2901 = vcombine.low %v2894, %v2895
    %v2903 = vunpack.c.l.s4 1966171168
    %v2904 = vunpack.c.0.s8 %v2903
    %v2905 = vlaneseq
    %v2906 = vshrl.u32 %v2905, 7
    %v2907 = vsub.s32 %v2904, %v2906
    %v2908 = vrot.slane %v2900, %v2907
    %v2910 = vunpack.c.l.s4 1966171168
    %v2911 = vunpack.c.0.s8 %v2910
    %v2912 = vlaneseq
    %v2913 = vshrl.u32 %v2912, 7
    %v2914 = vsub.s32 %v2911, %v2913
    %v2915 = vrot.slane %v2901, %v2914
    %v2916 = vcombine.low %v2908, %v2915
    %v2918 = vunpack.c.l.s4 1966171168
    %v2919 = vunpack.c.0.s8 %v2918
    %v2920 = vlaneseq
    %v2921 = vshrl.u32 %v2920, 7
    %v2922 = vsub.s32 %v2919, %v2921
    %v2923 = vrot.slane %v2916, %v2922
    %v2925 = vsub.f32 %v2870, %v2923
    %v2926 = vmul.f32 %v2275, %v2875
    %v2927 = vmul.f32 %v2277, %v2879
    %v2928 = vmul.f32 %v2501, %v2883
    %v2929 = vmul.f32 %v2503, %v2887
    %v2930 = vmul.f32 %v2279, %v2875
    %v2931 = vmul.f32 %v2281, %v2879
    %v2932 = vmul.f32 %v2505, %v2883
    %v2933 = vmul.f32 %v2507, %v2887
    %v2934 = vmul.f32 %v2285, %v2875
    %v2935 = vmul.f32 %v2287, %v2879
    %v2936 = vmul.f32 %v2511, %v2883
    %v2937 = vmul.f32 %v2513, %v2887
    %v2938 = vmul.f32 %v2289, %v2875
    %v2939 = vmul.f32 %v2291, %v2879
    %v2940 = vmul.f32 %v2515, %v2883
    %v2941 = vmul.f32 %v2517, %v2887
    %v2942 = vmul.f32 %v2295, %v2875
    %v2943 = vmul.f32 %v2297, %v2879
    %v2944 = vmul.f32 %v2521, %v2883
    %v2945 = vmul.f32 %v2523, %v2887
    %v2946 = vmul.f32 %v2299, %v2875
    %v2947 = vmul.f32 %v2301, %v2879
    %v2948 = vmul.f32 %v2525, %v2883
    %v2949 = vmul.f32 %v2527, %v2887
    %v2950 = vmul.f32 %v2305, %v2875
    %v2951 = vmul.f32 %v2307, %v2879
    %v2952 = vmul.f32 %v2531, %v2883
    %v2953 = vmul.f32 %v2533, %v2887
    %v2954 = vmul.f32 %v2309, %v2875
    %v2955 = vmul.f32 %v2311, %v2879
    %v2956 = vmul.f32 %v2535, %v2883
    %v2957 = vmul.f32 %v2537, %v2887
    %v2958 = vmul.f32 %v2315, %v2875
    %v2959 = vmul.f32 %v2317, %v2879
    %v2960 = vmul.f32 %v2541, %v2883
    %v2961 = vmul.f32 %v2543, %v2887
    %v2962 = vmul.f32 %v2319, %v2875
    %v2963 = vmul.f32 %v2321, %v2879
    %v2964 = vmul.f32 %v2545, %v2883
    %v2965 = vmul.f32 %v2547, %v2887
    %v2966 = vmul.f32 %v2325, %v2875
    %v2967 = vmul.f32 %v2327, %v2879
    %v2968 = vmul.f32 %v2551, %v2883
    %v2969 = vmul.f32 %v2553, %v2887
    %v2970 = vmul.f32 %v2329, %v2875
    %v2971 = vmul.f32 %v2331, %v2879
    %v2972 = vmul.f32 %v2555, %v2883
    %v2973 = vmul.f32 %v2557, %v2887
    %v2974 = vmul.f32 %v2335, %v2875
    %v2975 = vmul.f32 %v2337, %v2879
    %v2976 = vmul.f32 %v2561, %v2883
    %v2977 = vmul.f32 %v2563, %v2887
    %v2978 = vmul.f32 %v2339, %v2875
    %v2979 = vmul.f32 %v2341, %v2879
    %v2980 = vmul.f32 %v2565, %v2883
    %v2981 = vmul.f32 %v2567, %v2887
    %v2982 = vmul.f32 %v2345, %v2875
    %v2983 = vmul.f32 %v2347, %v2879
    %v2984 = vmul.f32 %v2571, %v2883
    %v2985 = vmul.f32 %v2573, %v2887
    %v2986 = vmul.f32 %v2349, %v2875
    %v2987 = vmul.f32 %v2351, %v2879
    %v2988 = vmul.f32 %v2575, %v2883
    %v2989 = vmul.f32 %v2577, %v2887
    %v2991 = vlaneseq
    %v2992 = vshrl.u32 %v2991, 7
    %v2993 = vsub.s32 0, %v2992
    %v2994 = vrot.slane %v2925, %v2993
    %v2995 = vlaneseq
    %v2996 = vshrl.u32 %v2995, 7
    %v2997 = vsub.s32 1, %v2996
    %v2998 = vrot.slane %v2925, %v2997
    %v2999 = vlaneseq
    %v3000 = vshrl.u32 %v2999, 7
    %v3001 = vsub.s32 2, %v3000
    %v3002 = vrot.slane %v2925, %v3001
    %v3003 = vlaneseq
    %v3004 = vshrl.u32 %v3003, 7
    %v3005 = vsub.s32 3, %v3004
    %v3006 = vrot.slane %v2925, %v3005
    %v3011 = vadd.f32 %v2926, %v2994
    %v3012 = vadd.f32 %v2927, %v2998
    %v3013 = vadd.f32 %v2928, %v3002
    %v3014 = vadd.f32 %v2929, %v3006
    %v3015 = vadd.f32 %v2930, %v2994
    %v3016 = vadd.f32 %v2931, %v2998
    %v3017 = vadd.f32 %v2932, %v3002
    %v3018 = vadd.f32 %v2933, %v3006
    %v3019 = vadd.f32 %v2934, %v2994
    %v3020 = vadd.f32 %v2935, %v2998
    %v3021 = vadd.f32 %v2936, %v3002
    %v3022 = vadd.f32 %v2937, %v3006
    %v3023 = vadd.f32 %v2938, %v2994
    %v3024 = vadd.f32 %v2939, %v2998
    %v3025 = vadd.f32 %v2940, %v3002
    %v3026 = vadd.f32 %v2941, %v3006
    %v3027 = vadd.f32 %v2942, %v2994
    %v3028 = vadd.f32 %v2943, %v2998
    %v3029 = vadd.f32 %v2944, %v3002
    %v3030 = vadd.f32 %v2945, %v3006
    %v3031 = vadd.f32 %v2946, %v2994
    %v3032 = vadd.f32 %v2947, %v2998
    %v3033 = vadd.f32 %v2948, %v3002
    %v3034 = vadd.f32 %v2949, %v3006
    %v3035 = vadd.f32 %v2950, %v2994
    %v3036 = vadd.f32 %v2951, %v2998
    %v3037 = vadd.f32 %v2952, %v3002
    %v3038 = vadd.f32 %v2953, %v3006
    %v3039 = vadd.f32 %v2954, %v2994
    %v3040 = vadd.f32 %v2955, %v2998
    %v3041 = vadd.f32 %v2956, %v3002
    %v3042 = vadd.f32 %v2957, %v3006
    %v3043 = vadd.f32 %v2958, %v2994
    %v3044 = vadd.f32 %v2959, %v2998
    %v3045 = vadd.f32 %v2960, %v3002
    %v3046 = vadd.f32 %v2961, %v3006
    %v3047 = vadd.f32 %v2962, %v2994
    %v3048 = vadd.f32 %v2963, %v2998
    %v3049 = vadd.f32 %v2964, %v3002
    %v3050 = vadd.f32 %v2965, %v3006
    %v3051 = vadd.f32 %v2966, %v2994
    %v3052 = vadd.f32 %v2967, %v2998
    %v3053 = vadd.f32 %v2968, %v3002
    %v3054 = vadd.f32 %v2969, %v3006
    %v3055 = vadd.f32 %v2970, %v2994
    %v3056 = vadd.f32 %v2971, %v2998
    %v3057 = vadd.f32 %v2972, %v3002
    %v3058 = vadd.f32 %v2973, %v3006
    %v3059 = vadd.f32 %v2974, %v2994
    %v3060 = vadd.f32 %v2975, %v2998
    %v3061 = vadd.f32 %v2976, %v3002
    %v3062 = vadd.f32 %v2977, %v3006
    %v3063 = vadd.f32 %v2978, %v2994
    %v3064 = vadd.f32 %v2979, %v2998
    %v3065 = vadd.f32 %v2980, %v3002
    %v3066 = vadd.f32 %v2981, %v3006
    %v3067 = vadd.f32 %v2982, %v2994
    %v3068 = vadd.f32 %v2983, %v2998
    %v3069 = vadd.f32 %v2984, %v3002
    %v3070 = vadd.f32 %v2985, %v3006
    %v3071 = vadd.f32 %v2986, %v2994
    %v3072 = vadd.f32 %v2987, %v2998
    %v3073 = vadd.f32 %v2988, %v3002
    %v3074 = vadd.f32 %v2989, %v3006
    %v3075 = vmax.f32 %v3011, 0.0
    %v3076 = vmax.f32 %v3012, 0.0
    %v3077 = vmax.f32 %v3013, 0.0
    %v3078 = vmax.f32 %v3014, 0.0
    %v3079 = vmax.f32 %v3015, 0.0
    %v3080 = vmax.f32 %v3016, 0.0
    %v3081 = vmax.f32 %v3017, 0.0
    %v3082 = vmax.f32 %v3018, 0.0
    %v3083 = vmax.f32 %v3019, 0.0
    %v3084 = vmax.f32 %v3020, 0.0
    %v3085 = vmax.f32 %v3021, 0.0
    %v3086 = vmax.f32 %v3022, 0.0
    %v3087 = vmax.f32 %v3023, 0.0
    %v3088 = vmax.f32 %v3024, 0.0
    %v3089 = vmax.f32 %v3025, 0.0
    %v3090 = vmax.f32 %v3026, 0.0
    %v3091 = vmax.f32 %v3027, 0.0
    %v3092 = vmax.f32 %v3028, 0.0
    %v3093 = vmax.f32 %v3029, 0.0
    %v3094 = vmax.f32 %v3030, 0.0
    %v3095 = vmax.f32 %v3031, 0.0
    %v3096 = vmax.f32 %v3032, 0.0
    %v3097 = vmax.f32 %v3033, 0.0
    %v3098 = vmax.f32 %v3034, 0.0
    %v3099 = vmax.f32 %v3035, 0.0
    %v3100 = vmax.f32 %v3036, 0.0
    %v3101 = vmax.f32 %v3037, 0.0
    %v3102 = vmax.f32 %v3038, 0.0
    %v3103 = vmax.f32 %v3039, 0.0
    %v3104 = vmax.f32 %v3040, 0.0
    %v3105 = vmax.f32 %v3041, 0.0
    %v3106 = vmax.f32 %v3042, 0.0
    %v3107 = vmax.f32 %v3043, 0.0
    %v3108 = vmax.f32 %v3044, 0.0
    %v3109 = vmax.f32 %v3045, 0.0
    %v3110 = vmax.f32 %v3046, 0.0
    %v3111 = vmax.f32 %v3047, 0.0
    %v3112 = vmax.f32 %v3048, 0.0
    %v3113 = vmax.f32 %v3049, 0.0
    %v3114 = vmax.f32 %v3050, 0.0
    %v3115 = vmax.f32 %v3051, 0.0
    %v3116 = vmax.f32 %v3052, 0.0
    %v3117 = vmax.f32 %v3053, 0.0
    %v3118 = vmax.f32 %v3054, 0.0
    %v3119 = vmax.f32 %v3055, 0.0
    %v3120 = vmax.f32 %v3056, 0.0
    %v3121 = vmax.f32 %v3057, 0.0
    %v3122 = vmax.f32 %v3058, 0.0
    %v3123 = vmax.f32 %v3059, 0.0
    %v3124 = vmax.f32 %v3060, 0.0
    %v3125 = vmax.f32 %v3061, 0.0
    %v3126 = vmax.f32 %v3062, 0.0
    %v3127 = vmax.f32 %v3063, 0.0
    %v3128 = vmax.f32 %v3064, 0.0
    %v3129 = vmax.f32 %v3065, 0.0
    %v3130 = vmax.f32 %v3066, 0.0
    %v3131 = vmax.f32 %v3067, 0.0
    %v3132 = vmax.f32 %v3068, 0.0
    %v3133 = vmax.f32 %v3069, 0.0
    %v3134 = vmax.f32 %v3070, 0.0
    %v3135 = vmax.f32 %v3071, 0.0
    %v3136 = vmax.f32 %v3072, 0.0
    %v3137 = vmax.f32 %v3073, 0.0
    %v3138 = vmax.f32 %v3074, 0.0
    %v3139 = vpack.c.bf16 %v3079, %v3075
    %v3140 = vpack.c.bf16 %v3080, %v3076
    %v3141 = vpack.c.bf16 %v3081, %v3077
    %v3142 = vpack.c.bf16 %v3082, %v3078
    %v3143 = vpack.c.bf16 %v3087, %v3083
    %v3144 = vpack.c.bf16 %v3088, %v3084
    %v3145 = vpack.c.bf16 %v3089, %v3085
    %v3146 = vpack.c.bf16 %v3090, %v3086
    %v3147 = vpack.c.bf16 %v3095, %v3091
    %v3148 = vpack.c.bf16 %v3096, %v3092
    %v3149 = vpack.c.bf16 %v3097, %v3093
    %v3150 = vpack.c.bf16 %v3098, %v3094
    %v3151 = vpack.c.bf16 %v3103, %v3099
    %v3152 = vpack.c.bf16 %v3104, %v3100
    %v3153 = vpack.c.bf16 %v3105, %v3101
    %v3154 = vpack.c.bf16 %v3106, %v3102
    %v3155 = vpack.c.bf16 %v3111, %v3107
    %v3156 = vpack.c.bf16 %v3112, %v3108
    %v3157 = vpack.c.bf16 %v3113, %v3109
    %v3158 = vpack.c.bf16 %v3114, %v3110
    %v3159 = vpack.c.bf16 %v3119, %v3115
    %v3160 = vpack.c.bf16 %v3120, %v3116
    %v3161 = vpack.c.bf16 %v3121, %v3117
    %v3162 = vpack.c.bf16 %v3122, %v3118
    %v3163 = vpack.c.bf16 %v3127, %v3123
    %v3164 = vpack.c.bf16 %v3128, %v3124
    %v3165 = vpack.c.bf16 %v3129, %v3125
    %v3166 = vpack.c.bf16 %v3130, %v3126
    %v3167 = vpack.c.bf16 %v3135, %v3131
    %v3168 = vpack.c.bf16 %v3136, %v3132
    %v3169 = vpack.c.bf16 %v3137, %v3133
    %v3170 = vpack.c.bf16 %v3138, %v3134
    %v3171 = vld [vmem:[#allocation5] sm:$0xff]
    %v3172 = vld [vmem:[#allocation5 + $0x8] sm:$0xff]
    %v3173 = vld [vmem:[#allocation5 + $0x10] sm:$0xff]
    %v3174 = vld [vmem:[#allocation5 + $0x18] sm:$0xff]
    %v3175 = vld [vmem:[#allocation5 + $0x20] sm:$0xff]
    %v3176 = vld [vmem:[#allocation5 + $0x28] sm:$0xff]
    %v3177 = vld [vmem:[#allocation5 + $0x30] sm:$0xff]
    %v3178 = vld [vmem:[#allocation5 + $0x38] sm:$0xff]
    %v3179 = vld [vmem:[#allocation5 + $0x40] sm:$0xff]
    %v3180 = vld [vmem:[#allocation5 + $0x48] sm:$0xff]
    %v3181 = vld [vmem:[#allocation5 + $0x50] sm:$0xff]
    %v3182 = vld [vmem:[#allocation5 + $0x58] sm:$0xff]
    %v3183 = vld [vmem:[#allocation5 + $0x60] sm:$0xff]
    %v3184 = vld [vmem:[#allocation5 + $0x68] sm:$0xff]
    %v3185 = vld [vmem:[#allocation5 + $0x70] sm:$0xff]
    %v3186 = vld [vmem:[#allocation5 + $0x78] sm:$0xff]
    %v3187 = vld [vmem:[#allocation5 + $0x80] sm:$0xff]
    %v3188 = vld [vmem:[#allocation5 + $0x88] sm:$0xff]
    %v3189 = vld [vmem:[#allocation5 + $0x90] sm:$0xff]
    %v3190 = vld [vmem:[#allocation5 + $0x98] sm:$0xff]
    %v3191 = vld [vmem:[#allocation5 + $0xa0] sm:$0xff]
    %v3192 = vld [vmem:[#allocation5 + $0xa8] sm:$0xff]
    %v3193 = vld [vmem:[#allocation5 + $0xb0] sm:$0xff]
    %v3194 = vld [vmem:[#allocation5 + $0xb8] sm:$0xff]
    %v3195 = vld [vmem:[#allocation5 + $0xc0] sm:$0xff]
    %v3196 = vld [vmem:[#allocation5 + $0xc8] sm:$0xff]
    %v3197 = vld [vmem:[#allocation5 + $0xd0] sm:$0xff]
    %v3198 = vld [vmem:[#allocation5 + $0xd8] sm:$0xff]
    %v3199 = vld [vmem:[#allocation5 + $0xe0] sm:$0xff]
    %v3200 = vld [vmem:[#allocation5 + $0xe8] sm:$0xff]
    %v3201 = vld [vmem:[#allocation5 + $0xf0] sm:$0xff]
    %v3202 = vld [vmem:[#allocation5 + $0xf8] sm:$0xff]
    %v3203 = vld [vmem:[#allocation5 + $0x100] sm:$0xff]
    %v3204 = vld [vmem:[#allocation5 + $0x108] sm:$0xff]
    %v3205 = vld [vmem:[#allocation5 + $0x110] sm:$0xff]
    %v3206 = vld [vmem:[#allocation5 + $0x118] sm:$0xff]
    %v3207 = vld [vmem:[#allocation5 + $0x120] sm:$0xff]
    %v3208 = vld [vmem:[#allocation5 + $0x128] sm:$0xff]
    %v3209 = vld [vmem:[#allocation5 + $0x130] sm:$0xff]
    %v3210 = vld [vmem:[#allocation5 + $0x138] sm:$0xff]
    %v3211 = vld [vmem:[#allocation5 + $0x140] sm:$0xff]
    %v3212 = vld [vmem:[#allocation5 + $0x148] sm:$0xff]
    %v3213 = vld [vmem:[#allocation5 + $0x150] sm:$0xff]
    %v3214 = vld [vmem:[#allocation5 + $0x158] sm:$0xff]
    %v3215 = vld [vmem:[#allocation5 + $0x160] sm:$0xff]
    %v3216 = vld [vmem:[#allocation5 + $0x168] sm:$0xff]
    %v3217 = vld [vmem:[#allocation5 + $0x170] sm:$0xff]
    %v3218 = vld [vmem:[#allocation5 + $0x178] sm:$0xff]
    %v3219 = vld [vmem:[#allocation5 + $0x180] sm:$0xff]
    %v3220 = vld [vmem:[#allocation5 + $0x188] sm:$0xff]
    %v3221 = vld [vmem:[#allocation5 + $0x190] sm:$0xff]
    %v3222 = vld [vmem:[#allocation5 + $0x198] sm:$0xff]
    %v3223 = vld [vmem:[#allocation5 + $0x1a0] sm:$0xff]
    %v3224 = vld [vmem:[#allocation5 + $0x1a8] sm:$0xff]
    %v3225 = vld [vmem:[#allocation5 + $0x1b0] sm:$0xff]
    %v3226 = vld [vmem:[#allocation5 + $0x1b8] sm:$0xff]
    %v3227 = vld [vmem:[#allocation5 + $0x1c0] sm:$0xff]
    %v3228 = vld [vmem:[#allocation5 + $0x1c8] sm:$0xff]
    %v3229 = vld [vmem:[#allocation5 + $0x1d0] sm:$0xff]
    %v3230 = vld [vmem:[#allocation5 + $0x1d8] sm:$0xff]
    %v3231 = vld [vmem:[#allocation5 + $0x1e0] sm:$0xff]
    %v3232 = vld [vmem:[#allocation5 + $0x1e8] sm:$0xff]
    %v3233 = vld [vmem:[#allocation5 + $0x1f0] sm:$0xff]
    %v3234 = vld [vmem:[#allocation5 + $0x1f8] sm:$0xff]
    %v3299 = vunpack.c.l.b16 %v3171
    %v3300 = vunpack.c.h.b16 %v3171
    %v3301 = vunpack.c.l.b16 %v3172
    %v3302 = vunpack.c.h.b16 %v3172
    %v3303 = vunpack.c.l.b16 %v3173
    %v3304 = vunpack.c.h.b16 %v3173
    %v3305 = vunpack.c.l.b16 %v3174
    %v3306 = vunpack.c.h.b16 %v3174
    %v3307 = vunpack.c.l.b16 %v3175
    %v3308 = vunpack.c.h.b16 %v3175
    %v3309 = vunpack.c.l.b16 %v3176
    %v3310 = vunpack.c.h.b16 %v3176
    %v3311 = vunpack.c.l.b16 %v3177
    %v3312 = vunpack.c.h.b16 %v3177
    %v3313 = vunpack.c.l.b16 %v3178
    %v3314 = vunpack.c.h.b16 %v3178
    %v3315 = vunpack.c.l.b16 %v3179
    %v3316 = vunpack.c.h.b16 %v3179
    %v3317 = vunpack.c.l.b16 %v3180
    %v3318 = vunpack.c.h.b16 %v3180
    %v3319 = vunpack.c.l.b16 %v3181
    %v3320 = vunpack.c.h.b16 %v3181
    %v3321 = vunpack.c.l.b16 %v3182
    %v3322 = vunpack.c.h.b16 %v3182
    %v3323 = vunpack.c.l.b16 %v3183
    %v3324 = vunpack.c.h.b16 %v3183
    %v3325 = vunpack.c.l.b16 %v3184
    %v3326 = vunpack.c.h.b16 %v3184
    %v3327 = vunpack.c.l.b16 %v3185
    %v3328 = vunpack.c.h.b16 %v3185
    %v3329 = vunpack.c.l.b16 %v3186
    %v3330 = vunpack.c.h.b16 %v3186
    %v3331 = vunpack.c.l.b16 %v3187
    %v3332 = vunpack.c.h.b16 %v3187
    %v3333 = vunpack.c.l.b16 %v3188
    %v3334 = vunpack.c.h.b16 %v3188
    %v3335 = vunpack.c.l.b16 %v3189
    %v3336 = vunpack.c.h.b16 %v3189
    %v3337 = vunpack.c.l.b16 %v3190
    %v3338 = vunpack.c.h.b16 %v3190
    %v3339 = vunpack.c.l.b16 %v3191
    %v3340 = vunpack.c.h.b16 %v3191
    %v3341 = vunpack.c.l.b16 %v3192
    %v3342 = vunpack.c.h.b16 %v3192
    %v3343 = vunpack.c.l.b16 %v3193
    %v3344 = vunpack.c.h.b16 %v3193
    %v3345 = vunpack.c.l.b16 %v3194
    %v3346 = vunpack.c.h.b16 %v3194
    %v3347 = vunpack.c.l.b16 %v3195
    %v3348 = vunpack.c.h.b16 %v3195
    %v3349 = vunpack.c.l.b16 %v3196
    %v3350 = vunpack.c.h.b16 %v3196
    %v3351 = vunpack.c.l.b16 %v3197
    %v3352 = vunpack.c.h.b16 %v3197
    %v3353 = vunpack.c.l.b16 %v3198
    %v3354 = vunpack.c.h.b16 %v3198
    %v3355 = vunpack.c.l.b16 %v3199
    %v3356 = vunpack.c.h.b16 %v3199
    %v3357 = vunpack.c.l.b16 %v3200
    %v3358 = vunpack.c.h.b16 %v3200
    %v3359 = vunpack.c.l.b16 %v3201
    %v3360 = vunpack.c.h.b16 %v3201
    %v3361 = vunpack.c.l.b16 %v3202
    %v3362 = vunpack.c.h.b16 %v3202
    %v3363 = vunpack.c.l.b16 %v3203
    %v3364 = vunpack.c.h.b16 %v3203
    %v3365 = vunpack.c.l.b16 %v3204
    %v3366 = vunpack.c.h.b16 %v3204
    %v3367 = vunpack.c.l.b16 %v3205
    %v3368 = vunpack.c.h.b16 %v3205
    %v3369 = vunpack.c.l.b16 %v3206
    %v3370 = vunpack.c.h.b16 %v3206
    %v3371 = vunpack.c.l.b16 %v3207
    %v3372 = vunpack.c.h.b16 %v3207
    %v3373 = vunpack.c.l.b16 %v3208
    %v3374 = vunpack.c.h.b16 %v3208
    %v3375 = vunpack.c.l.b16 %v3209
    %v3376 = vunpack.c.h.b16 %v3209
    %v3377 = vunpack.c.l.b16 %v3210
    %v3378 = vunpack.c.h.b16 %v3210
    %v3379 = vunpack.c.l.b16 %v3211
    %v3380 = vunpack.c.h.b16 %v3211
    %v3381 = vunpack.c.l.b16 %v3212
    %v3382 = vunpack.c.h.b16 %v3212
    %v3383 = vunpack.c.l.b16 %v3213
    %v3384 = vunpack.c.h.b16 %v3213
    %v3385 = vunpack.c.l.b16 %v3214
    %v3386 = vunpack.c.h.b16 %v3214
    %v3387 = vunpack.c.l.b16 %v3215
    %v3388 = vunpack.c.h.b16 %v3215
    %v3389 = vunpack.c.l.b16 %v3216
    %v3390 = vunpack.c.h.b16 %v3216
    %v3391 = vunpack.c.l.b16 %v3217
    %v3392 = vunpack.c.h.b16 %v3217
    %v3393 = vunpack.c.l.b16 %v3218
    %v3394 = vunpack.c.h.b16 %v3218
    %v3395 = vunpack.c.l.b16 %v3219
    %v3396 = vunpack.c.h.b16 %v3219
    %v3397 = vunpack.c.l.b16 %v3220
    %v3398 = vunpack.c.h.b16 %v3220
    %v3399 = vunpack.c.l.b16 %v3221
    %v3400 = vunpack.c.h.b16 %v3221
    %v3401 = vunpack.c.l.b16 %v3222
    %v3402 = vunpack.c.h.b16 %v3222
    %v3403 = vunpack.c.l.b16 %v3223
    %v3404 = vunpack.c.h.b16 %v3223
    %v3405 = vunpack.c.l.b16 %v3224
    %v3406 = vunpack.c.h.b16 %v3224
    %v3407 = vunpack.c.l.b16 %v3225
    %v3408 = vunpack.c.h.b16 %v3225
    %v3409 = vunpack.c.l.b16 %v3226
    %v3410 = vunpack.c.h.b16 %v3226
    %v3411 = vunpack.c.l.b16 %v3227
    %v3412 = vunpack.c.h.b16 %v3227
    %v3413 = vunpack.c.l.b16 %v3228
    %v3414 = vunpack.c.h.b16 %v3228
    %v3415 = vunpack.c.l.b16 %v3229
    %v3416 = vunpack.c.h.b16 %v3229
    %v3417 = vunpack.c.l.b16 %v3230
    %v3418 = vunpack.c.h.b16 %v3230
    %v3419 = vunpack.c.l.b16 %v3231
    %v3420 = vunpack.c.h.b16 %v3231
    %v3421 = vunpack.c.l.b16 %v3232
    %v3422 = vunpack.c.h.b16 %v3232
    %v3423 = vunpack.c.l.b16 %v3233
    %v3424 = vunpack.c.h.b16 %v3233
    %v3425 = vunpack.c.l.b16 %v3234
    %v3426 = vunpack.c.h.b16 %v3234
    %v3427 = vpack.c.b16 %v3301, %v3299
    %v3428 = vpack.c.b16 %v3302, %v3300
    %v3429 = vpack.c.b16 %v3305, %v3303
    %v3430 = vpack.c.b16 %v3306, %v3304
    %v3431 = vpack.c.b16 %v3309, %v3307
    %v3432 = vpack.c.b16 %v3310, %v3308
    %v3433 = vpack.c.b16 %v3313, %v3311
    %v3434 = vpack.c.b16 %v3314, %v3312
    %v3435 = vpack.c.b16 %v3317, %v3315
    %v3436 = vpack.c.b16 %v3318, %v3316
    %v3437 = vpack.c.b16 %v3321, %v3319
    %v3438 = vpack.c.b16 %v3322, %v3320
    %v3439 = vpack.c.b16 %v3325, %v3323
    %v3440 = vpack.c.b16 %v3326, %v3324
    %v3441 = vpack.c.b16 %v3329, %v3327
    %v3442 = vpack.c.b16 %v3330, %v3328
    %v3443 = vpack.c.b16 %v3333, %v3331
    %v3444 = vpack.c.b16 %v3334, %v3332
    %v3445 = vpack.c.b16 %v3337, %v3335
    %v3446 = vpack.c.b16 %v3338, %v3336
    %v3447 = vpack.c.b16 %v3341, %v3339
    %v3448 = vpack.c.b16 %v3342, %v3340
    %v3449 = vpack.c.b16 %v3345, %v3343
    %v3450 = vpack.c.b16 %v3346, %v3344
    %v3451 = vpack.c.b16 %v3349, %v3347
    %v3452 = vpack.c.b16 %v3350, %v3348
    %v3453 = vpack.c.b16 %v3353, %v3351
    %v3454 = vpack.c.b16 %v3354, %v3352
    %v3455 = vpack.c.b16 %v3357, %v3355
    %v3456 = vpack.c.b16 %v3358, %v3356
    %v3457 = vpack.c.b16 %v3361, %v3359
    %v3458 = vpack.c.b16 %v3362, %v3360
    %v3459 = vpack.c.b16 %v3365, %v3363
    %v3460 = vpack.c.b16 %v3366, %v3364
    %v3461 = vpack.c.b16 %v3369, %v3367
    %v3462 = vpack.c.b16 %v3370, %v3368
    %v3463 = vpack.c.b16 %v3373, %v3371
    %v3464 = vpack.c.b16 %v3374, %v3372
    %v3465 = vpack.c.b16 %v3377, %v3375
    %v3466 = vpack.c.b16 %v3378, %v3376
    %v3467 = vpack.c.b16 %v3381, %v3379
    %v3468 = vpack.c.b16 %v3382, %v3380
    %v3469 = vpack.c.b16 %v3385, %v3383
    %v3470 = vpack.c.b16 %v3386, %v3384
    %v3471 = vpack.c.b16 %v3389, %v3387
    %v3472 = vpack.c.b16 %v3390, %v3388
    %v3473 = vpack.c.b16 %v3393, %v3391
    %v3474 = vpack.c.b16 %v3394, %v3392
    %v3475 = vpack.c.b16 %v3397, %v3395
    %v3476 = vpack.c.b16 %v3398, %v3396
    %v3477 = vpack.c.b16 %v3401, %v3399
    %v3478 = vpack.c.b16 %v3402, %v3400
    %v3479 = vpack.c.b16 %v3405, %v3403
    %v3480 = vpack.c.b16 %v3406, %v3404
    %v3481 = vpack.c.b16 %v3409, %v3407
    %v3482 = vpack.c.b16 %v3410, %v3408
    %v3483 = vpack.c.b16 %v3413, %v3411
    %v3484 = vpack.c.b16 %v3414, %v3412
    %v3485 = vpack.c.b16 %v3417, %v3415
    %v3486 = vpack.c.b16 %v3418, %v3416
    %v3487 = vpack.c.b16 %v3421, %v3419
    %v3488 = vpack.c.b16 %v3422, %v3420
    %v3489 = vpack.c.b16 %v3425, %v3423
    %v3490 = vpack.c.b16 %v3426, %v3424
    %3555 = vmatprep.subr.bf16.mxu0 %v3442
    %3556 = vmatpush1.bf16.msra.mxu0 %v3441
    %3557 = vmatprep.subr.bf16.mxu0 %v3440
    %3558 = vmatpush1.bf16.msra.mxu0 %v3439
    %3559 = vmatprep.subr.bf16.mxu0 %v3438
    %3560 = vmatpush1.bf16.msra.mxu0 %v3437
    %3561 = vmatprep.subr.bf16.mxu0 %v3436
    %3562 = vmatpush1.bf16.msra.mxu0 %v3435
    %3563 = vmatprep.subr.bf16.mxu0 %v3434
    %3564 = vmatpush1.bf16.msra.mxu0 %v3433
    %3565 = vmatprep.subr.bf16.mxu0 %v3432
    %3566 = vmatpush1.bf16.msra.mxu0 %v3431
    %3567 = vmatprep.subr.bf16.mxu0 %v3430
    %3568 = vmatpush1.bf16.msra.mxu0 %v3429
    %3569 = vmatprep.subr.bf16.mxu0 %v3428
    %3570 = vmatpush1.bf16.msra.mxu0 %v3427
    %3571 = vmatprep.subr.bf16.mxu0 %v3458
    %3572 = vmatpush2.bf16.msra.mxu0 %v3457
    %3573 = vmatprep.subr.bf16.mxu0 %v3456
    %3574 = vmatpush2.bf16.msra.mxu0 %v3455
    %3575 = vmatprep.subr.bf16.mxu0 %v3454
    %3576 = vmatpush2.bf16.msra.mxu0 %v3453
    %3577 = vmatprep.subr.bf16.mxu0 %v3452
    %3578 = vmatpush2.bf16.msra.mxu0 %v3451
    %3579 = vmatprep.subr.bf16.mxu0 %v3450
    %3580 = vmatpush2.bf16.msra.mxu0 %v3449
    %3581 = vmatprep.subr.bf16.mxu0 %v3448
    %3582 = vmatpush2.bf16.msra.mxu0 %v3447
    %3583 = vmatprep.subr.bf16.mxu0 %v3446
    %3584 = vmatpush2.bf16.msra.mxu0 %v3445
    %3585 = vmatprep.subr.bf16.mxu0 %v3444
    %3586 = vmatpush2.bf16.msra.mxu0 %v3443
    %3587 = vmatprep.mubr.bf16.mxu0 %v3140
    %3588 = vmatmul.mubr.bf16.gmra.mxu0 %v3139
    %v3589 = vpop.f32.mrf.mxu0
    %v3590 = vadd.f32 0.0, %v3589
    %v3591 = vpop.f32.mrf.mxu0
    %v3592 = vadd.f32 0.0, %v3591
    %v3593 = vpop.f32.mrf.mxu0
    %v3594 = vadd.f32 0.0, %v3593
    %v3595 = vpop.f32.mrf.mxu0
    %v3596 = vadd.f32 0.0, %v3595
    %3597 = vmatprep.mubr.bf16.mxu0 %v3144
    %3598 = vmatmul.mubr.bf16.gmra.mxu0 %v3143
    %v3599 = vpop.f32.mrf.mxu0
    %v3600 = vadd.f32 0.0, %v3599
    %v3601 = vpop.f32.mrf.mxu0
    %v3602 = vadd.f32 0.0, %v3601
    %v3603 = vpop.f32.mrf.mxu0
    %v3604 = vadd.f32 0.0, %v3603
    %v3605 = vpop.f32.mrf.mxu0
    %v3606 = vadd.f32 0.0, %v3605
    %3607 = vmatprep.mubr.bf16.mxu0 %v3148
    %3608 = vmatmul.mubr.bf16.gmra.mxu0 %v3147
    %v3609 = vpop.f32.mrf.mxu0
    %v3610 = vadd.f32 0.0, %v3609
    %v3611 = vpop.f32.mrf.mxu0
    %v3612 = vadd.f32 0.0, %v3611
    %v3613 = vpop.f32.mrf.mxu0
    %v3614 = vadd.f32 0.0, %v3613
    %v3615 = vpop.f32.mrf.mxu0
    %v3616 = vadd.f32 0.0, %v3615
    %3617 = vmatprep.mubr.bf16.mxu0 %v3152
    %3618 = vmatmul.mubr.bf16.gmra.mxu0 %v3151
    %v3619 = vpop.f32.mrf.mxu0
    %v3620 = vadd.f32 0.0, %v3619
    %v3621 = vpop.f32.mrf.mxu0
    %v3622 = vadd.f32 0.0, %v3621
    %v3623 = vpop.f32.mrf.mxu0
    %v3624 = vadd.f32 0.0, %v3623
    %v3625 = vpop.f32.mrf.mxu0
    %v3626 = vadd.f32 0.0, %v3625
    %3627 = vmatprep.mubr.bf16.mxu0 %v3156
    %3628 = vmatmul.mubr.bf16.gmra.mxu0 %v3155
    %v3629 = vpop.f32.mrf.mxu0
    %v3630 = vadd.f32 0.0, %v3629
    %v3631 = vpop.f32.mrf.mxu0
    %v3632 = vadd.f32 0.0, %v3631
    %v3633 = vpop.f32.mrf.mxu0
    %v3634 = vadd.f32 0.0, %v3633
    %v3635 = vpop.f32.mrf.mxu0
    %v3636 = vadd.f32 0.0, %v3635
    %3637 = vmatprep.mubr.bf16.mxu0 %v3160
    %3638 = vmatmul.mubr.bf16.gmra.mxu0 %v3159
    %v3639 = vpop.f32.mrf.mxu0
    %v3640 = vadd.f32 0.0, %v3639
    %v3641 = vpop.f32.mrf.mxu0
    %v3642 = vadd.f32 0.0, %v3641
    %v3643 = vpop.f32.mrf.mxu0
    %v3644 = vadd.f32 0.0, %v3643
    %v3645 = vpop.f32.mrf.mxu0
    %v3646 = vadd.f32 0.0, %v3645
    %3647 = vmatprep.mubr.bf16.mxu0 %v3164
    %3648 = vmatmul.mubr.bf16.gmra.mxu0 %v3163
    %v3649 = vpop.f32.mrf.mxu0
    %v3650 = vadd.f32 0.0, %v3649
    %v3651 = vpop.f32.mrf.mxu0
    %v3652 = vadd.f32 0.0, %v3651
    %v3653 = vpop.f32.mrf.mxu0
    %v3654 = vadd.f32 0.0, %v3653
    %v3655 = vpop.f32.mrf.mxu0
    %v3656 = vadd.f32 0.0, %v3655
    %3657 = vmatprep.mubr.bf16.mxu0 %v3168
    %3658 = vmatmul.mubr.bf16.gmra.mxu0 %v3167
    %v3659 = vpop.f32.mrf.mxu0
    %v3660 = vadd.f32 0.0, %v3659
    %v3661 = vpop.f32.mrf.mxu0
    %v3662 = vadd.f32 0.0, %v3661
    %v3663 = vpop.f32.mrf.mxu0
    %v3664 = vadd.f32 0.0, %v3663
    %v3665 = vpop.f32.mrf.mxu0
    %v3666 = vadd.f32 0.0, %v3665
    %3667 = vdwg.mxu0
    %3668 = vmatprep.subr.bf16.mxu0 %v3474
    %3669 = vmatpush1.bf16.msra.mxu0 %v3473
    %3670 = vmatprep.subr.bf16.mxu0 %v3472
    %3671 = vmatpush1.bf16.msra.mxu0 %v3471
    %3672 = vmatprep.subr.bf16.mxu0 %v3470
    %3673 = vmatpush1.bf16.msra.mxu0 %v3469
    %3674 = vmatprep.subr.bf16.mxu0 %v3468
    %3675 = vmatpush1.bf16.msra.mxu0 %v3467
    %3676 = vmatprep.subr.bf16.mxu0 %v3466
    %3677 = vmatpush1.bf16.msra.mxu0 %v3465
    %3678 = vmatprep.subr.bf16.mxu0 %v3464
    %3679 = vmatpush1.bf16.msra.mxu0 %v3463
    %3680 = vmatprep.subr.bf16.mxu0 %v3462
    %3681 = vmatpush1.bf16.msra.mxu0 %v3461
    %3682 = vmatprep.subr.bf16.mxu0 %v3460
    %3683 = vmatpush1.bf16.msra.mxu0 %v3459
    %3684 = vmatprep.subr.bf16.mxu0 %v3490
    %3685 = vmatpush2.bf16.msra.mxu0 %v3489
    %3686 = vmatprep.subr.bf16.mxu0 %v3488
    %3687 = vmatpush2.bf16.msra.mxu0 %v3487
    %3688 = vmatprep.subr.bf16.mxu0 %v3486
    %3689 = vmatpush2.bf16.msra.mxu0 %v3485
    %3690 = vmatprep.subr.bf16.mxu0 %v3484
    %3691 = vmatpush2.bf16.msra.mxu0 %v3483
    %3692 = vmatprep.subr.bf16.mxu0 %v3482
    %3693 = vmatpush2.bf16.msra.mxu0 %v3481
    %3694 = vmatprep.subr.bf16.mxu0 %v3480
    %3695 = vmatpush2.bf16.msra.mxu0 %v3479
    %3696 = vmatprep.subr.bf16.mxu0 %v3478
    %3697 = vmatpush2.bf16.msra.mxu0 %v3477
    %3698 = vmatprep.subr.bf16.mxu0 %v3476
    %3699 = vmatpush2.bf16.msra.mxu0 %v3475
    %3700 = vmatprep.mubr.bf16.mxu0 %v3142
    %3701 = vmatmul.mubr.bf16.gmra.mxu0 %v3141
    %v3702 = vpop.f32.mrf.mxu0
    %v3703 = vadd.f32 %v3590, %v3702
    %v3704 = vpop.f32.mrf.mxu0
    %v3705 = vadd.f32 %v3592, %v3704
    %v3706 = vpop.f32.mrf.mxu0
    %v3707 = vadd.f32 %v3594, %v3706
    %v3708 = vpop.f32.mrf.mxu0
    %v3709 = vadd.f32 %v3596, %v3708
    %3710 = vmatprep.mubr.bf16.mxu0 %v3146
    %3711 = vmatmul.mubr.bf16.gmra.mxu0 %v3145
    %v3712 = vpop.f32.mrf.mxu0
    %v3713 = vadd.f32 %v3600, %v3712
    %v3714 = vpop.f32.mrf.mxu0
    %v3715 = vadd.f32 %v3602, %v3714
    %v3716 = vpop.f32.mrf.mxu0
    %v3717 = vadd.f32 %v3604, %v3716
    %v3718 = vpop.f32.mrf.mxu0
    %v3719 = vadd.f32 %v3606, %v3718
    %3720 = vmatprep.mubr.bf16.mxu0 %v3150
    %3721 = vmatmul.mubr.bf16.gmra.mxu0 %v3149
    %v3722 = vpop.f32.mrf.mxu0
    %v3723 = vadd.f32 %v3610, %v3722
    %v3724 = vpop.f32.mrf.mxu0
    %v3725 = vadd.f32 %v3612, %v3724
    %v3726 = vpop.f32.mrf.mxu0
    %v3727 = vadd.f32 %v3614, %v3726
    %v3728 = vpop.f32.mrf.mxu0
    %v3729 = vadd.f32 %v3616, %v3728
    %3730 = vmatprep.mubr.bf16.mxu0 %v3154
    %3731 = vmatmul.mubr.bf16.gmra.mxu0 %v3153
    %v3732 = vpop.f32.mrf.mxu0
    %v3733 = vadd.f32 %v3620, %v3732
    %v3734 = vpop.f32.mrf.mxu0
    %v3735 = vadd.f32 %v3622, %v3734
    %v3736 = vpop.f32.mrf.mxu0
    %v3737 = vadd.f32 %v3624, %v3736
    %v3738 = vpop.f32.mrf.mxu0
    %v3739 = vadd.f32 %v3626, %v3738
    %3740 = vmatprep.mubr.bf16.mxu0 %v3158
    %3741 = vmatmul.mubr.bf16.gmra.mxu0 %v3157
    %v3742 = vpop.f32.mrf.mxu0
    %v3743 = vadd.f32 %v3630, %v3742
    %v3744 = vpop.f32.mrf.mxu0
    %v3745 = vadd.f32 %v3632, %v3744
    %v3746 = vpop.f32.mrf.mxu0
    %v3747 = vadd.f32 %v3634, %v3746
    %v3748 = vpop.f32.mrf.mxu0
    %v3749 = vadd.f32 %v3636, %v3748
    %3750 = vmatprep.mubr.bf16.mxu0 %v3162
    %3751 = vmatmul.mubr.bf16.gmra.mxu0 %v3161
    %v3752 = vpop.f32.mrf.mxu0
    %v3753 = vadd.f32 %v3640, %v3752
    %v3754 = vpop.f32.mrf.mxu0
    %v3755 = vadd.f32 %v3642, %v3754
    %v3756 = vpop.f32.mrf.mxu0
    %v3757 = vadd.f32 %v3644, %v3756
    %v3758 = vpop.f32.mrf.mxu0
    %v3759 = vadd.f32 %v3646, %v3758
    %3760 = vmatprep.mubr.bf16.mxu0 %v3166
    %3761 = vmatmul.mubr.bf16.gmra.mxu0 %v3165
    %v3762 = vpop.f32.mrf.mxu0
    %v3763 = vadd.f32 %v3650, %v3762
    %v3764 = vpop.f32.mrf.mxu0
    %v3765 = vadd.f32 %v3652, %v3764
    %v3766 = vpop.f32.mrf.mxu0
    %v3767 = vadd.f32 %v3654, %v3766
    %v3768 = vpop.f32.mrf.mxu0
    %v3769 = vadd.f32 %v3656, %v3768
    %3770 = vmatprep.mubr.bf16.mxu0 %v3170
    %3771 = vmatmul.mubr.bf16.gmra.mxu0 %v3169
    %v3772 = vpop.f32.mrf.mxu0
    %v3773 = vadd.f32 %v3660, %v3772
    %v3774 = vpop.f32.mrf.mxu0
    %v3775 = vadd.f32 %v3662, %v3774
    %v3776 = vpop.f32.mrf.mxu0
    %v3777 = vadd.f32 %v3664, %v3776
    %v3778 = vpop.f32.mrf.mxu0
    %v3779 = vadd.f32 %v3666, %v3778
    %3780 = vdwg.mxu0
    %v3781 = vld [vmem:[%s1] sm:$0xff]
    %v3782 = vld [vmem:[%s1 + $0x8] sm:$0xff]
    %v3783 = vld [vmem:[%s1 + $0x10] sm:$0xff]
    %v3784 = vld [vmem:[%s1 + $0x18] sm:$0xff]
    %v3785 = vld [vmem:[%s1 + $0x20] sm:$0xff]
    %v3786 = vld [vmem:[%s1 + $0x28] sm:$0xff]
    %v3787 = vld [vmem:[%s1 + $0x30] sm:$0xff]
    %v3788 = vld [vmem:[%s1 + $0x38] sm:$0xff]
    %v3789 = vld [vmem:[%s1 + $0x40] sm:$0xff]
    %v3790 = vld [vmem:[%s1 + $0x48] sm:$0xff]
    %v3791 = vld [vmem:[%s1 + $0x50] sm:$0xff]
    %v3792 = vld [vmem:[%s1 + $0x58] sm:$0xff]
    %v3793 = vld [vmem:[%s1 + $0x60] sm:$0xff]
    %v3794 = vld [vmem:[%s1 + $0x68] sm:$0xff]
    %v3795 = vld [vmem:[%s1 + $0x70] sm:$0xff]
    %v3796 = vld [vmem:[%s1 + $0x78] sm:$0xff]
    %v3813 = vunpack.c.l.b16 %v3781
    %v3814 = vunpack.c.h.b16 %v3781
    %v3815 = vunpack.c.l.b16 %v3782
    %v3816 = vunpack.c.h.b16 %v3782
    %v3817 = vunpack.c.l.b16 %v3783
    %v3818 = vunpack.c.h.b16 %v3783
    %v3819 = vunpack.c.l.b16 %v3784
    %v3820 = vunpack.c.h.b16 %v3784
    %v3821 = vunpack.c.l.b16 %v3785
    %v3822 = vunpack.c.h.b16 %v3785
    %v3823 = vunpack.c.l.b16 %v3786
    %v3824 = vunpack.c.h.b16 %v3786
    %v3825 = vunpack.c.l.b16 %v3787
    %v3826 = vunpack.c.h.b16 %v3787
    %v3827 = vunpack.c.l.b16 %v3788
    %v3828 = vunpack.c.h.b16 %v3788
    %v3829 = vunpack.c.l.b16 %v3789
    %v3830 = vunpack.c.h.b16 %v3789
    %v3831 = vunpack.c.l.b16 %v3790
    %v3832 = vunpack.c.h.b16 %v3790
    %v3833 = vunpack.c.l.b16 %v3791
    %v3834 = vunpack.c.h.b16 %v3791
    %v3835 = vunpack.c.l.b16 %v3792
    %v3836 = vunpack.c.h.b16 %v3792
    %v3837 = vunpack.c.l.b16 %v3793
    %v3838 = vunpack.c.h.b16 %v3793
    %v3839 = vunpack.c.l.b16 %v3794
    %v3840 = vunpack.c.h.b16 %v3794
    %v3841 = vunpack.c.l.b16 %v3795
    %v3842 = vunpack.c.h.b16 %v3795
    %v3843 = vunpack.c.l.b16 %v3796
    %v3844 = vunpack.c.h.b16 %v3796
    %v3845 = vpack.c.b16 %v3815, %v3813
    %v3846 = vpack.c.b16 %v3816, %v3814
    %v3847 = vpack.c.b16 %v3819, %v3817
    %v3848 = vpack.c.b16 %v3820, %v3818
    %v3849 = vpack.c.b16 %v3823, %v3821
    %v3850 = vpack.c.b16 %v3824, %v3822
    %v3851 = vpack.c.b16 %v3827, %v3825
    %v3852 = vpack.c.b16 %v3828, %v3826
    %v3853 = vpack.c.b16 %v3831, %v3829
    %v3854 = vpack.c.b16 %v3832, %v3830
    %v3855 = vpack.c.b16 %v3835, %v3833
    %v3856 = vpack.c.b16 %v3836, %v3834
    %v3857 = vpack.c.b16 %v3839, %v3837
    %v3858 = vpack.c.b16 %v3840, %v3838
    %v3859 = vpack.c.b16 %v3843, %v3841
    %v3860 = vpack.c.b16 %v3844, %v3842
    %3877 = vmatprep.subr.bf16.mxu0 %v442
    %3878 = vmatpush1.bf16.msra.mxu0 %v441
    %3879 = vmatprep.subr.bf16.mxu0 %v438
    %3880 = vmatpush1.bf16.msra.mxu0 %v437
    %3881 = vmatprep.subr.bf16.mxu0 %v434
    %3882 = vmatpush1.bf16.msra.mxu0 %v433
    %3883 = vmatprep.subr.bf16.mxu0 %v430
    %3884 = vmatpush1.bf16.msra.mxu0 %v429
    %3885 = vmatprep.subr.bf16.mxu0 %v426
    %3886 = vmatpush1.bf16.msra.mxu0 %v425
    %3887 = vmatprep.subr.bf16.mxu0 %v422
    %3888 = vmatpush1.bf16.msra.mxu0 %v421
    %3889 = vmatprep.subr.bf16.mxu0 %v418
    %3890 = vmatpush1.bf16.msra.mxu0 %v417
    %3891 = vmatprep.subr.bf16.mxu0 %v414
    %3892 = vmatpush1.bf16.msra.mxu0 %v413
    %3893 = vmatprep.subr.bf16.mxu0 %v474
    %3894 = vmatpush2.bf16.msra.mxu0 %v473
    %3895 = vmatprep.subr.bf16.mxu0 %v470
    %3896 = vmatpush2.bf16.msra.mxu0 %v469
    %3897 = vmatprep.subr.bf16.mxu0 %v466
    %3898 = vmatpush2.bf16.msra.mxu0 %v465
    %3899 = vmatprep.subr.bf16.mxu0 %v462
    %3900 = vmatpush2.bf16.msra.mxu0 %v461
    %3901 = vmatprep.subr.bf16.mxu0 %v458
    %3902 = vmatpush2.bf16.msra.mxu0 %v457
    %3903 = vmatprep.subr.bf16.mxu0 %v454
    %3904 = vmatpush2.bf16.msra.mxu0 %v453
    %3905 = vmatprep.subr.bf16.mxu0 %v450
    %3906 = vmatpush2.bf16.msra.mxu0 %v449
    %3907 = vmatprep.subr.bf16.mxu0 %v446
    %3908 = vmatpush2.bf16.msra.mxu0 %v445
    %3909 = vmatprep.mubr.bf16.mxu0 %v3846
    %3910 = vmatmul.mubr.bf16.gmra.mxu0 %v3845
    %v3911 = vpop.f32.mrf.mxu0
    %v3912 = vadd.f32 0.0, %v3911
    %v3913 = vpop.f32.mrf.mxu0
    %v3914 = vadd.f32 0.0, %v3913
    %v3915 = vpop.f32.mrf.mxu0
    %v3916 = vadd.f32 0.0, %v3915
    %v3917 = vpop.f32.mrf.mxu0
    %v3918 = vadd.f32 0.0, %v3917
    %3919 = vmatprep.mubr.bf16.mxu0 %v3848
    %3920 = vmatmul.mubr.bf16.gmra.mxu0 %v3847
    %v3921 = vpop.f32.mrf.mxu0
    %v3922 = vadd.f32 0.0, %v3921
    %v3923 = vpop.f32.mrf.mxu0
    %v3924 = vadd.f32 0.0, %v3923
    %v3925 = vpop.f32.mrf.mxu0
    %v3926 = vadd.f32 0.0, %v3925
    %v3927 = vpop.f32.mrf.mxu0
    %v3928 = vadd.f32 0.0, %v3927
    %3929 = vmatprep.mubr.bf16.mxu0 %v3850
    %3930 = vmatmul.mubr.bf16.gmra.mxu0 %v3849
    %v3931 = vpop.f32.mrf.mxu0
    %v3932 = vadd.f32 0.0, %v3931
    %v3933 = vpop.f32.mrf.mxu0
    %v3934 = vadd.f32 0.0, %v3933
    %v3935 = vpop.f32.mrf.mxu0
    %v3936 = vadd.f32 0.0, %v3935
    %v3937 = vpop.f32.mrf.mxu0
    %v3938 = vadd.f32 0.0, %v3937
    %3939 = vmatprep.mubr.bf16.mxu0 %v3852
    %3940 = vmatmul.mubr.bf16.gmra.mxu0 %v3851
    %v3941 = vpop.f32.mrf.mxu0
    %v3942 = vadd.f32 0.0, %v3941
    %v3943 = vpop.f32.mrf.mxu0
    %v3944 = vadd.f32 0.0, %v3943
    %v3945 = vpop.f32.mrf.mxu0
    %v3946 = vadd.f32 0.0, %v3945
    %v3947 = vpop.f32.mrf.mxu0
    %v3948 = vadd.f32 0.0, %v3947
    %3949 = vmatprep.mubr.bf16.mxu0 %v3854
    %3950 = vmatmul.mubr.bf16.gmra.mxu0 %v3853
    %v3951 = vpop.f32.mrf.mxu0
    %v3952 = vadd.f32 0.0, %v3951
    %v3953 = vpop.f32.mrf.mxu0
    %v3954 = vadd.f32 0.0, %v3953
    %v3955 = vpop.f32.mrf.mxu0
    %v3956 = vadd.f32 0.0, %v3955
    %v3957 = vpop.f32.mrf.mxu0
    %v3958 = vadd.f32 0.0, %v3957
    %3959 = vmatprep.mubr.bf16.mxu0 %v3856
    %3960 = vmatmul.mubr.bf16.gmra.mxu0 %v3855
    %v3961 = vpop.f32.mrf.mxu0
    %v3962 = vadd.f32 0.0, %v3961
    %v3963 = vpop.f32.mrf.mxu0
    %v3964 = vadd.f32 0.0, %v3963
    %v3965 = vpop.f32.mrf.mxu0
    %v3966 = vadd.f32 0.0, %v3965
    %v3967 = vpop.f32.mrf.mxu0
    %v3968 = vadd.f32 0.0, %v3967
    %3969 = vmatprep.mubr.bf16.mxu0 %v3858
    %3970 = vmatmul.mubr.bf16.gmra.mxu0 %v3857
    %v3971 = vpop.f32.mrf.mxu0
    %v3972 = vadd.f32 0.0, %v3971
    %v3973 = vpop.f32.mrf.mxu0
    %v3974 = vadd.f32 0.0, %v3973
    %v3975 = vpop.f32.mrf.mxu0
    %v3976 = vadd.f32 0.0, %v3975
    %v3977 = vpop.f32.mrf.mxu0
    %v3978 = vadd.f32 0.0, %v3977
    %3979 = vmatprep.mubr.bf16.mxu0 %v3860
    %3980 = vmatmul.mubr.bf16.gmra.mxu0 %v3859
    %v3981 = vpop.f32.mrf.mxu0
    %v3982 = vadd.f32 0.0, %v3981
    %v3983 = vpop.f32.mrf.mxu0
    %v3984 = vadd.f32 0.0, %v3983
    %v3985 = vpop.f32.mrf.mxu0
    %v3986 = vadd.f32 0.0, %v3985
    %v3987 = vpop.f32.mrf.mxu0
    %v3988 = vadd.f32 0.0, %v3987
    %3989 = vdwg.mxu0
    %3990 = vmatprep.subr.bf16.mxu0 %v444
    %3991 = vmatpush1.bf16.msra.mxu0 %v443
    %3992 = vmatprep.subr.bf16.mxu0 %v440
    %3993 = vmatpush1.bf16.msra.mxu0 %v439
    %3994 = vmatprep.subr.bf16.mxu0 %v436
    %3995 = vmatpush1.bf16.msra.mxu0 %v435
    %3996 = vmatprep.subr.bf16.mxu0 %v432
    %3997 = vmatpush1.bf16.msra.mxu0 %v431
    %3998 = vmatprep.subr.bf16.mxu0 %v428
    %3999 = vmatpush1.bf16.msra.mxu0 %v427
    %4000 = vmatprep.subr.bf16.mxu0 %v424
    %4001 = vmatpush1.bf16.msra.mxu0 %v423
    %4002 = vmatprep.subr.bf16.mxu0 %v420
    %4003 = vmatpush1.bf16.msra.mxu0 %v419
    %4004 = vmatprep.subr.bf16.mxu0 %v416
    %4005 = vmatpush1.bf16.msra.mxu0 %v415
    %4006 = vmatprep.subr.bf16.mxu0 %v476
    %4007 = vmatpush2.bf16.msra.mxu0 %v475
    %4008 = vmatprep.subr.bf16.mxu0 %v472
    %4009 = vmatpush2.bf16.msra.mxu0 %v471
    %4010 = vmatprep.subr.bf16.mxu0 %v468
    %4011 = vmatpush2.bf16.msra.mxu0 %v467
    %4012 = vmatprep.subr.bf16.mxu0 %v464
    %4013 = vmatpush2.bf16.msra.mxu0 %v463
    %4014 = vmatprep.subr.bf16.mxu0 %v460
    %4015 = vmatpush2.bf16.msra.mxu0 %v459
    %4016 = vmatprep.subr.bf16.mxu0 %v456
    %4017 = vmatpush2.bf16.msra.mxu0 %v455
    %4018 = vmatprep.subr.bf16.mxu0 %v452
    %4019 = vmatpush2.bf16.msra.mxu0 %v451
    %4020 = vmatprep.subr.bf16.mxu0 %v448
    %4021 = vmatpush2.bf16.msra.mxu0 %v447
    %4022 = vmatprep.mubr.bf16.mxu0 %v3846
    %4023 = vmatmul.mubr.bf16.gmra.mxu0 %v3845
    %v4024 = vpop.f32.mrf.mxu0
    %v4025 = vadd.f32 0.0, %v4024
    %v4026 = vpop.f32.mrf.mxu0
    %v4027 = vadd.f32 0.0, %v4026
    %v4028 = vpop.f32.mrf.mxu0
    %v4029 = vadd.f32 0.0, %v4028
    %v4030 = vpop.f32.mrf.mxu0
    %v4031 = vadd.f32 0.0, %v4030
    %4032 = vmatprep.mubr.bf16.mxu0 %v3848
    %4033 = vmatmul.mubr.bf16.gmra.mxu0 %v3847
    %v4034 = vpop.f32.mrf.mxu0
    %v4035 = vadd.f32 0.0, %v4034
    %v4036 = vpop.f32.mrf.mxu0
    %v4037 = vadd.f32 0.0, %v4036
    %v4038 = vpop.f32.mrf.mxu0
    %v4039 = vadd.f32 0.0, %v4038
    %v4040 = vpop.f32.mrf.mxu0
    %v4041 = vadd.f32 0.0, %v4040
    %4042 = vmatprep.mubr.bf16.mxu0 %v3850
    %4043 = vmatmul.mubr.bf16.gmra.mxu0 %v3849
    %v4044 = vpop.f32.mrf.mxu0
    %v4045 = vadd.f32 0.0, %v4044
    %v4046 = vpop.f32.mrf.mxu0
    %v4047 = vadd.f32 0.0, %v4046
    %v4048 = vpop.f32.mrf.mxu0
    %v4049 = vadd.f32 0.0, %v4048
    %v4050 = vpop.f32.mrf.mxu0
    %v4051 = vadd.f32 0.0, %v4050
    %4052 = vmatprep.mubr.bf16.mxu0 %v3852
    %4053 = vmatmul.mubr.bf16.gmra.mxu0 %v3851
    %v4054 = vpop.f32.mrf.mxu0
    %v4055 = vadd.f32 0.0, %v4054
    %v4056 = vpop.f32.mrf.mxu0
    %v4057 = vadd.f32 0.0, %v4056
    %v4058 = vpop.f32.mrf.mxu0
    %v4059 = vadd.f32 0.0, %v4058
    %v4060 = vpop.f32.mrf.mxu0
    %v4061 = vadd.f32 0.0, %v4060
    %4062 = vmatprep.mubr.bf16.mxu0 %v3854
    %4063 = vmatmul.mubr.bf16.gmra.mxu0 %v3853
    %v4064 = vpop.f32.mrf.mxu0
    %v4065 = vadd.f32 0.0, %v4064
    %v4066 = vpop.f32.mrf.mxu0
    %v4067 = vadd.f32 0.0, %v4066
    %v4068 = vpop.f32.mrf.mxu0
    %v4069 = vadd.f32 0.0, %v4068
    %v4070 = vpop.f32.mrf.mxu0
    %v4071 = vadd.f32 0.0, %v4070
    %4072 = vmatprep.mubr.bf16.mxu0 %v3856
    %4073 = vmatmul.mubr.bf16.gmra.mxu0 %v3855
    %v4074 = vpop.f32.mrf.mxu0
    %v4075 = vadd.f32 0.0, %v4074
    %v4076 = vpop.f32.mrf.mxu0
    %v4077 = vadd.f32 0.0, %v4076
    %v4078 = vpop.f32.mrf.mxu0
    %v4079 = vadd.f32 0.0, %v4078
    %v4080 = vpop.f32.mrf.mxu0
    %v4081 = vadd.f32 0.0, %v4080
    %4082 = vmatprep.mubr.bf16.mxu0 %v3858
    %4083 = vmatmul.mubr.bf16.gmra.mxu0 %v3857
    %v4084 = vpop.f32.mrf.mxu0
    %v4085 = vadd.f32 0.0, %v4084
    %v4086 = vpop.f32.mrf.mxu0
    %v4087 = vadd.f32 0.0, %v4086
    %v4088 = vpop.f32.mrf.mxu0
    %v4089 = vadd.f32 0.0, %v4088
    %v4090 = vpop.f32.mrf.mxu0
    %v4091 = vadd.f32 0.0, %v4090
    %4092 = vmatprep.mubr.bf16.mxu0 %v3860
    %4093 = vmatmul.mubr.bf16.gmra.mxu0 %v3859
    %v4094 = vpop.f32.mrf.mxu0
    %v4095 = vadd.f32 0.0, %v4094
    %v4096 = vpop.f32.mrf.mxu0
    %v4097 = vadd.f32 0.0, %v4096
    %v4098 = vpop.f32.mrf.mxu0
    %v4099 = vadd.f32 0.0, %v4098
    %v4100 = vpop.f32.mrf.mxu0
    %v4101 = vadd.f32 0.0, %v4100
    %4102 = vdwg.mxu0
    %v4103 = vadd.f32 %v3912, %v3916
    %v4104 = vadd.f32 %v4103, %v3922
    %v4105 = vadd.f32 %v4104, %v3926
    %v4106 = vadd.f32 %v4105, %v3932
    %v4107 = vadd.f32 %v4106, %v3936
    %v4108 = vadd.f32 %v4107, %v3942
    %v4109 = vadd.f32 %v4108, %v3946
    %v4110 = vadd.f32 %v4109, %v3952
    %v4111 = vadd.f32 %v4110, %v3956
    %v4112 = vadd.f32 %v4111, %v3962
    %v4113 = vadd.f32 %v4112, %v3966
    %v4114 = vadd.f32 %v4113, %v3972
    %v4115 = vadd.f32 %v4114, %v3976
    %v4116 = vadd.f32 %v4115, %v3982
    %v4117 = vadd.f32 %v4116, %v3986
    %v4118 = vrot.slane %v4117, 4
    %v4119 = vadd.f32 %v4117, %v4118
    %v4120 = vrot.slane %v4119, 2
    %v4121 = vadd.f32 %v4119, %v4120
    %v4122 = vrot.slane %v4121, 1
    %v4123 = vadd.f32 %v4121, %v4122
    %v4124 = vadd.f32 %v3914, %v3918
    %v4125 = vadd.f32 %v4124, %v3924
    %v4126 = vadd.f32 %v4125, %v3928
    %v4127 = vadd.f32 %v4126, %v3934
    %v4128 = vadd.f32 %v4127, %v3938
    %v4129 = vadd.f32 %v4128, %v3944
    %v4130 = vadd.f32 %v4129, %v3948
    %v4131 = vadd.f32 %v4130, %v3954
    %v4132 = vadd.f32 %v4131, %v3958
    %v4133 = vadd.f32 %v4132, %v3964
    %v4134 = vadd.f32 %v4133, %v3968
    %v4135 = vadd.f32 %v4134, %v3974
    %v4136 = vadd.f32 %v4135, %v3978
    %v4137 = vadd.f32 %v4136, %v3984
    %v4138 = vadd.f32 %v4137, %v3988
    %v4139 = vrot.slane %v4138, 4
    %v4140 = vadd.f32 %v4138, %v4139
    %v4141 = vrot.slane %v4140, 2
    %v4142 = vadd.f32 %v4140, %v4141
    %v4143 = vrot.slane %v4142, 1
    %v4144 = vadd.f32 %v4142, %v4143
    %v4145 = vadd.f32 %v4025, %v4029
    %v4146 = vadd.f32 %v4145, %v4035
    %v4147 = vadd.f32 %v4146, %v4039
    %v4148 = vadd.f32 %v4147, %v4045
    %v4149 = vadd.f32 %v4148, %v4049
    %v4150 = vadd.f32 %v4149, %v4055
    %v4151 = vadd.f32 %v4150, %v4059
    %v4152 = vadd.f32 %v4151, %v4065
    %v4153 = vadd.f32 %v4152, %v4069
    %v4154 = vadd.f32 %v4153, %v4075
    %v4155 = vadd.f32 %v4154, %v4079
    %v4156 = vadd.f32 %v4155, %v4085
    %v4157 = vadd.f32 %v4156, %v4089
    %v4158 = vadd.f32 %v4157, %v4095
    %v4159 = vadd.f32 %v4158, %v4099
    %v4160 = vrot.slane %v4159, 4
    %v4161 = vadd.f32 %v4159, %v4160
    %v4162 = vrot.slane %v4161, 2
    %v4163 = vadd.f32 %v4161, %v4162
    %v4164 = vrot.slane %v4163, 1
    %v4165 = vadd.f32 %v4163, %v4164
    %v4166 = vadd.f32 %v4027, %v4031
    %v4167 = vadd.f32 %v4166, %v4037
    %v4168 = vadd.f32 %v4167, %v4041
    %v4169 = vadd.f32 %v4168, %v4047
    %v4170 = vadd.f32 %v4169, %v4051
    %v4171 = vadd.f32 %v4170, %v4057
    %v4172 = vadd.f32 %v4171, %v4061
    %v4173 = vadd.f32 %v4172, %v4067
    %v4174 = vadd.f32 %v4173, %v4071
    %v4175 = vadd.f32 %v4174, %v4077
    %v4176 = vadd.f32 %v4175, %v4081
    %v4177 = vadd.f32 %v4176, %v4087
    %v4178 = vadd.f32 %v4177, %v4091
    %v4179 = vadd.f32 %v4178, %v4097
    %v4180 = vadd.f32 %v4179, %v4101
    %v4181 = vrot.slane %v4180, 4
    %v4182 = vadd.f32 %v4180, %v4181
    %v4183 = vrot.slane %v4182, 2
    %v4184 = vadd.f32 %v4182, %v4183
    %v4185 = vrot.slane %v4184, 1
    %v4186 = vadd.f32 %v4184, %v4185
    %v4187 = vmul.f32 %v3912, %v3912
    %v4188 = vmul.f32 %v3914, %v3914
    %v4189 = vmul.f32 %v4025, %v4025
    %v4190 = vmul.f32 %v4027, %v4027
    %v4191 = vmul.f32 %v3916, %v3916
    %v4192 = vmul.f32 %v3918, %v3918
    %v4193 = vmul.f32 %v4029, %v4029
    %v4194 = vmul.f32 %v4031, %v4031
    %v4195 = vmul.f32 %v3922, %v3922
    %v4196 = vmul.f32 %v3924, %v3924
    %v4197 = vmul.f32 %v4035, %v4035
    %v4198 = vmul.f32 %v4037, %v4037
    %v4199 = vmul.f32 %v3926, %v3926
    %v4200 = vmul.f32 %v3928, %v3928
    %v4201 = vmul.f32 %v4039, %v4039
    %v4202 = vmul.f32 %v4041, %v4041
    %v4203 = vmul.f32 %v3932, %v3932
    %v4204 = vmul.f32 %v3934, %v3934
    %v4205 = vmul.f32 %v4045, %v4045
    %v4206 = vmul.f32 %v4047, %v4047
    %v4207 = vmul.f32 %v3936, %v3936
    %v4208 = vmul.f32 %v3938, %v3938
    %v4209 = vmul.f32 %v4049, %v4049
    %v4210 = vmul.f32 %v4051, %v4051
    %v4211 = vmul.f32 %v3942, %v3942
    %v4212 = vmul.f32 %v3944, %v3944
    %v4213 = vmul.f32 %v4055, %v4055
    %v4214 = vmul.f32 %v4057, %v4057
    %v4215 = vmul.f32 %v3946, %v3946
    %v4216 = vmul.f32 %v3948, %v3948
    %v4217 = vmul.f32 %v4059, %v4059
    %v4218 = vmul.f32 %v4061, %v4061
    %v4219 = vmul.f32 %v3952, %v3952
    %v4220 = vmul.f32 %v3954, %v3954
    %v4221 = vmul.f32 %v4065, %v4065
    %v4222 = vmul.f32 %v4067, %v4067
    %v4223 = vmul.f32 %v3956, %v3956
    %v4224 = vmul.f32 %v3958, %v3958
    %v4225 = vmul.f32 %v4069, %v4069
    %v4226 = vmul.f32 %v4071, %v4071
    %v4227 = vmul.f32 %v3962, %v3962
    %v4228 = vmul.f32 %v3964, %v3964
    %v4229 = vmul.f32 %v4075, %v4075
    %v4230 = vmul.f32 %v4077, %v4077
    %v4231 = vmul.f32 %v3966, %v3966
    %v4232 = vmul.f32 %v3968, %v3968
    %v4233 = vmul.f32 %v4079, %v4079
    %v4234 = vmul.f32 %v4081, %v4081
    %v4235 = vmul.f32 %v3972, %v3972
    %v4236 = vmul.f32 %v3974, %v3974
    %v4237 = vmul.f32 %v4085, %v4085
    %v4238 = vmul.f32 %v4087, %v4087
    %v4239 = vmul.f32 %v3976, %v3976
    %v4240 = vmul.f32 %v3978, %v3978
    %v4241 = vmul.f32 %v4089, %v4089
    %v4242 = vmul.f32 %v4091, %v4091
    %v4243 = vmul.f32 %v3982, %v3982
    %v4244 = vmul.f32 %v3984, %v3984
    %v4245 = vmul.f32 %v4095, %v4095
    %v4246 = vmul.f32 %v4097, %v4097
    %v4247 = vmul.f32 %v3986, %v3986
    %v4248 = vmul.f32 %v3988, %v3988
    %v4249 = vmul.f32 %v4099, %v4099
    %v4250 = vmul.f32 %v4101, %v4101
    %v4251 = vadd.f32 %v4187, %v4191
    %v4252 = vadd.f32 %v4251, %v4195
    %v4253 = vadd.f32 %v4252, %v4199
    %v4254 = vadd.f32 %v4253, %v4203
    %v4255 = vadd.f32 %v4254, %v4207
    %v4256 = vadd.f32 %v4255, %v4211
    %v4257 = vadd.f32 %v4256, %v4215
    %v4258 = vadd.f32 %v4257, %v4219
    %v4259 = vadd.f32 %v4258, %v4223
    %v4260 = vadd.f32 %v4259, %v4227
    %v4261 = vadd.f32 %v4260, %v4231
    %v4262 = vadd.f32 %v4261, %v4235
    %v4263 = vadd.f32 %v4262, %v4239
    %v4264 = vadd.f32 %v4263, %v4243
    %v4265 = vadd.f32 %v4264, %v4247
    %v4266 = vrot.slane %v4265, 4
    %v4267 = vadd.f32 %v4265, %v4266
    %v4268 = vrot.slane %v4267, 2
    %v4269 = vadd.f32 %v4267, %v4268
    %v4270 = vrot.slane %v4269, 1
    %v4271 = vadd.f32 %v4269, %v4270
    %v4272 = vadd.f32 %v4188, %v4192
    %v4273 = vadd.f32 %v4272, %v4196
    %v4274 = vadd.f32 %v4273, %v4200
    %v4275 = vadd.f32 %v4274, %v4204
    %v4276 = vadd.f32 %v4275, %v4208
    %v4277 = vadd.f32 %v4276, %v4212
    %v4278 = vadd.f32 %v4277, %v4216
    %v4279 = vadd.f32 %v4278, %v4220
    %v4280 = vadd.f32 %v4279, %v4224
    %v4281 = vadd.f32 %v4280, %v4228
    %v4282 = vadd.f32 %v4281, %v4232
    %v4283 = vadd.f32 %v4282, %v4236
    %v4284 = vadd.f32 %v4283, %v4240
    %v4285 = vadd.f32 %v4284, %v4244
    %v4286 = vadd.f32 %v4285, %v4248
    %v4287 = vrot.slane %v4286, 4
    %v4288 = vadd.f32 %v4286, %v4287
    %v4289 = vrot.slane %v4288, 2
    %v4290 = vadd.f32 %v4288, %v4289
    %v4291 = vrot.slane %v4290, 1
    %v4292 = vadd.f32 %v4290, %v4291
    %v4293 = vadd.f32 %v4189, %v4193
    %v4294 = vadd.f32 %v4293, %v4197
    %v4295 = vadd.f32 %v4294, %v4201
    %v4296 = vadd.f32 %v4295, %v4205
    %v4297 = vadd.f32 %v4296, %v4209
    %v4298 = vadd.f32 %v4297, %v4213
    %v4299 = vadd.f32 %v4298, %v4217
    %v4300 = vadd.f32 %v4299, %v4221
    %v4301 = vadd.f32 %v4300, %v4225
    %v4302 = vadd.f32 %v4301, %v4229
    %v4303 = vadd.f32 %v4302, %v4233
    %v4304 = vadd.f32 %v4303, %v4237
    %v4305 = vadd.f32 %v4304, %v4241
    %v4306 = vadd.f32 %v4305, %v4245
    %v4307 = vadd.f32 %v4306, %v4249
    %v4308 = vrot.slane %v4307, 4
    %v4309 = vadd.f32 %v4307, %v4308
    %v4310 = vrot.slane %v4309, 2
    %v4311 = vadd.f32 %v4309, %v4310
    %v4312 = vrot.slane %v4311, 1
    %v4313 = vadd.f32 %v4311, %v4312
    %v4314 = vadd.f32 %v4190, %v4194
    %v4315 = vadd.f32 %v4314, %v4198
    %v4316 = vadd.f32 %v4315, %v4202
    %v4317 = vadd.f32 %v4316, %v4206
    %v4318 = vadd.f32 %v4317, %v4210
    %v4319 = vadd.f32 %v4318, %v4214
    %v4320 = vadd.f32 %v4319, %v4218
    %v4321 = vadd.f32 %v4320, %v4222
    %v4322 = vadd.f32 %v4321, %v4226
    %v4323 = vadd.f32 %v4322, %v4230
    %v4324 = vadd.f32 %v4323, %v4234
    %v4325 = vadd.f32 %v4324, %v4238
    %v4326 = vadd.f32 %v4325, %v4242
    %v4327 = vadd.f32 %v4326, %v4246
    %v4328 = vadd.f32 %v4327, %v4250
    %v4329 = vrot.slane %v4328, 4
    %v4330 = vadd.f32 %v4328, %v4329
    %v4331 = vrot.slane %v4330, 2
    %v4332 = vadd.f32 %v4330, %v4331
    %v4333 = vrot.slane %v4332, 1
    %v4334 = vadd.f32 %v4332, %v4333
    %v4335 = vmul.f32 %v4123, 0.0078125
    %v4336 = vmul.f32 %v4144, 0.0078125
    %v4337 = vmul.f32 %v4165, 0.0078125
    %v4338 = vmul.f32 %v4186, 0.0078125
    %v4339 = vmul.f32 %v4271, 0.0078125
    %v4340 = vmul.f32 %v4292, 0.0078125
    %v4341 = vmul.f32 %v4313, 0.0078125
    %v4342 = vmul.f32 %v4334, 0.0078125
    %v4343 = vmul.f32 %v4335, %v4335
    %v4344 = vmul.f32 %v4336, %v4336
    %v4345 = vmul.f32 %v4337, %v4337
    %v4346 = vmul.f32 %v4338, %v4338
    %v4347 = vsub.f32 %v4339, %v4343
    %v4348 = vsub.f32 %v4340, %v4344
    %v4349 = vsub.f32 %v4341, %v4345
    %v4350 = vsub.f32 %v4342, %v4346
    %v4351 = vmax.f32 %v4347, 0.0
    %v4352 = vmax.f32 %v4348, 0.0
    %v4353 = vmax.f32 %v4349, 0.0
    %v4354 = vmax.f32 %v4350, 0.0
    %v4355 = vadd.f32 %v4351, 1e-05
    %v4356 = vadd.f32 %v4352, 1e-05
    %v4357 = vadd.f32 %v4353, 1e-05
    %v4358 = vadd.f32 %v4354, 1e-05
    %v4359 = vrsqrt.pop %v4355
    %v4360 = vrsqrt.pop %v4356
    %v4361 = vrsqrt.pop %v4357
    %v4362 = vrsqrt.pop %v4358
    %v4367 = vcombine.low %v4359, %v4360
    %v4368 = vcombine.low %v4361, %v4362
    %v4370 = vunpack.c.l.s4 1966171168
    %v4371 = vunpack.c.0.s8 %v4370
    %v4372 = vlaneseq
    %v4373 = vshrl.u32 %v4372, 7
    %v4374 = vsub.s32 %v4371, %v4373
    %v4375 = vrot.slane %v4367, %v4374
    %v4377 = vunpack.c.l.s4 1966171168
    %v4378 = vunpack.c.0.s8 %v4377
    %v4379 = vlaneseq
    %v4380 = vshrl.u32 %v4379, 7
    %v4381 = vsub.s32 %v4378, %v4380
    %v4382 = vrot.slane %v4368, %v4381
    %v4383 = vcombine.low %v4375, %v4382
    %v4385 = vunpack.c.l.s4 1966171168
    %v4386 = vunpack.c.0.s8 %v4385
    %v4387 = vlaneseq
    %v4388 = vshrl.u32 %v4387, 7
    %v4389 = vsub.s32 %v4386, %v4388
    %v4390 = vrot.slane %v4383, %v4389
    %v4392 = vmul.f32 %v1019, %v4390
    %v4394 = vlaneseq
    %v4395 = vshrl.u32 %v4394, 7
    %v4396 = vsub.s32 0, %v4395
    %v4397 = vrot.slane %v4392, %v4396
    %v4398 = vlaneseq
    %v4399 = vshrl.u32 %v4398, 7
    %v4400 = vsub.s32 1, %v4399
    %v4401 = vrot.slane %v4392, %v4400
    %v4402 = vlaneseq
    %v4403 = vshrl.u32 %v4402, 7
    %v4404 = vsub.s32 2, %v4403
    %v4405 = vrot.slane %v4392, %v4404
    %v4406 = vlaneseq
    %v4407 = vshrl.u32 %v4406, 7
    %v4408 = vsub.s32 3, %v4407
    %v4409 = vrot.slane %v4392, %v4408
    %v4414 = vmul.f32 %v4335, %v4397
    %v4415 = vmul.f32 %v4336, %v4401
    %v4416 = vmul.f32 %v4337, %v4405
    %v4417 = vmul.f32 %v4338, %v4409
    %v4422 = vcombine.low %v4414, %v4415
    %v4423 = vcombine.low %v4416, %v4417
    %v4425 = vunpack.c.l.s4 1966171168
    %v4426 = vunpack.c.0.s8 %v4425
    %v4427 = vlaneseq
    %v4428 = vshrl.u32 %v4427, 7
    %v4429 = vsub.s32 %v4426, %v4428
    %v4430 = vrot.slane %v4422, %v4429
    %v4432 = vunpack.c.l.s4 1966171168
    %v4433 = vunpack.c.0.s8 %v4432
    %v4434 = vlaneseq
    %v4435 = vshrl.u32 %v4434, 7
    %v4436 = vsub.s32 %v4433, %v4435
    %v4437 = vrot.slane %v4423, %v4436
    %v4438 = vcombine.low %v4430, %v4437
    %v4440 = vunpack.c.l.s4 1966171168
    %v4441 = vunpack.c.0.s8 %v4440
    %v4442 = vlaneseq
    %v4443 = vshrl.u32 %v4442, 7
    %v4444 = vsub.s32 %v4441, %v4443
    %v4445 = vrot.slane %v4438, %v4444
    %v4447 = vsub.f32 %v1058, %v4445
    %v4448 = vmul.f32 %v3912, %v4397
    %v4449 = vmul.f32 %v3914, %v4401
    %v4450 = vmul.f32 %v4025, %v4405
    %v4451 = vmul.f32 %v4027, %v4409
    %v4452 = vmul.f32 %v3916, %v4397
    %v4453 = vmul.f32 %v3918, %v4401
    %v4454 = vmul.f32 %v4029, %v4405
    %v4455 = vmul.f32 %v4031, %v4409
    %v4456 = vmul.f32 %v3922, %v4397
    %v4457 = vmul.f32 %v3924, %v4401
    %v4458 = vmul.f32 %v4035, %v4405
    %v4459 = vmul.f32 %v4037, %v4409
    %v4460 = vmul.f32 %v3926, %v4397
    %v4461 = vmul.f32 %v3928, %v4401
    %v4462 = vmul.f32 %v4039, %v4405
    %v4463 = vmul.f32 %v4041, %v4409
    %v4464 = vmul.f32 %v3932, %v4397
    %v4465 = vmul.f32 %v3934, %v4401
    %v4466 = vmul.f32 %v4045, %v4405
    %v4467 = vmul.f32 %v4047, %v4409
    %v4468 = vmul.f32 %v3936, %v4397
    %v4469 = vmul.f32 %v3938, %v4401
    %v4470 = vmul.f32 %v4049, %v4405
    %v4471 = vmul.f32 %v4051, %v4409
    %v4472 = vmul.f32 %v3942, %v4397
    %v4473 = vmul.f32 %v3944, %v4401
    %v4474 = vmul.f32 %v4055, %v4405
    %v4475 = vmul.f32 %v4057, %v4409
    %v4476 = vmul.f32 %v3946, %v4397
    %v4477 = vmul.f32 %v3948, %v4401
    %v4478 = vmul.f32 %v4059, %v4405
    %v4479 = vmul.f32 %v4061, %v4409
    %v4480 = vmul.f32 %v3952, %v4397
    %v4481 = vmul.f32 %v3954, %v4401
    %v4482 = vmul.f32 %v4065, %v4405
    %v4483 = vmul.f32 %v4067, %v4409
    %v4484 = vmul.f32 %v3956, %v4397
    %v4485 = vmul.f32 %v3958, %v4401
    %v4486 = vmul.f32 %v4069, %v4405
    %v4487 = vmul.f32 %v4071, %v4409
    %v4488 = vmul.f32 %v3962, %v4397
    %v4489 = vmul.f32 %v3964, %v4401
    %v4490 = vmul.f32 %v4075, %v4405
    %v4491 = vmul.f32 %v4077, %v4409
    %v4492 = vmul.f32 %v3966, %v4397
    %v4493 = vmul.f32 %v3968, %v4401
    %v4494 = vmul.f32 %v4079, %v4405
    %v4495 = vmul.f32 %v4081, %v4409
    %v4496 = vmul.f32 %v3972, %v4397
    %v4497 = vmul.f32 %v3974, %v4401
    %v4498 = vmul.f32 %v4085, %v4405
    %v4499 = vmul.f32 %v4087, %v4409
    %v4500 = vmul.f32 %v3976, %v4397
    %v4501 = vmul.f32 %v3978, %v4401
    %v4502 = vmul.f32 %v4089, %v4405
    %v4503 = vmul.f32 %v4091, %v4409
    %v4504 = vmul.f32 %v3982, %v4397
    %v4505 = vmul.f32 %v3984, %v4401
    %v4506 = vmul.f32 %v4095, %v4405
    %v4507 = vmul.f32 %v4097, %v4409
    %v4508 = vmul.f32 %v3986, %v4397
    %v4509 = vmul.f32 %v3988, %v4401
    %v4510 = vmul.f32 %v4099, %v4405
    %v4511 = vmul.f32 %v4101, %v4409
    %v4513 = vlaneseq
    %v4514 = vshrl.u32 %v4513, 7
    %v4515 = vsub.s32 0, %v4514
    %v4516 = vrot.slane %v4447, %v4515
    %v4517 = vlaneseq
    %v4518 = vshrl.u32 %v4517, 7
    %v4519 = vsub.s32 1, %v4518
    %v4520 = vrot.slane %v4447, %v4519
    %v4521 = vlaneseq
    %v4522 = vshrl.u32 %v4521, 7
    %v4523 = vsub.s32 2, %v4522
    %v4524 = vrot.slane %v4447, %v4523
    %v4525 = vlaneseq
    %v4526 = vshrl.u32 %v4525, 7
    %v4527 = vsub.s32 3, %v4526
    %v4528 = vrot.slane %v4447, %v4527
    %v4533 = vadd.f32 %v4448, %v4516
    %v4534 = vadd.f32 %v4449, %v4520
    %v4535 = vadd.f32 %v4450, %v4524
    %v4536 = vadd.f32 %v4451, %v4528
    %v4537 = vadd.f32 %v4452, %v4516
    %v4538 = vadd.f32 %v4453, %v4520
    %v4539 = vadd.f32 %v4454, %v4524
    %v4540 = vadd.f32 %v4455, %v4528
    %v4541 = vadd.f32 %v4456, %v4516
    %v4542 = vadd.f32 %v4457, %v4520
    %v4543 = vadd.f32 %v4458, %v4524
    %v4544 = vadd.f32 %v4459, %v4528
    %v4545 = vadd.f32 %v4460, %v4516
    %v4546 = vadd.f32 %v4461, %v4520
    %v4547 = vadd.f32 %v4462, %v4524
    %v4548 = vadd.f32 %v4463, %v4528
    %v4549 = vadd.f32 %v4464, %v4516
    %v4550 = vadd.f32 %v4465, %v4520
    %v4551 = vadd.f32 %v4466, %v4524
    %v4552 = vadd.f32 %v4467, %v4528
    %v4553 = vadd.f32 %v4468, %v4516
    %v4554 = vadd.f32 %v4469, %v4520
    %v4555 = vadd.f32 %v4470, %v4524
    %v4556 = vadd.f32 %v4471, %v4528
    %v4557 = vadd.f32 %v4472, %v4516
    %v4558 = vadd.f32 %v4473, %v4520
    %v4559 = vadd.f32 %v4474, %v4524
    %v4560 = vadd.f32 %v4475, %v4528
    %v4561 = vadd.f32 %v4476, %v4516
    %v4562 = vadd.f32 %v4477, %v4520
    %v4563 = vadd.f32 %v4478, %v4524
    %v4564 = vadd.f32 %v4479, %v4528
    %v4565 = vadd.f32 %v4480, %v4516
    %v4566 = vadd.f32 %v4481, %v4520
    %v4567 = vadd.f32 %v4482, %v4524
    %v4568 = vadd.f32 %v4483, %v4528
    %v4569 = vadd.f32 %v4484, %v4516
    %v4570 = vadd.f32 %v4485, %v4520
    %v4571 = vadd.f32 %v4486, %v4524
    %v4572 = vadd.f32 %v4487, %v4528
    %v4573 = vadd.f32 %v4488, %v4516
    %v4574 = vadd.f32 %v4489, %v4520
    %v4575 = vadd.f32 %v4490, %v4524
    %v4576 = vadd.f32 %v4491, %v4528
    %v4577 = vadd.f32 %v4492, %v4516
    %v4578 = vadd.f32 %v4493, %v4520
    %v4579 = vadd.f32 %v4494, %v4524
    %v4580 = vadd.f32 %v4495, %v4528
    %v4581 = vadd.f32 %v4496, %v4516
    %v4582 = vadd.f32 %v4497, %v4520
    %v4583 = vadd.f32 %v4498, %v4524
    %v4584 = vadd.f32 %v4499, %v4528
    %v4585 = vadd.f32 %v4500, %v4516
    %v4586 = vadd.f32 %v4501, %v4520
    %v4587 = vadd.f32 %v4502, %v4524
    %v4588 = vadd.f32 %v4503, %v4528
    %v4589 = vadd.f32 %v4504, %v4516
    %v4590 = vadd.f32 %v4505, %v4520
    %v4591 = vadd.f32 %v4506, %v4524
    %v4592 = vadd.f32 %v4507, %v4528
    %v4593 = vadd.f32 %v4508, %v4516
    %v4594 = vadd.f32 %v4509, %v4520
    %v4595 = vadd.f32 %v4510, %v4524
    %v4596 = vadd.f32 %v4511, %v4528
    %v4597 = vmax.f32 %v4533, 0.0
    %v4598 = vmax.f32 %v4534, 0.0
    %v4599 = vmax.f32 %v4535, 0.0
    %v4600 = vmax.f32 %v4536, 0.0
    %v4601 = vmax.f32 %v4537, 0.0
    %v4602 = vmax.f32 %v4538, 0.0
    %v4603 = vmax.f32 %v4539, 0.0
    %v4604 = vmax.f32 %v4540, 0.0
    %v4605 = vmax.f32 %v4541, 0.0
    %v4606 = vmax.f32 %v4542, 0.0
    %v4607 = vmax.f32 %v4543, 0.0
    %v4608 = vmax.f32 %v4544, 0.0
    %v4609 = vmax.f32 %v4545, 0.0
    %v4610 = vmax.f32 %v4546, 0.0
    %v4611 = vmax.f32 %v4547, 0.0
    %v4612 = vmax.f32 %v4548, 0.0
    %v4613 = vmax.f32 %v4549, 0.0
    %v4614 = vmax.f32 %v4550, 0.0
    %v4615 = vmax.f32 %v4551, 0.0
    %v4616 = vmax.f32 %v4552, 0.0
    %v4617 = vmax.f32 %v4553, 0.0
    %v4618 = vmax.f32 %v4554, 0.0
    %v4619 = vmax.f32 %v4555, 0.0
    %v4620 = vmax.f32 %v4556, 0.0
    %v4621 = vmax.f32 %v4557, 0.0
    %v4622 = vmax.f32 %v4558, 0.0
    %v4623 = vmax.f32 %v4559, 0.0
    %v4624 = vmax.f32 %v4560, 0.0
    %v4625 = vmax.f32 %v4561, 0.0
    %v4626 = vmax.f32 %v4562, 0.0
    %v4627 = vmax.f32 %v4563, 0.0
    %v4628 = vmax.f32 %v4564, 0.0
    %v4629 = vmax.f32 %v4565, 0.0
    %v4630 = vmax.f32 %v4566, 0.0
    %v4631 = vmax.f32 %v4567, 0.0
    %v4632 = vmax.f32 %v4568, 0.0
    %v4633 = vmax.f32 %v4569, 0.0
    %v4634 = vmax.f32 %v4570, 0.0
    %v4635 = vmax.f32 %v4571, 0.0
    %v4636 = vmax.f32 %v4572, 0.0
    %v4637 = vmax.f32 %v4573, 0.0
    %v4638 = vmax.f32 %v4574, 0.0
    %v4639 = vmax.f32 %v4575, 0.0
    %v4640 = vmax.f32 %v4576, 0.0
    %v4641 = vmax.f32 %v4577, 0.0
    %v4642 = vmax.f32 %v4578, 0.0
    %v4643 = vmax.f32 %v4579, 0.0
    %v4644 = vmax.f32 %v4580, 0.0
    %v4645 = vmax.f32 %v4581, 0.0
    %v4646 = vmax.f32 %v4582, 0.0
    %v4647 = vmax.f32 %v4583, 0.0
    %v4648 = vmax.f32 %v4584, 0.0
    %v4649 = vmax.f32 %v4585, 0.0
    %v4650 = vmax.f32 %v4586, 0.0
    %v4651 = vmax.f32 %v4587, 0.0
    %v4652 = vmax.f32 %v4588, 0.0
    %v4653 = vmax.f32 %v4589, 0.0
    %v4654 = vmax.f32 %v4590, 0.0
    %v4655 = vmax.f32 %v4591, 0.0
    %v4656 = vmax.f32 %v4592, 0.0
    %v4657 = vmax.f32 %v4593, 0.0
    %v4658 = vmax.f32 %v4594, 0.0
    %v4659 = vmax.f32 %v4595, 0.0
    %v4660 = vmax.f32 %v4596, 0.0
    %v4661 = vpack.c.bf16 %v4601, %v4597
    %v4662 = vpack.c.bf16 %v4602, %v4598
    %v4663 = vpack.c.bf16 %v4603, %v4599
    %v4664 = vpack.c.bf16 %v4604, %v4600
    %v4665 = vpack.c.bf16 %v4609, %v4605
    %v4666 = vpack.c.bf16 %v4610, %v4606
    %v4667 = vpack.c.bf16 %v4611, %v4607
    %v4668 = vpack.c.bf16 %v4612, %v4608
    %v4669 = vpack.c.bf16 %v4617, %v4613
    %v4670 = vpack.c.bf16 %v4618, %v4614
    %v4671 = vpack.c.bf16 %v4619, %v4615
    %v4672 = vpack.c.bf16 %v4620, %v4616
    %v4673 = vpack.c.bf16 %v4625, %v4621
    %v4674 = vpack.c.bf16 %v4626, %v4622
    %v4675 = vpack.c.bf16 %v4627, %v4623
    %v4676 = vpack.c.bf16 %v4628, %v4624
    %v4677 = vpack.c.bf16 %v4633, %v4629
    %v4678 = vpack.c.bf16 %v4634, %v4630
    %v4679 = vpack.c.bf16 %v4635, %v4631
    %v4680 = vpack.c.bf16 %v4636, %v4632
    %v4681 = vpack.c.bf16 %v4641, %v4637
    %v4682 = vpack.c.bf16 %v4642, %v4638
    %v4683 = vpack.c.bf16 %v4643, %v4639
    %v4684 = vpack.c.bf16 %v4644, %v4640
    %v4685 = vpack.c.bf16 %v4649, %v4645
    %v4686 = vpack.c.bf16 %v4650, %v4646
    %v4687 = vpack.c.bf16 %v4651, %v4647
    %v4688 = vpack.c.bf16 %v4652, %v4648
    %v4689 = vpack.c.bf16 %v4657, %v4653
    %v4690 = vpack.c.bf16 %v4658, %v4654
    %v4691 = vpack.c.bf16 %v4659, %v4655
    %v4692 = vpack.c.bf16 %v4660, %v4656
    %4693 = vmatprep.subr.bf16.mxu0 %v1900
    %4694 = vmatpush1.bf16.msra.mxu0 %v1899
    %4695 = vmatprep.subr.bf16.mxu0 %v1896
    %4696 = vmatpush1.bf16.msra.mxu0 %v1895
    %4697 = vmatprep.subr.bf16.mxu0 %v1892
    %4698 = vmatpush1.bf16.msra.mxu0 %v1891
    %4699 = vmatprep.subr.bf16.mxu0 %v1888
    %4700 = vmatpush1.bf16.msra.mxu0 %v1887
    %4701 = vmatprep.subr.bf16.mxu0 %v1884
    %4702 = vmatpush1.bf16.msra.mxu0 %v1883
    %4703 = vmatprep.subr.bf16.mxu0 %v1880
    %4704 = vmatpush1.bf16.msra.mxu0 %v1879
    %4705 = vmatprep.subr.bf16.mxu0 %v1876
    %4706 = vmatpush1.bf16.msra.mxu0 %v1875
    %4707 = vmatprep.subr.bf16.mxu0 %v1872
    %4708 = vmatpush1.bf16.msra.mxu0 %v1871
    %4709 = vmatprep.subr.bf16.mxu0 %v1932
    %4710 = vmatpush2.bf16.msra.mxu0 %v1931
    %4711 = vmatprep.subr.bf16.mxu0 %v1928
    %4712 = vmatpush2.bf16.msra.mxu0 %v1927
    %4713 = vmatprep.subr.bf16.mxu0 %v1924
    %4714 = vmatpush2.bf16.msra.mxu0 %v1923
    %4715 = vmatprep.subr.bf16.mxu0 %v1920
    %4716 = vmatpush2.bf16.msra.mxu0 %v1919
    %4717 = vmatprep.subr.bf16.mxu0 %v1916
    %4718 = vmatpush2.bf16.msra.mxu0 %v1915
    %4719 = vmatprep.subr.bf16.mxu0 %v1912
    %4720 = vmatpush2.bf16.msra.mxu0 %v1911
    %4721 = vmatprep.subr.bf16.mxu0 %v1908
    %4722 = vmatpush2.bf16.msra.mxu0 %v1907
    %4723 = vmatprep.subr.bf16.mxu0 %v1904
    %4724 = vmatpush2.bf16.msra.mxu0 %v1903
    %4725 = vmatprep.mubr.bf16.mxu0 %v4662
    %4726 = vmatmul.mubr.bf16.gmra.mxu0 %v4661
    %v4727 = vpop.f32.mrf.mxu0
    %v4728 = vadd.f32 0.0, %v4727
    %v4729 = vpop.f32.mrf.mxu0
    %v4730 = vadd.f32 0.0, %v4729
    %v4731 = vpop.f32.mrf.mxu0
    %v4732 = vadd.f32 0.0, %v4731
    %v4733 = vpop.f32.mrf.mxu0
    %v4734 = vadd.f32 0.0, %v4733
    %4735 = vmatprep.mubr.bf16.mxu0 %v4666
    %4736 = vmatmul.mubr.bf16.gmra.mxu0 %v4665
    %v4737 = vpop.f32.mrf.mxu0
    %v4738 = vadd.f32 0.0, %v4737
    %v4739 = vpop.f32.mrf.mxu0
    %v4740 = vadd.f32 0.0, %v4739
    %v4741 = vpop.f32.mrf.mxu0
    %v4742 = vadd.f32 0.0, %v4741
    %v4743 = vpop.f32.mrf.mxu0
    %v4744 = vadd.f32 0.0, %v4743
    %4745 = vmatprep.mubr.bf16.mxu0 %v4670
    %4746 = vmatmul.mubr.bf16.gmra.mxu0 %v4669
    %v4747 = vpop.f32.mrf.mxu0
    %v4748 = vadd.f32 0.0, %v4747
    %v4749 = vpop.f32.mrf.mxu0
    %v4750 = vadd.f32 0.0, %v4749
    %v4751 = vpop.f32.mrf.mxu0
    %v4752 = vadd.f32 0.0, %v4751
    %v4753 = vpop.f32.mrf.mxu0
    %v4754 = vadd.f32 0.0, %v4753
    %4755 = vmatprep.mubr.bf16.mxu0 %v4674
    %4756 = vmatmul.mubr.bf16.gmra.mxu0 %v4673
    %v4757 = vpop.f32.mrf.mxu0
    %v4758 = vadd.f32 0.0, %v4757
    %v4759 = vpop.f32.mrf.mxu0
    %v4760 = vadd.f32 0.0, %v4759
    %v4761 = vpop.f32.mrf.mxu0
    %v4762 = vadd.f32 0.0, %v4761
    %v4763 = vpop.f32.mrf.mxu0
    %v4764 = vadd.f32 0.0, %v4763
    %4765 = vmatprep.mubr.bf16.mxu0 %v4678
    %4766 = vmatmul.mubr.bf16.gmra.mxu0 %v4677
    %v4767 = vpop.f32.mrf.mxu0
    %v4768 = vadd.f32 0.0, %v4767
    %v4769 = vpop.f32.mrf.mxu0
    %v4770 = vadd.f32 0.0, %v4769
    %v4771 = vpop.f32.mrf.mxu0
    %v4772 = vadd.f32 0.0, %v4771
    %v4773 = vpop.f32.mrf.mxu0
    %v4774 = vadd.f32 0.0, %v4773
    %4775 = vmatprep.mubr.bf16.mxu0 %v4682
    %4776 = vmatmul.mubr.bf16.gmra.mxu0 %v4681
    %v4777 = vpop.f32.mrf.mxu0
    %v4778 = vadd.f32 0.0, %v4777
    %v4779 = vpop.f32.mrf.mxu0
    %v4780 = vadd.f32 0.0, %v4779
    %v4781 = vpop.f32.mrf.mxu0
    %v4782 = vadd.f32 0.0, %v4781
    %v4783 = vpop.f32.mrf.mxu0
    %v4784 = vadd.f32 0.0, %v4783
    %4785 = vmatprep.mubr.bf16.mxu0 %v4686
    %4786 = vmatmul.mubr.bf16.gmra.mxu0 %v4685
    %v4787 = vpop.f32.mrf.mxu0
    %v4788 = vadd.f32 0.0, %v4787
    %v4789 = vpop.f32.mrf.mxu0
    %v4790 = vadd.f32 0.0, %v4789
    %v4791 = vpop.f32.mrf.mxu0
    %v4792 = vadd.f32 0.0, %v4791
    %v4793 = vpop.f32.mrf.mxu0
    %v4794 = vadd.f32 0.0, %v4793
    %4795 = vmatprep.mubr.bf16.mxu0 %v4690
    %4796 = vmatmul.mubr.bf16.gmra.mxu0 %v4689
    %v4797 = vpop.f32.mrf.mxu0
    %v4798 = vadd.f32 0.0, %v4797
    %v4799 = vpop.f32.mrf.mxu0
    %v4800 = vadd.f32 0.0, %v4799
    %v4801 = vpop.f32.mrf.mxu0
    %v4802 = vadd.f32 0.0, %v4801
    %v4803 = vpop.f32.mrf.mxu0
    %v4804 = vadd.f32 0.0, %v4803
    %4805 = vdwg.mxu0
    %4806 = vmatprep.subr.bf16.mxu0 %v1964
    %4807 = vmatpush1.bf16.msra.mxu0 %v1963
    %4808 = vmatprep.subr.bf16.mxu0 %v1960
    %4809 = vmatpush1.bf16.msra.mxu0 %v1959
    %4810 = vmatprep.subr.bf16.mxu0 %v1956
    %4811 = vmatpush1.bf16.msra.mxu0 %v1955
    %4812 = vmatprep.subr.bf16.mxu0 %v1952
    %4813 = vmatpush1.bf16.msra.mxu0 %v1951
    %4814 = vmatprep.subr.bf16.mxu0 %v1948
    %4815 = vmatpush1.bf16.msra.mxu0 %v1947
    %4816 = vmatprep.subr.bf16.mxu0 %v1944
    %4817 = vmatpush1.bf16.msra.mxu0 %v1943
    %4818 = vmatprep.subr.bf16.mxu0 %v1940
    %4819 = vmatpush1.bf16.msra.mxu0 %v1939
    %4820 = vmatprep.subr.bf16.mxu0 %v1936
    %4821 = vmatpush1.bf16.msra.mxu0 %v1935
    %4822 = vmatprep.subr.bf16.mxu0 %v1996
    %4823 = vmatpush2.bf16.msra.mxu0 %v1995
    %4824 = vmatprep.subr.bf16.mxu0 %v1992
    %4825 = vmatpush2.bf16.msra.mxu0 %v1991
    %4826 = vmatprep.subr.bf16.mxu0 %v1988
    %4827 = vmatpush2.bf16.msra.mxu0 %v1987
    %4828 = vmatprep.subr.bf16.mxu0 %v1984
    %4829 = vmatpush2.bf16.msra.mxu0 %v1983
    %4830 = vmatprep.subr.bf16.mxu0 %v1980
    %4831 = vmatpush2.bf16.msra.mxu0 %v1979
    %4832 = vmatprep.subr.bf16.mxu0 %v1976
    %4833 = vmatpush2.bf16.msra.mxu0 %v1975
    %4834 = vmatprep.subr.bf16.mxu0 %v1972
    %4835 = vmatpush2.bf16.msra.mxu0 %v1971
    %4836 = vmatprep.subr.bf16.mxu0 %v1968
    %4837 = vmatpush2.bf16.msra.mxu0 %v1967
    %4838 = vmatprep.mubr.bf16.mxu0 %v4664
    %4839 = vmatmul.mubr.bf16.gmra.mxu0 %v4663
    %v4840 = vpop.f32.mrf.mxu0
    %v4841 = vadd.f32 %v4728, %v4840
    %v4842 = vpop.f32.mrf.mxu0
    %v4843 = vadd.f32 %v4730, %v4842
    %v4844 = vpop.f32.mrf.mxu0
    %v4845 = vadd.f32 %v4732, %v4844
    %v4846 = vpop.f32.mrf.mxu0
    %v4847 = vadd.f32 %v4734, %v4846
    %4848 = vmatprep.mubr.bf16.mxu0 %v4668
    %4849 = vmatmul.mubr.bf16.gmra.mxu0 %v4667
    %v4850 = vpop.f32.mrf.mxu0
    %v4851 = vadd.f32 %v4738, %v4850
    %v4852 = vpop.f32.mrf.mxu0
    %v4853 = vadd.f32 %v4740, %v4852
    %v4854 = vpop.f32.mrf.mxu0
    %v4855 = vadd.f32 %v4742, %v4854
    %v4856 = vpop.f32.mrf.mxu0
    %v4857 = vadd.f32 %v4744, %v4856
    %4858 = vmatprep.mubr.bf16.mxu0 %v4672
    %4859 = vmatmul.mubr.bf16.gmra.mxu0 %v4671
    %v4860 = vpop.f32.mrf.mxu0
    %v4861 = vadd.f32 %v4748, %v4860
    %v4862 = vpop.f32.mrf.mxu0
    %v4863 = vadd.f32 %v4750, %v4862
    %v4864 = vpop.f32.mrf.mxu0
    %v4865 = vadd.f32 %v4752, %v4864
    %v4866 = vpop.f32.mrf.mxu0
    %v4867 = vadd.f32 %v4754, %v4866
    %4868 = vmatprep.mubr.bf16.mxu0 %v4676
    %4869 = vmatmul.mubr.bf16.gmra.mxu0 %v4675
    %v4870 = vpop.f32.mrf.mxu0
    %v4871 = vadd.f32 %v4758, %v4870
    %v4872 = vpop.f32.mrf.mxu0
    %v4873 = vadd.f32 %v4760, %v4872
    %v4874 = vpop.f32.mrf.mxu0
    %v4875 = vadd.f32 %v4762, %v4874
    %v4876 = vpop.f32.mrf.mxu0
    %v4877 = vadd.f32 %v4764, %v4876
    %4878 = vmatprep.mubr.bf16.mxu0 %v4680
    %4879 = vmatmul.mubr.bf16.gmra.mxu0 %v4679
    %v4880 = vpop.f32.mrf.mxu0
    %v4881 = vadd.f32 %v4768, %v4880
    %v4882 = vpop.f32.mrf.mxu0
    %v4883 = vadd.f32 %v4770, %v4882
    %v4884 = vpop.f32.mrf.mxu0
    %v4885 = vadd.f32 %v4772, %v4884
    %v4886 = vpop.f32.mrf.mxu0
    %v4887 = vadd.f32 %v4774, %v4886
    %4888 = vmatprep.mubr.bf16.mxu0 %v4684
    %4889 = vmatmul.mubr.bf16.gmra.mxu0 %v4683
    %v4890 = vpop.f32.mrf.mxu0
    %v4891 = vadd.f32 %v4778, %v4890
    %v4892 = vpop.f32.mrf.mxu0
    %v4893 = vadd.f32 %v4780, %v4892
    %v4894 = vpop.f32.mrf.mxu0
    %v4895 = vadd.f32 %v4782, %v4894
    %v4896 = vpop.f32.mrf.mxu0
    %v4897 = vadd.f32 %v4784, %v4896
    %4898 = vmatprep.mubr.bf16.mxu0 %v4688
    %4899 = vmatmul.mubr.bf16.gmra.mxu0 %v4687
    %v4900 = vpop.f32.mrf.mxu0
    %v4901 = vadd.f32 %v4788, %v4900
    %v4902 = vpop.f32.mrf.mxu0
    %v4903 = vadd.f32 %v4790, %v4902
    %v4904 = vpop.f32.mrf.mxu0
    %v4905 = vadd.f32 %v4792, %v4904
    %v4906 = vpop.f32.mrf.mxu0
    %v4907 = vadd.f32 %v4794, %v4906
    %4908 = vmatprep.mubr.bf16.mxu0 %v4692
    %4909 = vmatmul.mubr.bf16.gmra.mxu0 %v4691
    %v4910 = vpop.f32.mrf.mxu0
    %v4911 = vadd.f32 %v4798, %v4910
    %v4912 = vpop.f32.mrf.mxu0
    %v4913 = vadd.f32 %v4800, %v4912
    %v4914 = vpop.f32.mrf.mxu0
    %v4915 = vadd.f32 %v4802, %v4914
    %v4916 = vpop.f32.mrf.mxu0
    %v4917 = vadd.f32 %v4804, %v4916
    %4918 = vdwg.mxu0
    %4919 = vmatprep.subr.bf16.mxu0 %v1902
    %4920 = vmatpush1.bf16.msra.mxu0 %v1901
    %4921 = vmatprep.subr.bf16.mxu0 %v1898
    %4922 = vmatpush1.bf16.msra.mxu0 %v1897
    %4923 = vmatprep.subr.bf16.mxu0 %v1894
    %4924 = vmatpush1.bf16.msra.mxu0 %v1893
    %4925 = vmatprep.subr.bf16.mxu0 %v1890
    %4926 = vmatpush1.bf16.msra.mxu0 %v1889
    %4927 = vmatprep.subr.bf16.mxu0 %v1886
    %4928 = vmatpush1.bf16.msra.mxu0 %v1885
    %4929 = vmatprep.subr.bf16.mxu0 %v1882
    %4930 = vmatpush1.bf16.msra.mxu0 %v1881
    %4931 = vmatprep.subr.bf16.mxu0 %v1878
    %4932 = vmatpush1.bf16.msra.mxu0 %v1877
    %4933 = vmatprep.subr.bf16.mxu0 %v1874
    %4934 = vmatpush1.bf16.msra.mxu0 %v1873
    %4935 = vmatprep.subr.bf16.mxu0 %v1934
    %4936 = vmatpush2.bf16.msra.mxu0 %v1933
    %4937 = vmatprep.subr.bf16.mxu0 %v1930
    %4938 = vmatpush2.bf16.msra.mxu0 %v1929
    %4939 = vmatprep.subr.bf16.mxu0 %v1926
    %4940 = vmatpush2.bf16.msra.mxu0 %v1925
    %4941 = vmatprep.subr.bf16.mxu0 %v1922
    %4942 = vmatpush2.bf16.msra.mxu0 %v1921
    %4943 = vmatprep.subr.bf16.mxu0 %v1918
    %4944 = vmatpush2.bf16.msra.mxu0 %v1917
    %4945 = vmatprep.subr.bf16.mxu0 %v1914
    %4946 = vmatpush2.bf16.msra.mxu0 %v1913
    %4947 = vmatprep.subr.bf16.mxu0 %v1910
    %4948 = vmatpush2.bf16.msra.mxu0 %v1909
    %4949 = vmatprep.subr.bf16.mxu0 %v1906
    %4950 = vmatpush2.bf16.msra.mxu0 %v1905
    %4951 = vmatprep.mubr.bf16.mxu0 %v4662
    %4952 = vmatmul.mubr.bf16.gmra.mxu0 %v4661
    %v4953 = vpop.f32.mrf.mxu0
    %v4954 = vadd.f32 0.0, %v4953
    %v4955 = vpop.f32.mrf.mxu0
    %v4956 = vadd.f32 0.0, %v4955
    %v4957 = vpop.f32.mrf.mxu0
    %v4958 = vadd.f32 0.0, %v4957
    %v4959 = vpop.f32.mrf.mxu0
    %v4960 = vadd.f32 0.0, %v4959
    %4961 = vmatprep.mubr.bf16.mxu0 %v4666
    %4962 = vmatmul.mubr.bf16.gmra.mxu0 %v4665
    %v4963 = vpop.f32.mrf.mxu0
    %v4964 = vadd.f32 0.0, %v4963
    %v4965 = vpop.f32.mrf.mxu0
    %v4966 = vadd.f32 0.0, %v4965
    %v4967 = vpop.f32.mrf.mxu0
    %v4968 = vadd.f32 0.0, %v4967
    %v4969 = vpop.f32.mrf.mxu0
    %v4970 = vadd.f32 0.0, %v4969
    %4971 = vmatprep.mubr.bf16.mxu0 %v4670
    %4972 = vmatmul.mubr.bf16.gmra.mxu0 %v4669
    %v4973 = vpop.f32.mrf.mxu0
    %v4974 = vadd.f32 0.0, %v4973
    %v4975 = vpop.f32.mrf.mxu0
    %v4976 = vadd.f32 0.0, %v4975
    %v4977 = vpop.f32.mrf.mxu0
    %v4978 = vadd.f32 0.0, %v4977
    %v4979 = vpop.f32.mrf.mxu0
    %v4980 = vadd.f32 0.0, %v4979
    %4981 = vmatprep.mubr.bf16.mxu0 %v4674
    %4982 = vmatmul.mubr.bf16.gmra.mxu0 %v4673
    %v4983 = vpop.f32.mrf.mxu0
    %v4984 = vadd.f32 0.0, %v4983
    %v4985 = vpop.f32.mrf.mxu0
    %v4986 = vadd.f32 0.0, %v4985
    %v4987 = vpop.f32.mrf.mxu0
    %v4988 = vadd.f32 0.0, %v4987
    %v4989 = vpop.f32.mrf.mxu0
    %v4990 = vadd.f32 0.0, %v4989
    %4991 = vmatprep.mubr.bf16.mxu0 %v4678
    %4992 = vmatmul.mubr.bf16.gmra.mxu0 %v4677
    %v4993 = vpop.f32.mrf.mxu0
    %v4994 = vadd.f32 0.0, %v4993
    %v4995 = vpop.f32.mrf.mxu0
    %v4996 = vadd.f32 0.0, %v4995
    %v4997 = vpop.f32.mrf.mxu0
    %v4998 = vadd.f32 0.0, %v4997
    %v4999 = vpop.f32.mrf.mxu0
    %v5000 = vadd.f32 0.0, %v4999
    %5001 = vmatprep.mubr.bf16.mxu0 %v4682
    %5002 = vmatmul.mubr.bf16.gmra.mxu0 %v4681
    %v5003 = vpop.f32.mrf.mxu0
    %v5004 = vadd.f32 0.0, %v5003
    %v5005 = vpop.f32.mrf.mxu0
    %v5006 = vadd.f32 0.0, %v5005
    %v5007 = vpop.f32.mrf.mxu0
    %v5008 = vadd.f32 0.0, %v5007
    %v5009 = vpop.f32.mrf.mxu0
    %v5010 = vadd.f32 0.0, %v5009
    %5011 = vmatprep.mubr.bf16.mxu0 %v4686
    %5012 = vmatmul.mubr.bf16.gmra.mxu0 %v4685
    %v5013 = vpop.f32.mrf.mxu0
    %v5014 = vadd.f32 0.0, %v5013
    %v5015 = vpop.f32.mrf.mxu0
    %v5016 = vadd.f32 0.0, %v5015
    %v5017 = vpop.f32.mrf.mxu0
    %v5018 = vadd.f32 0.0, %v5017
    %v5019 = vpop.f32.mrf.mxu0
    %v5020 = vadd.f32 0.0, %v5019
    %5021 = vmatprep.mubr.bf16.mxu0 %v4690
    %5022 = vmatmul.mubr.bf16.gmra.mxu0 %v4689
    %v5023 = vpop.f32.mrf.mxu0
    %v5024 = vadd.f32 0.0, %v5023
    %v5025 = vpop.f32.mrf.mxu0
    %v5026 = vadd.f32 0.0, %v5025
    %v5027 = vpop.f32.mrf.mxu0
    %v5028 = vadd.f32 0.0, %v5027
    %v5029 = vpop.f32.mrf.mxu0
    %v5030 = vadd.f32 0.0, %v5029
    %5031 = vdwg.mxu0
    %5032 = vmatprep.subr.bf16.mxu0 %v1966
    %5033 = vmatpush1.bf16.msra.mxu0 %v1965
    %5034 = vmatprep.subr.bf16.mxu0 %v1962
    %5035 = vmatpush1.bf16.msra.mxu0 %v1961
    %5036 = vmatprep.subr.bf16.mxu0 %v1958
    %5037 = vmatpush1.bf16.msra.mxu0 %v1957
    %5038 = vmatprep.subr.bf16.mxu0 %v1954
    %5039 = vmatpush1.bf16.msra.mxu0 %v1953
    %5040 = vmatprep.subr.bf16.mxu0 %v1950
    %5041 = vmatpush1.bf16.msra.mxu0 %v1949
    %5042 = vmatprep.subr.bf16.mxu0 %v1946
    %5043 = vmatpush1.bf16.msra.mxu0 %v1945
    %5044 = vmatprep.subr.bf16.mxu0 %v1942
    %5045 = vmatpush1.bf16.msra.mxu0 %v1941
    %5046 = vmatprep.subr.bf16.mxu0 %v1938
    %5047 = vmatpush1.bf16.msra.mxu0 %v1937
    %5048 = vmatprep.subr.bf16.mxu0 %v1998
    %5049 = vmatpush2.bf16.msra.mxu0 %v1997
    %5050 = vmatprep.subr.bf16.mxu0 %v1994
    %5051 = vmatpush2.bf16.msra.mxu0 %v1993
    %5052 = vmatprep.subr.bf16.mxu0 %v1990
    %5053 = vmatpush2.bf16.msra.mxu0 %v1989
    %5054 = vmatprep.subr.bf16.mxu0 %v1986
    %5055 = vmatpush2.bf16.msra.mxu0 %v1985
    %5056 = vmatprep.subr.bf16.mxu0 %v1982
    %5057 = vmatpush2.bf16.msra.mxu0 %v1981
    %5058 = vmatprep.subr.bf16.mxu0 %v1978
    %5059 = vmatpush2.bf16.msra.mxu0 %v1977
    %5060 = vmatprep.subr.bf16.mxu0 %v1974
    %5061 = vmatpush2.bf16.msra.mxu0 %v1973
    %5062 = vmatprep.subr.bf16.mxu0 %v1970
    %5063 = vmatpush2.bf16.msra.mxu0 %v1969
    %5064 = vmatprep.mubr.bf16.mxu0 %v4664
    %5065 = vmatmul.mubr.bf16.gmra.mxu0 %v4663
    %v5066 = vpop.f32.mrf.mxu0
    %v5067 = vadd.f32 %v4954, %v5066
    %v5068 = vpop.f32.mrf.mxu0
    %v5069 = vadd.f32 %v4956, %v5068
    %v5070 = vpop.f32.mrf.mxu0
    %v5071 = vadd.f32 %v4958, %v5070
    %v5072 = vpop.f32.mrf.mxu0
    %v5073 = vadd.f32 %v4960, %v5072
    %5074 = vmatprep.mubr.bf16.mxu0 %v4668
    %5075 = vmatmul.mubr.bf16.gmra.mxu0 %v4667
    %v5076 = vpop.f32.mrf.mxu0
    %v5077 = vadd.f32 %v4964, %v5076
    %v5078 = vpop.f32.mrf.mxu0
    %v5079 = vadd.f32 %v4966, %v5078
    %v5080 = vpop.f32.mrf.mxu0
    %v5081 = vadd.f32 %v4968, %v5080
    %v5082 = vpop.f32.mrf.mxu0
    %v5083 = vadd.f32 %v4970, %v5082
    %5084 = vmatprep.mubr.bf16.mxu0 %v4672
    %5085 = vmatmul.mubr.bf16.gmra.mxu0 %v4671
    %v5086 = vpop.f32.mrf.mxu0
    %v5087 = vadd.f32 %v4974, %v5086
    %v5088 = vpop.f32.mrf.mxu0
    %v5089 = vadd.f32 %v4976, %v5088
    %v5090 = vpop.f32.mrf.mxu0
    %v5091 = vadd.f32 %v4978, %v5090
    %v5092 = vpop.f32.mrf.mxu0
    %v5093 = vadd.f32 %v4980, %v5092
    %5094 = vmatprep.mubr.bf16.mxu0 %v4676
    %5095 = vmatmul.mubr.bf16.gmra.mxu0 %v4675
    %v5096 = vpop.f32.mrf.mxu0
    %v5097 = vadd.f32 %v4984, %v5096
    %v5098 = vpop.f32.mrf.mxu0
    %v5099 = vadd.f32 %v4986, %v5098
    %v5100 = vpop.f32.mrf.mxu0
    %v5101 = vadd.f32 %v4988, %v5100
    %v5102 = vpop.f32.mrf.mxu0
    %v5103 = vadd.f32 %v4990, %v5102
    %5104 = vmatprep.mubr.bf16.mxu0 %v4680
    %5105 = vmatmul.mubr.bf16.gmra.mxu0 %v4679
    %v5106 = vpop.f32.mrf.mxu0
    %v5107 = vadd.f32 %v4994, %v5106
    %v5108 = vpop.f32.mrf.mxu0
    %v5109 = vadd.f32 %v4996, %v5108
    %v5110 = vpop.f32.mrf.mxu0
    %v5111 = vadd.f32 %v4998, %v5110
    %v5112 = vpop.f32.mrf.mxu0
    %v5113 = vadd.f32 %v5000, %v5112
    %5114 = vmatprep.mubr.bf16.mxu0 %v4684
    %5115 = vmatmul.mubr.bf16.gmra.mxu0 %v4683
    %v5116 = vpop.f32.mrf.mxu0
    %v5117 = vadd.f32 %v5004, %v5116
    %v5118 = vpop.f32.mrf.mxu0
    %v5119 = vadd.f32 %v5006, %v5118
    %v5120 = vpop.f32.mrf.mxu0
    %v5121 = vadd.f32 %v5008, %v5120
    %v5122 = vpop.f32.mrf.mxu0
    %v5123 = vadd.f32 %v5010, %v5122
    %5124 = vmatprep.mubr.bf16.mxu0 %v4688
    %5125 = vmatmul.mubr.bf16.gmra.mxu0 %v4687
    %v5126 = vpop.f32.mrf.mxu0
    %v5127 = vadd.f32 %v5014, %v5126
    %v5128 = vpop.f32.mrf.mxu0
    %v5129 = vadd.f32 %v5016, %v5128
    %v5130 = vpop.f32.mrf.mxu0
    %v5131 = vadd.f32 %v5018, %v5130
    %v5132 = vpop.f32.mrf.mxu0
    %v5133 = vadd.f32 %v5020, %v5132
    %5134 = vmatprep.mubr.bf16.mxu0 %v4692
    %5135 = vmatmul.mubr.bf16.gmra.mxu0 %v4691
    %v5136 = vpop.f32.mrf.mxu0
    %v5137 = vadd.f32 %v5024, %v5136
    %v5138 = vpop.f32.mrf.mxu0
    %v5139 = vadd.f32 %v5026, %v5138
    %v5140 = vpop.f32.mrf.mxu0
    %v5141 = vadd.f32 %v5028, %v5140
    %v5142 = vpop.f32.mrf.mxu0
    %v5143 = vadd.f32 %v5030, %v5142
    %5144 = vdwg.mxu0
    %v5145 = vadd.f32 %v4841, %v4845
    %v5146 = vadd.f32 %v5145, %v4851
    %v5147 = vadd.f32 %v5146, %v4855
    %v5148 = vadd.f32 %v5147, %v4861
    %v5149 = vadd.f32 %v5148, %v4865
    %v5150 = vadd.f32 %v5149, %v4871
    %v5151 = vadd.f32 %v5150, %v4875
    %v5152 = vadd.f32 %v5151, %v4881
    %v5153 = vadd.f32 %v5152, %v4885
    %v5154 = vadd.f32 %v5153, %v4891
    %v5155 = vadd.f32 %v5154, %v4895
    %v5156 = vadd.f32 %v5155, %v4901
    %v5157 = vadd.f32 %v5156, %v4905
    %v5158 = vadd.f32 %v5157, %v4911
    %v5159 = vadd.f32 %v5158, %v4915
    %v5160 = vrot.slane %v5159, 4
    %v5161 = vadd.f32 %v5159, %v5160
    %v5162 = vrot.slane %v5161, 2
    %v5163 = vadd.f32 %v5161, %v5162
    %v5164 = vrot.slane %v5163, 1
    %v5165 = vadd.f32 %v5163, %v5164
    %v5166 = vadd.f32 %v4843, %v4847
    %v5167 = vadd.f32 %v5166, %v4853
    %v5168 = vadd.f32 %v5167, %v4857
    %v5169 = vadd.f32 %v5168, %v4863
    %v5170 = vadd.f32 %v5169, %v4867
    %v5171 = vadd.f32 %v5170, %v4873
    %v5172 = vadd.f32 %v5171, %v4877
    %v5173 = vadd.f32 %v5172, %v4883
    %v5174 = vadd.f32 %v5173, %v4887
    %v5175 = vadd.f32 %v5174, %v4893
    %v5176 = vadd.f32 %v5175, %v4897
    %v5177 = vadd.f32 %v5176, %v4903
    %v5178 = vadd.f32 %v5177, %v4907
    %v5179 = vadd.f32 %v5178, %v4913
    %v5180 = vadd.f32 %v5179, %v4917
    %v5181 = vrot.slane %v5180, 4
    %v5182 = vadd.f32 %v5180, %v5181
    %v5183 = vrot.slane %v5182, 2
    %v5184 = vadd.f32 %v5182, %v5183
    %v5185 = vrot.slane %v5184, 1
    %v5186 = vadd.f32 %v5184, %v5185
    %v5187 = vadd.f32 %v5067, %v5071
    %v5188 = vadd.f32 %v5187, %v5077
    %v5189 = vadd.f32 %v5188, %v5081
    %v5190 = vadd.f32 %v5189, %v5087
    %v5191 = vadd.f32 %v5190, %v5091
    %v5192 = vadd.f32 %v5191, %v5097
    %v5193 = vadd.f32 %v5192, %v5101
    %v5194 = vadd.f32 %v5193, %v5107
    %v5195 = vadd.f32 %v5194, %v5111
    %v5196 = vadd.f32 %v5195, %v5117
    %v5197 = vadd.f32 %v5196, %v5121
    %v5198 = vadd.f32 %v5197, %v5127
    %v5199 = vadd.f32 %v5198, %v5131
    %v5200 = vadd.f32 %v5199, %v5137
    %v5201 = vadd.f32 %v5200, %v5141
    %v5202 = vrot.slane %v5201, 4
    %v5203 = vadd.f32 %v5201, %v5202
    %v5204 = vrot.slane %v5203, 2
    %v5205 = vadd.f32 %v5203, %v5204
    %v5206 = vrot.slane %v5205, 1
    %v5207 = vadd.f32 %v5205, %v5206
    %v5208 = vadd.f32 %v5069, %v5073
    %v5209 = vadd.f32 %v5208, %v5079
    %v5210 = vadd.f32 %v5209, %v5083
    %v5211 = vadd.f32 %v5210, %v5089
    %v5212 = vadd.f32 %v5211, %v5093
    %v5213 = vadd.f32 %v5212, %v5099
    %v5214 = vadd.f32 %v5213, %v5103
    %v5215 = vadd.f32 %v5214, %v5109
    %v5216 = vadd.f32 %v5215, %v5113
    %v5217 = vadd.f32 %v5216, %v5119
    %v5218 = vadd.f32 %v5217, %v5123
    %v5219 = vadd.f32 %v5218, %v5129
    %v5220 = vadd.f32 %v5219, %v5133
    %v5221 = vadd.f32 %v5220, %v5139
    %v5222 = vadd.f32 %v5221, %v5143
    %v5223 = vrot.slane %v5222, 4
    %v5224 = vadd.f32 %v5222, %v5223
    %v5225 = vrot.slane %v5224, 2
    %v5226 = vadd.f32 %v5224, %v5225
    %v5227 = vrot.slane %v5226, 1
    %v5228 = vadd.f32 %v5226, %v5227
    %v5229 = vmul.f32 %v4841, %v4841
    %v5230 = vmul.f32 %v4843, %v4843
    %v5231 = vmul.f32 %v5067, %v5067
    %v5232 = vmul.f32 %v5069, %v5069
    %v5233 = vmul.f32 %v4845, %v4845
    %v5234 = vmul.f32 %v4847, %v4847
    %v5235 = vmul.f32 %v5071, %v5071
    %v5236 = vmul.f32 %v5073, %v5073
    %v5237 = vmul.f32 %v4851, %v4851
    %v5238 = vmul.f32 %v4853, %v4853
    %v5239 = vmul.f32 %v5077, %v5077
    %v5240 = vmul.f32 %v5079, %v5079
    %v5241 = vmul.f32 %v4855, %v4855
    %v5242 = vmul.f32 %v4857, %v4857
    %v5243 = vmul.f32 %v5081, %v5081
    %v5244 = vmul.f32 %v5083, %v5083
    %v5245 = vmul.f32 %v4861, %v4861
    %v5246 = vmul.f32 %v4863, %v4863
    %v5247 = vmul.f32 %v5087, %v5087
    %v5248 = vmul.f32 %v5089, %v5089
    %v5249 = vmul.f32 %v4865, %v4865
    %v5250 = vmul.f32 %v4867, %v4867
    %v5251 = vmul.f32 %v5091, %v5091
    %v5252 = vmul.f32 %v5093, %v5093
    %v5253 = vmul.f32 %v4871, %v4871
    %v5254 = vmul.f32 %v4873, %v4873
    %v5255 = vmul.f32 %v5097, %v5097
    %v5256 = vmul.f32 %v5099, %v5099
    %v5257 = vmul.f32 %v4875, %v4875
    %v5258 = vmul.f32 %v4877, %v4877
    %v5259 = vmul.f32 %v5101, %v5101
    %v5260 = vmul.f32 %v5103, %v5103
    %v5261 = vmul.f32 %v4881, %v4881
    %v5262 = vmul.f32 %v4883, %v4883
    %v5263 = vmul.f32 %v5107, %v5107
    %v5264 = vmul.f32 %v5109, %v5109
    %v5265 = vmul.f32 %v4885, %v4885
    %v5266 = vmul.f32 %v4887, %v4887
    %v5267 = vmul.f32 %v5111, %v5111
    %v5268 = vmul.f32 %v5113, %v5113
    %v5269 = vmul.f32 %v4891, %v4891
    %v5270 = vmul.f32 %v4893, %v4893
    %v5271 = vmul.f32 %v5117, %v5117
    %v5272 = vmul.f32 %v5119, %v5119
    %v5273 = vmul.f32 %v4895, %v4895
    %v5274 = vmul.f32 %v4897, %v4897
    %v5275 = vmul.f32 %v5121, %v5121
    %v5276 = vmul.f32 %v5123, %v5123
    %v5277 = vmul.f32 %v4901, %v4901
    %v5278 = vmul.f32 %v4903, %v4903
    %v5279 = vmul.f32 %v5127, %v5127
    %v5280 = vmul.f32 %v5129, %v5129
    %v5281 = vmul.f32 %v4905, %v4905
    %v5282 = vmul.f32 %v4907, %v4907
    %v5283 = vmul.f32 %v5131, %v5131
    %v5284 = vmul.f32 %v5133, %v5133
    %v5285 = vmul.f32 %v4911, %v4911
    %v5286 = vmul.f32 %v4913, %v4913
    %v5287 = vmul.f32 %v5137, %v5137
    %v5288 = vmul.f32 %v5139, %v5139
    %v5289 = vmul.f32 %v4915, %v4915
    %v5290 = vmul.f32 %v4917, %v4917
    %v5291 = vmul.f32 %v5141, %v5141
    %v5292 = vmul.f32 %v5143, %v5143
    %v5293 = vadd.f32 %v5229, %v5233
    %v5294 = vadd.f32 %v5293, %v5237
    %v5295 = vadd.f32 %v5294, %v5241
    %v5296 = vadd.f32 %v5295, %v5245
    %v5297 = vadd.f32 %v5296, %v5249
    %v5298 = vadd.f32 %v5297, %v5253
    %v5299 = vadd.f32 %v5298, %v5257
    %v5300 = vadd.f32 %v5299, %v5261
    %v5301 = vadd.f32 %v5300, %v5265
    %v5302 = vadd.f32 %v5301, %v5269
    %v5303 = vadd.f32 %v5302, %v5273
    %v5304 = vadd.f32 %v5303, %v5277
    %v5305 = vadd.f32 %v5304, %v5281
    %v5306 = vadd.f32 %v5305, %v5285
    %v5307 = vadd.f32 %v5306, %v5289
    %v5308 = vrot.slane %v5307, 4
    %v5309 = vadd.f32 %v5307, %v5308
    %v5310 = vrot.slane %v5309, 2
    %v5311 = vadd.f32 %v5309, %v5310
    %v5312 = vrot.slane %v5311, 1
    %v5313 = vadd.f32 %v5311, %v5312
    %v5314 = vadd.f32 %v5230, %v5234
    %v5315 = vadd.f32 %v5314, %v5238
    %v5316 = vadd.f32 %v5315, %v5242
    %v5317 = vadd.f32 %v5316, %v5246
    %v5318 = vadd.f32 %v5317, %v5250
    %v5319 = vadd.f32 %v5318, %v5254
    %v5320 = vadd.f32 %v5319, %v5258
    %v5321 = vadd.f32 %v5320, %v5262
    %v5322 = vadd.f32 %v5321, %v5266
    %v5323 = vadd.f32 %v5322, %v5270
    %v5324 = vadd.f32 %v5323, %v5274
    %v5325 = vadd.f32 %v5324, %v5278
    %v5326 = vadd.f32 %v5325, %v5282
    %v5327 = vadd.f32 %v5326, %v5286
    %v5328 = vadd.f32 %v5327, %v5290
    %v5329 = vrot.slane %v5328, 4
    %v5330 = vadd.f32 %v5328, %v5329
    %v5331 = vrot.slane %v5330, 2
    %v5332 = vadd.f32 %v5330, %v5331
    %v5333 = vrot.slane %v5332, 1
    %v5334 = vadd.f32 %v5332, %v5333
    %v5335 = vadd.f32 %v5231, %v5235
    %v5336 = vadd.f32 %v5335, %v5239
    %v5337 = vadd.f32 %v5336, %v5243
    %v5338 = vadd.f32 %v5337, %v5247
    %v5339 = vadd.f32 %v5338, %v5251
    %v5340 = vadd.f32 %v5339, %v5255
    %v5341 = vadd.f32 %v5340, %v5259
    %v5342 = vadd.f32 %v5341, %v5263
    %v5343 = vadd.f32 %v5342, %v5267
    %v5344 = vadd.f32 %v5343, %v5271
    %v5345 = vadd.f32 %v5344, %v5275
    %v5346 = vadd.f32 %v5345, %v5279
    %v5347 = vadd.f32 %v5346, %v5283
    %v5348 = vadd.f32 %v5347, %v5287
    %v5349 = vadd.f32 %v5348, %v5291
    %v5350 = vrot.slane %v5349, 4
    %v5351 = vadd.f32 %v5349, %v5350
    %v5352 = vrot.slane %v5351, 2
    %v5353 = vadd.f32 %v5351, %v5352
    %v5354 = vrot.slane %v5353, 1
    %v5355 = vadd.f32 %v5353, %v5354
    %v5356 = vadd.f32 %v5232, %v5236
    %v5357 = vadd.f32 %v5356, %v5240
    %v5358 = vadd.f32 %v5357, %v5244
    %v5359 = vadd.f32 %v5358, %v5248
    %v5360 = vadd.f32 %v5359, %v5252
    %v5361 = vadd.f32 %v5360, %v5256
    %v5362 = vadd.f32 %v5361, %v5260
    %v5363 = vadd.f32 %v5362, %v5264
    %v5364 = vadd.f32 %v5363, %v5268
    %v5365 = vadd.f32 %v5364, %v5272
    %v5366 = vadd.f32 %v5365, %v5276
    %v5367 = vadd.f32 %v5366, %v5280
    %v5368 = vadd.f32 %v5367, %v5284
    %v5369 = vadd.f32 %v5368, %v5288
    %v5370 = vadd.f32 %v5369, %v5292
    %v5371 = vrot.slane %v5370, 4
    %v5372 = vadd.f32 %v5370, %v5371
    %v5373 = vrot.slane %v5372, 2
    %v5374 = vadd.f32 %v5372, %v5373
    %v5375 = vrot.slane %v5374, 1
    %v5376 = vadd.f32 %v5374, %v5375
    %v5377 = vmul.f32 %v5165, 0.0078125
    %v5378 = vmul.f32 %v5186, 0.0078125
    %v5379 = vmul.f32 %v5207, 0.0078125
    %v5380 = vmul.f32 %v5228, 0.0078125
    %v5381 = vmul.f32 %v5313, 0.0078125
    %v5382 = vmul.f32 %v5334, 0.0078125
    %v5383 = vmul.f32 %v5355, 0.0078125
    %v5384 = vmul.f32 %v5376, 0.0078125
    %v5385 = vmul.f32 %v5377, %v5377
    %v5386 = vmul.f32 %v5378, %v5378
    %v5387 = vmul.f32 %v5379, %v5379
    %v5388 = vmul.f32 %v5380, %v5380
    %v5389 = vsub.f32 %v5381, %v5385
    %v5390 = vsub.f32 %v5382, %v5386
    %v5391 = vsub.f32 %v5383, %v5387
    %v5392 = vsub.f32 %v5384, %v5388
    %v5393 = vmax.f32 %v5389, 0.0
    %v5394 = vmax.f32 %v5390, 0.0
    %v5395 = vmax.f32 %v5391, 0.0
    %v5396 = vmax.f32 %v5392, 0.0
    %v5397 = vadd.f32 %v5393, 1e-05
    %v5398 = vadd.f32 %v5394, 1e-05
    %v5399 = vadd.f32 %v5395, 1e-05
    %v5400 = vadd.f32 %v5396, 1e-05
    %v5401 = vrsqrt.pop %v5397
    %v5402 = vrsqrt.pop %v5398
    %v5403 = vrsqrt.pop %v5399
    %v5404 = vrsqrt.pop %v5400
    %v5409 = vcombine.low %v5401, %v5402
    %v5410 = vcombine.low %v5403, %v5404
    %v5412 = vunpack.c.l.s4 1966171168
    %v5413 = vunpack.c.0.s8 %v5412
    %v5414 = vlaneseq
    %v5415 = vshrl.u32 %v5414, 7
    %v5416 = vsub.s32 %v5413, %v5415
    %v5417 = vrot.slane %v5409, %v5416
    %v5419 = vunpack.c.l.s4 1966171168
    %v5420 = vunpack.c.0.s8 %v5419
    %v5421 = vlaneseq
    %v5422 = vshrl.u32 %v5421, 7
    %v5423 = vsub.s32 %v5420, %v5422
    %v5424 = vrot.slane %v5410, %v5423
    %v5425 = vcombine.low %v5417, %v5424
    %v5427 = vunpack.c.l.s4 1966171168
    %v5428 = vunpack.c.0.s8 %v5427
    %v5429 = vlaneseq
    %v5430 = vshrl.u32 %v5429, 7
    %v5431 = vsub.s32 %v5428, %v5430
    %v5432 = vrot.slane %v5425, %v5431
    %v5434 = vmul.f32 %v2831, %v5432
    %v5436 = vlaneseq
    %v5437 = vshrl.u32 %v5436, 7
    %v5438 = vsub.s32 0, %v5437
    %v5439 = vrot.slane %v5434, %v5438
    %v5440 = vlaneseq
    %v5441 = vshrl.u32 %v5440, 7
    %v5442 = vsub.s32 1, %v5441
    %v5443 = vrot.slane %v5434, %v5442
    %v5444 = vlaneseq
    %v5445 = vshrl.u32 %v5444, 7
    %v5446 = vsub.s32 2, %v5445
    %v5447 = vrot.slane %v5434, %v5446
    %v5448 = vlaneseq
    %v5449 = vshrl.u32 %v5448, 7
    %v5450 = vsub.s32 3, %v5449
    %v5451 = vrot.slane %v5434, %v5450
    %v5456 = vmul.f32 %v5377, %v5439
    %v5457 = vmul.f32 %v5378, %v5443
    %v5458 = vmul.f32 %v5379, %v5447
    %v5459 = vmul.f32 %v5380, %v5451
    %v5464 = vcombine.low %v5456, %v5457
    %v5465 = vcombine.low %v5458, %v5459
    %v5467 = vunpack.c.l.s4 1966171168
    %v5468 = vunpack.c.0.s8 %v5467
    %v5469 = vlaneseq
    %v5470 = vshrl.u32 %v5469, 7
    %v5471 = vsub.s32 %v5468, %v5470
    %v5472 = vrot.slane %v5464, %v5471
    %v5474 = vunpack.c.l.s4 1966171168
    %v5475 = vunpack.c.0.s8 %v5474
    %v5476 = vlaneseq
    %v5477 = vshrl.u32 %v5476, 7
    %v5478 = vsub.s32 %v5475, %v5477
    %v5479 = vrot.slane %v5465, %v5478
    %v5480 = vcombine.low %v5472, %v5479
    %v5482 = vunpack.c.l.s4 1966171168
    %v5483 = vunpack.c.0.s8 %v5482
    %v5484 = vlaneseq
    %v5485 = vshrl.u32 %v5484, 7
    %v5486 = vsub.s32 %v5483, %v5485
    %v5487 = vrot.slane %v5480, %v5486
    %v5489 = vsub.f32 %v2870, %v5487
    %v5490 = vmul.f32 %v4841, %v5439
    %v5491 = vmul.f32 %v4843, %v5443
    %v5492 = vmul.f32 %v5067, %v5447
    %v5493 = vmul.f32 %v5069, %v5451
    %v5494 = vmul.f32 %v4845, %v5439
    %v5495 = vmul.f32 %v4847, %v5443
    %v5496 = vmul.f32 %v5071, %v5447
    %v5497 = vmul.f32 %v5073, %v5451
    %v5498 = vmul.f32 %v4851, %v5439
    %v5499 = vmul.f32 %v4853, %v5443
    %v5500 = vmul.f32 %v5077, %v5447
    %v5501 = vmul.f32 %v5079, %v5451
    %v5502 = vmul.f32 %v4855, %v5439
    %v5503 = vmul.f32 %v4857, %v5443
    %v5504 = vmul.f32 %v5081, %v5447
    %v5505 = vmul.f32 %v5083, %v5451
    %v5506 = vmul.f32 %v4861, %v5439
    %v5507 = vmul.f32 %v4863, %v5443
    %v5508 = vmul.f32 %v5087, %v5447
    %v5509 = vmul.f32 %v5089, %v5451
    %v5510 = vmul.f32 %v4865, %v5439
    %v5511 = vmul.f32 %v4867, %v5443
    %v5512 = vmul.f32 %v5091, %v5447
    %v5513 = vmul.f32 %v5093, %v5451
    %v5514 = vmul.f32 %v4871, %v5439
    %v5515 = vmul.f32 %v4873, %v5443
    %v5516 = vmul.f32 %v5097, %v5447
    %v5517 = vmul.f32 %v5099, %v5451
    %v5518 = vmul.f32 %v4875, %v5439
    %v5519 = vmul.f32 %v4877, %v5443
    %v5520 = vmul.f32 %v5101, %v5447
    %v5521 = vmul.f32 %v5103, %v5451
    %v5522 = vmul.f32 %v4881, %v5439
    %v5523 = vmul.f32 %v4883, %v5443
    %v5524 = vmul.f32 %v5107, %v5447
    %v5525 = vmul.f32 %v5109, %v5451
    %v5526 = vmul.f32 %v4885, %v5439
    %v5527 = vmul.f32 %v4887, %v5443
    %v5528 = vmul.f32 %v5111, %v5447
    %v5529 = vmul.f32 %v5113, %v5451
    %v5530 = vmul.f32 %v4891, %v5439
    %v5531 = vmul.f32 %v4893, %v5443
    %v5532 = vmul.f32 %v5117, %v5447
    %v5533 = vmul.f32 %v5119, %v5451
    %v5534 = vmul.f32 %v4895, %v5439
    %v5535 = vmul.f32 %v4897, %v5443
    %v5536 = vmul.f32 %v5121, %v5447
    %v5537 = vmul.f32 %v5123, %v5451
    %v5538 = vmul.f32 %v4901, %v5439
    %v5539 = vmul.f32 %v4903, %v5443
    %v5540 = vmul.f32 %v5127, %v5447
    %v5541 = vmul.f32 %v5129, %v5451
    %v5542 = vmul.f32 %v4905, %v5439
    %v5543 = vmul.f32 %v4907, %v5443
    %v5544 = vmul.f32 %v5131, %v5447
    %v5545 = vmul.f32 %v5133, %v5451
    %v5546 = vmul.f32 %v4911, %v5439
    %v5547 = vmul.f32 %v4913, %v5443
    %v5548 = vmul.f32 %v5137, %v5447
    %v5549 = vmul.f32 %v5139, %v5451
    %v5550 = vmul.f32 %v4915, %v5439
    %v5551 = vmul.f32 %v4917, %v5443
    %v5552 = vmul.f32 %v5141, %v5447
    %v5553 = vmul.f32 %v5143, %v5451
    %v5555 = vlaneseq
    %v5556 = vshrl.u32 %v5555, 7
    %v5557 = vsub.s32 0, %v5556
    %v5558 = vrot.slane %v5489, %v5557
    %v5559 = vlaneseq
    %v5560 = vshrl.u32 %v5559, 7
    %v5561 = vsub.s32 1, %v5560
    %v5562 = vrot.slane %v5489, %v5561
    %v5563 = vlaneseq
    %v5564 = vshrl.u32 %v5563, 7
    %v5565 = vsub.s32 2, %v5564
    %v5566 = vrot.slane %v5489, %v5565
    %v5567 = vlaneseq
    %v5568 = vshrl.u32 %v5567, 7
    %v5569 = vsub.s32 3, %v5568
    %v5570 = vrot.slane %v5489, %v5569
    %v5575 = vadd.f32 %v5490, %v5558
    %v5576 = vadd.f32 %v5491, %v5562
    %v5577 = vadd.f32 %v5492, %v5566
    %v5578 = vadd.f32 %v5493, %v5570
    %v5579 = vadd.f32 %v5494, %v5558
    %v5580 = vadd.f32 %v5495, %v5562
    %v5581 = vadd.f32 %v5496, %v5566
    %v5582 = vadd.f32 %v5497, %v5570
    %v5583 = vadd.f32 %v5498, %v5558
    %v5584 = vadd.f32 %v5499, %v5562
    %v5585 = vadd.f32 %v5500, %v5566
    %v5586 = vadd.f32 %v5501, %v5570
    %v5587 = vadd.f32 %v5502, %v5558
    %v5588 = vadd.f32 %v5503, %v5562
    %v5589 = vadd.f32 %v5504, %v5566
    %v5590 = vadd.f32 %v5505, %v5570
    %v5591 = vadd.f32 %v5506, %v5558
    %v5592 = vadd.f32 %v5507, %v5562
    %v5593 = vadd.f32 %v5508, %v5566
    %v5594 = vadd.f32 %v5509, %v5570
    %v5595 = vadd.f32 %v5510, %v5558
    %v5596 = vadd.f32 %v5511, %v5562
    %v5597 = vadd.f32 %v5512, %v5566
    %v5598 = vadd.f32 %v5513, %v5570
    %v5599 = vadd.f32 %v5514, %v5558
    %v5600 = vadd.f32 %v5515, %v5562
    %v5601 = vadd.f32 %v5516, %v5566
    %v5602 = vadd.f32 %v5517, %v5570
    %v5603 = vadd.f32 %v5518, %v5558
    %v5604 = vadd.f32 %v5519, %v5562
    %v5605 = vadd.f32 %v5520, %v5566
    %v5606 = vadd.f32 %v5521, %v5570
    %v5607 = vadd.f32 %v5522, %v5558
    %v5608 = vadd.f32 %v5523, %v5562
    %v5609 = vadd.f32 %v5524, %v5566
    %v5610 = vadd.f32 %v5525, %v5570
    %v5611 = vadd.f32 %v5526, %v5558
    %v5612 = vadd.f32 %v5527, %v5562
    %v5613 = vadd.f32 %v5528, %v5566
    %v5614 = vadd.f32 %v5529, %v5570
    %v5615 = vadd.f32 %v5530, %v5558
    %v5616 = vadd.f32 %v5531, %v5562
    %v5617 = vadd.f32 %v5532, %v5566
    %v5618 = vadd.f32 %v5533, %v5570
    %v5619 = vadd.f32 %v5534, %v5558
    %v5620 = vadd.f32 %v5535, %v5562
    %v5621 = vadd.f32 %v5536, %v5566
    %v5622 = vadd.f32 %v5537, %v5570
    %v5623 = vadd.f32 %v5538, %v5558
    %v5624 = vadd.f32 %v5539, %v5562
    %v5625 = vadd.f32 %v5540, %v5566
    %v5626 = vadd.f32 %v5541, %v5570
    %v5627 = vadd.f32 %v5542, %v5558
    %v5628 = vadd.f32 %v5543, %v5562
    %v5629 = vadd.f32 %v5544, %v5566
    %v5630 = vadd.f32 %v5545, %v5570
    %v5631 = vadd.f32 %v5546, %v5558
    %v5632 = vadd.f32 %v5547, %v5562
    %v5633 = vadd.f32 %v5548, %v5566
    %v5634 = vadd.f32 %v5549, %v5570
    %v5635 = vadd.f32 %v5550, %v5558
    %v5636 = vadd.f32 %v5551, %v5562
    %v5637 = vadd.f32 %v5552, %v5566
    %v5638 = vadd.f32 %v5553, %v5570
    %v5639 = vmax.f32 %v5575, 0.0
    %v5640 = vmax.f32 %v5576, 0.0
    %v5641 = vmax.f32 %v5577, 0.0
    %v5642 = vmax.f32 %v5578, 0.0
    %v5643 = vmax.f32 %v5579, 0.0
    %v5644 = vmax.f32 %v5580, 0.0
    %v5645 = vmax.f32 %v5581, 0.0
    %v5646 = vmax.f32 %v5582, 0.0
    %v5647 = vmax.f32 %v5583, 0.0
    %v5648 = vmax.f32 %v5584, 0.0
    %v5649 = vmax.f32 %v5585, 0.0
    %v5650 = vmax.f32 %v5586, 0.0
    %v5651 = vmax.f32 %v5587, 0.0
    %v5652 = vmax.f32 %v5588, 0.0
    %v5653 = vmax.f32 %v5589, 0.0
    %v5654 = vmax.f32 %v5590, 0.0
    %v5655 = vmax.f32 %v5591, 0.0
    %v5656 = vmax.f32 %v5592, 0.0
    %v5657 = vmax.f32 %v5593, 0.0
    %v5658 = vmax.f32 %v5594, 0.0
    %v5659 = vmax.f32 %v5595, 0.0
    %v5660 = vmax.f32 %v5596, 0.0
    %v5661 = vmax.f32 %v5597, 0.0
    %v5662 = vmax.f32 %v5598, 0.0
    %v5663 = vmax.f32 %v5599, 0.0
    %v5664 = vmax.f32 %v5600, 0.0
    %v5665 = vmax.f32 %v5601, 0.0
    %v5666 = vmax.f32 %v5602, 0.0
    %v5667 = vmax.f32 %v5603, 0.0
    %v5668 = vmax.f32 %v5604, 0.0
    %v5669 = vmax.f32 %v5605, 0.0
    %v5670 = vmax.f32 %v5606, 0.0
    %v5671 = vmax.f32 %v5607, 0.0
    %v5672 = vmax.f32 %v5608, 0.0
    %v5673 = vmax.f32 %v5609, 0.0
    %v5674 = vmax.f32 %v5610, 0.0
    %v5675 = vmax.f32 %v5611, 0.0
    %v5676 = vmax.f32 %v5612, 0.0
    %v5677 = vmax.f32 %v5613, 0.0
    %v5678 = vmax.f32 %v5614, 0.0
    %v5679 = vmax.f32 %v5615, 0.0
    %v5680 = vmax.f32 %v5616, 0.0
    %v5681 = vmax.f32 %v5617, 0.0
    %v5682 = vmax.f32 %v5618, 0.0
    %v5683 = vmax.f32 %v5619, 0.0
    %v5684 = vmax.f32 %v5620, 0.0
    %v5685 = vmax.f32 %v5621, 0.0
    %v5686 = vmax.f32 %v5622, 0.0
    %v5687 = vmax.f32 %v5623, 0.0
    %v5688 = vmax.f32 %v5624, 0.0
    %v5689 = vmax.f32 %v5625, 0.0
    %v5690 = vmax.f32 %v5626, 0.0
    %v5691 = vmax.f32 %v5627, 0.0
    %v5692 = vmax.f32 %v5628, 0.0
    %v5693 = vmax.f32 %v5629, 0.0
    %v5694 = vmax.f32 %v5630, 0.0
    %v5695 = vmax.f32 %v5631, 0.0
    %v5696 = vmax.f32 %v5632, 0.0
    %v5697 = vmax.f32 %v5633, 0.0
    %v5698 = vmax.f32 %v5634, 0.0
    %v5699 = vmax.f32 %v5635, 0.0
    %v5700 = vmax.f32 %v5636, 0.0
    %v5701 = vmax.f32 %v5637, 0.0
    %v5702 = vmax.f32 %v5638, 0.0
    %v5703 = vpack.c.bf16 %v5643, %v5639
    %v5704 = vpack.c.bf16 %v5644, %v5640
    %v5705 = vpack.c.bf16 %v5645, %v5641
    %v5706 = vpack.c.bf16 %v5646, %v5642
    %v5707 = vpack.c.bf16 %v5651, %v5647
    %v5708 = vpack.c.bf16 %v5652, %v5648
    %v5709 = vpack.c.bf16 %v5653, %v5649
    %v5710 = vpack.c.bf16 %v5654, %v5650
    %v5711 = vpack.c.bf16 %v5659, %v5655
    %v5712 = vpack.c.bf16 %v5660, %v5656
    %v5713 = vpack.c.bf16 %v5661, %v5657
    %v5714 = vpack.c.bf16 %v5662, %v5658
    %v5715 = vpack.c.bf16 %v5667, %v5663
    %v5716 = vpack.c.bf16 %v5668, %v5664
    %v5717 = vpack.c.bf16 %v5669, %v5665
    %v5718 = vpack.c.bf16 %v5670, %v5666
    %v5719 = vpack.c.bf16 %v5675, %v5671
    %v5720 = vpack.c.bf16 %v5676, %v5672
    %v5721 = vpack.c.bf16 %v5677, %v5673
    %v5722 = vpack.c.bf16 %v5678, %v5674
    %v5723 = vpack.c.bf16 %v5683, %v5679
    %v5724 = vpack.c.bf16 %v5684, %v5680
    %v5725 = vpack.c.bf16 %v5685, %v5681
    %v5726 = vpack.c.bf16 %v5686, %v5682
    %v5727 = vpack.c.bf16 %v5691, %v5687
    %v5728 = vpack.c.bf16 %v5692, %v5688
    %v5729 = vpack.c.bf16 %v5693, %v5689
    %v5730 = vpack.c.bf16 %v5694, %v5690
    %v5731 = vpack.c.bf16 %v5699, %v5695
    %v5732 = vpack.c.bf16 %v5700, %v5696
    %v5733 = vpack.c.bf16 %v5701, %v5697
    %v5734 = vpack.c.bf16 %v5702, %v5698
    %5735 = vmatprep.subr.bf16.mxu0 %v3442
    %5736 = vmatpush1.bf16.msra.mxu0 %v3441
    %5737 = vmatprep.subr.bf16.mxu0 %v3440
    %5738 = vmatpush1.bf16.msra.mxu0 %v3439
    %5739 = vmatprep.subr.bf16.mxu0 %v3438
    %5740 = vmatpush1.bf16.msra.mxu0 %v3437
    %5741 = vmatprep.subr.bf16.mxu0 %v3436
    %5742 = vmatpush1.bf16.msra.mxu0 %v3435
    %5743 = vmatprep.subr.bf16.mxu0 %v3434
    %5744 = vmatpush1.bf16.msra.mxu0 %v3433
    %5745 = vmatprep.subr.bf16.mxu0 %v3432
    %5746 = vmatpush1.bf16.msra.mxu0 %v3431
    %5747 = vmatprep.subr.bf16.mxu0 %v3430
    %5748 = vmatpush1.bf16.msra.mxu0 %v3429
    %5749 = vmatprep.subr.bf16.mxu0 %v3428
    %5750 = vmatpush1.bf16.msra.mxu0 %v3427
    %5751 = vmatprep.subr.bf16.mxu0 %v3458
    %5752 = vmatpush2.bf16.msra.mxu0 %v3457
    %5753 = vmatprep.subr.bf16.mxu0 %v3456
    %5754 = vmatpush2.bf16.msra.mxu0 %v3455
    %5755 = vmatprep.subr.bf16.mxu0 %v3454
    %5756 = vmatpush2.bf16.msra.mxu0 %v3453
    %5757 = vmatprep.subr.bf16.mxu0 %v3452
    %5758 = vmatpush2.bf16.msra.mxu0 %v3451
    %5759 = vmatprep.subr.bf16.mxu0 %v3450
    %5760 = vmatpush2.bf16.msra.mxu0 %v3449
    %5761 = vmatprep.subr.bf16.mxu0 %v3448
    %5762 = vmatpush2.bf16.msra.mxu0 %v3447
    %5763 = vmatprep.subr.bf16.mxu0 %v3446
    %5764 = vmatpush2.bf16.msra.mxu0 %v3445
    %5765 = vmatprep.subr.bf16.mxu0 %v3444
    %5766 = vmatpush2.bf16.msra.mxu0 %v3443
    %5767 = vmatprep.mubr.bf16.mxu0 %v5704
    %5768 = vmatmul.mubr.bf16.gmra.mxu0 %v5703
    %v5769 = vpop.f32.mrf.mxu0
    %v5770 = vadd.f32 0.0, %v5769
    %v5771 = vpop.f32.mrf.mxu0
    %v5772 = vadd.f32 0.0, %v5771
    %v5773 = vpop.f32.mrf.mxu0
    %v5774 = vadd.f32 0.0, %v5773
    %v5775 = vpop.f32.mrf.mxu0
    %v5776 = vadd.f32 0.0, %v5775
    %5777 = vmatprep.mubr.bf16.mxu0 %v5708
    %5778 = vmatmul.mubr.bf16.gmra.mxu0 %v5707
    %v5779 = vpop.f32.mrf.mxu0
    %v5780 = vadd.f32 0.0, %v5779
    %v5781 = vpop.f32.mrf.mxu0
    %v5782 = vadd.f32 0.0, %v5781
    %v5783 = vpop.f32.mrf.mxu0
    %v5784 = vadd.f32 0.0, %v5783
    %v5785 = vpop.f32.mrf.mxu0
    %v5786 = vadd.f32 0.0, %v5785
    %5787 = vmatprep.mubr.bf16.mxu0 %v5712
    %5788 = vmatmul.mubr.bf16.gmra.mxu0 %v5711
    %v5789 = vpop.f32.mrf.mxu0
    %v5790 = vadd.f32 0.0, %v5789
    %v5791 = vpop.f32.mrf.mxu0
    %v5792 = vadd.f32 0.0, %v5791
    %v5793 = vpop.f32.mrf.mxu0
    %v5794 = vadd.f32 0.0, %v5793
    %v5795 = vpop.f32.mrf.mxu0
    %v5796 = vadd.f32 0.0, %v5795
    %5797 = vmatprep.mubr.bf16.mxu0 %v5716
    %5798 = vmatmul.mubr.bf16.gmra.mxu0 %v5715
    %v5799 = vpop.f32.mrf.mxu0
    %v5800 = vadd.f32 0.0, %v5799
    %v5801 = vpop.f32.mrf.mxu0
    %v5802 = vadd.f32 0.0, %v5801
    %v5803 = vpop.f32.mrf.mxu0
    %v5804 = vadd.f32 0.0, %v5803
    %v5805 = vpop.f32.mrf.mxu0
    %v5806 = vadd.f32 0.0, %v5805
    %5807 = vmatprep.mubr.bf16.mxu0 %v5720
    %5808 = vmatmul.mubr.bf16.gmra.mxu0 %v5719
    %v5809 = vpop.f32.mrf.mxu0
    %v5810 = vadd.f32 0.0, %v5809
    %v5811 = vpop.f32.mrf.mxu0
    %v5812 = vadd.f32 0.0, %v5811
    %v5813 = vpop.f32.mrf.mxu0
    %v5814 = vadd.f32 0.0, %v5813
    %v5815 = vpop.f32.mrf.mxu0
    %v5816 = vadd.f32 0.0, %v5815
    %5817 = vmatprep.mubr.bf16.mxu0 %v5724
    %5818 = vmatmul.mubr.bf16.gmra.mxu0 %v5723
    %v5819 = vpop.f32.mrf.mxu0
    %v5820 = vadd.f32 0.0, %v5819
    %v5821 = vpop.f32.mrf.mxu0
    %v5822 = vadd.f32 0.0, %v5821
    %v5823 = vpop.f32.mrf.mxu0
    %v5824 = vadd.f32 0.0, %v5823
    %v5825 = vpop.f32.mrf.mxu0
    %v5826 = vadd.f32 0.0, %v5825
    %5827 = vmatprep.mubr.bf16.mxu0 %v5728
    %5828 = vmatmul.mubr.bf16.gmra.mxu0 %v5727
    %v5829 = vpop.f32.mrf.mxu0
    %v5830 = vadd.f32 0.0, %v5829
    %v5831 = vpop.f32.mrf.mxu0
    %v5832 = vadd.f32 0.0, %v5831
    %v5833 = vpop.f32.mrf.mxu0
    %v5834 = vadd.f32 0.0, %v5833
    %v5835 = vpop.f32.mrf.mxu0
    %v5836 = vadd.f32 0.0, %v5835
    %5837 = vmatprep.mubr.bf16.mxu0 %v5732
    %5838 = vmatmul.mubr.bf16.gmra.mxu0 %v5731
    %v5839 = vpop.f32.mrf.mxu0
    %v5840 = vadd.f32 0.0, %v5839
    %v5841 = vpop.f32.mrf.mxu0
    %v5842 = vadd.f32 0.0, %v5841
    %v5843 = vpop.f32.mrf.mxu0
    %v5844 = vadd.f32 0.0, %v5843
    %v5845 = vpop.f32.mrf.mxu0
    %v5846 = vadd.f32 0.0, %v5845
    %5847 = vdwg.mxu0
    %5848 = vmatprep.subr.bf16.mxu0 %v3474
    %5849 = vmatpush1.bf16.msra.mxu0 %v3473
    %5850 = vmatprep.subr.bf16.mxu0 %v3472
    %5851 = vmatpush1.bf16.msra.mxu0 %v3471
    %5852 = vmatprep.subr.bf16.mxu0 %v3470
    %5853 = vmatpush1.bf16.msra.mxu0 %v3469
    %5854 = vmatprep.subr.bf16.mxu0 %v3468
    %5855 = vmatpush1.bf16.msra.mxu0 %v3467
    %5856 = vmatprep.subr.bf16.mxu0 %v3466
    %5857 = vmatpush1.bf16.msra.mxu0 %v3465
    %5858 = vmatprep.subr.bf16.mxu0 %v3464
    %5859 = vmatpush1.bf16.msra.mxu0 %v3463
    %5860 = vmatprep.subr.bf16.mxu0 %v3462
    %5861 = vmatpush1.bf16.msra.mxu0 %v3461
    %5862 = vmatprep.subr.bf16.mxu0 %v3460
    %5863 = vmatpush1.bf16.msra.mxu0 %v3459
    %5864 = vmatprep.subr.bf16.mxu0 %v3490
    %5865 = vmatpush2.bf16.msra.mxu0 %v3489
    %5866 = vmatprep.subr.bf16.mxu0 %v3488
    %5867 = vmatpush2.bf16.msra.mxu0 %v3487
    %5868 = vmatprep.subr.bf16.mxu0 %v3486
    %5869 = vmatpush2.bf16.msra.mxu0 %v3485
    %5870 = vmatprep.subr.bf16.mxu0 %v3484
    %5871 = vmatpush2.bf16.msra.mxu0 %v3483
    %5872 = vmatprep.subr.bf16.mxu0 %v3482
    %5873 = vmatpush2.bf16.msra.mxu0 %v3481
    %5874 = vmatprep.subr.bf16.mxu0 %v3480
    %5875 = vmatpush2.bf16.msra.mxu0 %v3479
    %5876 = vmatprep.subr.bf16.mxu0 %v3478
    %5877 = vmatpush2.bf16.msra.mxu0 %v3477
    %5878 = vmatprep.subr.bf16.mxu0 %v3476
    %5879 = vmatpush2.bf16.msra.mxu0 %v3475
    %5880 = vmatprep.mubr.bf16.mxu0 %v5706
    %5881 = vmatmul.mubr.bf16.gmra.mxu0 %v5705
    %v5882 = vpop.f32.mrf.mxu0
    %v5883 = vadd.f32 %v5770, %v5882
    %v5884 = vpop.f32.mrf.mxu0
    %v5885 = vadd.f32 %v5772, %v5884
    %v5886 = vpop.f32.mrf.mxu0
    %v5887 = vadd.f32 %v5774, %v5886
    %v5888 = vpop.f32.mrf.mxu0
    %v5889 = vadd.f32 %v5776, %v5888
    %5890 = vmatprep.mubr.bf16.mxu0 %v5710
    %5891 = vmatmul.mubr.bf16.gmra.mxu0 %v5709
    %v5892 = vpop.f32.mrf.mxu0
    %v5893 = vadd.f32 %v5780, %v5892
    %v5894 = vpop.f32.mrf.mxu0
    %v5895 = vadd.f32 %v5782, %v5894
    %v5896 = vpop.f32.mrf.mxu0
    %v5897 = vadd.f32 %v5784, %v5896
    %v5898 = vpop.f32.mrf.mxu0
    %v5899 = vadd.f32 %v5786, %v5898
    %5900 = vmatprep.mubr.bf16.mxu0 %v5714
    %5901 = vmatmul.mubr.bf16.gmra.mxu0 %v5713
    %v5902 = vpop.f32.mrf.mxu0
    %v5903 = vadd.f32 %v5790, %v5902
    %v5904 = vpop.f32.mrf.mxu0
    %v5905 = vadd.f32 %v5792, %v5904
    %v5906 = vpop.f32.mrf.mxu0
    %v5907 = vadd.f32 %v5794, %v5906
    %v5908 = vpop.f32.mrf.mxu0
    %v5909 = vadd.f32 %v5796, %v5908
    %5910 = vmatprep.mubr.bf16.mxu0 %v5718
    %5911 = vmatmul.mubr.bf16.gmra.mxu0 %v5717
    %v5912 = vpop.f32.mrf.mxu0
    %v5913 = vadd.f32 %v5800, %v5912
    %v5914 = vpop.f32.mrf.mxu0
    %v5915 = vadd.f32 %v5802, %v5914
    %v5916 = vpop.f32.mrf.mxu0
    %v5917 = vadd.f32 %v5804, %v5916
    %v5918 = vpop.f32.mrf.mxu0
    %v5919 = vadd.f32 %v5806, %v5918
    %5920 = vmatprep.mubr.bf16.mxu0 %v5722
    %5921 = vmatmul.mubr.bf16.gmra.mxu0 %v5721
    %v5922 = vpop.f32.mrf.mxu0
    %v5923 = vadd.f32 %v5810, %v5922
    %v5924 = vpop.f32.mrf.mxu0
    %v5925 = vadd.f32 %v5812, %v5924
    %v5926 = vpop.f32.mrf.mxu0
    %v5927 = vadd.f32 %v5814, %v5926
    %v5928 = vpop.f32.mrf.mxu0
    %v5929 = vadd.f32 %v5816, %v5928
    %5930 = vmatprep.mubr.bf16.mxu0 %v5726
    %5931 = vmatmul.mubr.bf16.gmra.mxu0 %v5725
    %v5932 = vpop.f32.mrf.mxu0
    %v5933 = vadd.f32 %v5820, %v5932
    %v5934 = vpop.f32.mrf.mxu0
    %v5935 = vadd.f32 %v5822, %v5934
    %v5936 = vpop.f32.mrf.mxu0
    %v5937 = vadd.f32 %v5824, %v5936
    %v5938 = vpop.f32.mrf.mxu0
    %v5939 = vadd.f32 %v5826, %v5938
    %5940 = vmatprep.mubr.bf16.mxu0 %v5730
    %5941 = vmatmul.mubr.bf16.gmra.mxu0 %v5729
    %v5942 = vpop.f32.mrf.mxu0
    %v5943 = vadd.f32 %v5830, %v5942
    %v5944 = vpop.f32.mrf.mxu0
    %v5945 = vadd.f32 %v5832, %v5944
    %v5946 = vpop.f32.mrf.mxu0
    %v5947 = vadd.f32 %v5834, %v5946
    %v5948 = vpop.f32.mrf.mxu0
    %v5949 = vadd.f32 %v5836, %v5948
    %5950 = vmatprep.mubr.bf16.mxu0 %v5734
    %5951 = vmatmul.mubr.bf16.gmra.mxu0 %v5733
    %v5952 = vpop.f32.mrf.mxu0
    %v5953 = vadd.f32 %v5840, %v5952
    %v5954 = vpop.f32.mrf.mxu0
    %v5955 = vadd.f32 %v5842, %v5954
    %v5956 = vpop.f32.mrf.mxu0
    %v5957 = vadd.f32 %v5844, %v5956
    %v5958 = vpop.f32.mrf.mxu0
    %v5959 = vadd.f32 %v5846, %v5958
    %5960 = vdwg.mxu0
    %v5961 = vadd.f32 %v3703, %v3707
    %v5962 = vadd.f32 %v5961, %v3713
    %v5963 = vadd.f32 %v5962, %v3717
    %v5964 = vadd.f32 %v5963, %v3723
    %v5965 = vadd.f32 %v5964, %v3727
    %v5966 = vadd.f32 %v5965, %v3733
    %v5967 = vadd.f32 %v5966, %v3737
    %v5968 = vadd.f32 %v5967, %v3743
    %v5969 = vadd.f32 %v5968, %v3747
    %v5970 = vadd.f32 %v5969, %v3753
    %v5971 = vadd.f32 %v5970, %v3757
    %v5972 = vadd.f32 %v5971, %v3763
    %v5973 = vadd.f32 %v5972, %v3767
    %v5974 = vadd.f32 %v5973, %v3773
    %v5975 = vadd.f32 %v5974, %v3777
    %v5976 = vrot.slane %v5975, 4
    %v5977 = vadd.f32 %v5975, %v5976
    %v5978 = vrot.slane %v5977, 2
    %v5979 = vadd.f32 %v5977, %v5978
    %v5980 = vrot.slane %v5979, 1
    %v5981 = vadd.f32 %v5979, %v5980
    %v5982 = vadd.f32 %v3705, %v3709
    %v5983 = vadd.f32 %v5982, %v3715
    %v5984 = vadd.f32 %v5983, %v3719
    %v5985 = vadd.f32 %v5984, %v3725
    %v5986 = vadd.f32 %v5985, %v3729
    %v5987 = vadd.f32 %v5986, %v3735
    %v5988 = vadd.f32 %v5987, %v3739
    %v5989 = vadd.f32 %v5988, %v3745
    %v5990 = vadd.f32 %v5989, %v3749
    %v5991 = vadd.f32 %v5990, %v3755
    %v5992 = vadd.f32 %v5991, %v3759
    %v5993 = vadd.f32 %v5992, %v3765
    %v5994 = vadd.f32 %v5993, %v3769
    %v5995 = vadd.f32 %v5994, %v3775
    %v5996 = vadd.f32 %v5995, %v3779
    %v5997 = vrot.slane %v5996, 4
    %v5998 = vadd.f32 %v5996, %v5997
    %v5999 = vrot.slane %v5998, 2
    %v6000 = vadd.f32 %v5998, %v5999
    %v6001 = vrot.slane %v6000, 1
    %v6002 = vadd.f32 %v6000, %v6001
    %v6003 = vmul.f32 %v3703, %v3703
    %v6004 = vmul.f32 %v3705, %v3705
    %v6005 = vmul.f32 %v3707, %v3707
    %v6006 = vmul.f32 %v3709, %v3709
    %v6007 = vmul.f32 %v3713, %v3713
    %v6008 = vmul.f32 %v3715, %v3715
    %v6009 = vmul.f32 %v3717, %v3717
    %v6010 = vmul.f32 %v3719, %v3719
    %v6011 = vmul.f32 %v3723, %v3723
    %v6012 = vmul.f32 %v3725, %v3725
    %v6013 = vmul.f32 %v3727, %v3727
    %v6014 = vmul.f32 %v3729, %v3729
    %v6015 = vmul.f32 %v3733, %v3733
    %v6016 = vmul.f32 %v3735, %v3735
    %v6017 = vmul.f32 %v3737, %v3737
    %v6018 = vmul.f32 %v3739, %v3739
    %v6019 = vmul.f32 %v3743, %v3743
    %v6020 = vmul.f32 %v3745, %v3745
    %v6021 = vmul.f32 %v3747, %v3747
    %v6022 = vmul.f32 %v3749, %v3749
    %v6023 = vmul.f32 %v3753, %v3753
    %v6024 = vmul.f32 %v3755, %v3755
    %v6025 = vmul.f32 %v3757, %v3757
    %v6026 = vmul.f32 %v3759, %v3759
    %v6027 = vmul.f32 %v3763, %v3763
    %v6028 = vmul.f32 %v3765, %v3765
    %v6029 = vmul.f32 %v3767, %v3767
    %v6030 = vmul.f32 %v3769, %v3769
    %v6031 = vmul.f32 %v3773, %v3773
    %v6032 = vmul.f32 %v3775, %v3775
    %v6033 = vmul.f32 %v3777, %v3777
    %v6034 = vmul.f32 %v3779, %v3779
    %v6035 = vadd.f32 %v6003, %v6005
    %v6036 = vadd.f32 %v6035, %v6007
    %v6037 = vadd.f32 %v6036, %v6009
    %v6038 = vadd.f32 %v6037, %v6011
    %v6039 = vadd.f32 %v6038, %v6013
    %v6040 = vadd.f32 %v6039, %v6015
    %v6041 = vadd.f32 %v6040, %v6017
    %v6042 = vadd.f32 %v6041, %v6019
    %v6043 = vadd.f32 %v6042, %v6021
    %v6044 = vadd.f32 %v6043, %v6023
    %v6045 = vadd.f32 %v6044, %v6025
    %v6046 = vadd.f32 %v6045, %v6027
    %v6047 = vadd.f32 %v6046, %v6029
    %v6048 = vadd.f32 %v6047, %v6031
    %v6049 = vadd.f32 %v6048, %v6033
    %v6050 = vrot.slane %v6049, 4
    %v6051 = vadd.f32 %v6049, %v6050
    %v6052 = vrot.slane %v6051, 2
    %v6053 = vadd.f32 %v6051, %v6052
    %v6054 = vrot.slane %v6053, 1
    %v6055 = vadd.f32 %v6053, %v6054
    %v6056 = vadd.f32 %v6004, %v6006
    %v6057 = vadd.f32 %v6056, %v6008
    %v6058 = vadd.f32 %v6057, %v6010
    %v6059 = vadd.f32 %v6058, %v6012
    %v6060 = vadd.f32 %v6059, %v6014
    %v6061 = vadd.f32 %v6060, %v6016
    %v6062 = vadd.f32 %v6061, %v6018
    %v6063 = vadd.f32 %v6062, %v6020
    %v6064 = vadd.f32 %v6063, %v6022
    %v6065 = vadd.f32 %v6064, %v6024
    %v6066 = vadd.f32 %v6065, %v6026
    %v6067 = vadd.f32 %v6066, %v6028
    %v6068 = vadd.f32 %v6067, %v6030
    %v6069 = vadd.f32 %v6068, %v6032
    %v6070 = vadd.f32 %v6069, %v6034
    %v6071 = vrot.slane %v6070, 4
    %v6072 = vadd.f32 %v6070, %v6071
    %v6073 = vrot.slane %v6072, 2
    %v6074 = vadd.f32 %v6072, %v6073
    %v6075 = vrot.slane %v6074, 1
    %v6076 = vadd.f32 %v6074, %v6075
    %v6077 = vmul.f32 %v5981, 0.0078125
    %v6078 = vmul.f32 %v6002, 0.0078125
    %v6079 = vmul.f32 %v6055, 0.0078125
    %v6080 = vmul.f32 %v6076, 0.0078125
    %v6081 = vmul.f32 %v6077, %v6077
    %v6082 = vmul.f32 %v6078, %v6078
    %v6083 = vsub.f32 %v6079, %v6081
    %v6084 = vsub.f32 %v6080, %v6082
    %v6085 = vmax.f32 %v6083, 0.0
    %v6086 = vmax.f32 %v6084, 0.0
    %v6087 = vsub.f32 %v3703, %v6077
    %v6088 = vsub.f32 %v3705, %v6078
    %v6089 = vsub.f32 %v3707, %v6077
    %v6090 = vsub.f32 %v3709, %v6078
    %v6091 = vsub.f32 %v3713, %v6077
    %v6092 = vsub.f32 %v3715, %v6078
    %v6093 = vsub.f32 %v3717, %v6077
    %v6094 = vsub.f32 %v3719, %v6078
    %v6095 = vsub.f32 %v3723, %v6077
    %v6096 = vsub.f32 %v3725, %v6078
    %v6097 = vsub.f32 %v3727, %v6077
    %v6098 = vsub.f32 %v3729, %v6078
    %v6099 = vsub.f32 %v3733, %v6077
    %v6100 = vsub.f32 %v3735, %v6078
    %v6101 = vsub.f32 %v3737, %v6077
    %v6102 = vsub.f32 %v3739, %v6078
    %v6103 = vsub.f32 %v3743, %v6077
    %v6104 = vsub.f32 %v3745, %v6078
    %v6105 = vsub.f32 %v3747, %v6077
    %v6106 = vsub.f32 %v3749, %v6078
    %v6107 = vsub.f32 %v3753, %v6077
    %v6108 = vsub.f32 %v3755, %v6078
    %v6109 = vsub.f32 %v3757, %v6077
    %v6110 = vsub.f32 %v3759, %v6078
    %v6111 = vsub.f32 %v3763, %v6077
    %v6112 = vsub.f32 %v3765, %v6078
    %v6113 = vsub.f32 %v3767, %v6077
    %v6114 = vsub.f32 %v3769, %v6078
    %v6115 = vsub.f32 %v3773, %v6077
    %v6116 = vsub.f32 %v3775, %v6078
    %v6117 = vsub.f32 %v3777, %v6077
    %v6118 = vsub.f32 %v3779, %v6078
    %v6119 = vadd.f32 %v6085, 1e-05
    %v6120 = vadd.f32 %v6086, 1e-05
    %v6121 = vrsqrt.pop %v6119
    %v6122 = vrsqrt.pop %v6120
    %v6123 = vmul.f32 %v6087, %v6121
    %v6124 = vmul.f32 %v6088, %v6122
    %v6125 = vmul.f32 %v6089, %v6121
    %v6126 = vmul.f32 %v6090, %v6122
    %v6127 = vmul.f32 %v6091, %v6121
    %v6128 = vmul.f32 %v6092, %v6122
    %v6129 = vmul.f32 %v6093, %v6121
    %v6130 = vmul.f32 %v6094, %v6122
    %v6131 = vmul.f32 %v6095, %v6121
    %v6132 = vmul.f32 %v6096, %v6122
    %v6133 = vmul.f32 %v6097, %v6121
    %v6134 = vmul.f32 %v6098, %v6122
    %v6135 = vmul.f32 %v6099, %v6121
    %v6136 = vmul.f32 %v6100, %v6122
    %v6137 = vmul.f32 %v6101, %v6121
    %v6138 = vmul.f32 %v6102, %v6122
    %v6139 = vmul.f32 %v6103, %v6121
    %v6140 = vmul.f32 %v6104, %v6122
    %v6141 = vmul.f32 %v6105, %v6121
    %v6142 = vmul.f32 %v6106, %v6122
    %v6143 = vmul.f32 %v6107, %v6121
    %v6144 = vmul.f32 %v6108, %v6122
    %v6145 = vmul.f32 %v6109, %v6121
    %v6146 = vmul.f32 %v6110, %v6122
    %v6147 = vmul.f32 %v6111, %v6121
    %v6148 = vmul.f32 %v6112, %v6122
    %v6149 = vmul.f32 %v6113, %v6121
    %v6150 = vmul.f32 %v6114, %v6122
    %v6151 = vmul.f32 %v6115, %v6121
    %v6152 = vmul.f32 %v6116, %v6122
    %v6153 = vmul.f32 %v6117, %v6121
    %v6154 = vmul.f32 %v6118, %v6122
    %v6155 = vadd.f32 %v5883, %v5887
    %v6156 = vadd.f32 %v6155, %v5893
    %v6157 = vadd.f32 %v6156, %v5897
    %v6158 = vadd.f32 %v6157, %v5903
    %v6159 = vadd.f32 %v6158, %v5907
    %v6160 = vadd.f32 %v6159, %v5913
    %v6161 = vadd.f32 %v6160, %v5917
    %v6162 = vadd.f32 %v6161, %v5923
    %v6163 = vadd.f32 %v6162, %v5927
    %v6164 = vadd.f32 %v6163, %v5933
    %v6165 = vadd.f32 %v6164, %v5937
    %v6166 = vadd.f32 %v6165, %v5943
    %v6167 = vadd.f32 %v6166, %v5947
    %v6168 = vadd.f32 %v6167, %v5953
    %v6169 = vadd.f32 %v6168, %v5957
    %v6170 = vrot.slane %v6169, 4
    %v6171 = vadd.f32 %v6169, %v6170
    %v6172 = vrot.slane %v6171, 2
    %v6173 = vadd.f32 %v6171, %v6172
    %v6174 = vrot.slane %v6173, 1
    %v6175 = vadd.f32 %v6173, %v6174
    %v6176 = vadd.f32 %v5885, %v5889
    %v6177 = vadd.f32 %v6176, %v5895
    %v6178 = vadd.f32 %v6177, %v5899
    %v6179 = vadd.f32 %v6178, %v5905
    %v6180 = vadd.f32 %v6179, %v5909
    %v6181 = vadd.f32 %v6180, %v5915
    %v6182 = vadd.f32 %v6181, %v5919
    %v6183 = vadd.f32 %v6182, %v5925
    %v6184 = vadd.f32 %v6183, %v5929
    %v6185 = vadd.f32 %v6184, %v5935
    %v6186 = vadd.f32 %v6185, %v5939
    %v6187 = vadd.f32 %v6186, %v5945
    %v6188 = vadd.f32 %v6187, %v5949
    %v6189 = vadd.f32 %v6188, %v5955
    %v6190 = vadd.f32 %v6189, %v5959
    %v6191 = vrot.slane %v6190, 4
    %v6192 = vadd.f32 %v6190, %v6191
    %v6193 = vrot.slane %v6192, 2
    %v6194 = vadd.f32 %v6192, %v6193
    %v6195 = vrot.slane %v6194, 1
    %v6196 = vadd.f32 %v6194, %v6195
    %v6197 = vmul.f32 %v5883, %v5883
    %v6198 = vmul.f32 %v5885, %v5885
    %v6199 = vmul.f32 %v5887, %v5887
    %v6200 = vmul.f32 %v5889, %v5889
    %v6201 = vmul.f32 %v5893, %v5893
    %v6202 = vmul.f32 %v5895, %v5895
    %v6203 = vmul.f32 %v5897, %v5897
    %v6204 = vmul.f32 %v5899, %v5899
    %v6205 = vmul.f32 %v5903, %v5903
    %v6206 = vmul.f32 %v5905, %v5905
    %v6207 = vmul.f32 %v5907, %v5907
    %v6208 = vmul.f32 %v5909, %v5909
    %v6209 = vmul.f32 %v5913, %v5913
    %v6210 = vmul.f32 %v5915, %v5915
    %v6211 = vmul.f32 %v5917, %v5917
    %v6212 = vmul.f32 %v5919, %v5919
    %v6213 = vmul.f32 %v5923, %v5923
    %v6214 = vmul.f32 %v5925, %v5925
    %v6215 = vmul.f32 %v5927, %v5927
    %v6216 = vmul.f32 %v5929, %v5929
    %v6217 = vmul.f32 %v5933, %v5933
    %v6218 = vmul.f32 %v5935, %v5935
    %v6219 = vmul.f32 %v5937, %v5937
    %v6220 = vmul.f32 %v5939, %v5939
    %v6221 = vmul.f32 %v5943, %v5943
    %v6222 = vmul.f32 %v5945, %v5945
    %v6223 = vmul.f32 %v5947, %v5947
    %v6224 = vmul.f32 %v5949, %v5949
    %v6225 = vmul.f32 %v5953, %v5953
    %v6226 = vmul.f32 %v5955, %v5955
    %v6227 = vmul.f32 %v5957, %v5957
    %v6228 = vmul.f32 %v5959, %v5959
    %v6229 = vadd.f32 %v6197, %v6199
    %v6230 = vadd.f32 %v6229, %v6201
    %v6231 = vadd.f32 %v6230, %v6203
    %v6232 = vadd.f32 %v6231, %v6205
    %v6233 = vadd.f32 %v6232, %v6207
    %v6234 = vadd.f32 %v6233, %v6209
    %v6235 = vadd.f32 %v6234, %v6211
    %v6236 = vadd.f32 %v6235, %v6213
    %v6237 = vadd.f32 %v6236, %v6215
    %v6238 = vadd.f32 %v6237, %v6217
    %v6239 = vadd.f32 %v6238, %v6219
    %v6240 = vadd.f32 %v6239, %v6221
    %v6241 = vadd.f32 %v6240, %v6223
    %v6242 = vadd.f32 %v6241, %v6225
    %v6243 = vadd.f32 %v6242, %v6227
    %v6244 = vrot.slane %v6243, 4
    %v6245 = vadd.f32 %v6243, %v6244
    %v6246 = vrot.slane %v6245, 2
    %v6247 = vadd.f32 %v6245, %v6246
    %v6248 = vrot.slane %v6247, 1
    %v6249 = vadd.f32 %v6247, %v6248
    %v6250 = vadd.f32 %v6198, %v6200
    %v6251 = vadd.f32 %v6250, %v6202
    %v6252 = vadd.f32 %v6251, %v6204
    %v6253 = vadd.f32 %v6252, %v6206
    %v6254 = vadd.f32 %v6253, %v6208
    %v6255 = vadd.f32 %v6254, %v6210
    %v6256 = vadd.f32 %v6255, %v6212
    %v6257 = vadd.f32 %v6256, %v6214
    %v6258 = vadd.f32 %v6257, %v6216
    %v6259 = vadd.f32 %v6258, %v6218
    %v6260 = vadd.f32 %v6259, %v6220
    %v6261 = vadd.f32 %v6260, %v6222
    %v6262 = vadd.f32 %v6261, %v6224
    %v6263 = vadd.f32 %v6262, %v6226
    %v6264 = vadd.f32 %v6263, %v6228
    %v6265 = vrot.slane %v6264, 4
    %v6266 = vadd.f32 %v6264, %v6265
    %v6267 = vrot.slane %v6266, 2
    %v6268 = vadd.f32 %v6266, %v6267
    %v6269 = vrot.slane %v6268, 1
    %v6270 = vadd.f32 %v6268, %v6269
    %v6271 = vmul.f32 %v6175, 0.0078125
    %v6272 = vmul.f32 %v6196, 0.0078125
    %v6273 = vmul.f32 %v6249, 0.0078125
    %v6274 = vmul.f32 %v6270, 0.0078125
    %v6275 = vmul.f32 %v6271, %v6271
    %v6276 = vmul.f32 %v6272, %v6272
    %v6277 = vsub.f32 %v6273, %v6275
    %v6278 = vsub.f32 %v6274, %v6276
    %v6279 = vmax.f32 %v6277, 0.0
    %v6280 = vmax.f32 %v6278, 0.0
    %v6281 = vsub.f32 %v5883, %v6271
    %v6282 = vsub.f32 %v5885, %v6272
    %v6283 = vsub.f32 %v5887, %v6271
    %v6284 = vsub.f32 %v5889, %v6272
    %v6285 = vsub.f32 %v5893, %v6271
    %v6286 = vsub.f32 %v5895, %v6272
    %v6287 = vsub.f32 %v5897, %v6271
    %v6288 = vsub.f32 %v5899, %v6272
    %v6289 = vsub.f32 %v5903, %v6271
    %v6290 = vsub.f32 %v5905, %v6272
    %v6291 = vsub.f32 %v5907, %v6271
    %v6292 = vsub.f32 %v5909, %v6272
    %v6293 = vsub.f32 %v5913, %v6271
    %v6294 = vsub.f32 %v5915, %v6272
    %v6295 = vsub.f32 %v5917, %v6271
    %v6296 = vsub.f32 %v5919, %v6272
    %v6297 = vsub.f32 %v5923, %v6271
    %v6298 = vsub.f32 %v5925, %v6272
    %v6299 = vsub.f32 %v5927, %v6271
    %v6300 = vsub.f32 %v5929, %v6272
    %v6301 = vsub.f32 %v5933, %v6271
    %v6302 = vsub.f32 %v5935, %v6272
    %v6303 = vsub.f32 %v5937, %v6271
    %v6304 = vsub.f32 %v5939, %v6272
    %v6305 = vsub.f32 %v5943, %v6271
    %v6306 = vsub.f32 %v5945, %v6272
    %v6307 = vsub.f32 %v5947, %v6271
    %v6308 = vsub.f32 %v5949, %v6272
    %v6309 = vsub.f32 %v5953, %v6271
    %v6310 = vsub.f32 %v5955, %v6272
    %v6311 = vsub.f32 %v5957, %v6271
    %v6312 = vsub.f32 %v5959, %v6272
    %v6313 = vadd.f32 %v6279, 1e-05
    %v6314 = vadd.f32 %v6280, 1e-05
    %v6315 = vrsqrt.pop %v6313
    %v6316 = vrsqrt.pop %v6314
    %v6317 = vmul.f32 %v6281, %v6315
    %v6318 = vmul.f32 %v6282, %v6316
    %v6319 = vmul.f32 %v6283, %v6315
    %v6320 = vmul.f32 %v6284, %v6316
    %v6321 = vmul.f32 %v6285, %v6315
    %v6322 = vmul.f32 %v6286, %v6316
    %v6323 = vmul.f32 %v6287, %v6315
    %v6324 = vmul.f32 %v6288, %v6316
    %v6325 = vmul.f32 %v6289, %v6315
    %v6326 = vmul.f32 %v6290, %v6316
    %v6327 = vmul.f32 %v6291, %v6315
    %v6328 = vmul.f32 %v6292, %v6316
    %v6329 = vmul.f32 %v6293, %v6315
    %v6330 = vmul.f32 %v6294, %v6316
    %v6331 = vmul.f32 %v6295, %v6315
    %v6332 = vmul.f32 %v6296, %v6316
    %v6333 = vmul.f32 %v6297, %v6315
    %v6334 = vmul.f32 %v6298, %v6316
    %v6335 = vmul.f32 %v6299, %v6315
    %v6336 = vmul.f32 %v6300, %v6316
    %v6337 = vmul.f32 %v6301, %v6315
    %v6338 = vmul.f32 %v6302, %v6316
    %v6339 = vmul.f32 %v6303, %v6315
    %v6340 = vmul.f32 %v6304, %v6316
    %v6341 = vmul.f32 %v6305, %v6315
    %v6342 = vmul.f32 %v6306, %v6316
    %v6343 = vmul.f32 %v6307, %v6315
    %v6344 = vmul.f32 %v6308, %v6316
    %v6345 = vmul.f32 %v6309, %v6315
    %v6346 = vmul.f32 %v6310, %v6316
    %v6347 = vmul.f32 %v6311, %v6315
    %v6348 = vmul.f32 %v6312, %v6316
    %6349 = vxpose.xlu0.b32.start [1/16] %v6123, 128
    %6350 = vxpose.xlu0.b32.cont [2/16] %v6125, 128
    %6351 = vxpose.xlu0.b32.cont [3/16] %v6127, 128
    %6352 = vxpose.xlu0.b32.cont [4/16] %v6129, 128
    %6353 = vxpose.xlu0.b32.cont [5/16] %v6131, 128
    %6354 = vxpose.xlu0.b32.cont [6/16] %v6133, 128
    %6355 = vxpose.xlu0.b32.cont [7/16] %v6135, 128
    %6356 = vxpose.xlu0.b32.cont [8/16] %v6137, 128
    %6357 = vxpose.xlu0.b32.cont [9/16] %v6139, 128
    %6358 = vxpose.xlu0.b32.cont [10/16] %v6141, 128
    %6359 = vxpose.xlu0.b32.cont [11/16] %v6143, 128
    %6360 = vxpose.xlu0.b32.cont [12/16] %v6145, 128
    %6361 = vxpose.xlu0.b32.cont [13/16] %v6147, 128
    %6362 = vxpose.xlu0.b32.cont [14/16] %v6149, 128
    %6363 = vxpose.xlu0.b32.cont [15/16] %v6151, 128
    %6364 = vxpose.xlu0.b32.end [16/16] %v6153, 128
    %v6365 = vpop.trf.xlu0
    %v6366 = vpop.trf.xlu0
    %v6367 = vpop.trf.xlu0
    %v6368 = vpop.trf.xlu0
    %v6369 = vpop.trf.xlu0
    %v6370 = vpop.trf.xlu0
    %v6371 = vpop.trf.xlu0
    %v6372 = vpop.trf.xlu0
    %v6373 = vpop.trf.xlu0
    %v6374 = vpop.trf.xlu0
    %v6375 = vpop.trf.xlu0
    %v6376 = vpop.trf.xlu0
    %v6377 = vpop.trf.xlu0
    %v6378 = vpop.trf.xlu0
    %v6379 = vpop.trf.xlu0
    %v6380 = vpop.trf.xlu0
    %6381 = vxpose.xlu0.b32.start [1/16] %v6124, 128
    %6382 = vxpose.xlu0.b32.cont [2/16] %v6126, 128
    %6383 = vxpose.xlu0.b32.cont [3/16] %v6128, 128
    %6384 = vxpose.xlu0.b32.cont [4/16] %v6130, 128
    %6385 = vxpose.xlu0.b32.cont [5/16] %v6132, 128
    %6386 = vxpose.xlu0.b32.cont [6/16] %v6134, 128
    %6387 = vxpose.xlu0.b32.cont [7/16] %v6136, 128
    %6388 = vxpose.xlu0.b32.cont [8/16] %v6138, 128
    %6389 = vxpose.xlu0.b32.cont [9/16] %v6140, 128
    %6390 = vxpose.xlu0.b32.cont [10/16] %v6142, 128
    %6391 = vxpose.xlu0.b32.cont [11/16] %v6144, 128
    %6392 = vxpose.xlu0.b32.cont [12/16] %v6146, 128
    %6393 = vxpose.xlu0.b32.cont [13/16] %v6148, 128
    %6394 = vxpose.xlu0.b32.cont [14/16] %v6150, 128
    %6395 = vxpose.xlu0.b32.cont [15/16] %v6152, 128
    %6396 = vxpose.xlu0.b32.end [16/16] %v6154, 128
    %v6397 = vpop.trf.xlu0
    %v6398 = vpop.trf.xlu0
    %v6399 = vpop.trf.xlu0
    %v6400 = vpop.trf.xlu0
    %v6401 = vpop.trf.xlu0
    %v6402 = vpop.trf.xlu0
    %v6403 = vpop.trf.xlu0
    %v6404 = vpop.trf.xlu0
    %v6405 = vpop.trf.xlu0
    %v6406 = vpop.trf.xlu0
    %v6407 = vpop.trf.xlu0
    %v6408 = vpop.trf.xlu0
    %v6409 = vpop.trf.xlu0
    %v6410 = vpop.trf.xlu0
    %v6411 = vpop.trf.xlu0
    %v6412 = vpop.trf.xlu0
    %6413 = vmatprep.subr.mxu0 %v6348
    %6414 = vmatpush1.msra.mxu0 %v6347
    %6415 = vmatprep.subr.mxu0 %v6346
    %6416 = vmatpush1.msra.mxu0 %v6345
    %6417 = vmatprep.subr.mxu0 %v6344
    %6418 = vmatpush1.msra.mxu0 %v6343
    %6419 = vmatprep.subr.mxu0 %v6342
    %6420 = vmatpush1.msra.mxu0 %v6341
    %6421 = vmatprep.subr.mxu0 %v6340
    %6422 = vmatpush1.msra.mxu0 %v6339
    %6423 = vmatprep.subr.mxu0 %v6338
    %6424 = vmatpush1.msra.mxu0 %v6337
    %6425 = vmatprep.subr.mxu0 %v6336
    %6426 = vmatpush1.msra.mxu0 %v6335
    %6427 = vmatprep.subr.mxu0 %v6334
    %6428 = vmatpush1.msra.mxu0 %v6333
    %6429 = vmatprep.subr.mxu0 %v6332
    %6430 = vmatpush1.msra.mxu0 %v6331
    %6431 = vmatprep.subr.mxu0 %v6330
    %6432 = vmatpush1.msra.mxu0 %v6329
    %6433 = vmatprep.subr.mxu0 %v6328
    %6434 = vmatpush1.msra.mxu0 %v6327
    %6435 = vmatprep.subr.mxu0 %v6326
    %6436 = vmatpush1.msra.mxu0 %v6325
    %6437 = vmatprep.subr.mxu0 %v6324
    %6438 = vmatpush1.msra.mxu0 %v6323
    %6439 = vmatprep.subr.mxu0 %v6322
    %6440 = vmatpush1.msra.mxu0 %v6321
    %6441 = vmatprep.subr.mxu0 %v6320
    %6442 = vmatpush1.msra.mxu0 %v6319
    %6443 = vmatprep.subr.mxu0 %v6318
    %6444 = vmatpush1.msra.mxu0 %v6317
    %6445 = vmatprep.subr.mxu0 0.0
    %6446 = vmatpush2.msra.mxu0 0.0
    %6447 = vmatprep.subr.mxu0 0.0
    %6448 = vmatpush2.msra.mxu0 0.0
    %6449 = vmatprep.subr.mxu0 0.0
    %6450 = vmatpush2.msra.mxu0 0.0
    %6451 = vmatprep.subr.mxu0 0.0
    %6452 = vmatpush2.msra.mxu0 0.0
    %6453 = vmatprep.subr.mxu0 0.0
    %6454 = vmatpush2.msra.mxu0 0.0
    %6455 = vmatprep.subr.mxu0 0.0
    %6456 = vmatpush2.msra.mxu0 0.0
    %6457 = vmatprep.subr.mxu0 0.0
    %6458 = vmatpush2.msra.mxu0 0.0
    %6459 = vmatprep.subr.mxu0 0.0
    %6460 = vmatpush2.msra.mxu0 0.0
    %6461 = vmatprep.subr.mxu0 0.0
    %6462 = vmatpush2.msra.mxu0 0.0
    %6463 = vmatprep.subr.mxu0 0.0
    %6464 = vmatpush2.msra.mxu0 0.0
    %6465 = vmatprep.subr.mxu0 0.0
    %6466 = vmatpush2.msra.mxu0 0.0
    %6467 = vmatprep.subr.mxu0 0.0
    %6468 = vmatpush2.msra.mxu0 0.0
    %6469 = vmatprep.subr.mxu0 0.0
    %6470 = vmatpush2.msra.mxu0 0.0
    %6471 = vmatprep.subr.mxu0 0.0
    %6472 = vmatpush2.msra.mxu0 0.0
    %6473 = vmatprep.subr.mxu0 0.0
    %6474 = vmatpush2.msra.mxu0 0.0
    %6475 = vmatprep.subr.mxu0 0.0
    %6476 = vmatpush2.msra.mxu0 0.0
    %6477 = vmatprep.mubr.f32.mxu0 0.0
    %6478 = vmatmul.mubr.f32.gmra.mxu0 %v6365
    %v6479 = vpop.f32.mrf.mxu0
    %v6480 = vadd.f32 0.0, %v6479
    %v6481 = vpop.f32.mrf.mxu0
    %v6482 = vadd.f32 0.0, %v6481
    %6483 = vmatprep.mubr.f32.mxu0 0.0
    %6484 = vmatmul.mubr.f32.gmra.mxu0 %v6366
    %v6485 = vpop.f32.mrf.mxu0
    %v6486 = vadd.f32 0.0, %v6485
    %v6487 = vpop.f32.mrf.mxu0
    %v6488 = vadd.f32 0.0, %v6487
    %6489 = vmatprep.mubr.f32.mxu0 0.0
    %6490 = vmatmul.mubr.f32.gmra.mxu0 %v6367
    %v6491 = vpop.f32.mrf.mxu0
    %v6492 = vadd.f32 0.0, %v6491
    %v6493 = vpop.f32.mrf.mxu0
    %v6494 = vadd.f32 0.0, %v6493
    %6495 = vmatprep.mubr.f32.mxu0 0.0
    %6496 = vmatmul.mubr.f32.gmra.mxu0 %v6368
    %v6497 = vpop.f32.mrf.mxu0
    %v6498 = vadd.f32 0.0, %v6497
    %v6499 = vpop.f32.mrf.mxu0
    %v6500 = vadd.f32 0.0, %v6499
    %6501 = vmatprep.mubr.f32.mxu0 0.0
    %6502 = vmatmul.mubr.f32.gmra.mxu0 %v6369
    %v6503 = vpop.f32.mrf.mxu0
    %v6504 = vadd.f32 0.0, %v6503
    %v6505 = vpop.f32.mrf.mxu0
    %v6506 = vadd.f32 0.0, %v6505
    %6507 = vmatprep.mubr.f32.mxu0 0.0
    %6508 = vmatmul.mubr.f32.gmra.mxu0 %v6370
    %v6509 = vpop.f32.mrf.mxu0
    %v6510 = vadd.f32 0.0, %v6509
    %v6511 = vpop.f32.mrf.mxu0
    %v6512 = vadd.f32 0.0, %v6511
    %6513 = vmatprep.mubr.f32.mxu0 0.0
    %6514 = vmatmul.mubr.f32.gmra.mxu0 %v6371
    %v6515 = vpop.f32.mrf.mxu0
    %v6516 = vadd.f32 0.0, %v6515
    %v6517 = vpop.f32.mrf.mxu0
    %v6518 = vadd.f32 0.0, %v6517
    %6519 = vmatprep.mubr.f32.mxu0 0.0
    %6520 = vmatmul.mubr.f32.gmra.mxu0 %v6372
    %v6521 = vpop.f32.mrf.mxu0
    %v6522 = vadd.f32 0.0, %v6521
    %v6523 = vpop.f32.mrf.mxu0
    %v6524 = vadd.f32 0.0, %v6523
    %6525 = vmatprep.mubr.f32.mxu0 0.0
    %6526 = vmatmul.mubr.f32.gmra.mxu0 %v6373
    %v6527 = vpop.f32.mrf.mxu0
    %v6528 = vadd.f32 0.0, %v6527
    %v6529 = vpop.f32.mrf.mxu0
    %v6530 = vadd.f32 0.0, %v6529
    %6531 = vmatprep.mubr.f32.mxu0 0.0
    %6532 = vmatmul.mubr.f32.gmra.mxu0 %v6374
    %v6533 = vpop.f32.mrf.mxu0
    %v6534 = vadd.f32 0.0, %v6533
    %v6535 = vpop.f32.mrf.mxu0
    %v6536 = vadd.f32 0.0, %v6535
    %6537 = vmatprep.mubr.f32.mxu0 0.0
    %6538 = vmatmul.mubr.f32.gmra.mxu0 %v6375
    %v6539 = vpop.f32.mrf.mxu0
    %v6540 = vadd.f32 0.0, %v6539
    %v6541 = vpop.f32.mrf.mxu0
    %v6542 = vadd.f32 0.0, %v6541
    %6543 = vmatprep.mubr.f32.mxu0 0.0
    %6544 = vmatmul.mubr.f32.gmra.mxu0 %v6376
    %v6545 = vpop.f32.mrf.mxu0
    %v6546 = vadd.f32 0.0, %v6545
    %v6547 = vpop.f32.mrf.mxu0
    %v6548 = vadd.f32 0.0, %v6547
    %6549 = vmatprep.mubr.f32.mxu0 0.0
    %6550 = vmatmul.mubr.f32.gmra.mxu0 %v6377
    %v6551 = vpop.f32.mrf.mxu0
    %v6552 = vadd.f32 0.0, %v6551
    %v6553 = vpop.f32.mrf.mxu0
    %v6554 = vadd.f32 0.0, %v6553
    %6555 = vmatprep.mubr.f32.mxu0 0.0
    %6556 = vmatmul.mubr.f32.gmra.mxu0 %v6378
    %v6557 = vpop.f32.mrf.mxu0
    %v6558 = vadd.f32 0.0, %v6557
    %v6559 = vpop.f32.mrf.mxu0
    %v6560 = vadd.f32 0.0, %v6559
    %6561 = vmatprep.mubr.f32.mxu0 0.0
    %6562 = vmatmul.mubr.f32.gmra.mxu0 %v6379
    %v6563 = vpop.f32.mrf.mxu0
    %v6564 = vadd.f32 0.0, %v6563
    %v6565 = vpop.f32.mrf.mxu0
    %v6566 = vadd.f32 0.0, %v6565
    %6567 = vmatprep.mubr.f32.mxu0 0.0
    %6568 = vmatmul.mubr.f32.gmra.mxu0 %v6380
    %v6569 = vpop.f32.mrf.mxu0
    %v6570 = vadd.f32 0.0, %v6569
    %v6571 = vpop.f32.mrf.mxu0
    %v6572 = vadd.f32 0.0, %v6571
    %6573 = vmatprep.mubr.f32.mxu0 0.0
    %6574 = vmatmul.mubr.f32.gmra.mxu0 %v6397
    %v6575 = vpop.f32.mrf.mxu0
    %v6576 = vadd.f32 0.0, %v6575
    %v6577 = vpop.f32.mrf.mxu0
    %v6578 = vadd.f32 0.0, %v6577
    %6579 = vmatprep.mubr.f32.mxu0 0.0
    %6580 = vmatmul.mubr.f32.gmra.mxu0 %v6398
    %v6581 = vpop.f32.mrf.mxu0
    %v6582 = vadd.f32 0.0, %v6581
    %v6583 = vpop.f32.mrf.mxu0
    %v6584 = vadd.f32 0.0, %v6583
    %6585 = vmatprep.mubr.f32.mxu0 0.0
    %6586 = vmatmul.mubr.f32.gmra.mxu0 %v6399
    %v6587 = vpop.f32.mrf.mxu0
    %v6588 = vadd.f32 0.0, %v6587
    %v6589 = vpop.f32.mrf.mxu0
    %v6590 = vadd.f32 0.0, %v6589
    %6591 = vmatprep.mubr.f32.mxu0 0.0
    %6592 = vmatmul.mubr.f32.gmra.mxu0 %v6400
    %v6593 = vpop.f32.mrf.mxu0
    %v6594 = vadd.f32 0.0, %v6593
    %v6595 = vpop.f32.mrf.mxu0
    %v6596 = vadd.f32 0.0, %v6595
    %6597 = vmatprep.mubr.f32.mxu0 0.0
    %6598 = vmatmul.mubr.f32.gmra.mxu0 %v6401
    %v6599 = vpop.f32.mrf.mxu0
    %v6600 = vadd.f32 0.0, %v6599
    %v6601 = vpop.f32.mrf.mxu0
    %v6602 = vadd.f32 0.0, %v6601
    %6603 = vmatprep.mubr.f32.mxu0 0.0
    %6604 = vmatmul.mubr.f32.gmra.mxu0 %v6402
    %v6605 = vpop.f32.mrf.mxu0
    %v6606 = vadd.f32 0.0, %v6605
    %v6607 = vpop.f32.mrf.mxu0
    %v6608 = vadd.f32 0.0, %v6607
    %6609 = vmatprep.mubr.f32.mxu0 0.0
    %6610 = vmatmul.mubr.f32.gmra.mxu0 %v6403
    %v6611 = vpop.f32.mrf.mxu0
    %v6612 = vadd.f32 0.0, %v6611
    %v6613 = vpop.f32.mrf.mxu0
    %v6614 = vadd.f32 0.0, %v6613
    %6615 = vmatprep.mubr.f32.mxu0 0.0
    %6616 = vmatmul.mubr.f32.gmra.mxu0 %v6404
    %v6617 = vpop.f32.mrf.mxu0
    %v6618 = vadd.f32 0.0, %v6617
    %v6619 = vpop.f32.mrf.mxu0
    %v6620 = vadd.f32 0.0, %v6619
    %6621 = vmatprep.mubr.f32.mxu0 0.0
    %6622 = vmatmul.mubr.f32.gmra.mxu0 %v6405
    %v6623 = vpop.f32.mrf.mxu0
    %v6624 = vadd.f32 0.0, %v6623
    %v6625 = vpop.f32.mrf.mxu0
    %v6626 = vadd.f32 0.0, %v6625
    %6627 = vmatprep.mubr.f32.mxu0 0.0
    %6628 = vmatmul.mubr.f32.gmra.mxu0 %v6406
    %v6629 = vpop.f32.mrf.mxu0
    %v6630 = vadd.f32 0.0, %v6629
    %v6631 = vpop.f32.mrf.mxu0
    %v6632 = vadd.f32 0.0, %v6631
    %6633 = vmatprep.mubr.f32.mxu0 0.0
    %6634 = vmatmul.mubr.f32.gmra.mxu0 %v6407
    %v6635 = vpop.f32.mrf.mxu0
    %v6636 = vadd.f32 0.0, %v6635
    %v6637 = vpop.f32.mrf.mxu0
    %v6638 = vadd.f32 0.0, %v6637
    %6639 = vmatprep.mubr.f32.mxu0 0.0
    %6640 = vmatmul.mubr.f32.gmra.mxu0 %v6408
    %v6641 = vpop.f32.mrf.mxu0
    %v6642 = vadd.f32 0.0, %v6641
    %v6643 = vpop.f32.mrf.mxu0
    %v6644 = vadd.f32 0.0, %v6643
    %6645 = vmatprep.mubr.f32.mxu0 0.0
    %6646 = vmatmul.mubr.f32.gmra.mxu0 %v6409
    %v6647 = vpop.f32.mrf.mxu0
    %v6648 = vadd.f32 0.0, %v6647
    %v6649 = vpop.f32.mrf.mxu0
    %v6650 = vadd.f32 0.0, %v6649
    %6651 = vmatprep.mubr.f32.mxu0 0.0
    %6652 = vmatmul.mubr.f32.gmra.mxu0 %v6410
    %v6653 = vpop.f32.mrf.mxu0
    %v6654 = vadd.f32 0.0, %v6653
    %v6655 = vpop.f32.mrf.mxu0
    %v6656 = vadd.f32 0.0, %v6655
    %6657 = vmatprep.mubr.f32.mxu0 0.0
    %6658 = vmatmul.mubr.f32.gmra.mxu0 %v6411
    %v6659 = vpop.f32.mrf.mxu0
    %v6660 = vadd.f32 0.0, %v6659
    %v6661 = vpop.f32.mrf.mxu0
    %v6662 = vadd.f32 0.0, %v6661
    %6663 = vmatprep.mubr.f32.mxu0 0.0
    %6664 = vmatmul.mubr.f32.gmra.mxu0 %v6412
    %v6665 = vpop.f32.mrf.mxu0
    %v6666 = vadd.f32 0.0, %v6665
    %v6667 = vpop.f32.mrf.mxu0
    %v6668 = vadd.f32 0.0, %v6667
    %6669 = vdwg.mxu0
    %v6670 = vmul.f32 %v6480, 0.0078125
    %v6671 = vmul.f32 %v6482, 0.0078125
    %v6672 = vmul.f32 %v6486, 0.0078125
    %v6673 = vmul.f32 %v6488, 0.0078125
    %v6674 = vmul.f32 %v6492, 0.0078125
    %v6675 = vmul.f32 %v6494, 0.0078125
    %v6676 = vmul.f32 %v6498, 0.0078125
    %v6677 = vmul.f32 %v6500, 0.0078125
    %v6678 = vmul.f32 %v6504, 0.0078125
    %v6679 = vmul.f32 %v6506, 0.0078125
    %v6680 = vmul.f32 %v6510, 0.0078125
    %v6681 = vmul.f32 %v6512, 0.0078125
    %v6682 = vmul.f32 %v6516, 0.0078125
    %v6683 = vmul.f32 %v6518, 0.0078125
    %v6684 = vmul.f32 %v6522, 0.0078125
    %v6685 = vmul.f32 %v6524, 0.0078125
    %v6686 = vmul.f32 %v6528, 0.0078125
    %v6687 = vmul.f32 %v6530, 0.0078125
    %v6688 = vmul.f32 %v6534, 0.0078125
    %v6689 = vmul.f32 %v6536, 0.0078125
    %v6690 = vmul.f32 %v6540, 0.0078125
    %v6691 = vmul.f32 %v6542, 0.0078125
    %v6692 = vmul.f32 %v6546, 0.0078125
    %v6693 = vmul.f32 %v6548, 0.0078125
    %v6694 = vmul.f32 %v6552, 0.0078125
    %v6695 = vmul.f32 %v6554, 0.0078125
    %v6696 = vmul.f32 %v6558, 0.0078125
    %v6697 = vmul.f32 %v6560, 0.0078125
    %v6698 = vmul.f32 %v6564, 0.0078125
    %v6699 = vmul.f32 %v6566, 0.0078125
    %v6700 = vmul.f32 %v6570, 0.0078125
    %v6701 = vmul.f32 %v6572, 0.0078125
    %v6702 = vmul.f32 %v6576, 0.0078125
    %v6703 = vmul.f32 %v6578, 0.0078125
    %v6704 = vmul.f32 %v6582, 0.0078125
    %v6705 = vmul.f32 %v6584, 0.0078125
    %v6706 = vmul.f32 %v6588, 0.0078125
    %v6707 = vmul.f32 %v6590, 0.0078125
    %v6708 = vmul.f32 %v6594, 0.0078125
    %v6709 = vmul.f32 %v6596, 0.0078125
    %v6710 = vmul.f32 %v6600, 0.0078125
    %v6711 = vmul.f32 %v6602, 0.0078125
    %v6712 = vmul.f32 %v6606, 0.0078125
    %v6713 = vmul.f32 %v6608, 0.0078125
    %v6714 = vmul.f32 %v6612, 0.0078125
    %v6715 = vmul.f32 %v6614, 0.0078125
    %v6716 = vmul.f32 %v6618, 0.0078125
    %v6717 = vmul.f32 %v6620, 0.0078125
    %v6718 = vmul.f32 %v6624, 0.0078125
    %v6719 = vmul.f32 %v6626, 0.0078125
    %v6720 = vmul.f32 %v6630, 0.0078125
    %v6721 = vmul.f32 %v6632, 0.0078125
    %v6722 = vmul.f32 %v6636, 0.0078125
    %v6723 = vmul.f32 %v6638, 0.0078125
    %v6724 = vmul.f32 %v6642, 0.0078125
    %v6725 = vmul.f32 %v6644, 0.0078125
    %v6726 = vmul.f32 %v6648, 0.0078125
    %v6727 = vmul.f32 %v6650, 0.0078125
    %v6728 = vmul.f32 %v6654, 0.0078125
    %v6729 = vmul.f32 %v6656, 0.0078125
    %v6730 = vmul.f32 %v6660, 0.0078125
    %v6731 = vmul.f32 %v6662, 0.0078125
    %v6732 = vmul.f32 %v6666, 0.0078125
    %v6733 = vmul.f32 %v6668, 0.0078125
    %v6734 = vlaneseq
    %v6735 = vshrl.u32 %v6734, 7
    %v6736 = vadd.s32 %v6735, 8
    %v6737 = vadd.s32 %v6735, 16
    %v6738 = vadd.s32 %v6735, 24
    %v6739 = vadd.s32 %v6735, 32
    %v6740 = vadd.s32 %v6735, 40
    %v6741 = vadd.s32 %v6735, 48
    %v6742 = vadd.s32 %v6735, 56
    %v6743 = vadd.s32 %v6735, 64
    %v6744 = vadd.s32 %v6735, 72
    %v6745 = vadd.s32 %v6735, 80
    %v6746 = vadd.s32 %v6735, 88
    %v6747 = vadd.s32 %v6735, 96
    %v6748 = vadd.s32 %v6735, 104
    %v6749 = vadd.s32 %v6735, 112
    %v6750 = vadd.s32 %v6735, 120
    %v6751 = vadd.s32 %v6735, 128
    %v6752 = vadd.s32 %v6735, 136
    %v6753 = vadd.s32 %v6735, 144
    %v6754 = vadd.s32 %v6735, 152
    %v6755 = vadd.s32 %v6735, 160
    %v6756 = vadd.s32 %v6735, 168
    %v6757 = vadd.s32 %v6735, 176
    %v6758 = vadd.s32 %v6735, 184
    %v6759 = vadd.s32 %v6735, 192
    %v6760 = vadd.s32 %v6735, 200
    %v6761 = vadd.s32 %v6735, 208
    %v6762 = vadd.s32 %v6735, 216
    %v6763 = vadd.s32 %v6735, 224
    %v6764 = vadd.s32 %v6735, 232
    %v6765 = vadd.s32 %v6735, 240
    %v6766 = vadd.s32 %v6735, 248
    %v6767 = vlaneseq
    %v6768 = vand.u32 %v6767, 127
    %v6769 = vadd.s32 %v6768, 128
    %vm6770 = vcmp.eq.s32.totalorder %v6735, %v6768
    %vm6771 = vcmp.eq.s32.totalorder %v6735, %v6769
    %vm6772 = vcmp.eq.s32.totalorder %v6736, %v6768
    %vm6773 = vcmp.eq.s32.totalorder %v6736, %v6769
    %vm6774 = vcmp.eq.s32.totalorder %v6737, %v6768
    %vm6775 = vcmp.eq.s32.totalorder %v6737, %v6769
    %vm6776 = vcmp.eq.s32.totalorder %v6738, %v6768
    %vm6777 = vcmp.eq.s32.totalorder %v6738, %v6769
    %vm6778 = vcmp.eq.s32.totalorder %v6739, %v6768
    %vm6779 = vcmp.eq.s32.totalorder %v6739, %v6769
    %vm6780 = vcmp.eq.s32.totalorder %v6740, %v6768
    %vm6781 = vcmp.eq.s32.totalorder %v6740, %v6769
    %vm6782 = vcmp.eq.s32.totalorder %v6741, %v6768
    %vm6783 = vcmp.eq.s32.totalorder %v6741, %v6769
    %vm6784 = vcmp.eq.s32.totalorder %v6742, %v6768
    %vm6785 = vcmp.eq.s32.totalorder %v6742, %v6769
    %vm6786 = vcmp.eq.s32.totalorder %v6743, %v6768
    %vm6787 = vcmp.eq.s32.totalorder %v6743, %v6769
    %vm6788 = vcmp.eq.s32.totalorder %v6744, %v6768
    %vm6789 = vcmp.eq.s32.totalorder %v6744, %v6769
    %vm6790 = vcmp.eq.s32.totalorder %v6745, %v6768
    %vm6791 = vcmp.eq.s32.totalorder %v6745, %v6769
    %vm6792 = vcmp.eq.s32.totalorder %v6746, %v6768
    %vm6793 = vcmp.eq.s32.totalorder %v6746, %v6769
    %vm6794 = vcmp.eq.s32.totalorder %v6747, %v6768
    %vm6795 = vcmp.eq.s32.totalorder %v6747, %v6769
    %vm6796 = vcmp.eq.s32.totalorder %v6748, %v6768
    %vm6797 = vcmp.eq.s32.totalorder %v6748, %v6769
    %vm6798 = vcmp.eq.s32.totalorder %v6749, %v6768
    %vm6799 = vcmp.eq.s32.totalorder %v6749, %v6769
    %vm6800 = vcmp.eq.s32.totalorder %v6750, %v6768
    %vm6801 = vcmp.eq.s32.totalorder %v6750, %v6769
    %vm6802 = vcmp.eq.s32.totalorder %v6751, %v6768
    %vm6803 = vcmp.eq.s32.totalorder %v6751, %v6769
    %vm6804 = vcmp.eq.s32.totalorder %v6752, %v6768
    %vm6805 = vcmp.eq.s32.totalorder %v6752, %v6769
    %vm6806 = vcmp.eq.s32.totalorder %v6753, %v6768
    %vm6807 = vcmp.eq.s32.totalorder %v6753, %v6769
    %vm6808 = vcmp.eq.s32.totalorder %v6754, %v6768
    %vm6809 = vcmp.eq.s32.totalorder %v6754, %v6769
    %vm6810 = vcmp.eq.s32.totalorder %v6755, %v6768
    %vm6811 = vcmp.eq.s32.totalorder %v6755, %v6769
    %vm6812 = vcmp.eq.s32.totalorder %v6756, %v6768
    %vm6813 = vcmp.eq.s32.totalorder %v6756, %v6769
    %vm6814 = vcmp.eq.s32.totalorder %v6757, %v6768
    %vm6815 = vcmp.eq.s32.totalorder %v6757, %v6769
    %vm6816 = vcmp.eq.s32.totalorder %v6758, %v6768
    %vm6817 = vcmp.eq.s32.totalorder %v6758, %v6769
    %vm6818 = vcmp.eq.s32.totalorder %v6759, %v6768
    %vm6819 = vcmp.eq.s32.totalorder %v6759, %v6769
    %vm6820 = vcmp.eq.s32.totalorder %v6760, %v6768
    %vm6821 = vcmp.eq.s32.totalorder %v6760, %v6769
    %vm6822 = vcmp.eq.s32.totalorder %v6761, %v6768
    %vm6823 = vcmp.eq.s32.totalorder %v6761, %v6769
    %vm6824 = vcmp.eq.s32.totalorder %v6762, %v6768
    %vm6825 = vcmp.eq.s32.totalorder %v6762, %v6769
    %vm6826 = vcmp.eq.s32.totalorder %v6763, %v6768
    %vm6827 = vcmp.eq.s32.totalorder %v6763, %v6769
    %vm6828 = vcmp.eq.s32.totalorder %v6764, %v6768
    %vm6829 = vcmp.eq.s32.totalorder %v6764, %v6769
    %vm6830 = vcmp.eq.s32.totalorder %v6765, %v6768
    %vm6831 = vcmp.eq.s32.totalorder %v6765, %v6769
    %vm6832 = vcmp.eq.s32.totalorder %v6766, %v6768
    %vm6833 = vcmp.eq.s32.totalorder %v6766, %v6769
    %v6834 = vsub.f32 %v6670, 1.0
    %v6835 = vsub.f32 %v6671, 1.0
    %v6836 = vsub.f32 %v6672, 1.0
    %v6837 = vsub.f32 %v6673, 1.0
    %v6838 = vsub.f32 %v6674, 1.0
    %v6839 = vsub.f32 %v6675, 1.0
    %v6840 = vsub.f32 %v6676, 1.0
    %v6841 = vsub.f32 %v6677, 1.0
    %v6842 = vsub.f32 %v6678, 1.0
    %v6843 = vsub.f32 %v6679, 1.0
    %v6844 = vsub.f32 %v6680, 1.0
    %v6845 = vsub.f32 %v6681, 1.0
    %v6846 = vsub.f32 %v6682, 1.0
    %v6847 = vsub.f32 %v6683, 1.0
    %v6848 = vsub.f32 %v6684, 1.0
    %v6849 = vsub.f32 %v6685, 1.0
    %v6850 = vsub.f32 %v6686, 1.0
    %v6851 = vsub.f32 %v6687, 1.0
    %v6852 = vsub.f32 %v6688, 1.0
    %v6853 = vsub.f32 %v6689, 1.0
    %v6854 = vsub.f32 %v6690, 1.0
    %v6855 = vsub.f32 %v6691, 1.0
    %v6856 = vsub.f32 %v6692, 1.0
    %v6857 = vsub.f32 %v6693, 1.0
    %v6858 = vsub.f32 %v6694, 1.0
    %v6859 = vsub.f32 %v6695, 1.0
    %v6860 = vsub.f32 %v6696, 1.0
    %v6861 = vsub.f32 %v6697, 1.0
    %v6862 = vsub.f32 %v6698, 1.0
    %v6863 = vsub.f32 %v6699, 1.0
    %v6864 = vsub.f32 %v6700, 1.0
    %v6865 = vsub.f32 %v6701, 1.0
    %v6866 = vsub.f32 %v6702, 1.0
    %v6867 = vsub.f32 %v6703, 1.0
    %v6868 = vsub.f32 %v6704, 1.0
    %v6869 = vsub.f32 %v6705, 1.0
    %v6870 = vsub.f32 %v6706, 1.0
    %v6871 = vsub.f32 %v6707, 1.0
    %v6872 = vsub.f32 %v6708, 1.0
    %v6873 = vsub.f32 %v6709, 1.0
    %v6874 = vsub.f32 %v6710, 1.0
    %v6875 = vsub.f32 %v6711, 1.0
    %v6876 = vsub.f32 %v6712, 1.0
    %v6877 = vsub.f32 %v6713, 1.0
    %v6878 = vsub.f32 %v6714, 1.0
    %v6879 = vsub.f32 %v6715, 1.0
    %v6880 = vsub.f32 %v6716, 1.0
    %v6881 = vsub.f32 %v6717, 1.0
    %v6882 = vsub.f32 %v6718, 1.0
    %v6883 = vsub.f32 %v6719, 1.0
    %v6884 = vsub.f32 %v6720, 1.0
    %v6885 = vsub.f32 %v6721, 1.0
    %v6886 = vsub.f32 %v6722, 1.0
    %v6887 = vsub.f32 %v6723, 1.0
    %v6888 = vsub.f32 %v6724, 1.0
    %v6889 = vsub.f32 %v6725, 1.0
    %v6890 = vsub.f32 %v6726, 1.0
    %v6891 = vsub.f32 %v6727, 1.0
    %v6892 = vsub.f32 %v6728, 1.0
    %v6893 = vsub.f32 %v6729, 1.0
    %v6894 = vsub.f32 %v6730, 1.0
    %v6895 = vsub.f32 %v6731, 1.0
    %v6896 = vsub.f32 %v6732, 1.0
    %v6897 = vsub.f32 %v6733, 1.0
    %v6898 = vmul.f32 %v6670, 0.071414284
    %v6899 = vmul.f32 %v6671, 0.071414284
    %v6900 = vmul.f32 %v6672, 0.071414284
    %v6901 = vmul.f32 %v6673, 0.071414284
    %v6902 = vmul.f32 %v6674, 0.071414284
    %v6903 = vmul.f32 %v6675, 0.071414284
    %v6904 = vmul.f32 %v6676, 0.071414284
    %v6905 = vmul.f32 %v6677, 0.071414284
    %v6906 = vmul.f32 %v6678, 0.071414284
    %v6907 = vmul.f32 %v6679, 0.071414284
    %v6908 = vmul.f32 %v6680, 0.071414284
    %v6909 = vmul.f32 %v6681, 0.071414284
    %v6910 = vmul.f32 %v6682, 0.071414284
    %v6911 = vmul.f32 %v6683, 0.071414284
    %v6912 = vmul.f32 %v6684, 0.071414284
    %v6913 = vmul.f32 %v6685, 0.071414284
    %v6914 = vmul.f32 %v6686, 0.071414284
    %v6915 = vmul.f32 %v6687, 0.071414284
    %v6916 = vmul.f32 %v6688, 0.071414284
    %v6917 = vmul.f32 %v6689, 0.071414284
    %v6918 = vmul.f32 %v6690, 0.071414284
    %v6919 = vmul.f32 %v6691, 0.071414284
    %v6920 = vmul.f32 %v6692, 0.071414284
    %v6921 = vmul.f32 %v6693, 0.071414284
    %v6922 = vmul.f32 %v6694, 0.071414284
    %v6923 = vmul.f32 %v6695, 0.071414284
    %v6924 = vmul.f32 %v6696, 0.071414284
    %v6925 = vmul.f32 %v6697, 0.071414284
    %v6926 = vmul.f32 %v6698, 0.071414284
    %v6927 = vmul.f32 %v6699, 0.071414284
    %v6928 = vmul.f32 %v6700, 0.071414284
    %v6929 = vmul.f32 %v6701, 0.071414284
    %v6930 = vmul.f32 %v6702, 0.071414284
    %v6931 = vmul.f32 %v6703, 0.071414284
    %v6932 = vmul.f32 %v6704, 0.071414284
    %v6933 = vmul.f32 %v6705, 0.071414284
    %v6934 = vmul.f32 %v6706, 0.071414284
    %v6935 = vmul.f32 %v6707, 0.071414284
    %v6936 = vmul.f32 %v6708, 0.071414284
    %v6937 = vmul.f32 %v6709, 0.071414284
    %v6938 = vmul.f32 %v6710, 0.071414284
    %v6939 = vmul.f32 %v6711, 0.071414284
    %v6940 = vmul.f32 %v6712, 0.071414284
    %v6941 = vmul.f32 %v6713, 0.071414284
    %v6942 = vmul.f32 %v6714, 0.071414284
    %v6943 = vmul.f32 %v6715, 0.071414284
    %v6944 = vmul.f32 %v6716, 0.071414284
    %v6945 = vmul.f32 %v6717, 0.071414284
    %v6946 = vmul.f32 %v6718, 0.071414284
    %v6947 = vmul.f32 %v6719, 0.071414284
    %v6948 = vmul.f32 %v6720, 0.071414284
    %v6949 = vmul.f32 %v6721, 0.071414284
    %v6950 = vmul.f32 %v6722, 0.071414284
    %v6951 = vmul.f32 %v6723, 0.071414284
    %v6952 = vmul.f32 %v6724, 0.071414284
    %v6953 = vmul.f32 %v6725, 0.071414284
    %v6954 = vmul.f32 %v6726, 0.071414284
    %v6955 = vmul.f32 %v6727, 0.071414284
    %v6956 = vmul.f32 %v6728, 0.071414284
    %v6957 = vmul.f32 %v6729, 0.071414284
    %v6958 = vmul.f32 %v6730, 0.071414284
    %v6959 = vmul.f32 %v6731, 0.071414284
    %v6960 = vmul.f32 %v6732, 0.071414284
    %v6961 = vmul.f32 %v6733, 0.071414284
    %v6962 = vsel %vm6770, %v6834, %v6898
    %v6963 = vsel %vm6771, %v6835, %v6899
    %v6964 = vsel %vm6772, %v6836, %v6900
    %v6965 = vsel %vm6773, %v6837, %v6901
    %v6966 = vsel %vm6774, %v6838, %v6902
    %v6967 = vsel %vm6775, %v6839, %v6903
    %v6968 = vsel %vm6776, %v6840, %v6904
    %v6969 = vsel %vm6777, %v6841, %v6905
    %v6970 = vsel %vm6778, %v6842, %v6906
    %v6971 = vsel %vm6779, %v6843, %v6907
    %v6972 = vsel %vm6780, %v6844, %v6908
    %v6973 = vsel %vm6781, %v6845, %v6909
    %v6974 = vsel %vm6782, %v6846, %v6910
    %v6975 = vsel %vm6783, %v6847, %v6911
    %v6976 = vsel %vm6784, %v6848, %v6912
    %v6977 = vsel %vm6785, %v6849, %v6913
    %v6978 = vsel %vm6786, %v6850, %v6914
    %v6979 = vsel %vm6787, %v6851, %v6915
    %v6980 = vsel %vm6788, %v6852, %v6916
    %v6981 = vsel %vm6789, %v6853, %v6917
    %v6982 = vsel %vm6790, %v6854, %v6918
    %v6983 = vsel %vm6791, %v6855, %v6919
    %v6984 = vsel %vm6792, %v6856, %v6920
    %v6985 = vsel %vm6793, %v6857, %v6921
    %v6986 = vsel %vm6794, %v6858, %v6922
    %v6987 = vsel %vm6795, %v6859, %v6923
    %v6988 = vsel %vm6796, %v6860, %v6924
    %v6989 = vsel %vm6797, %v6861, %v6925
    %v6990 = vsel %vm6798, %v6862, %v6926
    %v6991 = vsel %vm6799, %v6863, %v6927
    %v6992 = vsel %vm6800, %v6864, %v6928
    %v6993 = vsel %vm6801, %v6865, %v6929
    %v6994 = vsel %vm6802, %v6866, %v6930
    %v6995 = vsel %vm6803, %v6867, %v6931
    %v6996 = vsel %vm6804, %v6868, %v6932
    %v6997 = vsel %vm6805, %v6869, %v6933
    %v6998 = vsel %vm6806, %v6870, %v6934
    %v6999 = vsel %vm6807, %v6871, %v6935
    %v7000 = vsel %vm6808, %v6872, %v6936
    %v7001 = vsel %vm6809, %v6873, %v6937
    %v7002 = vsel %vm6810, %v6874, %v6938
    %v7003 = vsel %vm6811, %v6875, %v6939
    %v7004 = vsel %vm6812, %v6876, %v6940
    %v7005 = vsel %vm6813, %v6877, %v6941
    %v7006 = vsel %vm6814, %v6878, %v6942
    %v7007 = vsel %vm6815, %v6879, %v6943
    %v7008 = vsel %vm6816, %v6880, %v6944
    %v7009 = vsel %vm6817, %v6881, %v6945
    %v7010 = vsel %vm6818, %v6882, %v6946
    %v7011 = vsel %vm6819, %v6883, %v6947
    %v7012 = vsel %vm6820, %v6884, %v6948
    %v7013 = vsel %vm6821, %v6885, %v6949
    %v7014 = vsel %vm6822, %v6886, %v6950
    %v7015 = vsel %vm6823, %v6887, %v6951
    %v7016 = vsel %vm6824, %v6888, %v6952
    %v7017 = vsel %vm6825, %v6889, %v6953
    %v7018 = vsel %vm6826, %v6890, %v6954
    %v7019 = vsel %vm6827, %v6891, %v6955
    %v7020 = vsel %vm6828, %v6892, %v6956
    %v7021 = vsel %vm6829, %v6893, %v6957
    %v7022 = vsel %vm6830, %v6894, %v6958
    %v7023 = vsel %vm6831, %v6895, %v6959
    %v7024 = vsel %vm6832, %v6896, %v6960
    %v7025 = vsel %vm6833, %v6897, %v6961
    %v7026 = vmul.f32 %v6962, %v6962
    %v7027 = vmul.f32 %v6963, %v6963
    %v7028 = vmul.f32 %v6964, %v6964
    %v7029 = vmul.f32 %v6965, %v6965
    %v7030 = vmul.f32 %v6966, %v6966
    %v7031 = vmul.f32 %v6967, %v6967
    %v7032 = vmul.f32 %v6968, %v6968
    %v7033 = vmul.f32 %v6969, %v6969
    %v7034 = vmul.f32 %v6970, %v6970
    %v7035 = vmul.f32 %v6971, %v6971
    %v7036 = vmul.f32 %v6972, %v6972
    %v7037 = vmul.f32 %v6973, %v6973
    %v7038 = vmul.f32 %v6974, %v6974
    %v7039 = vmul.f32 %v6975, %v6975
    %v7040 = vmul.f32 %v6976, %v6976
    %v7041 = vmul.f32 %v6977, %v6977
    %v7042 = vmul.f32 %v6978, %v6978
    %v7043 = vmul.f32 %v6979, %v6979
    %v7044 = vmul.f32 %v6980, %v6980
    %v7045 = vmul.f32 %v6981, %v6981
    %v7046 = vmul.f32 %v6982, %v6982
    %v7047 = vmul.f32 %v6983, %v6983
    %v7048 = vmul.f32 %v6984, %v6984
    %v7049 = vmul.f32 %v6985, %v6985
    %v7050 = vmul.f32 %v6986, %v6986
    %v7051 = vmul.f32 %v6987, %v6987
    %v7052 = vmul.f32 %v6988, %v6988
    %v7053 = vmul.f32 %v6989, %v6989
    %v7054 = vmul.f32 %v6990, %v6990
    %v7055 = vmul.f32 %v6991, %v6991
    %v7056 = vmul.f32 %v6992, %v6992
    %v7057 = vmul.f32 %v6993, %v6993
    %v7058 = vmul.f32 %v6994, %v6994
    %v7059 = vmul.f32 %v6995, %v6995
    %v7060 = vmul.f32 %v6996, %v6996
    %v7061 = vmul.f32 %v6997, %v6997
    %v7062 = vmul.f32 %v6998, %v6998
    %v7063 = vmul.f32 %v6999, %v6999
    %v7064 = vmul.f32 %v7000, %v7000
    %v7065 = vmul.f32 %v7001, %v7001
    %v7066 = vmul.f32 %v7002, %v7002
    %v7067 = vmul.f32 %v7003, %v7003
    %v7068 = vmul.f32 %v7004, %v7004
    %v7069 = vmul.f32 %v7005, %v7005
    %v7070 = vmul.f32 %v7006, %v7006
    %v7071 = vmul.f32 %v7007, %v7007
    %v7072 = vmul.f32 %v7008, %v7008
    %v7073 = vmul.f32 %v7009, %v7009
    %v7074 = vmul.f32 %v7010, %v7010
    %v7075 = vmul.f32 %v7011, %v7011
    %v7076 = vmul.f32 %v7012, %v7012
    %v7077 = vmul.f32 %v7013, %v7013
    %v7078 = vmul.f32 %v7014, %v7014
    %v7079 = vmul.f32 %v7015, %v7015
    %v7080 = vmul.f32 %v7016, %v7016
    %v7081 = vmul.f32 %v7017, %v7017
    %v7082 = vmul.f32 %v7018, %v7018
    %v7083 = vmul.f32 %v7019, %v7019
    %v7084 = vmul.f32 %v7020, %v7020
    %v7085 = vmul.f32 %v7021, %v7021
    %v7086 = vmul.f32 %v7022, %v7022
    %v7087 = vmul.f32 %v7023, %v7023
    %v7088 = vmul.f32 %v7024, %v7024
    %v7089 = vmul.f32 %v7025, %v7025
    %v7090 = vadd.f32 %v7026, %v7027
    %7091 = vadd.xlane.f32.xlu0 %v7090
    %v7092 = vpop.xlane.xlu0 %7091
    %v7093 = vadd.f32 %v7028, %v7029
    %7094 = vadd.xlane.f32.xlu0 %v7093
    %v7095 = vpop.xlane.xlu0 %7094
    %v7096 = vadd.f32 %v7030, %v7031
    %7097 = vadd.xlane.f32.xlu0 %v7096
    %v7098 = vpop.xlane.xlu0 %7097
    %v7099 = vadd.f32 %v7032, %v7033
    %7100 = vadd.xlane.f32.xlu0 %v7099
    %v7101 = vpop.xlane.xlu0 %7100
    %v7102 = vadd.f32 %v7034, %v7035
    %7103 = vadd.xlane.f32.xlu0 %v7102
    %v7104 = vpop.xlane.xlu0 %7103
    %v7105 = vadd.f32 %v7036, %v7037
    %7106 = vadd.xlane.f32.xlu0 %v7105
    %v7107 = vpop.xlane.xlu0 %7106
    %v7108 = vadd.f32 %v7038, %v7039
    %7109 = vadd.xlane.f32.xlu0 %v7108
    %v7110 = vpop.xlane.xlu0 %7109
    %v7111 = vadd.f32 %v7040, %v7041
    %7112 = vadd.xlane.f32.xlu0 %v7111
    %v7113 = vpop.xlane.xlu0 %7112
    %v7114 = vadd.f32 %v7042, %v7043
    %7115 = vadd.xlane.f32.xlu0 %v7114
    %v7116 = vpop.xlane.xlu0 %7115
    %v7117 = vadd.f32 %v7044, %v7045
    %7118 = vadd.xlane.f32.xlu0 %v7117
    %v7119 = vpop.xlane.xlu0 %7118
    %v7120 = vadd.f32 %v7046, %v7047
    %7121 = vadd.xlane.f32.xlu0 %v7120
    %v7122 = vpop.xlane.xlu0 %7121
    %v7123 = vadd.f32 %v7048, %v7049
    %7124 = vadd.xlane.f32.xlu0 %v7123
    %v7125 = vpop.xlane.xlu0 %7124
    %v7126 = vadd.f32 %v7050, %v7051
    %7127 = vadd.xlane.f32.xlu0 %v7126
    %v7128 = vpop.xlane.xlu0 %7127
    %v7129 = vadd.f32 %v7052, %v7053
    %7130 = vadd.xlane.f32.xlu0 %v7129
    %v7131 = vpop.xlane.xlu0 %7130
    %v7132 = vadd.f32 %v7054, %v7055
    %7133 = vadd.xlane.f32.xlu0 %v7132
    %v7134 = vpop.xlane.xlu0 %7133
    %v7135 = vadd.f32 %v7056, %v7057
    %7136 = vadd.xlane.f32.xlu0 %v7135
    %v7137 = vpop.xlane.xlu0 %7136
    %v7138 = vadd.f32 %v7058, %v7059
    %7139 = vadd.xlane.f32.xlu0 %v7138
    %v7140 = vpop.xlane.xlu0 %7139
    %v7141 = vadd.f32 %v7060, %v7061
    %7142 = vadd.xlane.f32.xlu0 %v7141
    %v7143 = vpop.xlane.xlu0 %7142
    %v7144 = vadd.f32 %v7062, %v7063
    %7145 = vadd.xlane.f32.xlu0 %v7144
    %v7146 = vpop.xlane.xlu0 %7145
    %v7147 = vadd.f32 %v7064, %v7065
    %7148 = vadd.xlane.f32.xlu0 %v7147
    %v7149 = vpop.xlane.xlu0 %7148
    %v7150 = vadd.f32 %v7066, %v7067
    %7151 = vadd.xlane.f32.xlu0 %v7150
    %v7152 = vpop.xlane.xlu0 %7151
    %v7153 = vadd.f32 %v7068, %v7069
    %7154 = vadd.xlane.f32.xlu0 %v7153
    %v7155 = vpop.xlane.xlu0 %7154
    %v7156 = vadd.f32 %v7070, %v7071
    %7157 = vadd.xlane.f32.xlu0 %v7156
    %v7158 = vpop.xlane.xlu0 %7157
    %v7159 = vadd.f32 %v7072, %v7073
    %7160 = vadd.xlane.f32.xlu0 %v7159
    %v7161 = vpop.xlane.xlu0 %7160
    %v7162 = vadd.f32 %v7074, %v7075
    %7163 = vadd.xlane.f32.xlu0 %v7162
    %v7164 = vpop.xlane.xlu0 %7163
    %v7165 = vadd.f32 %v7076, %v7077
    %7166 = vadd.xlane.f32.xlu0 %v7165
    %v7167 = vpop.xlane.xlu0 %7166
    %v7168 = vadd.f32 %v7078, %v7079
    %7169 = vadd.xlane.f32.xlu0 %v7168
    %v7170 = vpop.xlane.xlu0 %7169
    %v7171 = vadd.f32 %v7080, %v7081
    %7172 = vadd.xlane.f32.xlu0 %v7171
    %v7173 = vpop.xlane.xlu0 %7172
    %v7174 = vadd.f32 %v7082, %v7083
    %7175 = vadd.xlane.f32.xlu0 %v7174
    %v7176 = vpop.xlane.xlu0 %7175
    %v7177 = vadd.f32 %v7084, %v7085
    %7178 = vadd.xlane.f32.xlu0 %v7177
    %v7179 = vpop.xlane.xlu0 %7178
    %v7180 = vadd.f32 %v7086, %v7087
    %7181 = vadd.xlane.f32.xlu0 %v7180
    %v7182 = vpop.xlane.xlu0 %7181
    %v7183 = vadd.f32 %v7088, %v7089
    %7184 = vadd.xlane.f32.xlu0 %v7183
    %v7185 = vpop.xlane.xlu0 %7184
    %v7186 = vadd.f32 %v7092, %v7095
    %v7187 = vadd.f32 %v7186, %v7098
    %v7188 = vadd.f32 %v7187, %v7101
    %v7189 = vadd.f32 %v7188, %v7104
    %v7190 = vadd.f32 %v7189, %v7107
    %v7191 = vadd.f32 %v7190, %v7110
    %v7192 = vadd.f32 %v7191, %v7113
    %v7193 = vadd.f32 %v7192, %v7116
    %v7194 = vadd.f32 %v7193, %v7119
    %v7195 = vadd.f32 %v7194, %v7122
    %v7196 = vadd.f32 %v7195, %v7125
    %v7197 = vadd.f32 %v7196, %v7128
    %v7198 = vadd.f32 %v7197, %v7131
    %v7199 = vadd.f32 %v7198, %v7134
    %v7200 = vadd.f32 %v7199, %v7137
    %v7201 = vadd.f32 %v7200, %v7140
    %v7202 = vadd.f32 %v7201, %v7143
    %v7203 = vadd.f32 %v7202, %v7146
    %v7204 = vadd.f32 %v7203, %v7149
    %v7205 = vadd.f32 %v7204, %v7152
    %v7206 = vadd.f32 %v7205, %v7155
    %v7207 = vadd.f32 %v7206, %v7158
    %v7208 = vadd.f32 %v7207, %v7161
    %v7209 = vadd.f32 %v7208, %v7164
    %v7210 = vadd.f32 %v7209, %v7167
    %v7211 = vadd.f32 %v7210, %v7170
    %v7212 = vadd.f32 %v7211, %v7173
    %v7213 = vadd.f32 %v7212, %v7176
    %v7214 = vadd.f32 %v7213, %v7179
    %v7215 = vadd.f32 %v7214, %v7182
    %v7216 = vadd.f32 %v7215, %v7185
    %v7217 = vrot.slane %v7216, 4
    %v7218 = vadd.f32 %v7216, %v7217
    %v7219 = vrot.slane %v7218, 2
    %v7220 = vadd.f32 %v7218, %v7219
    %v7221 = vrot.slane %v7220, 1
    %v7222 = vadd.f32 %v7220, %v7221
    %v7223 = vmul.f32 %v7222, 0.03125
    %vm7224 = vcmask 0
    %7225 = vst.msk [vmem:[#allocation7] sm:$0x1] %vm7224, %v7223
    // Predicated region
    $region46: #{barlow_twins_forward.1} parent=1 // pred_check
      _
    $region47: #{barlow_twins_forward.1} parent=1 // pred_check_branch
      %7227 = sbr.rel (0) target = $region49
    $region48: #{barlow_twins_forward.1} parent=1 // pred_region
      %s7229 = ssub.s32 16, 16
      %7230 = vsyncadd [#allocation4], %s7229
      %s7232 = sshll.u32 [#allocation7], 4
      %s7233 = int_to_ptr.vmem [resolvable:$true] %s7232
      %7235 = dma.vmem_to_hbm [thread:$0]  %s7233, 16, %s9, [#allocation4]
    $region49: #{barlow_twins_forward.1} parent=1 // pred_fallthru
      _
    // Predicated region
    $region50: #{barlow_twins_forward.1} parent=1 // pred_check
      _
    $region51: #{barlow_twins_forward.1} parent=1 // pred_check_branch
      %7237 = sbr.rel (0) target = $region53
    $region52: #{barlow_twins_forward.1} parent=1 // pred_region
      %7238 = dma.done [#allocation4], 16
    $region53: #{barlow_twins_forward.1} parent=1 // pred_fallthru
      _
    %7239 = vsyncpa [#allocation3], 1
    %7240 = vsyncpa [#allocation6], 1
    %7241 = vsyncpa [#allocation4], 1

</llo_original>
